<compile_context>
chip_gen: v7x
topology: tpu7x:2x2x1
jax: 0.10.0
libtpu: 0.0.40
codegen_flags: <defaults>
</compile_context>

<pallas_src>
import functools

import jax
import jax.numpy as jnp
from jax.experimental import pallas as pl
from jax.experimental.pallas import tpu as pltpu

LANE = 128                       # channel dims padded to multiples of the lane width
_HB = 8                          # sublane granularity of the halo row-blocks
_VMEM_LIMIT = 32 * 1024 * 1024   # conservative scoped-VMEM budget (fits v7x 64 MiB/TC)

_CompilerParams = getattr(pltpu, "CompilerParams", None) or getattr(
    pltpu, "TPUCompilerParams")


def _cparams(semantics):
    return _CompilerParams(dimension_semantics=semantics,
                           vmem_limit_bytes=_VMEM_LIMIT)


def _silu(x):
    return x * jax.nn.sigmoid(x)


def _ceil_to(n, m=LANE):
    return ((n + m - 1) // m) * m


def _pick_row_tile(h, cap=32):
    best = h
    t = _HB
    while t <= min(h, cap):
        if h % t == 0:
            best = t
        t += _HB
    return best


# ----------------------------- Pallas kernels ------------------------------


def head_kernel(x_ref, w1_ref, s1_ref, b1_ref, w2_ref, t_ref, y2_ref):
    """Fused cv1 (1x1 conv + BN + SiLU) and cv2 (plain 1x1 conv); x read once."""
    x = x_ref[...].astype(jnp.bfloat16)
    t = jnp.dot(x, w1_ref[...], preferred_element_type=jnp.float32)
    t = _silu(t * s1_ref[...] + b1_ref[...])
    y2 = jnp.dot(x, w2_ref[...], preferred_element_type=jnp.float32)
    t_ref[...] = t.astype(t_ref.dtype)
    y2_ref[...] = y2.astype(y2_ref.dtype)


def tail_kernel(cur_ref, y2_ref, w3_ref, sa_ref, ba_ref, sb_ref, bb_ref,
                w4a_ref, w4b_ref, s4_ref, b4_ref, o_ref):
    """Fused cv3, post-concat BN+SiLU and cv4 (+BN+SiLU); cv4 weight split so the
    concatenated tensor is never materialized."""
    y1 = jnp.dot(cur_ref[...], w3_ref[...], preferred_element_type=jnp.float32)
    z1 = _silu(y1 * sa_ref[...] + ba_ref[...])
    z2 = _silu(y2_ref[...].astype(jnp.float32) * sb_ref[...] + bb_ref[...])
    y = (jnp.dot(z1.astype(jnp.bfloat16), w4a_ref[...],
                 preferred_element_type=jnp.float32)
         + jnp.dot(z2.astype(jnp.bfloat16), w4b_ref[...],
                   preferred_element_type=jnp.float32))
    o_ref[...] = _silu(y * s4_ref[...] + b4_ref[...]).astype(o_ref.dtype)


def bottleneck_kernel(cur_ref, top_ref, bot_ref, w1_ref, s1_ref, b1_ref,
                      w2_ref, s2_ref, b2_ref, o_ref, xp_ref, *, add):
    """Fused inner Bottleneck: 1x1 conv+BN+SiLU, 3x3 conv+BN+SiLU, residual add.

    Gridded over (batch, row-tiles).  The one-row top/bottom halos come from two
    extra 8-row blocks of the same input (clamped index maps), are run through the
    same 1x1 conv, masked to zero at the image borders and written into a
    zero-padded VMEM scratch so no padded activation ever touches HBM.
    """
    _, TH, W, CP = cur_ref.shape
    r = pl.program_id(1)
    nr = pl.num_programs(1)

    w1 = w1_ref[...]                       # (CP, CP) bf16
    s1 = s1_ref[...]                       # (1, CP) f32
    b1 = b1_ref[...]

    cur = cur_ref[0].reshape(TH * W, CP)   # bf16
    b1_main = _silu(jnp.dot(cur, w1, preferred_element_type=jnp.float32) * s1 + b1)

    top_row = top_ref[0, _HB - 1]          # (W, CP)  == image row r*TH - 1
    bot_row = bot_ref[0, 0]                # (W, CP)  == image row (r+1)*TH
    b1_top = _silu(jnp.dot(top_row, w1, preferred_element_type=jnp.float32) * s1 + b1)
    b1_bot = _silu(jnp.dot(bot_row, w1, preferred_element_type=jnp.float32) * s1 + b1)
    b1_top = b1_top * (r > 0).astype(jnp.float32)
    b1_bot = b1_bot * (r < nr - 1).astype(jnp.float32)

    # Build the zero-padded (TH+2, W+2, CP) halo tile in VMEM.
    xp_ref[...] = jnp.zeros((TH + 2, W + 2, CP), jnp.bfloat16)
    xp_ref[0, 1:W + 1, :] = b1_top.astype(jnp.bfloat16)
    xp_ref[TH + 1, 1:W + 1, :] = b1_bot.astype(jnp.bfloat16)
    xp_ref[1:TH + 1, 1:W + 1, :] = b1_main.reshape(TH, W, CP).astype(jnp.bfloat16)

    acc = jnp.zeros((TH * W, CP), jnp.float32)
    for dy in range(3):
        for dx in range(3):
            patch = xp_ref[dy:dy + TH, dx:dx + W, :]        # (TH, W, CP) bf16
            acc = acc + jnp.dot(patch.reshape(TH * W, CP), w2_ref[dy, dx],
                                preferred_element_type=jnp.float32)
    y = _silu(acc * s2_ref[...] + b2_ref[...])
    if add:
        y = y + cur.astype(jnp.float32)
    o_ref[0] = y.reshape(TH, W, CP).astype(o_ref.dtype)


# ------------------------------ wrappers ------------------------------------


def csp_head(x2d, prm, tm):
    M, C1P = x2d.shape
    CP = prm["cv1_w"].shape[1]
    return pl.pallas_call(
        head_kernel,
        out_shape=(jax.ShapeDtypeStruct((M, CP), jnp.bfloat16),
                   jax.ShapeDtypeStruct((M, CP), jnp.bfloat16)),
        grid=(pl.cdiv(M, tm),),
        in_specs=[
            pl.BlockSpec((tm, C1P), lambda i: (i, 0)),
            pl.BlockSpec((C1P, CP), lambda i: (0, 0)),
            pl.BlockSpec((1, CP), lambda i: (0, 0)),
            pl.BlockSpec((1, CP), lambda i: (0, 0)),
            pl.BlockSpec((C1P, CP), lambda i: (0, 0)),
        ],
        out_specs=(pl.BlockSpec((tm, CP), lambda i: (i, 0)),
                   pl.BlockSpec((tm, CP), lambda i: (i, 0))),
        compiler_params=_cparams(("parallel",)),
    )(x2d, prm["cv1_w"], prm["cv1_scale"], prm["cv1_bias"], prm["cv2_w"])


def csp_tail(cur2d, y2_2d, prm, tm):
    M, CP = cur2d.shape
    C2P = prm["cv4_w_a"].shape[1]
    return pl.pallas_call(
        tail_kernel,
        out_shape=jax.ShapeDtypeStruct((M, C2P), jnp.float32),
        grid=(pl.cdiv(M, tm),),
        in_specs=[
            pl.BlockSpec((tm, CP), lambda i: (i, 0)),
            pl.BlockSpec((tm, CP), lambda i: (i, 0)),
            pl.BlockSpec((CP, CP), lambda i: (0, 0)),
            pl.BlockSpec((1, CP), lambda i: (0, 0)),
            pl.BlockSpec((1, CP), lambda i: (0, 0)),
            pl.BlockSpec((1, CP), lambda i: (0, 0)),
            pl.BlockSpec((1, CP), lambda i: (0, 0)),
            pl.BlockSpec((CP, C2P), lambda i: (0, 0)),
            pl.BlockSpec((CP, C2P), lambda i: (0, 0)),
            pl.BlockSpec((1, C2P), lambda i: (0, 0)),
            pl.BlockSpec((1, C2P), lambda i: (0, 0)),
        ],
        out_specs=pl.BlockSpec((tm, C2P), lambda i: (i, 0)),
        compiler_params=_cparams(("parallel",)),
    )(cur2d, y2_2d, prm["cv3_w"], prm["bn_scale_a"], prm["bn_bias_a"],
      prm["bn_scale_b"], prm["bn_bias_b"], prm["cv4_w_a"], prm["cv4_w_b"],
      prm["cv4_scale"], prm["cv4_bias"])


def bottleneck_block(cur, bp, *, add, row_tile=None):
    N, H, W, CP = cur.shape
    # TODO(synk): support H not divisible by 8 (would need ragged halo blocks).
    assert H % _HB == 0, "H must be a multiple of 8 for the halo row-tiling scheme"
    TH = row_tile if row_tile is not None else _pick_row_tile(H)
    assert H % TH == 0 and TH % _HB == 0
    nrt = H // TH
    nrb = H // _HB
    tb = TH // _HB
    kern = functools.partial(bottleneck_kernel, add=add)
    return pl.pallas_call(
        kern,
        out_shape=jax.ShapeDtypeStruct((N, H, W, CP), cur.dtype),
        grid=(N, nrt),
        in_specs=[
            pl.BlockSpec((1, TH, W, CP), lambda b, r: (b, r, 0, 0)),
            pl.BlockSpec((1, _HB, W, CP),
                         lambda b, r: (b, jnp.maximum(r * tb - 1, 0), 0, 0)),
            pl.BlockSpec((1, _HB, W, CP),
                         lambda b, r: (b, jnp.minimum((r + 1) * tb, nrb - 1), 0, 0)),
            pl.BlockSpec((CP, CP), lambda b, r: (0, 0)),
            pl.BlockSpec((1, CP), lambda b, r: (0, 0)),
            pl.BlockSpec((1, CP), lambda b, r: (0, 0)),
            pl.BlockSpec((3, 3, CP, CP), lambda b, r: (0, 0, 0, 0)),
            pl.BlockSpec((1, CP), lambda b, r: (0, 0)),
            pl.BlockSpec((1, CP), lambda b, r: (0, 0)),
        ],
        out_specs=pl.BlockSpec((1, TH, W, CP), lambda b, r: (b, r, 0, 0)),
        scratch_shapes=[pltpu.VMEM((TH + 2, W + 2, CP), jnp.bfloat16)],
        compiler_params=_cparams(("parallel", "parallel")),
    )(cur, cur, cur, bp["cv1_w"], bp["cv1_scale"], bp["cv1_bias"],
      bp["cv2_w"], bp["cv2_scale"], bp["cv2_bias"])


# ------------------------ parameters (deterministic) ------------------------


def _fold_bn(key, c, eps=1e-5):
    k1, k2, k3, k4 = jax.random.split(key, 4)
    gamma = 1.0 + 0.1 * jax.random.normal(k1, (c,), jnp.float32)
    beta = 0.1 * jax.random.normal(k2, (c,), jnp.float32)
    mean = 0.1 * jax.random.normal(k3, (c,), jnp.float32)
    var = 1.0 + 0.1 * jax.random.uniform(k4, (c,), jnp.float32)
    scale = gamma / jnp.sqrt(var + eps)
    bias = beta - mean * scale
    return scale, bias


def init_params(key, c1, c2, n=1, e=0.5):
    c_ = int(c2 * e)
    keys = jax.random.split(key, 8 + 4 * n)
    p = {}
    p["cv1_w"] = 0.1 * jax.random.normal(keys[0], (c1, c_), jnp.float32)
    p["cv1_scale"], p["cv1_bias"] = _fold_bn(keys[1], c_)
    p["cv2_w"] = 0.1 * jax.random.normal(keys[2], (c1, c_), jnp.float32)
    p["cv3_w"] = 0.1 * jax.random.normal(keys[3], (c_, c_), jnp.float32)
    p["cv4_w"] = 0.1 * jax.random.normal(keys[4], (2 * c_, c2), jnp.float32)
    p["cv4_scale"], p["cv4_bias"] = _fold_bn(keys[5], c2)
    p["bn_scale"], p["bn_bias"] = _fold_bn(keys[6], 2 * c_)
    p["m"] = []
    for i in range(n):
        k0, k1, k2, k3 = keys[8 + 4 * i: 12 + 4 * i]
        bp = {}
        bp["cv1_w"] = 0.1 * jax.random.normal(k0, (c_, c_), jnp.float32)
        bp["cv1_scale"], bp["cv1_bias"] = _fold_bn(k1, c_)
        bp["cv2_w"] = 0.1 * jax.random.normal(k2, (3, 3, c_, c_), jnp.float32)
        bp["cv2_scale"], bp["cv2_bias"] = _fold_bn(k3, c_)
        p["m"].append(bp)
    return p


def _pad2(w, r, c):
    return jnp.pad(w, ((0, r - w.shape[0]), (0, c - w.shape[1])))


def _pad_conv(w, ci, co):
    return jnp.pad(w, ((0, 0), (0, 0), (0, ci - w.shape[2]), (0, co - w.shape[3])))


def _pad_row(v, c, fill):
    out = jnp.full((c,), fill, v.dtype).at[:v.shape[0]].set(v)
    return out.reshape(1, c)


def prepare_params(raw, c1, c2):
    """Zero-pad channels to lane multiples and pre-cast MXU operands to bf16."""
    c_ = raw["cv1_w"].shape[1]
    C1P, CP, C2P = _ceil_to(c1), _ceil_to(c_), _ceil_to(c2)
    bf = jnp.bfloat16
    p = {}
    p["cv1_w"] = _pad2(raw["cv1_w"], C1P, CP).astype(bf)
    p["cv1_scale"] = _pad_row(raw["cv1_scale"], CP, 1.0)
    p["cv1_bias"] = _pad_row(raw["cv1_bias"], CP, 0.0)
    p["cv2_w"] = _pad2(raw["cv2_w"], C1P, CP).astype(bf)
    p["cv3_w"] = _pad2(raw["cv3_w"], CP, CP).astype(bf)
    w4 = raw["cv4_w"]
    p["cv4_w_a"] = _pad2(w4[:c_], CP, C2P).astype(bf)
    p["cv4_w_b"] = _pad2(w4[c_:], CP, C2P).astype(bf)
    p["cv4_scale"] = _pad_row(raw["cv4_scale"], C2P, 1.0)
    p["cv4_bias"] = _pad_row(raw["cv4_bias"], C2P, 0.0)
    p["bn_scale_a"] = _pad_row(raw["bn_scale"][:c_], CP, 1.0)
    p["bn_bias_a"] = _pad_row(raw["bn_bias"][:c_], CP, 0.0)
    p["bn_scale_b"] = _pad_row(raw["bn_scale"][c_:], CP, 1.0)
    p["bn_bias_b"] = _pad_row(raw["bn_bias"][c_:], CP, 0.0)
    p["m"] = []
    for bp in raw["m"]:
        q = {}
        q["cv1_w"] = _pad2(bp["cv1_w"], CP, CP).astype(bf)
        q["cv1_scale"] = _pad_row(bp["cv1_scale"], CP, 1.0)
        q["cv1_bias"] = _pad_row(bp["cv1_bias"], CP, 0.0)
        q["cv2_w"] = _pad_conv(bp["cv2_w"], CP, CP).astype(bf)
        q["cv2_scale"] = _pad_row(bp["cv2_scale"], CP, 1.0)
        q["cv2_bias"] = _pad_row(bp["cv2_bias"], CP, 0.0)
        p["m"].append(q)
    return p


# ------------------------------ forward -------------------------------------


def bottleneck_csp_forward(x, prm, *, c2, shortcut=True, row_tile=None, m_tile=256):
    """x: (N, H, W, c1) NHWC float32. Returns (N, H, W, c2) float32."""
    N, H, W, c1 = x.shape
    C1P = prm["cv1_w"].shape[0]
    CP = prm["cv1_w"].shape[1]
    C2P = prm["cv4_w_a"].shape[1]
    M = N * H * W
    tm = min(m_tile, M)

    if C1P > c1:
        x = jnp.pad(x, ((0, 0), (0, 0), (0, 0), (0, C1P - c1)))
    x2d = x.reshape(M, C1P)

    # cv1 (+BN+SiLU) and cv2 fused: x read once.
    t2d, y2_2d = csp_head(x2d, prm, tm)
    cur = t2d.reshape(N, H, W, CP)

    # m: sequence of fused Bottleneck(c_, c_, shortcut, e=1.0) kernels.
    for bp in prm["m"]:
        cur = bottleneck_block(cur, bp, add=bool(shortcut), row_tile=row_tile)

    # cv3 + BN + SiLU + cv4 (+BN+SiLU), no concat materialization.
    out2d = csp_tail(cur.reshape(M, CP), y2_2d, prm, tm)
    return out2d.reshape(N, H, W, C2P)[..., :c2]


# --------------------------- pure-JAX reference ------------------------------


def reference_forward(x, raw, shortcut=True):
    hp = jax.lax.Precision.HIGHEST

    def pw(v, w):
        return jnp.einsum("nhwc,cd->nhwd", v, w, precision=hp)

    def bnf(v, s, b):
        return v * s + b

    cur = _silu(bnf(pw(x, raw["cv1_w"]), raw["cv1_scale"], raw["cv1_bias"]))
    for bp in raw["m"]:
        h = _silu(bnf(pw(cur, bp["cv1_w"]), bp["cv1_scale"], bp["cv1_bias"]))
        conv = jax.lax.conv_general_dilated(
            h, bp["cv2_w"], window_strides=(1, 1), padding="SAME",
            dimension_numbers=("NHWC", "HWIO", "NHWC"), precision=hp)
        y = _silu(bnf(conv, bp["cv2_scale"], bp["cv2_bias"]))
        cur = cur + y if shortcut else y
    y1 = pw(cur, raw["cv3_w"])
    y2 = pw(x, raw["cv2_w"])
    cat = jnp.concatenate([y1, y2], axis=-1)
    z = _silu(bnf(cat, raw["bn_scale"], raw["bn_bias"]))
    return _silu(bnf(pw(z, raw["cv4_w"]), raw["cv4_scale"], raw["cv4_bias"]))


# -------------------------------- main ---------------------------------------


if __name__ == "__main__":
    key = jax.random.PRNGKey(0)
    kx, kp = jax.random.split(key)

    N, H, W_, C1, C2, NBOT = 2, 16, 16, 8, 8, 1
    x = jax.random.normal(kx, (N, H, W_, C1), jnp.float32)  # NHWC (== NCHW (2, 8, 16, 16))
    raw = init_params(kp, C1, C2, n=NBOT, e=0.5)
    prm = prepare_params(raw, C1, C2)

    fwd = jax.jit(functools.partial(bottleneck_csp_forward, c2=C2,
                                    shortcut=True, row_tile=8))
    out = jax.block_until_ready(fwd(x, prm))
    assert out.shape == (N, H, W_, C2)
    assert bool(jnp.all(jnp.isfinite(out)))

    ref = reference_forward(x, raw, shortcut=True)
    err = float(jnp.max(jnp.abs(out - ref)))
    assert bool(jnp.allclose(out, ref, rtol=5e-2, atol=5e-2)), f"max |err| = {err}"

    print("KERNEL_OK")
</pallas_src>

<mosaic_0001>
module attributes {stable_mosaic.version = 11 : i64} {
  func.func @head_kernel(%arg0: i32, %arg1: memref<256x128xf32, #tpu.memory_space<vmem>>, %arg2: memref<128x128xbf16, #tpu.memory_space<vmem>>, %arg3: memref<1x128xf32, #tpu.memory_space<vmem>>, %arg4: memref<1x128xf32, #tpu.memory_space<vmem>>, %arg5: memref<128x128xbf16, #tpu.memory_space<vmem>>, %arg6: memref<256x128xbf16, #tpu.memory_space<vmem>>, %arg7: memref<256x128xbf16, #tpu.memory_space<vmem>>) attributes {dimension_semantics = [#tpu.dimension_semantics<parallel>], iteration_bounds = array<i64: 2>, scalar_prefetch = 0 : i64, scratch_operands = 0 : i64, tpu.core_type = #tpu.core_type<tc>, window_params = [{transform_indices = @transform_0, window_bounds = array<i64: 256, 128>}, {pipeline_mode = #tpu.pipeline_mode<synchronous>, transform_indices = @transform_1, window_bounds = array<i64: 128, 128>}, {pipeline_mode = #tpu.pipeline_mode<synchronous>, transform_indices = @transform_2, window_bounds = array<i64: 1, 128>}, {pipeline_mode = #tpu.pipeline_mode<synchronous>, transform_indices = @transform_3, window_bounds = array<i64: 1, 128>}, {pipeline_mode = #tpu.pipeline_mode<synchronous>, transform_indices = @transform_4, window_bounds = array<i64: 128, 128>}, {transform_indices = @transform_5, window_bounds = array<i64: 256, 128>}, {transform_indices = @transform_6, window_bounds = array<i64: 256, 128>}]} {
    %c0 = arith.constant 0 : index
    %c0_0 = arith.constant 0 : index
    %0 = vector.load %arg1[%c0, %c0_0] : memref<256x128xf32, #tpu.memory_space<vmem>>, vector<256x128xf32>
    %1 = arith.truncf %0 : vector<256x128xf32> to vector<256x128xbf16>
    %c0_1 = arith.constant 0 : index
    %c0_2 = arith.constant 0 : index
    %2 = vector.load %arg2[%c0_1, %c0_2] : memref<128x128xbf16, #tpu.memory_space<vmem>>, vector<128x128xbf16>
    %cst = arith.constant dense<0.000000e+00> : vector<256x128xf32>
    %3 = tpu.matmul %1, %2, %cst {dimension_numbers = #tpu.dot_dimension_numbers<[1], [0], [0], [1], [0, 0, 1, 1], [], []>} : vector<256x128xbf16>, vector<128x128xbf16>, vector<256x128xf32> -> vector<256x128xf32>
    %c0_3 = arith.constant 0 : index
    %c0_4 = arith.constant 0 : index
    %4 = vector.load %arg3[%c0_3, %c0_4] : memref<1x128xf32, #tpu.memory_space<vmem>>, vector<1x128xf32>
    %5 = vector.broadcast %4 : vector<1x128xf32> to vector<256x128xf32>
    %6 = arith.mulf %3, %5 : vector<256x128xf32>
    %c0_5 = arith.constant 0 : index
    %c0_6 = arith.constant 0 : index
    %7 = vector.load %arg4[%c0_5, %c0_6] : memref<1x128xf32, #tpu.memory_space<vmem>>, vector<1x128xf32>
    %8 = vector.broadcast %7 : vector<1x128xf32> to vector<256x128xf32>
    %9 = arith.addf %6, %8 : vector<256x128xf32>
    %10 = arith.negf %9 : vector<256x128xf32>
    %11 = math.exp %10 : vector<256x128xf32>
    %cst_7 = arith.constant 1.000000e+00 : f32
    %12 = vector.broadcast %cst_7 : f32 to vector<256x128xf32>
    %13 = arith.addf %12, %11 : vector<256x128xf32>
    %14 = arith.divf %12, %13 : vector<256x128xf32>
    %15 = arith.mulf %9, %14 : vector<256x128xf32>
    %c0_8 = arith.constant 0 : index
    %c0_9 = arith.constant 0 : index
    %16 = vector.load %arg5[%c0_8, %c0_9] : memref<128x128xbf16, #tpu.memory_space<vmem>>, vector<128x128xbf16>
    %cst_10 = arith.constant dense<0.000000e+00> : vector<256x128xf32>
    %17 = tpu.matmul %1, %16, %cst_10 {dimension_numbers = #tpu.dot_dimension_numbers<[1], [0], [0], [1], [0, 0, 1, 1], [], []>} : vector<256x128xbf16>, vector<128x128xbf16>, vector<256x128xf32> -> vector<256x128xf32>
    %18 = arith.truncf %15 : vector<256x128xf32> to vector<256x128xbf16>
    %c0_11 = arith.constant 0 : index
    %c0_12 = arith.constant 0 : index
    %19 = vector.load %arg6[%c0_11, %c0_12] : memref<256x128xbf16, #tpu.memory_space<vmem>>, vector<256x128xbf16>
    tpu.vector_store %arg6[%c0_11, %c0_12], %18 {strides = array<i32>} : memref<256x128xbf16, #tpu.memory_space<vmem>>, vector<256x128xbf16>,
    %20 = arith.truncf %17 : vector<256x128xf32> to vector<256x128xbf16>
    %c0_13 = arith.constant 0 : index
    %c0_14 = arith.constant 0 : index
    %21 = vector.load %arg7[%c0_13, %c0_14] : memref<256x128xbf16, #tpu.memory_space<vmem>>, vector<256x128xbf16>
    tpu.vector_store %arg7[%c0_13, %c0_14], %20 {strides = array<i32>} : memref<256x128xbf16, #tpu.memory_space<vmem>>, vector<256x128xbf16>,
    return
  }
  func.func @transform_0(%arg0: i32) -> (i32, i32) {
    %c0_i32 = arith.constant 0 : i32
    %c0_i32_0 = arith.constant 0 : i32
    return %arg0, %c0_i32 : i32, i32
  }
  func.func @transform_1(%arg0: i32) -> (i32, i32) {
    %c0_i32 = arith.constant 0 : i32
    %c0_i32_0 = arith.constant 0 : i32
    %c0_i32_1 = arith.constant 0 : i32
    return %c0_i32, %c0_i32_0 : i32, i32
  }
  func.func @transform_2(%arg0: i32) -> (i32, i32) {
    %c0_i32 = arith.constant 0 : i32
    %c0_i32_0 = arith.constant 0 : i32
    %c0_i32_1 = arith.constant 0 : i32
    return %c0_i32, %c0_i32_0 : i32, i32
  }
  func.func @transform_3(%arg0: i32) -> (i32, i32) {
    %c0_i32 = arith.constant 0 : i32
    %c0_i32_0 = arith.constant 0 : i32
    %c0_i32_1 = arith.constant 0 : i32
    return %c0_i32, %c0_i32_0 : i32, i32
  }
  func.func @transform_4(%arg0: i32) -> (i32, i32) {
    %c0_i32 = arith.constant 0 : i32
    %c0_i32_0 = arith.constant 0 : i32
    %c0_i32_1 = arith.constant 0 : i32
    return %c0_i32, %c0_i32_0 : i32, i32
  }
  func.func @transform_5(%arg0: i32) -> (i32, i32) {
    %c0_i32 = arith.constant 0 : i32
    %c0_i32_0 = arith.constant 0 : i32
    return %arg0, %c0_i32 : i32, i32
  }
  func.func @transform_6(%arg0: i32) -> (i32, i32) {
    %c0_i32 = arith.constant 0 : i32
    %c0_i32_0 = arith.constant 0 : i32
    return %arg0, %c0_i32 : i32, i32
  }
}

module attributes {stable_mosaic.version = 11 : i64} {
  func.func @bottleneck_kernel(%arg0: i32, %arg1: i32, %arg2: memref<1x8x16x128xbf16, #tpu.memory_space<vmem>>, %arg3: memref<1x8x16x128xbf16, #tpu.memory_space<vmem>>, %arg4: memref<1x8x16x128xbf16, #tpu.memory_space<vmem>>, %arg5: memref<128x128xbf16, #tpu.memory_space<vmem>>, %arg6: memref<1x128xf32, #tpu.memory_space<vmem>>, %arg7: memref<1x128xf32, #tpu.memory_space<vmem>>, %arg8: memref<3x3x128x128xbf16, #tpu.memory_space<vmem>>, %arg9: memref<1x128xf32, #tpu.memory_space<vmem>>, %arg10: memref<1x128xf32, #tpu.memory_space<vmem>>, %arg11: memref<1x8x16x128xbf16, #tpu.memory_space<vmem>>, %arg12: memref<10x18x128xbf16, #tpu.memory_space<vmem>>) attributes {dimension_semantics = [#tpu.dimension_semantics<parallel>, #tpu.dimension_semantics<parallel>], iteration_bounds = array<i64: 2, 2>, scalar_prefetch = 0 : i64, scratch_operands = 1 : i64, tpu.core_type = #tpu.core_type<tc>, window_params = [{transform_indices = @transform_0, window_bounds = array<i64: 1, 8, 16, 128>}, {transform_indices = @transform_1, window_bounds = array<i64: 1, 8, 16, 128>}, {transform_indices = @transform_2, window_bounds = array<i64: 1, 8, 16, 128>}, {pipeline_mode = #tpu.pipeline_mode<synchronous>, transform_indices = @transform_3, window_bounds = array<i64: 128, 128>}, {pipeline_mode = #tpu.pipeline_mode<synchronous>, transform_indices = @transform_4, window_bounds = array<i64: 1, 128>}, {pipeline_mode = #tpu.pipeline_mode<synchronous>, transform_indices = @transform_5, window_bounds = array<i64: 1, 128>}, {pipeline_mode = #tpu.pipeline_mode<synchronous>, transform_indices = @transform_6, window_bounds = array<i64: 3, 3, 128, 128>}, {pipeline_mode = #tpu.pipeline_mode<synchronous>, transform_indices = @transform_7, window_bounds = array<i64: 1, 128>}, {pipeline_mode = #tpu.pipeline_mode<synchronous>, transform_indices = @transform_8, window_bounds = array<i64: 1, 128>}, {transform_indices = @transform_9, window_bounds = array<i64: 1, 8, 16, 128>}]} {
    %c0 = arith.constant 0 : index
    %c0_0 = arith.constant 0 : index
    %0 = vector.load %arg5[%c0, %c0_0] : memref<128x128xbf16, #tpu.memory_space<vmem>>, vector<128x128xbf16>
    %c0_1 = arith.constant 0 : index
    %c0_2 = arith.constant 0 : index
    %1 = vector.load %arg6[%c0_1, %c0_2] : memref<1x128xf32, #tpu.memory_space<vmem>>, vector<1x128xf32>
    %c0_3 = arith.constant 0 : index
    %c0_4 = arith.constant 0 : index
    %2 = vector.load %arg7[%c0_3, %c0_4] : memref<1x128xf32, #tpu.memory_space<vmem>>, vector<1x128xf32>
    %c0_5 = arith.constant 0 : index
    %c0_6 = arith.constant 0 : index
    %c0_7 = arith.constant 0 : index
    %c0_8 = arith.constant 0 : index
    %3 = vector.load %arg2[%c0_5, %c0_6, %c0_7, %c0_8] : memref<1x8x16x128xbf16, #tpu.memory_space<vmem>>, vector<1x8x16x128xbf16>
    %4 = vector.shape_cast %3 : vector<1x8x16x128xbf16> to vector<8x16x128xbf16>
    %5 = vector.shape_cast %4 : vector<8x16x128xbf16> to vector<128x128xbf16>
    %cst = arith.constant dense<0.000000e+00> : vector<128x128xf32>
    %6 = tpu.matmul %5, %0, %cst {dimension_numbers = #tpu.dot_dimension_numbers<[1], [0], [0], [1], [0, 0, 1, 1], [], []>} : vector<128x128xbf16>, vector<128x128xbf16>, vector<128x128xf32> -> vector<128x128xf32>
    %7 = vector.broadcast %1 : vector<1x128xf32> to vector<128x128xf32>
    %8 = arith.mulf %6, %7 : vector<128x128xf32>
    %9 = vector.broadcast %2 : vector<1x128xf32> to vector<128x128xf32>
    %10 = arith.addf %8, %9 : vector<128x128xf32>
    %11 = arith.negf %10 : vector<128x128xf32>
    %12 = math.exp %11 : vector<128x128xf32>
    %cst_9 = arith.constant 1.000000e+00 : f32
    %13 = vector.broadcast %cst_9 : f32 to vector<128x128xf32>
    %14 = arith.addf %13, %12 : vector<128x128xf32>
    %15 = arith.divf %13, %14 : vector<128x128xf32>
    %16 = arith.mulf %10, %15 : vector<128x128xf32>
    %c0_10 = arith.constant 0 : index
    %c7 = arith.constant 7 : index
    %c0_11 = arith.constant 0 : index
    %c0_12 = arith.constant 0 : index
    %17 = vector.load %arg3[%c0_10, %c7, %c0_11, %c0_12] : memref<1x8x16x128xbf16, #tpu.memory_space<vmem>>, vector<1x1x16x128xbf16>
    %18 = vector.shape_cast %17 : vector<1x1x16x128xbf16> to vector<16x128xbf16>
    %c0_13 = arith.constant 0 : index
    %c0_14 = arith.constant 0 : index
    %c0_15 = arith.constant 0 : index
    %c0_16 = arith.constant 0 : index
    %19 = vector.load %arg4[%c0_13, %c0_14, %c0_15, %c0_16] : memref<1x8x16x128xbf16, #tpu.memory_space<vmem>>, vector<1x1x16x128xbf16>
    %20 = vector.shape_cast %19 : vector<1x1x16x128xbf16> to vector<16x128xbf16>
    %cst_17 = arith.constant dense<0.000000e+00> : vector<16x128xf32>
    %21 = tpu.matmul %18, %0, %cst_17 {dimension_numbers = #tpu.dot_dimension_numbers<[1], [0], [0], [1], [0, 0, 1, 1], [], []>} : vector<16x128xbf16>, vector<128x128xbf16>, vector<16x128xf32> -> vector<16x128xf32>
    %22 = vector.broadcast %1 : vector<1x128xf32> to vector<16x128xf32>
    %23 = arith.mulf %21, %22 : vector<16x128xf32>
    %24 = vector.broadcast %2 : vector<1x128xf32> to vector<16x128xf32>
    %25 = arith.addf %23, %24 : vector<16x128xf32>
    %26 = arith.negf %25 : vector<16x128xf32>
    %27 = math.exp %26 : vector<16x128xf32>
    %cst_18 = arith.constant 1.000000e+00 : f32
    %28 = vector.broadcast %cst_18 : f32 to vector<16x128xf32>
    %29 = arith.addf %28, %27 : vector<16x128xf32>
    %30 = arith.divf %28, %29 : vector<16x128xf32>
    %31 = arith.mulf %25, %30 : vector<16x128xf32>
    %cst_19 = arith.constant dense<0.000000e+00> : vector<16x128xf32>
    %32 = tpu.matmul %20, %0, %cst_19 {dimension_numbers = #tpu.dot_dimension_numbers<[1], [0], [0], [1], [0, 0, 1, 1], [], []>} : vector<16x128xbf16>, vector<128x128xbf16>, vector<16x128xf32> -> vector<16x128xf32>
    %33 = vector.broadcast %1 : vector<1x128xf32> to vector<16x128xf32>
    %34 = arith.mulf %32, %33 : vector<16x128xf32>
    %35 = vector.broadcast %2 : vector<1x128xf32> to vector<16x128xf32>
    %36 = arith.addf %34, %35 : vector<16x128xf32>
    %37 = arith.negf %36 : vector<16x128xf32>
    %38 = math.exp %37 : vector<16x128xf32>
    %cst_20 = arith.constant 1.000000e+00 : f32
    %39 = vector.broadcast %cst_20 : f32 to vector<16x128xf32>
    %40 = arith.addf %39, %38 : vector<16x128xf32>
    %41 = arith.divf %39, %40 : vector<16x128xf32>
    %42 = arith.mulf %36, %41 : vector<16x128xf32>
    %c0_i32 = arith.constant 0 : i32
    %43 = arith.cmpi sgt, %arg1, %c0_i32 : i32
    %44 = arith.extui %43 : i1 to i32
    %45 = arith.sitofp %44 : i32 to f32
    %46 = vector.broadcast %45 : f32 to vector<16x128xf32>
    %47 = arith.mulf %31, %46 : vector<16x128xf32>
    %c1_i32 = arith.constant 1 : i32
    %48 = arith.cmpi slt, %arg1, %c1_i32 : i32
    %49 = arith.extui %48 : i1 to i32
    %50 = arith.sitofp %49 : i32 to f32
    %51 = vector.broadcast %50 : f32 to vector<16x128xf32>
    %52 = arith.mulf %42, %51 : vector<16x128xf32>
    %cst_21 = arith.constant 0.000000e+00 : bf16
    %53 = vector.broadcast %cst_21 : bf16 to vector<10x18x128xbf16>
    %c0_22 = arith.constant 0 : index
    %c0_23 = arith.constant 0 : index
    %c0_24 = arith.constant 0 : index
    %54 = vector.load %arg12[%c0_22, %c0_23, %c0_24] : memref<10x18x128xbf16, #tpu.memory_space<vmem>>, vector<10x18x128xbf16>
    tpu.vector_store %arg12[%c0_22, %c0_23, %c0_24], %53 {strides = array<i32>} : memref<10x18x128xbf16, #tpu.memory_space<vmem>>, vector<10x18x128xbf16>,
    %55 = arith.truncf %47 : vector<16x128xf32> to vector<16x128xbf16>
    %c0_25 = arith.constant 0 : index
    %c1 = arith.constant 1 : index
    %c0_26 = arith.constant 0 : index
    %56 = vector.load %arg12[%c0_25, %c1, %c0_26] : memref<10x18x128xbf16, #tpu.memory_space<vmem>>, vector<1x16x128xbf16>
    %57 = vector.shape_cast %56 : vector<1x16x128xbf16> to vector<16x128xbf16>
    %58 = vector.shape_cast %55 : vector<16x128xbf16> to vector<1x16x128xbf16>
    tpu.vector_store %arg12[%c0_25, %c1, %c0_26], %58 {strides = array<i32>} : memref<10x18x128xbf16, #tpu.memory_space<vmem>>, vector<1x16x128xbf16>,
    %59 = arith.truncf %52 : vector<16x128xf32> to vector<16x128xbf16>
    %c9 = arith.constant 9 : index
    %c1_27 = arith.constant 1 : index
    %c0_28 = arith.constant 0 : index
    %60 = vector.load %arg12[%c9, %c1_27, %c0_28] : memref<10x18x128xbf16, #tpu.memory_space<vmem>>, vector<1x16x128xbf16>
    %61 = vector.shape_cast %60 : vector<1x16x128xbf16> to vector<16x128xbf16>
    %62 = vector.shape_cast %59 : vector<16x128xbf16> to vector<1x16x128xbf16>
    tpu.vector_store %arg12[%c9, %c1_27, %c0_28], %62 {strides = array<i32>} : memref<10x18x128xbf16, #tpu.memory_space<vmem>>, vector<1x16x128xbf16>,
    %63 = vector.shape_cast %16 : vector<128x128xf32> to vector<8x16x128xf32>
    %64 = arith.truncf %63 : vector<8x16x128xf32> to vector<8x16x128xbf16>
    %c1_29 = arith.constant 1 : index
    %c1_30 = arith.constant 1 : index
    %c0_31 = arith.constant 0 : index
    %65 = vector.load %arg12[%c1_29, %c1_30, %c0_31] : memref<10x18x128xbf16, #tpu.memory_space<vmem>>, vector<8x16x128xbf16>
    tpu.vector_store %arg12[%c1_29, %c1_30, %c0_31], %64 {strides = array<i32>} : memref<10x18x128xbf16, #tpu.memory_space<vmem>>, vector<8x16x128xbf16>,
    %cst_32 = arith.constant 0.000000e+00 : f32
    %66 = vector.broadcast %cst_32 : f32 to vector<128x128xf32>
    %c0_33 = arith.constant 0 : index
    %c0_34 = arith.constant 0 : index
    %c0_35 = arith.constant 0 : index
    %67 = vector.load %arg12[%c0_33, %c0_34, %c0_35] : memref<10x18x128xbf16, #tpu.memory_space<vmem>>, vector<8x16x128xbf16>
    %68 = vector.shape_cast %67 : vector<8x16x128xbf16> to vector<128x128xbf16>
    %c0_36 = arith.constant 0 : index
    %c0_37 = arith.constant 0 : index
    %c0_38 = arith.constant 0 : index
    %c0_39 = arith.constant 0 : index
    %69 = vector.load %arg8[%c0_36, %c0_37, %c0_38, %c0_39] : memref<3x3x128x128xbf16, #tpu.memory_space<vmem>>, vector<1x1x128x128xbf16>
    %70 = vector.shape_cast %69 : vector<1x1x128x128xbf16> to vector<128x128xbf16>
    %cst_40 = arith.constant dense<0.000000e+00> : vector<128x128xf32>
    %71 = tpu.matmul %68, %70, %cst_40 {dimension_numbers = #tpu.dot_dimension_numbers<[1], [0], [0], [1], [0, 0, 1, 1], [], []>} : vector<128x128xbf16>, vector<128x128xbf16>, vector<128x128xf32> -> vector<128x128xf32>
    %72 = arith.addf %66, %71 : vector<128x128xf32>
    %c0_41 = arith.constant 0 : index
    %c1_42 = arith.constant 1 : index
    %c0_43 = arith.constant 0 : index
    %73 = vector.load %arg12[%c0_41, %c1_42, %c0_43] : memref<10x18x128xbf16, #tpu.memory_space<vmem>>, vector<8x16x128xbf16>
    %74 = vector.shape_cast %73 : vector<8x16x128xbf16> to vector<128x128xbf16>
    %c0_44 = arith.constant 0 : index
    %c1_45 = arith.constant 1 : index
    %c0_46 = arith.constant 0 : index
    %c0_47 = arith.constant 0 : index
    %75 = vector.load %arg8[%c0_44, %c1_45, %c0_46, %c0_47] : memref<3x3x128x128xbf16, #tpu.memory_space<vmem>>, vector<1x1x128x128xbf16>
    %76 = vector.shape_cast %75 : vector<1x1x128x128xbf16> to vector<128x128xbf16>
    %cst_48 = arith.constant dense<0.000000e+00> : vector<128x128xf32>
    %77 = tpu.matmul %74, %76, %cst_48 {dimension_numbers = #tpu.dot_dimension_numbers<[1], [0], [0], [1], [0, 0, 1, 1], [], []>} : vector<128x128xbf16>, vector<128x128xbf16>, vector<128x128xf32> -> vector<128x128xf32>
    %78 = arith.addf %72, %77 : vector<128x128xf32>
    %c0_49 = arith.constant 0 : index
    %c2 = arith.constant 2 : index
    %c0_50 = arith.constant 0 : index
    %79 = vector.load %arg12[%c0_49, %c2, %c0_50] : memref<10x18x128xbf16, #tpu.memory_space<vmem>>, vector<8x16x128xbf16>
    %80 = vector.shape_cast %79 : vector<8x16x128xbf16> to vector<128x128xbf16>
    %c0_51 = arith.constant 0 : index
    %c2_52 = arith.constant 2 : index
    %c0_53 = arith.constant 0 : index
    %c0_54 = arith.constant 0 : index
    %81 = vector.load %arg8[%c0_51, %c2_52, %c0_53, %c0_54] : memref<3x3x128x128xbf16, #tpu.memory_space<vmem>>, vector<1x1x128x128xbf16>
    %82 = vector.shape_cast %81 : vector<1x1x128x128xbf16> to vector<128x128xbf16>
    %cst_55 = arith.constant dense<0.000000e+00> : vector<128x128xf32>
    %83 = tpu.matmul %80, %82, %cst_55 {dimension_numbers = #tpu.dot_dimension_numbers<[1], [0], [0], [1], [0, 0, 1, 1], [], []>} : vector<128x128xbf16>, vector<128x128xbf16>, vector<128x128xf32> -> vector<128x128xf32>
    %84 = arith.addf %78, %83 : vector<128x128xf32>
    %c1_56 = arith.constant 1 : index
    %c0_57 = arith.constant 0 : index
    %c0_58 = arith.constant 0 : index
    %85 = vector.load %arg12[%c1_56, %c0_57, %c0_58] : memref<10x18x128xbf16, #tpu.memory_space<vmem>>, vector<8x16x128xbf16>
    %86 = vector.shape_cast %85 : vector<8x16x128xbf16> to vector<128x128xbf16>
    %c1_59 = arith.constant 1 : index
    %c0_60 = arith.constant 0 : index
    %c0_61 = arith.constant 0 : index
    %c0_62 = arith.constant 0 : index
    %87 = vector.load %arg8[%c1_59, %c0_60, %c0_61, %c0_62] : memref<3x3x128x128xbf16, #tpu.memory_space<vmem>>, vector<1x1x128x128xbf16>
    %88 = vector.shape_cast %87 : vector<1x1x128x128xbf16> to vector<128x128xbf16>
    %cst_63 = arith.constant dense<0.000000e+00> : vector<128x128xf32>
    %89 = tpu.matmul %86, %88, %cst_63 {dimension_numbers = #tpu.dot_dimension_numbers<[1], [0], [0], [1], [0, 0, 1, 1], [], []>} : vector<128x128xbf16>, vector<128x128xbf16>, vector<128x128xf32> -> vector<128x128xf32>
    %90 = arith.addf %84, %89 : vector<128x128xf32>
    %c1_64 = arith.constant 1 : index
    %c1_65 = arith.constant 1 : index
    %c0_66 = arith.constant 0 : index
    %91 = vector.load %arg12[%c1_64, %c1_65, %c0_66] : memref<10x18x128xbf16, #tpu.memory_space<vmem>>, vector<8x16x128xbf16>
    %92 = vector.shape_cast %91 : vector<8x16x128xbf16> to vector<128x128xbf16>
    %c1_67 = arith.constant 1 : index
    %c1_68 = arith.constant 1 : index
    %c0_69 = arith.constant 0 : index
    %c0_70 = arith.constant 0 : index
    %93 = vector.load %arg8[%c1_67, %c1_68, %c0_69, %c0_70] : memref<3x3x128x128xbf16, #tpu.memory_space<vmem>>, vector<1x1x128x128xbf16>
    %94 = vector.shape_cast %93 : vector<1x1x128x128xbf16> to vector<128x128xbf16>
    %cst_71 = arith.constant dense<0.000000e+00> : vector<128x128xf32>
    %95 = tpu.matmul %92, %94, %cst_71 {dimension_numbers = #tpu.dot_dimension_numbers<[1], [0], [0], [1], [0, 0, 1, 1], [], []>} : vector<128x128xbf16>, vector<128x128xbf16>, vector<128x128xf32> -> vector<128x128xf32>
    %96 = arith.addf %90, %95 : vector<128x128xf32>
    %c1_72 = arith.constant 1 : index
    %c2_73 = arith.constant 2 : index
    %c0_74 = arith.constant 0 : index
    %97 = vector.load %arg12[%c1_72, %c2_73, %c0_74] : memref<10x18x128xbf16, #tpu.memory_space<vmem>>, vector<8x16x128xbf16>
    %98 = vector.shape_cast %97 : vector<8x16x128xbf16> to vector<128x128xbf16>
    %c1_75 = arith.constant 1 : index
    %c2_76 = arith.constant 2 : index
    %c0_77 = arith.constant 0 : index
    %c0_78 = arith.constant 0 : index
    %99 = vector.load %arg8[%c1_75, %c2_76, %c0_77, %c0_78] : memref<3x3x128x128xbf16, #tpu.memory_space<vmem>>, vector<1x1x128x128xbf16>
    %100 = vector.shape_cast %99 : vector<1x1x128x128xbf16> to vector<128x128xbf16>
    %cst_79 = arith.constant dense<0.000000e+00> : vector<128x128xf32>
    %101 = tpu.matmul %98, %100, %cst_79 {dimension_numbers = #tpu.dot_dimension_numbers<[1], [0], [0], [1], [0, 0, 1, 1], [], []>} : vector<128x128xbf16>, vector<128x128xbf16>, vector<128x128xf32> -> vector<128x128xf32>
    %102 = arith.addf %96, %101 : vector<128x128xf32>
    %c2_80 = arith.constant 2 : index
    %c0_81 = arith.constant 0 : index
    %c0_82 = arith.constant 0 : index
    %103 = vector.load %arg12[%c2_80, %c0_81, %c0_82] : memref<10x18x128xbf16, #tpu.memory_space<vmem>>, vector<8x16x128xbf16>
    %104 = vector.shape_cast %103 : vector<8x16x128xbf16> to vector<128x128xbf16>
    %c2_83 = arith.constant 2 : index
    %c0_84 = arith.constant 0 : index
    %c0_85 = arith.constant 0 : index
    %c0_86 = arith.constant 0 : index
    %105 = vector.load %arg8[%c2_83, %c0_84, %c0_85, %c0_86] : memref<3x3x128x128xbf16, #tpu.memory_space<vmem>>, vector<1x1x128x128xbf16>
    %106 = vector.shape_cast %105 : vector<1x1x128x128xbf16> to vector<128x128xbf16>
    %cst_87 = arith.constant dense<0.000000e+00> : vector<128x128xf32>
    %107 = tpu.matmul %104, %106, %cst_87 {dimension_numbers = #tpu.dot_dimension_numbers<[1], [0], [0], [1], [0, 0, 1, 1], [], []>} : vector<128x128xbf16>, vector<128x128xbf16>, vector<128x128xf32> -> vector<128x128xf32>
    %108 = arith.addf %102, %107 : vector<128x128xf32>
    %c2_88 = arith.constant 2 : index
    %c1_89 = arith.constant 1 : index
    %c0_90 = arith.constant 0 : index
    %109 = vector.load %arg12[%c2_88, %c1_89, %c0_90] : memref<10x18x128xbf16, #tpu.memory_space<vmem>>, vector<8x16x128xbf16>
    %110 = vector.shape_cast %109 : vector<8x16x128xbf16> to vector<128x128xbf16>
    %c2_91 = arith.constant 2 : index
    %c1_92 = arith.constant 1 : index
    %c0_93 = arith.constant 0 : index
    %c0_94 = arith.constant 0 : index
    %111 = vector.load %arg8[%c2_91, %c1_92, %c0_93, %c0_94] : memref<3x3x128x128xbf16, #tpu.memory_space<vmem>>, vector<1x1x128x128xbf16>
    %112 = vector.shape_cast %111 : vector<1x1x128x128xbf16> to vector<128x128xbf16>
    %cst_95 = arith.constant dense<0.000000e+00> : vector<128x128xf32>
    %113 = tpu.matmul %110, %112, %cst_95 {dimension_numbers = #tpu.dot_dimension_numbers<[1], [0], [0], [1], [0, 0, 1, 1], [], []>} : vector<128x128xbf16>, vector<128x128xbf16>, vector<128x128xf32> -> vector<128x128xf32>
    %114 = arith.addf %108, %113 : vector<128x128xf32>
    %c2_96 = arith.constant 2 : index
    %c2_97 = arith.constant 2 : index
    %c0_98 = arith.constant 0 : index
    %115 = vector.load %arg12[%c2_96, %c2_97, %c0_98] : memref<10x18x128xbf16, #tpu.memory_space<vmem>>, vector<8x16x128xbf16>
    %116 = vector.shape_cast %115 : vector<8x16x128xbf16> to vector<128x128xbf16>
    %c2_99 = arith.constant 2 : index
    %c2_100 = arith.constant 2 : index
    %c0_101 = arith.constant 0 : index
    %c0_102 = arith.constant 0 : index
    %117 = vector.load %arg8[%c2_99, %c2_100, %c0_101, %c0_102] : memref<3x3x128x128xbf16, #tpu.memory_space<vmem>>, vector<1x1x128x128xbf16>
    %118 = vector.shape_cast %117 : vector<1x1x128x128xbf16> to vector<128x128xbf16>
    %cst_103 = arith.constant dense<0.000000e+00> : vector<128x128xf32>
    %119 = tpu.matmul %116, %118, %cst_103 {dimension_numbers = #tpu.dot_dimension_numbers<[1], [0], [0], [1], [0, 0, 1, 1], [], []>} : vector<128x128xbf16>, vector<128x128xbf16>, vector<128x128xf32> -> vector<128x128xf32>
    %120 = arith.addf %114, %119 : vector<128x128xf32>
    %c0_104 = arith.constant 0 : index
    %c0_105 = arith.constant 0 : index
    %121 = vector.load %arg9[%c0_104, %c0_105] : memref<1x128xf32, #tpu.memory_space<vmem>>, vector<1x128xf32>
    %122 = vector.broadcast %121 : vector<1x128xf32> to vector<128x128xf32>
    %123 = arith.mulf %120, %122 : vector<128x128xf32>
    %c0_106 = arith.constant 0 : index
    %c0_107 = arith.constant 0 : index
    %124 = vector.load %arg10[%c0_106, %c0_107] : memref<1x128xf32, #tpu.memory_space<vmem>>, vector<1x128xf32>
    %125 = vector.broadcast %124 : vector<1x128xf32> to vector<128x128xf32>
    %126 = arith.addf %123, %125 : vector<128x128xf32>
    %127 = arith.negf %126 : vector<128x128xf32>
    %128 = math.exp %127 : vector<128x128xf32>
    %cst_108 = arith.constant 1.000000e+00 : f32
    %129 = vector.broadcast %cst_108 : f32 to vector<128x128xf32>
    %130 = arith.addf %129, %128 : vector<128x128xf32>
    %131 = arith.divf %129, %130 : vector<128x128xf32>
    %132 = arith.mulf %126, %131 : vector<128x128xf32>
    %133 = arith.extf %5 : vector<128x128xbf16> to vector<128x128xf32>
    %134 = arith.addf %132, %133 : vector<128x128xf32>
    %135 = vector.shape_cast %134 : vector<128x128xf32> to vector<8x16x128xf32>
    %136 = arith.truncf %135 : vector<8x16x128xf32> to vector<8x16x128xbf16>
    %c0_109 = arith.constant 0 : index
    %c0_110 = arith.constant 0 : index
    %c0_111 = arith.constant 0 : index
    %c0_112 = arith.constant 0 : index
    %137 = vector.load %arg11[%c0_109, %c0_110, %c0_111, %c0_112] : memref<1x8x16x128xbf16, #tpu.memory_space<vmem>>, vector<1x8x16x128xbf16>
    %138 = vector.shape_cast %137 : vector<1x8x16x128xbf16> to vector<8x16x128xbf16>
    %139 = vector.shape_cast %136 : vector<8x16x128xbf16> to vector<1x8x16x128xbf16>
    tpu.vector_store %arg11[%c0_109, %c0_110, %c0_111, %c0_112], %139 {strides = array<i32>} : memref<1x8x16x128xbf16, #tpu.memory_space<vmem>>, vector<1x8x16x128xbf16>,
    return
  }
  func.func @transform_0(%arg0: i32, %arg1: i32) -> (i32, i32, i32, i32) {
    %c0_i32 = arith.constant 0 : i32
    %c0_i32_0 = arith.constant 0 : i32
    %c0_i32_1 = arith.constant 0 : i32
    return %arg0, %arg1, %c0_i32, %c0_i32_0 : i32, i32, i32, i32
  }
  func.func @transform_1(%arg0: i32, %arg1: i32) -> (i32, i32, i32, i32) {
    %c1_i32 = arith.constant 1 : i32
    %0 = arith.muli %arg1, %c1_i32 : i32
    %c1_i32_0 = arith.constant 1 : i32
    %1 = arith.subi %0, %c1_i32_0 : i32
    %c0_i32 = arith.constant 0 : i32
    %2 = arith.maxsi %1, %c0_i32 : i32
    %c0_i32_1 = arith.constant 0 : i32
    %c0_i32_2 = arith.constant 0 : i32
    %c0_i32_3 = arith.constant 0 : i32
    return %arg0, %2, %c0_i32_1, %c0_i32_2 : i32, i32, i32, i32
  }
  func.func @transform_2(%arg0: i32, %arg1: i32) -> (i32, i32, i32, i32) {
    %c1_i32 = arith.constant 1 : i32
    %0 = arith.addi %arg1, %c1_i32 : i32
    %c1_i32_0 = arith.constant 1 : i32
    %1 = arith.muli %0, %c1_i32_0 : i32
    %c1_i32_1 = arith.constant 1 : i32
    %2 = arith.minsi %1, %c1_i32_1 : i32
    %c0_i32 = arith.constant 0 : i32
    %c0_i32_2 = arith.constant 0 : i32
    %c0_i32_3 = arith.constant 0 : i32
    return %arg0, %2, %c0_i32, %c0_i32_2 : i32, i32, i32, i32
  }
  func.func @transform_3(%arg0: i32, %arg1: i32) -> (i32, i32) {
    %c0_i32 = arith.constant 0 : i32
    %c0_i32_0 = arith.constant 0 : i32
    %c0_i32_1 = arith.constant 0 : i32
    return %c0_i32, %c0_i32_0 : i32, i32
  }
  func.func @transform_4(%arg0: i32, %arg1: i32) -> (i32, i32) {
    %c0_i32 = arith.constant 0 : i32
    %c0_i32_0 = arith.constant 0 : i32
    %c0_i32_1 = arith.constant 0 : i32
    return %c0_i32, %c0_i32_0 : i32, i32
  }
  func.func @transform_5(%arg0: i32, %arg1: i32) -> (i32, i32) {
    %c0_i32 = arith.constant 0 : i32
    %c0_i32_0 = arith.constant 0 : i32
    %c0_i32_1 = arith.constant 0 : i32
    return %c0_i32, %c0_i32_0 : i32, i32
  }
  func.func @transform_6(%arg0: i32, %arg1: i32) -> (i32, i32, i32, i32) {
    %c0_i32 = arith.constant 0 : i32
    %c0_i32_0 = arith.constant 0 : i32
    %c0_i32_1 = arith.constant 0 : i32
    %c0_i32_2 = arith.constant 0 : i32
    %c0_i32_3 = arith.constant 0 : i32
    return %c0_i32, %c0_i32_0, %c0_i32_1, %c0_i32_2 : i32, i32, i32, i32
  }
  func.func @transform_7(%arg0: i32, %arg1: i32) -> (i32, i32) {
    %c0_i32 = arith.constant 0 : i32
    %c0_i32_0 = arith.constant 0 : i32
    %c0_i32_1 = arith.constant 0 : i32
    return %c0_i32, %c0_i32_0 : i32, i32
  }
  func.func @transform_8(%arg0: i32, %arg1: i32) -> (i32, i32) {
    %c0_i32 = arith.constant 0 : i32
    %c0_i32_0 = arith.constant 0 : i32
    %c0_i32_1 = arith.constant 0 : i32
    return %c0_i32, %c0_i32_0 : i32, i32
  }
  func.func @transform_9(%arg0: i32, %arg1: i32) -> (i32, i32, i32, i32) {
    %c0_i32 = arith.constant 0 : i32
    %c0_i32_0 = arith.constant 0 : i32
    %c0_i32_1 = arith.constant 0 : i32
    return %arg0, %arg1, %c0_i32, %c0_i32_0 : i32, i32, i32, i32
  }
}

module attributes {stable_mosaic.version = 11 : i64} {
  func.func @tail_kernel(%arg0: i32, %arg1: memref<256x128xbf16, #tpu.memory_space<vmem>>, %arg2: memref<256x128xbf16, #tpu.memory_space<vmem>>, %arg3: memref<128x128xbf16, #tpu.memory_space<vmem>>, %arg4: memref<1x128xf32, #tpu.memory_space<vmem>>, %arg5: memref<1x128xf32, #tpu.memory_space<vmem>>, %arg6: memref<1x128xf32, #tpu.memory_space<vmem>>, %arg7: memref<1x128xf32, #tpu.memory_space<vmem>>, %arg8: memref<128x128xbf16, #tpu.memory_space<vmem>>, %arg9: memref<128x128xbf16, #tpu.memory_space<vmem>>, %arg10: memref<1x128xf32, #tpu.memory_space<vmem>>, %arg11: memref<1x128xf32, #tpu.memory_space<vmem>>, %arg12: memref<256x128xf32, #tpu.memory_space<vmem>>) attributes {dimension_semantics = [#tpu.dimension_semantics<parallel>], iteration_bounds = array<i64: 2>, scalar_prefetch = 0 : i64, scratch_operands = 0 : i64, tpu.core_type = #tpu.core_type<tc>, window_params = [{transform_indices = @transform_0, window_bounds = array<i64: 256, 128>}, {transform_indices = @transform_1, window_bounds = array<i64: 256, 128>}, {pipeline_mode = #tpu.pipeline_mode<synchronous>, transform_indices = @transform_2, window_bounds = array<i64: 128, 128>}, {pipeline_mode = #tpu.pipeline_mode<synchronous>, transform_indices = @transform_3, window_bounds = array<i64: 1, 128>}, {pipeline_mode = #tpu.pipeline_mode<synchronous>, transform_indices = @transform_4, window_bounds = array<i64: 1, 128>}, {pipeline_mode = #tpu.pipeline_mode<synchronous>, transform_indices = @transform_5, window_bounds = array<i64: 1, 128>}, {pipeline_mode = #tpu.pipeline_mode<synchronous>, transform_indices = @transform_6, window_bounds = array<i64: 1, 128>}, {pipeline_mode = #tpu.pipeline_mode<synchronous>, transform_indices = @transform_7, window_bounds = array<i64: 128, 128>}, {pipeline_mode = #tpu.pipeline_mode<synchronous>, transform_indices = @transform_8, window_bounds = array<i64: 128, 128>}, {pipeline_mode = #tpu.pipeline_mode<synchronous>, transform_indices = @transform_9, window_bounds = array<i64: 1, 128>}, {pipeline_mode = #tpu.pipeline_mode<synchronous>, transform_indices = @transform_10, window_bounds = array<i64: 1, 128>}, {transform_indices = @transform_11, window_bounds = array<i64: 256, 128>}]} {
    %c0 = arith.constant 0 : index
    %c0_0 = arith.constant 0 : index
    %0 = vector.load %arg1[%c0, %c0_0] : memref<256x128xbf16, #tpu.memory_space<vmem>>, vector<256x128xbf16>
    %c0_1 = arith.constant 0 : index
    %c0_2 = arith.constant 0 : index
    %1 = vector.load %arg3[%c0_1, %c0_2] : memref<128x128xbf16, #tpu.memory_space<vmem>>, vector<128x128xbf16>
    %cst = arith.constant dense<0.000000e+00> : vector<256x128xf32>
    %2 = tpu.matmul %0, %1, %cst {dimension_numbers = #tpu.dot_dimension_numbers<[1], [0], [0], [1], [0, 0, 1, 1], [], []>} : vector<256x128xbf16>, vector<128x128xbf16>, vector<256x128xf32> -> vector<256x128xf32>
    %c0_3 = arith.constant 0 : index
    %c0_4 = arith.constant 0 : index
    %3 = vector.load %arg4[%c0_3, %c0_4] : memref<1x128xf32, #tpu.memory_space<vmem>>, vector<1x128xf32>
    %4 = vector.broadcast %3 : vector<1x128xf32> to vector<256x128xf32>
    %5 = arith.mulf %2, %4 : vector<256x128xf32>
    %c0_5 = arith.constant 0 : index
    %c0_6 = arith.constant 0 : index
    %6 = vector.load %arg5[%c0_5, %c0_6] : memref<1x128xf32, #tpu.memory_space<vmem>>, vector<1x128xf32>
    %7 = vector.broadcast %6 : vector<1x128xf32> to vector<256x128xf32>
    %8 = arith.addf %5, %7 : vector<256x128xf32>
    %9 = arith.negf %8 : vector<256x128xf32>
    %10 = math.exp %9 : vector<256x128xf32>
    %cst_7 = arith.constant 1.000000e+00 : f32
    %11 = vector.broadcast %cst_7 : f32 to vector<256x128xf32>
    %12 = arith.addf %11, %10 : vector<256x128xf32>
    %13 = arith.divf %11, %12 : vector<256x128xf32>
    %14 = arith.mulf %8, %13 : vector<256x128xf32>
    %c0_8 = arith.constant 0 : index
    %c0_9 = arith.constant 0 : index
    %15 = vector.load %arg2[%c0_8, %c0_9] : memref<256x128xbf16, #tpu.memory_space<vmem>>, vector<256x128xbf16>
    %16 = arith.extf %15 : vector<256x128xbf16> to vector<256x128xf32>
    %c0_10 = arith.constant 0 : index
    %c0_11 = arith.constant 0 : index
    %17 = vector.load %arg6[%c0_10, %c0_11] : memref<1x128xf32, #tpu.memory_space<vmem>>, vector<1x128xf32>
    %18 = vector.broadcast %17 : vector<1x128xf32> to vector<256x128xf32>
    %19 = arith.mulf %16, %18 : vector<256x128xf32>
    %c0_12 = arith.constant 0 : index
    %c0_13 = arith.constant 0 : index
    %20 = vector.load %arg7[%c0_12, %c0_13] : memref<1x128xf32, #tpu.memory_space<vmem>>, vector<1x128xf32>
    %21 = vector.broadcast %20 : vector<1x128xf32> to vector<256x128xf32>
    %22 = arith.addf %19, %21 : vector<256x128xf32>
    %23 = arith.negf %22 : vector<256x128xf32>
    %24 = math.exp %23 : vector<256x128xf32>
    %cst_14 = arith.constant 1.000000e+00 : f32
    %25 = vector.broadcast %cst_14 : f32 to vector<256x128xf32>
    %26 = arith.addf %25, %24 : vector<256x128xf32>
    %27 = arith.divf %25, %26 : vector<256x128xf32>
    %28 = arith.mulf %22, %27 : vector<256x128xf32>
    %29 = arith.truncf %14 : vector<256x128xf32> to vector<256x128xbf16>
    %c0_15 = arith.constant 0 : index
    %c0_16 = arith.constant 0 : index
    %30 = vector.load %arg8[%c0_15, %c0_16] : memref<128x128xbf16, #tpu.memory_space<vmem>>, vector<128x128xbf16>
    %cst_17 = arith.constant dense<0.000000e+00> : vector<256x128xf32>
    %31 = tpu.matmul %29, %30, %cst_17 {dimension_numbers = #tpu.dot_dimension_numbers<[1], [0], [0], [1], [0, 0, 1, 1], [], []>} : vector<256x128xbf16>, vector<128x128xbf16>, vector<256x128xf32> -> vector<256x128xf32>
    %32 = arith.truncf %28 : vector<256x128xf32> to vector<256x128xbf16>
    %c0_18 = arith.constant 0 : index
    %c0_19 = arith.constant 0 : index
    %33 = vector.load %arg9[%c0_18, %c0_19] : memref<128x128xbf16, #tpu.memory_space<vmem>>, vector<128x128xbf16>
    %cst_20 = arith.constant dense<0.000000e+00> : vector<256x128xf32>
    %34 = tpu.matmul %32, %33, %cst_20 {dimension_numbers = #tpu.dot_dimension_numbers<[1], [0], [0], [1], [0, 0, 1, 1], [], []>} : vector<256x128xbf16>, vector<128x128xbf16>, vector<256x128xf32> -> vector<256x128xf32>
    %35 = arith.addf %31, %34 : vector<256x128xf32>
    %c0_21 = arith.constant 0 : index
    %c0_22 = arith.constant 0 : index
    %36 = vector.load %arg10[%c0_21, %c0_22] : memref<1x128xf32, #tpu.memory_space<vmem>>, vector<1x128xf32>
    %37 = vector.broadcast %36 : vector<1x128xf32> to vector<256x128xf32>
    %38 = arith.mulf %35, %37 : vector<256x128xf32>
    %c0_23 = arith.constant 0 : index
    %c0_24 = arith.constant 0 : index
    %39 = vector.load %arg11[%c0_23, %c0_24] : memref<1x128xf32, #tpu.memory_space<vmem>>, vector<1x128xf32>
    %40 = vector.broadcast %39 : vector<1x128xf32> to vector<256x128xf32>
    %41 = arith.addf %38, %40 : vector<256x128xf32>
    %42 = arith.negf %41 : vector<256x128xf32>
    %43 = math.exp %42 : vector<256x128xf32>
    %cst_25 = arith.constant 1.000000e+00 : f32
    %44 = vector.broadcast %cst_25 : f32 to vector<256x128xf32>
    %45 = arith.addf %44, %43 : vector<256x128xf32>
    %46 = arith.divf %44, %45 : vector<256x128xf32>
    %47 = arith.mulf %41, %46 : vector<256x128xf32>
    %c0_26 = arith.constant 0 : index
    %c0_27 = arith.constant 0 : index
    %48 = vector.load %arg12[%c0_26, %c0_27] : memref<256x128xf32, #tpu.memory_space<vmem>>, vector<256x128xf32>
    tpu.vector_store %arg12[%c0_26, %c0_27], %47 {strides = array<i32>} : memref<256x128xf32, #tpu.memory_space<vmem>>, vector<256x128xf32>,
    return
  }
  func.func @transform_0(%arg0: i32) -> (i32, i32) {
    %c0_i32 = arith.constant 0 : i32
    %c0_i32_0 = arith.constant 0 : i32
    return %arg0, %c0_i32 : i32, i32
  }
  func.func @transform_1(%arg0: i32) -> (i32, i32) {
    %c0_i32 = arith.constant 0 : i32
    %c0_i32_0 = arith.constant 0 : i32
    return %arg0, %c0_i32 : i32, i32
  }
  func.func @transform_2(%arg0: i32) -> (i32, i32) {
    %c0_i32 = arith.constant 0 : i32
    %c0_i32_0 = arith.constant 0 : i32
    %c0_i32_1 = arith.constant 0 : i32
    return %c0_i32, %c0_i32_0 : i32, i32
  }
  func.func @transform_3(%arg0: i32) -> (i32, i32) {
    %c0_i32 = arith.constant 0 : i32
    %c0_i32_0 = arith.constant 0 : i32
    %c0_i32_1 = arith.constant 0 : i32
    return %c0_i32, %c0_i32_0 : i32, i32
  }
  func.func @transform_4(%arg0: i32) -> (i32, i32) {
    %c0_i32 = arith.constant 0 : i32
    %c0_i32_0 = arith.constant 0 : i32
    %c0_i32_1 = arith.constant 0 : i32
    return %c0_i32, %c0_i32_0 : i32, i32
  }
  func.func @transform_5(%arg0: i32) -> (i32, i32) {
    %c0_i32 = arith.constant 0 : i32
    %c0_i32_0 = arith.constant 0 : i32
    %c0_i32_1 = arith.constant 0 : i32
    return %c0_i32, %c0_i32_0 : i32, i32
  }
  func.func @transform_6(%arg0: i32) -> (i32, i32) {
    %c0_i32 = arith.constant 0 : i32
    %c0_i32_0 = arith.constant 0 : i32
    %c0_i32_1 = arith.constant 0 : i32
    return %c0_i32, %c0_i32_0 : i32, i32
  }
  func.func @transform_7(%arg0: i32) -> (i32, i32) {
    %c0_i32 = arith.constant 0 : i32
    %c0_i32_0 = arith.constant 0 : i32
    %c0_i32_1 = arith.constant 0 : i32
    return %c0_i32, %c0_i32_0 : i32, i32
  }
  func.func @transform_8(%arg0: i32) -> (i32, i32) {
    %c0_i32 = arith.constant 0 : i32
    %c0_i32_0 = arith.constant 0 : i32
    %c0_i32_1 = arith.constant 0 : i32
    return %c0_i32, %c0_i32_0 : i32, i32
  }
  func.func @transform_9(%arg0: i32) -> (i32, i32) {
    %c0_i32 = arith.constant 0 : i32
    %c0_i32_0 = arith.constant 0 : i32
    %c0_i32_1 = arith.constant 0 : i32
    return %c0_i32, %c0_i32_0 : i32, i32
  }
  func.func @transform_10(%arg0: i32) -> (i32, i32) {
    %c0_i32 = arith.constant 0 : i32
    %c0_i32_0 = arith.constant 0 : i32
    %c0_i32_1 = arith.constant 0 : i32
    return %c0_i32, %c0_i32_0 : i32, i32
  }
  func.func @transform_11(%arg0: i32) -> (i32, i32) {
    %c0_i32 = arith.constant 0 : i32
    %c0_i32_0 = arith.constant 0 : i32
    return %arg0, %c0_i32 : i32, i32
  }
}

</mosaic_0001>

<llo_original>
// kernel: bottleneck_csp_forward.3
$region0: #{bottleneck_csp_forward.3}
  #allocation0 [shape = 'u32[]', space=smem, size = 0x4, offset = 0x4, fixed_abs, tag = 'smem constant byte address 0x4 - core index']
  #allocation1 [shape = 'u32[144,128]{1,0:T(1,128)}', space=vmem, size = 0x12000, scoped, tag = 'internal scratch']
  %s0 = inlined_call_operand.vmem [shape: f32[512,128], index: 0, kind: input, shape index: {}]
  %s1 = inlined_call_operand.vmem [shape: bf16[128,128], index: 1, kind: input, shape index: {}]
  %s2 = inlined_call_operand.vmem [shape: f32[1,128], index: 2, kind: input, shape index: {}]
  %s3 = inlined_call_operand.vmem [shape: f32[1,128], index: 3, kind: input, shape index: {}]
  %s4 = inlined_call_operand.vmem [shape: bf16[128,128], index: 4, kind: input, shape index: {}]
  %s5 = inlined_call_operand.vmem [shape: bf16[512,128], index: 5, kind: output, shape index: {0}]
  %s6 = inlined_call_operand.vmem [shape: bf16[512,128], index: 6, kind: output, shape index: {1}]
  %7 = xla_tuple %s5, %s6
  %s8 = sld [smem:[#allocation0]]
  $region61: #{bottleneck_csp_forward.3} parent=0
    _
  %s10 = ssub.s32 1, %s8
  %s11 = scalar_select 0, %s10, %s8
  loop: start=0, step=1, limit=4
  $region2: #{bottleneck_csp_forward.3} parent=0 // loop_pre_header
    _
  $region3: #{bottleneck_csp_forward.3} parent=0 // loop_header
    %s13 = sphi 0, %s17
    %p14 = scmp.ge.s32.totalorder %s13, 4
    %s23 = sphi 0, %s25
    %s26 = sphi 0, %s23
    %s27 = sphi 0, %s26
    %s43 = sphi 0, %s27
    %s47 = sphi 0, %s47
    %s49 = sphi 0, %s47
    %s50 = sphi 0, %s49
    %s64 = sphi 0, %s50
    %s68 = sphi 0, %s68
    %s70 = sphi 0, %s68
    %s71 = sphi 0, %s70
    %s85 = sphi 0, %s71
    %s89 = sphi 0, %s89
    %s91 = sphi 0, %s89
    %s92 = sphi 0, %s91
    %s106 = sphi 0, %s92
    %s110 = sphi 0, %s110
    %s112 = sphi 0, %s110
    %s113 = sphi 0, %s112
    %s127 = sphi 0, %s113
    %s133 = sphi 0, %s135
    %s136 = sphi 0, %s133
    %s137 = sphi 0, %s136
    %s153 = sphi 0, %s137
    %s159 = sphi 0, %s161
    %s162 = sphi 0, %s159
    %s163 = sphi 0, %s162
    %s179 = sphi 0, %s163
  $region4: #{bottleneck_csp_forward.3} parent=0 // loop_header_branch
    %16 = sbr.rel (%p14) target = $region8
  $region5: #{bottleneck_csp_forward.3} parent=0 // loop_body
    %s18 = ssub.s32 %s13, 1
    %s19 = ssub.s32 %s13, 2
    %s20 = sadd.s32 %s13, 1
    %s21 = ssub.s32 %s13, %s20
    %p22 = scmp.eq.s32.totalorder %s21, 0
    %s24 = sadd.s32 %s23, 1
    %s25 = scalar_select %p22, %s23, %s24
    %p28 = pneg %p22
    %p29 = scmp.eq.s32.totalorder %s13, 1
    %p30 = por %p28, %p29
    %p31 = scmp.ne.s32.totalorder %s23, %s26
    %p32 = scmp.eq.s32.totalorder %s13, 0
    %p33 = por %p31, %p32
    %p34 = scmp.ne.s32.totalorder %s23, %s26
    %p35 = scmp.eq.s32.totalorder %s18, 1
    %p36 = por %p34, %p35
    %p37 = scmp.ne.s32.totalorder %s26, %s27
    %p38 = scmp.eq.s32.totalorder %s18, 0
    %p39 = por %p37, %p38
    %p40 = scmp.ne.s32.totalorder %s26, %s27
    %p41 = scmp.eq.s32.totalorder %s19, 1
    %p42 = por %p40, %p41
    %p44 = scmp.ne.s32.totalorder %s27, %s43
    %p45 = scmp.eq.s32.totalorder %s19, 0
    %p46 = por %p44, %p45
    %s48 = sadd.s32 %s47, 1
    %p51 = scmp.eq.s32.totalorder %s13, 1
    %p52 = scmp.ne.s32.totalorder %s47, %s49
    %p53 = scmp.eq.s32.totalorder %s13, 0
    %p54 = por %p52, %p53
    %p55 = scmp.ne.s32.totalorder %s47, %s49
    %p56 = scmp.eq.s32.totalorder %s18, 1
    %p57 = por %p55, %p56
    %p58 = scmp.ne.s32.totalorder %s49, %s50
    %p59 = scmp.eq.s32.totalorder %s18, 0
    %p60 = por %p58, %p59
    %p61 = scmp.ne.s32.totalorder %s49, %s50
    %p62 = scmp.eq.s32.totalorder %s19, 1
    %p63 = por %p61, %p62
    %p65 = scmp.ne.s32.totalorder %s50, %s64
    %p66 = scmp.eq.s32.totalorder %s19, 0
    %p67 = por %p65, %p66
    %s69 = sadd.s32 %s68, 1
    %p72 = scmp.eq.s32.totalorder %s13, 1
    %p73 = scmp.ne.s32.totalorder %s68, %s70
    %p74 = scmp.eq.s32.totalorder %s13, 0
    %p75 = por %p73, %p74
    %p76 = scmp.ne.s32.totalorder %s68, %s70
    %p77 = scmp.eq.s32.totalorder %s18, 1
    %p78 = por %p76, %p77
    %p79 = scmp.ne.s32.totalorder %s70, %s71
    %p80 = scmp.eq.s32.totalorder %s18, 0
    %p81 = por %p79, %p80
    %p82 = scmp.ne.s32.totalorder %s70, %s71
    %p83 = scmp.eq.s32.totalorder %s19, 1
    %p84 = por %p82, %p83
    %p86 = scmp.ne.s32.totalorder %s71, %s85
    %p87 = scmp.eq.s32.totalorder %s19, 0
    %p88 = por %p86, %p87
    %s90 = sadd.s32 %s89, 1
    %p93 = scmp.eq.s32.totalorder %s13, 1
    %p94 = scmp.ne.s32.totalorder %s89, %s91
    %p95 = scmp.eq.s32.totalorder %s13, 0
    %p96 = por %p94, %p95
    %p97 = scmp.ne.s32.totalorder %s89, %s91
    %p98 = scmp.eq.s32.totalorder %s18, 1
    %p99 = por %p97, %p98
    %p100 = scmp.ne.s32.totalorder %s91, %s92
    %p101 = scmp.eq.s32.totalorder %s18, 0
    %p102 = por %p100, %p101
    %p103 = scmp.ne.s32.totalorder %s91, %s92
    %p104 = scmp.eq.s32.totalorder %s19, 1
    %p105 = por %p103, %p104
    %p107 = scmp.ne.s32.totalorder %s92, %s106
    %p108 = scmp.eq.s32.totalorder %s19, 0
    %p109 = por %p107, %p108
    %s111 = sadd.s32 %s110, 1
    %p114 = scmp.eq.s32.totalorder %s13, 1
    %p115 = scmp.ne.s32.totalorder %s110, %s112
    %p116 = scmp.eq.s32.totalorder %s13, 0
    %p117 = por %p115, %p116
    %p118 = scmp.ne.s32.totalorder %s110, %s112
    %p119 = scmp.eq.s32.totalorder %s18, 1
    %p120 = por %p118, %p119
    %p121 = scmp.ne.s32.totalorder %s112, %s113
    %p122 = scmp.eq.s32.totalorder %s18, 0
    %p123 = por %p121, %p122
    %p124 = scmp.ne.s32.totalorder %s112, %s113
    %p125 = scmp.eq.s32.totalorder %s19, 1
    %p126 = por %p124, %p125
    %p128 = scmp.ne.s32.totalorder %s113, %s127
    %p129 = scmp.eq.s32.totalorder %s19, 0
    %p130 = por %p128, %p129
    %s131 = ssub.s32 %s13, %s20
    %p132 = scmp.eq.s32.totalorder %s131, 0
    %s134 = sadd.s32 %s133, 1
    %s135 = scalar_select %p132, %s133, %s134
    %p138 = pneg %p132
    %p139 = scmp.eq.s32.totalorder %s13, 1
    %p140 = por %p138, %p139
    %p141 = scmp.ne.s32.totalorder %s133, %s136
    %p142 = scmp.eq.s32.totalorder %s13, 0
    %p143 = por %p141, %p142
    %p144 = scmp.ne.s32.totalorder %s133, %s136
    %p145 = scmp.eq.s32.totalorder %s18, 1
    %p146 = por %p144, %p145
    %p147 = scmp.ne.s32.totalorder %s136, %s137
    %p148 = scmp.eq.s32.totalorder %s18, 0
    %p149 = por %p147, %p148
    %p150 = scmp.ne.s32.totalorder %s136, %s137
    %p151 = scmp.eq.s32.totalorder %s19, 1
    %p152 = por %p150, %p151
    %p154 = scmp.ne.s32.totalorder %s137, %s153
    %p155 = scmp.eq.s32.totalorder %s19, 0
    %p156 = por %p154, %p155
    %s157 = ssub.s32 %s13, %s20
    %p158 = scmp.eq.s32.totalorder %s157, 0
    %s160 = sadd.s32 %s159, 1
    %s161 = scalar_select %p158, %s159, %s160
    %p164 = pneg %p158
    %p165 = scmp.eq.s32.totalorder %s13, 1
    %p166 = por %p164, %p165
    %p167 = scmp.ne.s32.totalorder %s159, %s162
    %p168 = scmp.eq.s32.totalorder %s13, 0
    %p169 = por %p167, %p168
    %p170 = scmp.ne.s32.totalorder %s159, %s162
    %p171 = scmp.eq.s32.totalorder %s18, 1
    %p172 = por %p170, %p171
    %p173 = scmp.ne.s32.totalorder %s162, %s163
    %p174 = scmp.eq.s32.totalorder %s18, 0
    %p175 = por %p173, %p174
    %p176 = scmp.ne.s32.totalorder %s162, %s163
    %p177 = scmp.eq.s32.totalorder %s19, 1
    %p178 = por %p176, %p177
    %p180 = scmp.ne.s32.totalorder %s163, %s179
    %p181 = scmp.eq.s32.totalorder %s19, 0
    %p182 = por %p180, %p181
    %p183 = scmp.le.s32.totalorder 1, %s13
    %p184 = scmp.lt.s32.totalorder %s13, 3
    %p185 = pnand %p183, %p184
    %p186 = pneg %p185
    // Predicated region
    $region9: #{bottleneck_csp_forward.3} parent=5 // pred_check
      _
    $region10: #{bottleneck_csp_forward.3} parent=5 // pred_check_branch
      %188 = sbr.rel (%p185) target = $region12
    $region11: #{bottleneck_csp_forward.3} parent=5 // pred_region
      %s189 = ssub.s32 %s13, 1
      // Predicated region
      $region13: #{bottleneck_csp_forward.3} parent=11 // pred_check
        %p190 = pneg %p60
      $region14: #{bottleneck_csp_forward.3} parent=11 // pred_check_branch
        %192 = sbr.rel (%p190) target = $region16
      $region15: #{bottleneck_csp_forward.3} parent=11 // pred_region
        _
      $region16: #{bottleneck_csp_forward.3} parent=11 // pred_fallthru
        _
      // Predicated region
      $region17: #{bottleneck_csp_forward.3} parent=11 // pred_check
        %p193 = pneg %p81
      $region18: #{bottleneck_csp_forward.3} parent=11 // pred_check_branch
        %195 = sbr.rel (%p193) target = $region20
      $region19: #{bottleneck_csp_forward.3} parent=11 // pred_region
        _
      $region20: #{bottleneck_csp_forward.3} parent=11 // pred_fallthru
        _
      // Predicated region
      $region21: #{bottleneck_csp_forward.3} parent=11 // pred_check
        %p196 = pneg %p102
      $region22: #{bottleneck_csp_forward.3} parent=11 // pred_check_branch
        %198 = sbr.rel (%p196) target = $region24
      $region23: #{bottleneck_csp_forward.3} parent=11 // pred_region
        _
      $region24: #{bottleneck_csp_forward.3} parent=11 // pred_fallthru
        _
      // Predicated region
      $region25: #{bottleneck_csp_forward.3} parent=11 // pred_check
        %p199 = pneg %p123
      $region26: #{bottleneck_csp_forward.3} parent=11 // pred_check_branch
        %201 = sbr.rel (%p199) target = $region28
      $region27: #{bottleneck_csp_forward.3} parent=11 // pred_region
        _
      $region28: #{bottleneck_csp_forward.3} parent=11 // pred_fallthru
        _
    $region12: #{bottleneck_csp_forward.3} parent=5 // pred_fallthru
      _
    %p202 = scmp.lt.s32.totalorder %s13, 2
    // Predicated region
    $region29: #{bottleneck_csp_forward.3} parent=5 // pred_check
      %p203 = pneg %p202
    $region30: #{bottleneck_csp_forward.3} parent=5 // pred_check_branch
      %205 = sbr.rel (%p203) target = $region32
    $region31: #{bottleneck_csp_forward.3} parent=5 // pred_region
      // Predicated region
      $region33: #{bottleneck_csp_forward.3} parent=31 // pred_check
        %p206 = pneg %p33
      $region34: #{bottleneck_csp_forward.3} parent=31 // pred_check_branch
        %208 = sbr.rel (%p206) target = $region36
      $region35: #{bottleneck_csp_forward.3} parent=31 // pred_region
        %s209 = smul.u32 32, %s13
        %p210 = scmp.lt.s32.totalorder %s209, 63
        %s211 = scalar_select %p210, %s209, 63
        %s212 = smul.addr %s211, 8
        %s213 = scalar_lea.vmem %s0, %s212
        %s214 = smul.u32 32, %s13
      $region36: #{bottleneck_csp_forward.3} parent=31 // pred_fallthru
        _
    $region32: #{bottleneck_csp_forward.3} parent=5 // pred_fallthru
      _
    %p215 = scmp.le.s32.totalorder 1, %s13
    %p216 = scmp.lt.s32.totalorder %s13, 3
    %p217 = pnand %p215, %p216
    %p218 = pneg %p217
    // Predicated region
    $region37: #{bottleneck_csp_forward.3} parent=5 // pred_check
      _
    $region38: #{bottleneck_csp_forward.3} parent=5 // pred_check_branch
      %220 = sbr.rel (%p217) target = $region40
    $region39: #{bottleneck_csp_forward.3} parent=5 // pred_region
      %s221 = ssub.s32 %s13, 1
      %s222 = smul.u32 32, %s18
      %p223 = scmp.lt.s32.totalorder %s222, 63
      %s224 = scalar_select %p223, %s222, 63
      %s225 = smul.addr %s224, 8
      %s226 = scalar_lea.vmem %s0, %s225
      %p227 = pneg %p39
      %p228 = pneg %p36
      %p229 = pneg %p60
      %p230 = pneg %p57
      %p231 = pneg %p81
      %p232 = pneg %p78
      %p233 = pneg %p102
      %p234 = pneg %p99
      %p235 = pneg %p123
      %p236 = pneg %p120
      %p237 = pneg %p149
      %p238 = pneg %p146
      %s239 = smul.u32 32, %s18
      %p240 = scmp.lt.s32.totalorder %s239, 63
      %s241 = scalar_select %p240, %s239, 63
      %s242 = smul.addr %s241, 4
      %s243 = scalar_lea.vmem %s5, %s242
      %p244 = pneg %p175
      %p245 = pneg %p172
      %s246 = smul.u32 32, %s18
      %p247 = scmp.lt.s32.totalorder %s246, 63
      %s248 = scalar_select %p247, %s246, 63
      %s249 = smul.addr %s248, 4
      %s250 = scalar_lea.vmem %s6, %s249
      %s251 = smul.u32 32, %s18
      %p252 = scmp.lt.s32.totalorder %s251, 63
      %s253 = scalar_select %p252, %s251, 63
      %s254 = smul.addr %s253, 8
      %s255 = scalar_lea.vmem %s0, %s254
      %s256 = smul.u32 32, %s18
      %s257 = smul.u32 32, %s18
      %p258 = scmp.lt.s32.totalorder %s257, 63
      %s259 = scalar_select %p258, %s257, 63
      %s260 = smul.addr %s259, 4
      %s261 = scalar_lea.vmem %s5, %s260
      %s262 = smul.u32 32, %s18
      %s263 = smul.u32 32, %s18
      %p264 = scmp.lt.s32.totalorder %s263, 63
      %s265 = scalar_select %p264, %s263, 63
      %s266 = smul.addr %s265, 4
      %s267 = scalar_lea.vmem %s6, %s266
      %s268 = smul.u32 32, %s18
      %v270 = vld [vmem:[%s255] sm:$0xff]
      %v271 = vld [vmem:[%s255 + $0x8] sm:$0xff]
      %v272 = vld [vmem:[%s255 + $0x10] sm:$0xff]
      %v273 = vld [vmem:[%s255 + $0x18] sm:$0xff]
      %v274 = vld [vmem:[%s255 + $0x20] sm:$0xff]
      %v275 = vld [vmem:[%s255 + $0x28] sm:$0xff]
      %v276 = vld [vmem:[%s255 + $0x30] sm:$0xff]
      %v277 = vld [vmem:[%s255 + $0x38] sm:$0xff]
      %v278 = vld [vmem:[%s255 + $0x40] sm:$0xff]
      %v279 = vld [vmem:[%s255 + $0x48] sm:$0xff]
      %v280 = vld [vmem:[%s255 + $0x50] sm:$0xff]
      %v281 = vld [vmem:[%s255 + $0x58] sm:$0xff]
      %v282 = vld [vmem:[%s255 + $0x60] sm:$0xff]
      %v283 = vld [vmem:[%s255 + $0x68] sm:$0xff]
      %v284 = vld [vmem:[%s255 + $0x70] sm:$0xff]
      %v285 = vld [vmem:[%s255 + $0x78] sm:$0xff]
      %v286 = vld [vmem:[%s255 + $0x80] sm:$0xff]
      %v287 = vld [vmem:[%s255 + $0x88] sm:$0xff]
      %v288 = vld [vmem:[%s255 + $0x90] sm:$0xff]
      %v289 = vld [vmem:[%s255 + $0x98] sm:$0xff]
      %v290 = vld [vmem:[%s255 + $0xa0] sm:$0xff]
      %v291 = vld [vmem:[%s255 + $0xa8] sm:$0xff]
      %v292 = vld [vmem:[%s255 + $0xb0] sm:$0xff]
      %v293 = vld [vmem:[%s255 + $0xb8] sm:$0xff]
      %v294 = vld [vmem:[%s255 + $0xc0] sm:$0xff]
      %v295 = vld [vmem:[%s255 + $0xc8] sm:$0xff]
      %v296 = vld [vmem:[%s255 + $0xd0] sm:$0xff]
      %v297 = vld [vmem:[%s255 + $0xd8] sm:$0xff]
      %v298 = vld [vmem:[%s255 + $0xe0] sm:$0xff]
      %v299 = vld [vmem:[%s255 + $0xe8] sm:$0xff]
      %v300 = vld [vmem:[%s255 + $0xf0] sm:$0xff]
      %v301 = vld [vmem:[%s255 + $0xf8] sm:$0xff]
      %v302 = vpack.c.bf16 %v271, %v270
      %v303 = vpack.c.bf16 %v273, %v272
      %v304 = vpack.c.bf16 %v275, %v274
      %v305 = vpack.c.bf16 %v277, %v276
      %v306 = vpack.c.bf16 %v279, %v278
      %v307 = vpack.c.bf16 %v281, %v280
      %v308 = vpack.c.bf16 %v283, %v282
      %v309 = vpack.c.bf16 %v285, %v284
      %v310 = vpack.c.bf16 %v287, %v286
      %v311 = vpack.c.bf16 %v289, %v288
      %v312 = vpack.c.bf16 %v291, %v290
      %v313 = vpack.c.bf16 %v293, %v292
      %v314 = vpack.c.bf16 %v295, %v294
      %v315 = vpack.c.bf16 %v297, %v296
      %v316 = vpack.c.bf16 %v299, %v298
      %v317 = vpack.c.bf16 %v301, %v300
      %v318 = vld [vmem:[%s1] sm:$0xf]
      %v319 = vld [vmem:[%s1 + $0x4] sm:$0xf]
      %v320 = vld [vmem:[%s1 + $0x8] sm:$0xf]
      %v321 = vld [vmem:[%s1 + $0xc] sm:$0xf]
      %v322 = vld [vmem:[%s1 + $0x10] sm:$0xf]
      %v323 = vld [vmem:[%s1 + $0x14] sm:$0xf]
      %v324 = vld [vmem:[%s1 + $0x18] sm:$0xf]
      %v325 = vld [vmem:[%s1 + $0x1c] sm:$0xf]
      %v326 = vld [vmem:[%s1 + $0x20] sm:$0xf]
      %v327 = vld [vmem:[%s1 + $0x24] sm:$0xf]
      %v328 = vld [vmem:[%s1 + $0x28] sm:$0xf]
      %v329 = vld [vmem:[%s1 + $0x2c] sm:$0xf]
      %v330 = vld [vmem:[%s1 + $0x30] sm:$0xf]
      %v331 = vld [vmem:[%s1 + $0x34] sm:$0xf]
      %v332 = vld [vmem:[%s1 + $0x38] sm:$0xf]
      %v333 = vld [vmem:[%s1 + $0x3c] sm:$0xf]
      %v350 = vunpack.c.l.b16 %v318
      %v351 = vunpack.c.l.b16 %v319
      %v352 = vunpack.c.l.b16 %v320
      %v353 = vunpack.c.l.b16 %v321
      %v354 = vunpack.c.l.b16 %v322
      %v355 = vunpack.c.l.b16 %v323
      %v356 = vunpack.c.l.b16 %v324
      %v357 = vunpack.c.l.b16 %v325
      %v358 = vunpack.c.l.b16 %v326
      %v359 = vunpack.c.l.b16 %v327
      %v360 = vunpack.c.l.b16 %v328
      %v361 = vunpack.c.l.b16 %v329
      %v362 = vunpack.c.l.b16 %v330
      %v363 = vunpack.c.l.b16 %v331
      %v364 = vunpack.c.l.b16 %v332
      %v365 = vunpack.c.l.b16 %v333
      %v366 = vpack.c.b16 %v351, %v350
      %v367 = vpack.c.b16 %v353, %v352
      %v368 = vpack.c.b16 %v355, %v354
      %v369 = vpack.c.b16 %v357, %v356
      %v370 = vpack.c.b16 %v359, %v358
      %v371 = vpack.c.b16 %v361, %v360
      %v372 = vpack.c.b16 %v363, %v362
      %v373 = vpack.c.b16 %v365, %v364
      %382 = vmatprep.subr.bf16.mxu0 0
      %383 = vmatpush1.bf16.msra.mxu0 %v366
      %384 = vmatprep.subr.bf16.mxu0 0
      %385 = vmatpush1.bf16.msra.mxu0 %v367
      %386 = vmatprep.subr.bf16.mxu0 0
      %387 = vmatpush1.bf16.msra.mxu0 %v368
      %388 = vmatprep.subr.bf16.mxu0 0
      %389 = vmatpush1.bf16.msra.mxu0 %v369
      %390 = vmatprep.subr.bf16.mxu0 0
      %391 = vmatpush1.bf16.msra.mxu0 %v370
      %392 = vmatprep.subr.bf16.mxu0 0
      %393 = vmatpush1.bf16.msra.mxu0 %v371
      %394 = vmatprep.subr.bf16.mxu0 0
      %395 = vmatpush1.bf16.msra.mxu0 %v372
      %396 = vmatprep.subr.bf16.mxu0 0
      %397 = vmatpush1.bf16.msra.mxu0 %v373
      %398 = vmatprep.subr.bf16.mxu0 0
      %399 = vmatpush1.bf16.msra.mxu0 0
      %400 = vmatprep.subr.bf16.mxu0 0
      %401 = vmatpush1.bf16.msra.mxu0 0
      %402 = vmatprep.subr.bf16.mxu0 0
      %403 = vmatpush1.bf16.msra.mxu0 0
      %404 = vmatprep.subr.bf16.mxu0 0
      %405 = vmatpush1.bf16.msra.mxu0 0
      %406 = vmatprep.subr.bf16.mxu0 0
      %407 = vmatpush1.bf16.msra.mxu0 0
      %408 = vmatprep.subr.bf16.mxu0 0
      %409 = vmatpush1.bf16.msra.mxu0 0
      %410 = vmatprep.subr.bf16.mxu0 0
      %411 = vmatpush1.bf16.msra.mxu0 0
      %412 = vmatprep.subr.bf16.mxu0 0
      %413 = vmatpush1.bf16.msra.mxu0 0
      %414 = vmatprep.mubr.bf16.mxu0 0
      %415 = vmatmul.mubr.bf16.gmra.mrb[0].mxu0 %v302
      %v416 = vpop.f32.mrb[0].mxu0
      %v417 = vadd.f32 0.0, %v416
      %v418 = vpop.f32.mrb[0].mxu0
      %v419 = vpop.f32.mrb[0].mxu0
      %v420 = vadd.f32 0.0, %v419
      %v421 = vpop.f32.mrb[0].mxu0
      %422 = vmatprep.mubr.bf16.mxu0 0
      %423 = vmatmul.mubr.bf16.gmra.mrb[0].mxu0 %v303
      %v424 = vpop.f32.mrb[0].mxu0
      %v425 = vadd.f32 0.0, %v424
      %v426 = vpop.f32.mrb[0].mxu0
      %v427 = vpop.f32.mrb[0].mxu0
      %v428 = vadd.f32 0.0, %v427
      %v429 = vpop.f32.mrb[0].mxu0
      %430 = vmatprep.mubr.bf16.mxu0 0
      %431 = vmatmul.mubr.bf16.gmra.mrb[0].mxu0 %v304
      %v432 = vpop.f32.mrb[0].mxu0
      %v433 = vadd.f32 0.0, %v432
      %v434 = vpop.f32.mrb[0].mxu0
      %v435 = vpop.f32.mrb[0].mxu0
      %v436 = vadd.f32 0.0, %v435
      %v437 = vpop.f32.mrb[0].mxu0
      %438 = vmatprep.mubr.bf16.mxu0 0
      %439 = vmatmul.mubr.bf16.gmra.mrb[0].mxu0 %v305
      %v440 = vpop.f32.mrb[0].mxu0
      %v441 = vadd.f32 0.0, %v440
      %v442 = vpop.f32.mrb[0].mxu0
      %v443 = vpop.f32.mrb[0].mxu0
      %v444 = vadd.f32 0.0, %v443
      %v445 = vpop.f32.mrb[0].mxu0
      %446 = vmatprep.mubr.bf16.mxu0 0
      %447 = vmatmul.mubr.bf16.gmra.mrb[0].mxu0 %v306
      %v448 = vpop.f32.mrb[0].mxu0
      %v449 = vadd.f32 0.0, %v448
      %v450 = vpop.f32.mrb[0].mxu0
      %v451 = vpop.f32.mrb[0].mxu0
      %v452 = vadd.f32 0.0, %v451
      %v453 = vpop.f32.mrb[0].mxu0
      %454 = vmatprep.mubr.bf16.mxu0 0
      %455 = vmatmul.mubr.bf16.gmra.mrb[0].mxu0 %v307
      %v456 = vpop.f32.mrb[0].mxu0
      %v457 = vadd.f32 0.0, %v456
      %v458 = vpop.f32.mrb[0].mxu0
      %v459 = vpop.f32.mrb[0].mxu0
      %v460 = vadd.f32 0.0, %v459
      %v461 = vpop.f32.mrb[0].mxu0
      %462 = vmatprep.mubr.bf16.mxu0 0
      %463 = vmatmul.mubr.bf16.gmra.mrb[0].mxu0 %v308
      %v464 = vpop.f32.mrb[0].mxu0
      %v465 = vadd.f32 0.0, %v464
      %v466 = vpop.f32.mrb[0].mxu0
      %v467 = vpop.f32.mrb[0].mxu0
      %v468 = vadd.f32 0.0, %v467
      %v469 = vpop.f32.mrb[0].mxu0
      %470 = vmatprep.mubr.bf16.mxu0 0
      %471 = vmatmul.mubr.bf16.gmra.mrb[0].mxu0 %v309
      %v472 = vpop.f32.mrb[0].mxu0
      %v473 = vadd.f32 0.0, %v472
      %v474 = vpop.f32.mrb[0].mxu0
      %v475 = vpop.f32.mrb[0].mxu0
      %v476 = vadd.f32 0.0, %v475
      %v477 = vpop.f32.mrb[0].mxu0
      %478 = vmatprep.mubr.bf16.mxu0 0
      %479 = vmatmul.mubr.bf16.gmra.mrb[0].mxu0 %v310
      %v480 = vpop.f32.mrb[0].mxu0
      %v481 = vadd.f32 0.0, %v480
      %v482 = vpop.f32.mrb[0].mxu0
      %v483 = vpop.f32.mrb[0].mxu0
      %v484 = vadd.f32 0.0, %v483
      %v485 = vpop.f32.mrb[0].mxu0
      %486 = vmatprep.mubr.bf16.mxu0 0
      %487 = vmatmul.mubr.bf16.gmra.mrb[0].mxu0 %v311
      %v488 = vpop.f32.mrb[0].mxu0
      %v489 = vadd.f32 0.0, %v488
      %v490 = vpop.f32.mrb[0].mxu0
      %v491 = vpop.f32.mrb[0].mxu0
      %v492 = vadd.f32 0.0, %v491
      %v493 = vpop.f32.mrb[0].mxu0
      %494 = vmatprep.mubr.bf16.mxu0 0
      %495 = vmatmul.mubr.bf16.gmra.mrb[0].mxu0 %v312
      %v496 = vpop.f32.mrb[0].mxu0
      %v497 = vadd.f32 0.0, %v496
      %v498 = vpop.f32.mrb[0].mxu0
      %v499 = vpop.f32.mrb[0].mxu0
      %v500 = vadd.f32 0.0, %v499
      %v501 = vpop.f32.mrb[0].mxu0
      %502 = vmatprep.mubr.bf16.mxu0 0
      %503 = vmatmul.mubr.bf16.gmra.mrb[0].mxu0 %v313
      %v504 = vpop.f32.mrb[0].mxu0
      %v505 = vadd.f32 0.0, %v504
      %v506 = vpop.f32.mrb[0].mxu0
      %v507 = vpop.f32.mrb[0].mxu0
      %v508 = vadd.f32 0.0, %v507
      %v509 = vpop.f32.mrb[0].mxu0
      %510 = vmatprep.mubr.bf16.mxu0 0
      %511 = vmatmul.mubr.bf16.gmra.mrb[0].mxu0 %v314
      %v512 = vpop.f32.mrb[0].mxu0
      %v513 = vadd.f32 0.0, %v512
      %v514 = vpop.f32.mrb[0].mxu0
      %v515 = vpop.f32.mrb[0].mxu0
      %v516 = vadd.f32 0.0, %v515
      %v517 = vpop.f32.mrb[0].mxu0
      %518 = vmatprep.mubr.bf16.mxu0 0
      %519 = vmatmul.mubr.bf16.gmra.mrb[0].mxu0 %v315
      %v520 = vpop.f32.mrb[0].mxu0
      %v521 = vadd.f32 0.0, %v520
      %v522 = vpop.f32.mrb[0].mxu0
      %v523 = vpop.f32.mrb[0].mxu0
      %v524 = vadd.f32 0.0, %v523
      %v525 = vpop.f32.mrb[0].mxu0
      %526 = vmatprep.mubr.bf16.mxu0 0
      %527 = vmatmul.mubr.bf16.gmra.mrb[0].mxu0 %v316
      %v528 = vpop.f32.mrb[0].mxu0
      %v529 = vadd.f32 0.0, %v528
      %v530 = vpop.f32.mrb[0].mxu0
      %v531 = vpop.f32.mrb[0].mxu0
      %v532 = vadd.f32 0.0, %v531
      %v533 = vpop.f32.mrb[0].mxu0
      %534 = vmatprep.mubr.bf16.mxu0 0
      %535 = vmatmul.mubr.bf16.gmra.mrb[0].mxu0 %v317
      %v536 = vpop.f32.mrb[0].mxu0
      %v537 = vadd.f32 0.0, %v536
      %v538 = vpop.f32.mrb[0].mxu0
      %v539 = vpop.f32.mrb[0].mxu0
      %v540 = vadd.f32 0.0, %v539
      %v541 = vpop.f32.mrb[0].mxu0
      %542 = vdwg.mxu0
      %v543 = vld [vmem:[%s2] sm:$0x1]
      %v545 = vlaneseq
      %v546 = vshrl.u32 %v545, 7
      %v547 = vsub.s32 0, %v546
      %v548 = vrot.slane %v543, %v547
      %v550 = vmul.f32 %v417, %v548
      %v551 = vmul.f32 %v420, %v548
      %v552 = vmul.f32 %v425, %v548
      %v553 = vmul.f32 %v428, %v548
      %v554 = vmul.f32 %v433, %v548
      %v555 = vmul.f32 %v436, %v548
      %v556 = vmul.f32 %v441, %v548
      %v557 = vmul.f32 %v444, %v548
      %v558 = vmul.f32 %v449, %v548
      %v559 = vmul.f32 %v452, %v548
      %v560 = vmul.f32 %v457, %v548
      %v561 = vmul.f32 %v460, %v548
      %v562 = vmul.f32 %v465, %v548
      %v563 = vmul.f32 %v468, %v548
      %v564 = vmul.f32 %v473, %v548
      %v565 = vmul.f32 %v476, %v548
      %v566 = vmul.f32 %v481, %v548
      %v567 = vmul.f32 %v484, %v548
      %v568 = vmul.f32 %v489, %v548
      %v569 = vmul.f32 %v492, %v548
      %v570 = vmul.f32 %v497, %v548
      %v571 = vmul.f32 %v500, %v548
      %v572 = vmul.f32 %v505, %v548
      %v573 = vmul.f32 %v508, %v548
      %v574 = vmul.f32 %v513, %v548
      %v575 = vmul.f32 %v516, %v548
      %v576 = vmul.f32 %v521, %v548
      %v577 = vmul.f32 %v524, %v548
      %v578 = vmul.f32 %v529, %v548
      %v579 = vmul.f32 %v532, %v548
      %v580 = vmul.f32 %v537, %v548
      %v581 = vmul.f32 %v540, %v548
      %v582 = vld [vmem:[%s3] sm:$0x1]
      %v584 = vlaneseq
      %v585 = vshrl.u32 %v584, 7
      %v586 = vsub.s32 0, %v585
      %v587 = vrot.slane %v582, %v586
      %v589 = vadd.f32 %v550, %v587
      %v590 = vadd.f32 %v551, %v587
      %v591 = vadd.f32 %v552, %v587
      %v592 = vadd.f32 %v553, %v587
      %v593 = vadd.f32 %v554, %v587
      %v594 = vadd.f32 %v555, %v587
      %v595 = vadd.f32 %v556, %v587
      %v596 = vadd.f32 %v557, %v587
      %v597 = vadd.f32 %v558, %v587
      %v598 = vadd.f32 %v559, %v587
      %v599 = vadd.f32 %v560, %v587
      %v600 = vadd.f32 %v561, %v587
      %v601 = vadd.f32 %v562, %v587
      %v602 = vadd.f32 %v563, %v587
      %v603 = vadd.f32 %v564, %v587
      %v604 = vadd.f32 %v565, %v587
      %v605 = vadd.f32 %v566, %v587
      %v606 = vadd.f32 %v567, %v587
      %v607 = vadd.f32 %v568, %v587
      %v608 = vadd.f32 %v569, %v587
      %v609 = vadd.f32 %v570, %v587
      %v610 = vadd.f32 %v571, %v587
      %v611 = vadd.f32 %v572, %v587
      %v612 = vadd.f32 %v573, %v587
      %v613 = vadd.f32 %v574, %v587
      %v614 = vadd.f32 %v575, %v587
      %v615 = vadd.f32 %v576, %v587
      %v616 = vadd.f32 %v577, %v587
      %v617 = vadd.f32 %v578, %v587
      %v618 = vadd.f32 %v579, %v587
      %v619 = vadd.f32 %v580, %v587
      %v620 = vadd.f32 %v581, %v587
      %v621 = vxor.u32 %v589, 2147483648
      %v622 = vxor.u32 %v590, 2147483648
      %v623 = vxor.u32 %v591, 2147483648
      %v624 = vxor.u32 %v592, 2147483648
      %v625 = vxor.u32 %v593, 2147483648
      %v626 = vxor.u32 %v594, 2147483648
      %v627 = vxor.u32 %v595, 2147483648
      %v628 = vxor.u32 %v596, 2147483648
      %v629 = vxor.u32 %v597, 2147483648
      %v630 = vxor.u32 %v598, 2147483648
      %v631 = vxor.u32 %v599, 2147483648
      %v632 = vxor.u32 %v600, 2147483648
      %v633 = vxor.u32 %v601, 2147483648
      %v634 = vxor.u32 %v602, 2147483648
      %v635 = vxor.u32 %v603, 2147483648
      %v636 = vxor.u32 %v604, 2147483648
      %v637 = vxor.u32 %v605, 2147483648
      %v638 = vxor.u32 %v606, 2147483648
      %v639 = vxor.u32 %v607, 2147483648
      %v640 = vxor.u32 %v608, 2147483648
      %v641 = vxor.u32 %v609, 2147483648
      %v642 = vxor.u32 %v610, 2147483648
      %v643 = vxor.u32 %v611, 2147483648
      %v644 = vxor.u32 %v612, 2147483648
      %v645 = vxor.u32 %v613, 2147483648
      %v646 = vxor.u32 %v614, 2147483648
      %v647 = vxor.u32 %v615, 2147483648
      %v648 = vxor.u32 %v616, 2147483648
      %v649 = vxor.u32 %v617, 2147483648
      %v650 = vxor.u32 %v618, 2147483648
      %v651 = vxor.u32 %v619, 2147483648
      %v652 = vxor.u32 %v620, 2147483648
      %v653 = vmul.f32 %v621, 1.442695
      %v654 = vpow.pop %v653
      %v655 = vmul.f32 %v622, 1.442695
      %v656 = vpow.pop %v655
      %v657 = vmul.f32 %v623, 1.442695
      %v658 = vpow.pop %v657
      %v659 = vmul.f32 %v624, 1.442695
      %v660 = vpow.pop %v659
      %v661 = vmul.f32 %v625, 1.442695
      %v662 = vpow.pop %v661
      %v663 = vmul.f32 %v626, 1.442695
      %v664 = vpow.pop %v663
      %v665 = vmul.f32 %v627, 1.442695
      %v666 = vpow.pop %v665
      %v667 = vmul.f32 %v628, 1.442695
      %v668 = vpow.pop %v667
      %v669 = vmul.f32 %v629, 1.442695
      %v670 = vpow.pop %v669
      %v671 = vmul.f32 %v630, 1.442695
      %v672 = vpow.pop %v671
      %v673 = vmul.f32 %v631, 1.442695
      %v674 = vpow.pop %v673
      %v675 = vmul.f32 %v632, 1.442695
      %v676 = vpow.pop %v675
      %v677 = vmul.f32 %v633, 1.442695
      %v678 = vpow.pop %v677
      %v679 = vmul.f32 %v634, 1.442695
      %v680 = vpow.pop %v679
      %v681 = vmul.f32 %v635, 1.442695
      %v682 = vpow.pop %v681
      %v683 = vmul.f32 %v636, 1.442695
      %v684 = vpow.pop %v683
      %v685 = vmul.f32 %v637, 1.442695
      %v686 = vpow.pop %v685
      %v687 = vmul.f32 %v638, 1.442695
      %v688 = vpow.pop %v687
      %v689 = vmul.f32 %v639, 1.442695
      %v690 = vpow.pop %v689
      %v691 = vmul.f32 %v640, 1.442695
      %v692 = vpow.pop %v691
      %v693 = vmul.f32 %v641, 1.442695
      %v694 = vpow.pop %v693
      %v695 = vmul.f32 %v642, 1.442695
      %v696 = vpow.pop %v695
      %v697 = vmul.f32 %v643, 1.442695
      %v698 = vpow.pop %v697
      %v699 = vmul.f32 %v644, 1.442695
      %v700 = vpow.pop %v699
      %v701 = vmul.f32 %v645, 1.442695
      %v702 = vpow.pop %v701
      %v703 = vmul.f32 %v646, 1.442695
      %v704 = vpow.pop %v703
      %v705 = vmul.f32 %v647, 1.442695
      %v706 = vpow.pop %v705
      %v707 = vmul.f32 %v648, 1.442695
      %v708 = vpow.pop %v707
      %v709 = vmul.f32 %v649, 1.442695
      %v710 = vpow.pop %v709
      %v711 = vmul.f32 %v650, 1.442695
      %v712 = vpow.pop %v711
      %v713 = vmul.f32 %v651, 1.442695
      %v714 = vpow.pop %v713
      %v715 = vmul.f32 %v652, 1.442695
      %v716 = vpow.pop %v715
      %v717 = vadd.f32 %v654, 1.0
      %v718 = vadd.f32 %v656, 1.0
      %v719 = vadd.f32 %v658, 1.0
      %v720 = vadd.f32 %v660, 1.0
      %v721 = vadd.f32 %v662, 1.0
      %v722 = vadd.f32 %v664, 1.0
      %v723 = vadd.f32 %v666, 1.0
      %v724 = vadd.f32 %v668, 1.0
      %v725 = vadd.f32 %v670, 1.0
      %v726 = vadd.f32 %v672, 1.0
      %v727 = vadd.f32 %v674, 1.0
      %v728 = vadd.f32 %v676, 1.0
      %v729 = vadd.f32 %v678, 1.0
      %v730 = vadd.f32 %v680, 1.0
      %v731 = vadd.f32 %v682, 1.0
      %v732 = vadd.f32 %v684, 1.0
      %v733 = vadd.f32 %v686, 1.0
      %v734 = vadd.f32 %v688, 1.0
      %v735 = vadd.f32 %v690, 1.0
      %v736 = vadd.f32 %v692, 1.0
      %v737 = vadd.f32 %v694, 1.0
      %v738 = vadd.f32 %v696, 1.0
      %v739 = vadd.f32 %v698, 1.0
      %v740 = vadd.f32 %v700, 1.0
      %v741 = vadd.f32 %v702, 1.0
      %v742 = vadd.f32 %v704, 1.0
      %v743 = vadd.f32 %v706, 1.0
      %v744 = vadd.f32 %v708, 1.0
      %v745 = vadd.f32 %v710, 1.0
      %v746 = vadd.f32 %v712, 1.0
      %v747 = vadd.f32 %v714, 1.0
      %v748 = vadd.f32 %v716, 1.0
      %v749 = vrcp.pop %v717
      %v750 = vmul.f32 1.0, %v749
      %v751 = vrcp.pop %v718
      %v752 = vmul.f32 1.0, %v751
      %v753 = vrcp.pop %v719
      %v754 = vmul.f32 1.0, %v753
      %v755 = vrcp.pop %v720
      %v756 = vmul.f32 1.0, %v755
      %v757 = vrcp.pop %v721
      %v758 = vmul.f32 1.0, %v757
      %v759 = vrcp.pop %v722
      %v760 = vmul.f32 1.0, %v759
      %v761 = vrcp.pop %v723
      %v762 = vmul.f32 1.0, %v761
      %v763 = vrcp.pop %v724
      %v764 = vmul.f32 1.0, %v763
      %v765 = vrcp.pop %v725
      %v766 = vmul.f32 1.0, %v765
      %v767 = vrcp.pop %v726
      %v768 = vmul.f32 1.0, %v767
      %v769 = vrcp.pop %v727
      %v770 = vmul.f32 1.0, %v769
      %v771 = vrcp.pop %v728
      %v772 = vmul.f32 1.0, %v771
      %v773 = vrcp.pop %v729
      %v774 = vmul.f32 1.0, %v773
      %v775 = vrcp.pop %v730
      %v776 = vmul.f32 1.0, %v775
      %v777 = vrcp.pop %v731
      %v778 = vmul.f32 1.0, %v777
      %v779 = vrcp.pop %v732
      %v780 = vmul.f32 1.0, %v779
      %v781 = vrcp.pop %v733
      %v782 = vmul.f32 1.0, %v781
      %v783 = vrcp.pop %v734
      %v784 = vmul.f32 1.0, %v783
      %v785 = vrcp.pop %v735
      %v786 = vmul.f32 1.0, %v785
      %v787 = vrcp.pop %v736
      %v788 = vmul.f32 1.0, %v787
      %v789 = vrcp.pop %v737
      %v790 = vmul.f32 1.0, %v789
      %v791 = vrcp.pop %v738
      %v792 = vmul.f32 1.0, %v791
      %v793 = vrcp.pop %v739
      %v794 = vmul.f32 1.0, %v793
      %v795 = vrcp.pop %v740
      %v796 = vmul.f32 1.0, %v795
      %v797 = vrcp.pop %v741
      %v798 = vmul.f32 1.0, %v797
      %v799 = vrcp.pop %v742
      %v800 = vmul.f32 1.0, %v799
      %v801 = vrcp.pop %v743
      %v802 = vmul.f32 1.0, %v801
      %v803 = vrcp.pop %v744
      %v804 = vmul.f32 1.0, %v803
      %v805 = vrcp.pop %v745
      %v806 = vmul.f32 1.0, %v805
      %v807 = vrcp.pop %v746
      %v808 = vmul.f32 1.0, %v807
      %v809 = vrcp.pop %v747
      %v810 = vmul.f32 1.0, %v809
      %v811 = vrcp.pop %v748
      %v812 = vmul.f32 1.0, %v811
      %v813 = vmul.f32 %v589, %v750
      %v814 = vmul.f32 %v590, %v752
      %v815 = vmul.f32 %v591, %v754
      %v816 = vmul.f32 %v592, %v756
      %v817 = vmul.f32 %v593, %v758
      %v818 = vmul.f32 %v594, %v760
      %v819 = vmul.f32 %v595, %v762
      %v820 = vmul.f32 %v596, %v764
      %v821 = vmul.f32 %v597, %v766
      %v822 = vmul.f32 %v598, %v768
      %v823 = vmul.f32 %v599, %v770
      %v824 = vmul.f32 %v600, %v772
      %v825 = vmul.f32 %v601, %v774
      %v826 = vmul.f32 %v602, %v776
      %v827 = vmul.f32 %v603, %v778
      %v828 = vmul.f32 %v604, %v780
      %v829 = vmul.f32 %v605, %v782
      %v830 = vmul.f32 %v606, %v784
      %v831 = vmul.f32 %v607, %v786
      %v832 = vmul.f32 %v608, %v788
      %v833 = vmul.f32 %v609, %v790
      %v834 = vmul.f32 %v610, %v792
      %v835 = vmul.f32 %v611, %v794
      %v836 = vmul.f32 %v612, %v796
      %v837 = vmul.f32 %v613, %v798
      %v838 = vmul.f32 %v614, %v800
      %v839 = vmul.f32 %v615, %v802
      %v840 = vmul.f32 %v616, %v804
      %v841 = vmul.f32 %v617, %v806
      %v842 = vmul.f32 %v618, %v808
      %v843 = vmul.f32 %v619, %v810
      %v844 = vmul.f32 %v620, %v812
      %v845 = vld [vmem:[%s4] sm:$0xf]
      %v846 = vld [vmem:[%s4 + $0x4] sm:$0xf]
      %v847 = vld [vmem:[%s4 + $0x8] sm:$0xf]
      %v848 = vld [vmem:[%s4 + $0xc] sm:$0xf]
      %v849 = vld [vmem:[%s4 + $0x10] sm:$0xf]
      %v850 = vld [vmem:[%s4 + $0x14] sm:$0xf]
      %v851 = vld [vmem:[%s4 + $0x18] sm:$0xf]
      %v852 = vld [vmem:[%s4 + $0x1c] sm:$0xf]
      %v853 = vld [vmem:[%s4 + $0x20] sm:$0xf]
      %v854 = vld [vmem:[%s4 + $0x24] sm:$0xf]
      %v855 = vld [vmem:[%s4 + $0x28] sm:$0xf]
      %v856 = vld [vmem:[%s4 + $0x2c] sm:$0xf]
      %v857 = vld [vmem:[%s4 + $0x30] sm:$0xf]
      %v858 = vld [vmem:[%s4 + $0x34] sm:$0xf]
      %v859 = vld [vmem:[%s4 + $0x38] sm:$0xf]
      %v860 = vld [vmem:[%s4 + $0x3c] sm:$0xf]
      %v877 = vunpack.c.l.b16 %v845
      %v878 = vunpack.c.l.b16 %v846
      %v879 = vunpack.c.l.b16 %v847
      %v880 = vunpack.c.l.b16 %v848
      %v881 = vunpack.c.l.b16 %v849
      %v882 = vunpack.c.l.b16 %v850
      %v883 = vunpack.c.l.b16 %v851
      %v884 = vunpack.c.l.b16 %v852
      %v885 = vunpack.c.l.b16 %v853
      %v886 = vunpack.c.l.b16 %v854
      %v887 = vunpack.c.l.b16 %v855
      %v888 = vunpack.c.l.b16 %v856
      %v889 = vunpack.c.l.b16 %v857
      %v890 = vunpack.c.l.b16 %v858
      %v891 = vunpack.c.l.b16 %v859
      %v892 = vunpack.c.l.b16 %v860
      %v893 = vpack.c.b16 %v878, %v877
      %v894 = vpack.c.b16 %v880, %v879
      %v895 = vpack.c.b16 %v882, %v881
      %v896 = vpack.c.b16 %v884, %v883
      %v897 = vpack.c.b16 %v886, %v885
      %v898 = vpack.c.b16 %v888, %v887
      %v899 = vpack.c.b16 %v890, %v889
      %v900 = vpack.c.b16 %v892, %v891
      %909 = vmatprep.subr.bf16.mxu0 0
      %910 = vmatpush1.bf16.msra.mxu0 %v893
      %911 = vmatprep.subr.bf16.mxu0 0
      %912 = vmatpush1.bf16.msra.mxu0 %v894
      %913 = vmatprep.subr.bf16.mxu0 0
      %914 = vmatpush1.bf16.msra.mxu0 %v895
      %915 = vmatprep.subr.bf16.mxu0 0
      %916 = vmatpush1.bf16.msra.mxu0 %v896
      %917 = vmatprep.subr.bf16.mxu0 0
      %918 = vmatpush1.bf16.msra.mxu0 %v897
      %919 = vmatprep.subr.bf16.mxu0 0
      %920 = vmatpush1.bf16.msra.mxu0 %v898
      %921 = vmatprep.subr.bf16.mxu0 0
      %922 = vmatpush1.bf16.msra.mxu0 %v899
      %923 = vmatprep.subr.bf16.mxu0 0
      %924 = vmatpush1.bf16.msra.mxu0 %v900
      %925 = vmatprep.subr.bf16.mxu0 0
      %926 = vmatpush1.bf16.msra.mxu0 0
      %927 = vmatprep.subr.bf16.mxu0 0
      %928 = vmatpush1.bf16.msra.mxu0 0
      %929 = vmatprep.subr.bf16.mxu0 0
      %930 = vmatpush1.bf16.msra.mxu0 0
      %931 = vmatprep.subr.bf16.mxu0 0
      %932 = vmatpush1.bf16.msra.mxu0 0
      %933 = vmatprep.subr.bf16.mxu0 0
      %934 = vmatpush1.bf16.msra.mxu0 0
      %935 = vmatprep.subr.bf16.mxu0 0
      %936 = vmatpush1.bf16.msra.mxu0 0
      %937 = vmatprep.subr.bf16.mxu0 0
      %938 = vmatpush1.bf16.msra.mxu0 0
      %939 = vmatprep.subr.bf16.mxu0 0
      %940 = vmatpush1.bf16.msra.mxu0 0
      %941 = vmatprep.mubr.bf16.mxu0 0
      %942 = vmatmul.mubr.bf16.gmra.mrb[0].mxu0 %v302
      %v943 = vpop.f32.mrb[0].mxu0
      %v944 = vadd.f32 0.0, %v943
      %v945 = vpop.f32.mrb[0].mxu0
      %v946 = vpop.f32.mrb[0].mxu0
      %v947 = vadd.f32 0.0, %v946
      %v948 = vpop.f32.mrb[0].mxu0
      %949 = vmatprep.mubr.bf16.mxu0 0
      %950 = vmatmul.mubr.bf16.gmra.mrb[0].mxu0 %v303
      %v951 = vpop.f32.mrb[0].mxu0
      %v952 = vadd.f32 0.0, %v951
      %v953 = vpop.f32.mrb[0].mxu0
      %v954 = vpop.f32.mrb[0].mxu0
      %v955 = vadd.f32 0.0, %v954
      %v956 = vpop.f32.mrb[0].mxu0
      %957 = vmatprep.mubr.bf16.mxu0 0
      %958 = vmatmul.mubr.bf16.gmra.mrb[0].mxu0 %v304
      %v959 = vpop.f32.mrb[0].mxu0
      %v960 = vadd.f32 0.0, %v959
      %v961 = vpop.f32.mrb[0].mxu0
      %v962 = vpop.f32.mrb[0].mxu0
      %v963 = vadd.f32 0.0, %v962
      %v964 = vpop.f32.mrb[0].mxu0
      %965 = vmatprep.mubr.bf16.mxu0 0
      %966 = vmatmul.mubr.bf16.gmra.mrb[0].mxu0 %v305
      %v967 = vpop.f32.mrb[0].mxu0
      %v968 = vadd.f32 0.0, %v967
      %v969 = vpop.f32.mrb[0].mxu0
      %v970 = vpop.f32.mrb[0].mxu0
      %v971 = vadd.f32 0.0, %v970
      %v972 = vpop.f32.mrb[0].mxu0
      %973 = vmatprep.mubr.bf16.mxu0 0
      %974 = vmatmul.mubr.bf16.gmra.mrb[0].mxu0 %v306
      %v975 = vpop.f32.mrb[0].mxu0
      %v976 = vadd.f32 0.0, %v975
      %v977 = vpop.f32.mrb[0].mxu0
      %v978 = vpop.f32.mrb[0].mxu0
      %v979 = vadd.f32 0.0, %v978
      %v980 = vpop.f32.mrb[0].mxu0
      %981 = vmatprep.mubr.bf16.mxu0 0
      %982 = vmatmul.mubr.bf16.gmra.mrb[0].mxu0 %v307
      %v983 = vpop.f32.mrb[0].mxu0
      %v984 = vadd.f32 0.0, %v983
      %v985 = vpop.f32.mrb[0].mxu0
      %v986 = vpop.f32.mrb[0].mxu0
      %v987 = vadd.f32 0.0, %v986
      %v988 = vpop.f32.mrb[0].mxu0
      %989 = vmatprep.mubr.bf16.mxu0 0
      %990 = vmatmul.mubr.bf16.gmra.mrb[0].mxu0 %v308
      %v991 = vpop.f32.mrb[0].mxu0
      %v992 = vadd.f32 0.0, %v991
      %v993 = vpop.f32.mrb[0].mxu0
      %v994 = vpop.f32.mrb[0].mxu0
      %v995 = vadd.f32 0.0, %v994
      %v996 = vpop.f32.mrb[0].mxu0
      %997 = vmatprep.mubr.bf16.mxu0 0
      %998 = vmatmul.mubr.bf16.gmra.mrb[0].mxu0 %v309
      %v999 = vpop.f32.mrb[0].mxu0
      %v1000 = vadd.f32 0.0, %v999
      %v1001 = vpop.f32.mrb[0].mxu0
      %v1002 = vpop.f32.mrb[0].mxu0
      %v1003 = vadd.f32 0.0, %v1002
      %v1004 = vpop.f32.mrb[0].mxu0
      %1005 = vmatprep.mubr.bf16.mxu0 0
      %1006 = vmatmul.mubr.bf16.gmra.mrb[0].mxu0 %v310
      %v1007 = vpop.f32.mrb[0].mxu0
      %v1008 = vadd.f32 0.0, %v1007
      %v1009 = vpop.f32.mrb[0].mxu0
      %v1010 = vpop.f32.mrb[0].mxu0
      %v1011 = vadd.f32 0.0, %v1010
      %v1012 = vpop.f32.mrb[0].mxu0
      %1013 = vmatprep.mubr.bf16.mxu0 0
      %1014 = vmatmul.mubr.bf16.gmra.mrb[0].mxu0 %v311
      %v1015 = vpop.f32.mrb[0].mxu0
      %v1016 = vadd.f32 0.0, %v1015
      %v1017 = vpop.f32.mrb[0].mxu0
      %v1018 = vpop.f32.mrb[0].mxu0
      %v1019 = vadd.f32 0.0, %v1018
      %v1020 = vpop.f32.mrb[0].mxu0
      %1021 = vmatprep.mubr.bf16.mxu0 0
      %1022 = vmatmul.mubr.bf16.gmra.mrb[0].mxu0 %v312
      %v1023 = vpop.f32.mrb[0].mxu0
      %v1024 = vadd.f32 0.0, %v1023
      %v1025 = vpop.f32.mrb[0].mxu0
      %v1026 = vpop.f32.mrb[0].mxu0
      %v1027 = vadd.f32 0.0, %v1026
      %v1028 = vpop.f32.mrb[0].mxu0
      %1029 = vmatprep.mubr.bf16.mxu0 0
      %1030 = vmatmul.mubr.bf16.gmra.mrb[0].mxu0 %v313
      %v1031 = vpop.f32.mrb[0].mxu0
      %v1032 = vadd.f32 0.0, %v1031
      %v1033 = vpop.f32.mrb[0].mxu0
      %v1034 = vpop.f32.mrb[0].mxu0
      %v1035 = vadd.f32 0.0, %v1034
      %v1036 = vpop.f32.mrb[0].mxu0
      %1037 = vmatprep.mubr.bf16.mxu0 0
      %1038 = vmatmul.mubr.bf16.gmra.mrb[0].mxu0 %v314
      %v1039 = vpop.f32.mrb[0].mxu0
      %v1040 = vadd.f32 0.0, %v1039
      %v1041 = vpop.f32.mrb[0].mxu0
      %v1042 = vpop.f32.mrb[0].mxu0
      %v1043 = vadd.f32 0.0, %v1042
      %v1044 = vpop.f32.mrb[0].mxu0
      %1045 = vmatprep.mubr.bf16.mxu0 0
      %1046 = vmatmul.mubr.bf16.gmra.mrb[0].mxu0 %v315
      %v1047 = vpop.f32.mrb[0].mxu0
      %v1048 = vadd.f32 0.0, %v1047
      %v1049 = vpop.f32.mrb[0].mxu0
      %v1050 = vpop.f32.mrb[0].mxu0
      %v1051 = vadd.f32 0.0, %v1050
      %v1052 = vpop.f32.mrb[0].mxu0
      %1053 = vmatprep.mubr.bf16.mxu0 0
      %1054 = vmatmul.mubr.bf16.gmra.mrb[0].mxu0 %v316
      %v1055 = vpop.f32.mrb[0].mxu0
      %v1056 = vadd.f32 0.0, %v1055
      %v1057 = vpop.f32.mrb[0].mxu0
      %v1058 = vpop.f32.mrb[0].mxu0
      %v1059 = vadd.f32 0.0, %v1058
      %v1060 = vpop.f32.mrb[0].mxu0
      %1061 = vmatprep.mubr.bf16.mxu0 0
      %1062 = vmatmul.mubr.bf16.gmra.mrb[0].mxu0 %v317
      %v1063 = vpop.f32.mrb[0].mxu0
      %v1064 = vadd.f32 0.0, %v1063
      %v1065 = vpop.f32.mrb[0].mxu0
      %v1066 = vpop.f32.mrb[0].mxu0
      %v1067 = vadd.f32 0.0, %v1066
      %v1068 = vpop.f32.mrb[0].mxu0
      %1069 = vdwg.mxu0
      %v1070 = vpack.c.bf16 %v814, %v813
      %v1071 = vpack.c.bf16 %v816, %v815
      %v1072 = vpack.c.bf16 %v818, %v817
      %v1073 = vpack.c.bf16 %v820, %v819
      %v1074 = vpack.c.bf16 %v822, %v821
      %v1075 = vpack.c.bf16 %v824, %v823
      %v1076 = vpack.c.bf16 %v826, %v825
      %v1077 = vpack.c.bf16 %v828, %v827
      %v1078 = vpack.c.bf16 %v830, %v829
      %v1079 = vpack.c.bf16 %v832, %v831
      %v1080 = vpack.c.bf16 %v834, %v833
      %v1081 = vpack.c.bf16 %v836, %v835
      %v1082 = vpack.c.bf16 %v838, %v837
      %v1083 = vpack.c.bf16 %v840, %v839
      %v1084 = vpack.c.bf16 %v842, %v841
      %v1085 = vpack.c.bf16 %v844, %v843
      %v1102 = vunpack.c.l.b16 %v1070
      %v1103 = vunpack.c.h.b16 %v1070
      %v1104 = vunpack.c.l.b16 %v1071
      %v1105 = vunpack.c.h.b16 %v1071
      %v1106 = vunpack.c.l.b16 %v1072
      %v1107 = vunpack.c.h.b16 %v1072
      %v1108 = vunpack.c.l.b16 %v1073
      %v1109 = vunpack.c.h.b16 %v1073
      %v1110 = vunpack.c.l.b16 %v1074
      %v1111 = vunpack.c.h.b16 %v1074
      %v1112 = vunpack.c.l.b16 %v1075
      %v1113 = vunpack.c.h.b16 %v1075
      %v1114 = vunpack.c.l.b16 %v1076
      %v1115 = vunpack.c.h.b16 %v1076
      %v1116 = vunpack.c.l.b16 %v1077
      %v1117 = vunpack.c.h.b16 %v1077
      %v1118 = vunpack.c.l.b16 %v1078
      %v1119 = vunpack.c.h.b16 %v1078
      %v1120 = vunpack.c.l.b16 %v1079
      %v1121 = vunpack.c.h.b16 %v1079
      %v1122 = vunpack.c.l.b16 %v1080
      %v1123 = vunpack.c.h.b16 %v1080
      %v1124 = vunpack.c.l.b16 %v1081
      %v1125 = vunpack.c.h.b16 %v1081
      %v1126 = vunpack.c.l.b16 %v1082
      %v1127 = vunpack.c.h.b16 %v1082
      %v1128 = vunpack.c.l.b16 %v1083
      %v1129 = vunpack.c.h.b16 %v1083
      %v1130 = vunpack.c.l.b16 %v1084
      %v1131 = vunpack.c.h.b16 %v1084
      %v1132 = vunpack.c.l.b16 %v1085
      %v1133 = vunpack.c.h.b16 %v1085
      %v1134 = vpack.c.b16 %v1102, %v1102
      %v1135 = vpack.c.b16 %v1103, %v1103
      %v1136 = vpack.c.b16 %v1104, %v1104
      %v1137 = vpack.c.b16 %v1105, %v1105
      %v1138 = vpack.c.b16 %v1106, %v1106
      %v1139 = vpack.c.b16 %v1107, %v1107
      %v1140 = vpack.c.b16 %v1108, %v1108
      %v1141 = vpack.c.b16 %v1109, %v1109
      %v1142 = vpack.c.b16 %v1110, %v1110
      %v1143 = vpack.c.b16 %v1111, %v1111
      %v1144 = vpack.c.b16 %v1112, %v1112
      %v1145 = vpack.c.b16 %v1113, %v1113
      %v1146 = vpack.c.b16 %v1114, %v1114
      %v1147 = vpack.c.b16 %v1115, %v1115
      %v1148 = vpack.c.b16 %v1116, %v1116
      %v1149 = vpack.c.b16 %v1117, %v1117
      %v1150 = vpack.c.b16 %v1118, %v1118
      %v1151 = vpack.c.b16 %v1119, %v1119
      %v1152 = vpack.c.b16 %v1120, %v1120
      %v1153 = vpack.c.b16 %v1121, %v1121
      %v1154 = vpack.c.b16 %v1122, %v1122
      %v1155 = vpack.c.b16 %v1123, %v1123
      %v1156 = vpack.c.b16 %v1124, %v1124
      %v1157 = vpack.c.b16 %v1125, %v1125
      %v1158 = vpack.c.b16 %v1126, %v1126
      %v1159 = vpack.c.b16 %v1127, %v1127
      %v1160 = vpack.c.b16 %v1128, %v1128
      %v1161 = vpack.c.b16 %v1129, %v1129
      %v1162 = vpack.c.b16 %v1130, %v1130
      %v1163 = vpack.c.b16 %v1131, %v1131
      %v1164 = vpack.c.b16 %v1132, %v1132
      %v1165 = vpack.c.b16 %v1133, %v1133
      %1198 = vst [vmem:[%s261] sm:$0xf] %v1134
      %1199 = vst [vmem:[%s261 + $0x4] sm:$0xf] %v1135
      %1200 = vst [vmem:[%s261 + $0x8] sm:$0xf] %v1136
      %1201 = vst [vmem:[%s261 + $0xc] sm:$0xf] %v1137
      %1202 = vst [vmem:[%s261 + $0x10] sm:$0xf] %v1138
      %1203 = vst [vmem:[%s261 + $0x14] sm:$0xf] %v1139
      %1204 = vst [vmem:[%s261 + $0x18] sm:$0xf] %v1140
      %1205 = vst [vmem:[%s261 + $0x1c] sm:$0xf] %v1141
      %1206 = vst [vmem:[%s261 + $0x20] sm:$0xf] %v1142
      %1207 = vst [vmem:[%s261 + $0x24] sm:$0xf] %v1143
      %1208 = vst [vmem:[%s261 + $0x28] sm:$0xf] %v1144
      %1209 = vst [vmem:[%s261 + $0x2c] sm:$0xf] %v1145
      %1210 = vst [vmem:[%s261 + $0x30] sm:$0xf] %v1146
      %1211 = vst [vmem:[%s261 + $0x34] sm:$0xf] %v1147
      %1212 = vst [vmem:[%s261 + $0x38] sm:$0xf] %v1148
      %1213 = vst [vmem:[%s261 + $0x3c] sm:$0xf] %v1149
      %1214 = vst [vmem:[%s261 + $0x40] sm:$0xf] %v1150
      %1215 = vst [vmem:[%s261 + $0x44] sm:$0xf] %v1151
      %1216 = vst [vmem:[%s261 + $0x48] sm:$0xf] %v1152
      %1217 = vst [vmem:[%s261 + $0x4c] sm:$0xf] %v1153
      %1218 = vst [vmem:[%s261 + $0x50] sm:$0xf] %v1154
      %1219 = vst [vmem:[%s261 + $0x54] sm:$0xf] %v1155
      %1220 = vst [vmem:[%s261 + $0x58] sm:$0xf] %v1156
      %1221 = vst [vmem:[%s261 + $0x5c] sm:$0xf] %v1157
      %1222 = vst [vmem:[%s261 + $0x60] sm:$0xf] %v1158
      %1223 = vst [vmem:[%s261 + $0x64] sm:$0xf] %v1159
      %1224 = vst [vmem:[%s261 + $0x68] sm:$0xf] %v1160
      %1225 = vst [vmem:[%s261 + $0x6c] sm:$0xf] %v1161
      %1226 = vst [vmem:[%s261 + $0x70] sm:$0xf] %v1162
      %1227 = vst [vmem:[%s261 + $0x74] sm:$0xf] %v1163
      %1228 = vst [vmem:[%s261 + $0x78] sm:$0xf] %v1164
      %1229 = vst [vmem:[%s261 + $0x7c] sm:$0xf] %v1165
      %v1230 = vpack.c.bf16 %v947, %v944
      %v1231 = vpack.c.bf16 %v955, %v952
      %v1232 = vpack.c.bf16 %v963, %v960
      %v1233 = vpack.c.bf16 %v971, %v968
      %v1234 = vpack.c.bf16 %v979, %v976
      %v1235 = vpack.c.bf16 %v987, %v984
      %v1236 = vpack.c.bf16 %v995, %v992
      %v1237 = vpack.c.bf16 %v1003, %v1000
      %v1238 = vpack.c.bf16 %v1011, %v1008
      %v1239 = vpack.c.bf16 %v1019, %v1016
      %v1240 = vpack.c.bf16 %v1027, %v1024
      %v1241 = vpack.c.bf16 %v1035, %v1032
      %v1242 = vpack.c.bf16 %v1043, %v1040
      %v1243 = vpack.c.bf16 %v1051, %v1048
      %v1244 = vpack.c.bf16 %v1059, %v1056
      %v1245 = vpack.c.bf16 %v1067, %v1064
      %v1262 = vunpack.c.l.b16 %v1230
      %v1263 = vunpack.c.h.b16 %v1230
      %v1264 = vunpack.c.l.b16 %v1231
      %v1265 = vunpack.c.h.b16 %v1231
      %v1266 = vunpack.c.l.b16 %v1232
      %v1267 = vunpack.c.h.b16 %v1232
      %v1268 = vunpack.c.l.b16 %v1233
      %v1269 = vunpack.c.h.b16 %v1233
      %v1270 = vunpack.c.l.b16 %v1234
      %v1271 = vunpack.c.h.b16 %v1234
      %v1272 = vunpack.c.l.b16 %v1235
      %v1273 = vunpack.c.h.b16 %v1235
      %v1274 = vunpack.c.l.b16 %v1236
      %v1275 = vunpack.c.h.b16 %v1236
      %v1276 = vunpack.c.l.b16 %v1237
      %v1277 = vunpack.c.h.b16 %v1237
      %v1278 = vunpack.c.l.b16 %v1238
      %v1279 = vunpack.c.h.b16 %v1238
      %v1280 = vunpack.c.l.b16 %v1239
      %v1281 = vunpack.c.h.b16 %v1239
      %v1282 = vunpack.c.l.b16 %v1240
      %v1283 = vunpack.c.h.b16 %v1240
      %v1284 = vunpack.c.l.b16 %v1241
      %v1285 = vunpack.c.h.b16 %v1241
      %v1286 = vunpack.c.l.b16 %v1242
      %v1287 = vunpack.c.h.b16 %v1242
      %v1288 = vunpack.c.l.b16 %v1243
      %v1289 = vunpack.c.h.b16 %v1243
      %v1290 = vunpack.c.l.b16 %v1244
      %v1291 = vunpack.c.h.b16 %v1244
      %v1292 = vunpack.c.l.b16 %v1245
      %v1293 = vunpack.c.h.b16 %v1245
      %v1294 = vpack.c.b16 %v1262, %v1262
      %v1295 = vpack.c.b16 %v1263, %v1263
      %v1296 = vpack.c.b16 %v1264, %v1264
      %v1297 = vpack.c.b16 %v1265, %v1265
      %v1298 = vpack.c.b16 %v1266, %v1266
      %v1299 = vpack.c.b16 %v1267, %v1267
      %v1300 = vpack.c.b16 %v1268, %v1268
      %v1301 = vpack.c.b16 %v1269, %v1269
      %v1302 = vpack.c.b16 %v1270, %v1270
      %v1303 = vpack.c.b16 %v1271, %v1271
      %v1304 = vpack.c.b16 %v1272, %v1272
      %v1305 = vpack.c.b16 %v1273, %v1273
      %v1306 = vpack.c.b16 %v1274, %v1274
      %v1307 = vpack.c.b16 %v1275, %v1275
      %v1308 = vpack.c.b16 %v1276, %v1276
      %v1309 = vpack.c.b16 %v1277, %v1277
      %v1310 = vpack.c.b16 %v1278, %v1278
      %v1311 = vpack.c.b16 %v1279, %v1279
      %v1312 = vpack.c.b16 %v1280, %v1280
      %v1313 = vpack.c.b16 %v1281, %v1281
      %v1314 = vpack.c.b16 %v1282, %v1282
      %v1315 = vpack.c.b16 %v1283, %v1283
      %v1316 = vpack.c.b16 %v1284, %v1284
      %v1317 = vpack.c.b16 %v1285, %v1285
      %v1318 = vpack.c.b16 %v1286, %v1286
      %v1319 = vpack.c.b16 %v1287, %v1287
      %v1320 = vpack.c.b16 %v1288, %v1288
      %v1321 = vpack.c.b16 %v1289, %v1289
      %v1322 = vpack.c.b16 %v1290, %v1290
      %v1323 = vpack.c.b16 %v1291, %v1291
      %v1324 = vpack.c.b16 %v1292, %v1292
      %v1325 = vpack.c.b16 %v1293, %v1293
      %1358 = vst [vmem:[%s267] sm:$0xf] %v1294
      %1359 = vst [vmem:[%s267 + $0x4] sm:$0xf] %v1295
      %1360 = vst [vmem:[%s267 + $0x8] sm:$0xf] %v1296
      %1361 = vst [vmem:[%s267 + $0xc] sm:$0xf] %v1297
      %1362 = vst [vmem:[%s267 + $0x10] sm:$0xf] %v1298
      %1363 = vst [vmem:[%s267 + $0x14] sm:$0xf] %v1299
      %1364 = vst [vmem:[%s267 + $0x18] sm:$0xf] %v1300
      %1365 = vst [vmem:[%s267 + $0x1c] sm:$0xf] %v1301
      %1366 = vst [vmem:[%s267 + $0x20] sm:$0xf] %v1302
      %1367 = vst [vmem:[%s267 + $0x24] sm:$0xf] %v1303
      %1368 = vst [vmem:[%s267 + $0x28] sm:$0xf] %v1304
      %1369 = vst [vmem:[%s267 + $0x2c] sm:$0xf] %v1305
      %1370 = vst [vmem:[%s267 + $0x30] sm:$0xf] %v1306
      %1371 = vst [vmem:[%s267 + $0x34] sm:$0xf] %v1307
      %1372 = vst [vmem:[%s267 + $0x38] sm:$0xf] %v1308
      %1373 = vst [vmem:[%s267 + $0x3c] sm:$0xf] %v1309
      %1374 = vst [vmem:[%s267 + $0x40] sm:$0xf] %v1310
      %1375 = vst [vmem:[%s267 + $0x44] sm:$0xf] %v1311
      %1376 = vst [vmem:[%s267 + $0x48] sm:$0xf] %v1312
      %1377 = vst [vmem:[%s267 + $0x4c] sm:$0xf] %v1313
      %1378 = vst [vmem:[%s267 + $0x50] sm:$0xf] %v1314
      %1379 = vst [vmem:[%s267 + $0x54] sm:$0xf] %v1315
      %1380 = vst [vmem:[%s267 + $0x58] sm:$0xf] %v1316
      %1381 = vst [vmem:[%s267 + $0x5c] sm:$0xf] %v1317
      %1382 = vst [vmem:[%s267 + $0x60] sm:$0xf] %v1318
      %1383 = vst [vmem:[%s267 + $0x64] sm:$0xf] %v1319
      %1384 = vst [vmem:[%s267 + $0x68] sm:$0xf] %v1320
      %1385 = vst [vmem:[%s267 + $0x6c] sm:$0xf] %v1321
      %1386 = vst [vmem:[%s267 + $0x70] sm:$0xf] %v1322
      %1387 = vst [vmem:[%s267 + $0x74] sm:$0xf] %v1323
      %1388 = vst [vmem:[%s267 + $0x78] sm:$0xf] %v1324
      %1389 = vst [vmem:[%s267 + $0x7c] sm:$0xf] %v1325
      %s1390 = smul.u32 32, %s18
      %p1391 = scmp.lt.s32.totalorder %s1390, 63
      %s1392 = scalar_select %p1391, %s1390, 63
      %s1393 = smul.addr %s1392, 4
      %s1394 = scalar_lea.vmem %s5, %s1393
      %s1395 = smul.u32 32, %s18
      %p1396 = scmp.lt.s32.totalorder %s1395, 63
      %s1397 = scalar_select %p1396, %s1395, 63
      %s1398 = smul.addr %s1397, 4
      %s1399 = scalar_lea.vmem %s6, %s1398
      // Predicated region
      $region41: #{bottleneck_csp_forward.3} parent=39 // pred_check
        %p1400 = pneg %p146
      $region42: #{bottleneck_csp_forward.3} parent=39 // pred_check_branch
        %1402 = sbr.rel (%p1400) target = $region44
      $region43: #{bottleneck_csp_forward.3} parent=39 // pred_region
        %s1403 = smul.u32 32, %s18
      $region44: #{bottleneck_csp_forward.3} parent=39 // pred_fallthru
        _
      // Predicated region
      $region45: #{bottleneck_csp_forward.3} parent=39 // pred_check
        %p1404 = pneg %p172
      $region46: #{bottleneck_csp_forward.3} parent=39 // pred_check_branch
        %1406 = sbr.rel (%p1404) target = $region48
      $region47: #{bottleneck_csp_forward.3} parent=39 // pred_region
        %s1407 = smul.u32 32, %s18
      $region48: #{bottleneck_csp_forward.3} parent=39 // pred_fallthru
        _
    $region40: #{bottleneck_csp_forward.3} parent=5 // pred_fallthru
      _
    %p1408 = scmp.le.s32.totalorder 2, %s13
    // Predicated region
    $region49: #{bottleneck_csp_forward.3} parent=5 // pred_check
      %p1409 = pneg %p1408
    $region50: #{bottleneck_csp_forward.3} parent=5 // pred_check_branch
      %1411 = sbr.rel (%p1409) target = $region52
    $region51: #{bottleneck_csp_forward.3} parent=5 // pred_region
      %s1412 = ssub.s32 %s13, 2
      // Predicated region
      $region53: #{bottleneck_csp_forward.3} parent=51 // pred_check
        %p1413 = pneg %p152
      $region54: #{bottleneck_csp_forward.3} parent=51 // pred_check_branch
        %1415 = sbr.rel (%p1413) target = $region56
      $region55: #{bottleneck_csp_forward.3} parent=51 // pred_region
        %s1416 = smul.u32 32, %s19
        %p1417 = scmp.lt.s32.totalorder %s1416, 63
        %s1418 = scalar_select %p1417, %s1416, 63
        %s1419 = smul.addr %s1418, 4
        %s1420 = scalar_lea.vmem %s5, %s1419
      $region56: #{bottleneck_csp_forward.3} parent=51 // pred_fallthru
        _
      // Predicated region
      $region57: #{bottleneck_csp_forward.3} parent=51 // pred_check
        %p1421 = pneg %p178
      $region58: #{bottleneck_csp_forward.3} parent=51 // pred_check_branch
        %1423 = sbr.rel (%p1421) target = $region60
      $region59: #{bottleneck_csp_forward.3} parent=51 // pred_region
        %s1424 = smul.u32 32, %s19
        %p1425 = scmp.lt.s32.totalorder %s1424, 63
        %s1426 = scalar_select %p1425, %s1424, 63
        %s1427 = smul.addr %s1426, 4
        %s1428 = scalar_lea.vmem %s6, %s1427
      $region60: #{bottleneck_csp_forward.3} parent=51 // pred_fallthru
        _
    $region52: #{bottleneck_csp_forward.3} parent=5 // pred_fallthru
      _
  $region6: #{bottleneck_csp_forward.3} parent=0 // loop_footer
    %s17 = sadd.s32 1, %s13
  $region7: #{bottleneck_csp_forward.3} parent=0 // loop_footer_branch
    %12 = sbr.rel target = $region3
  $region8: #{bottleneck_csp_forward.3} parent=0 // loop_exit
    _

// kernel: bottleneck_csp_forward.5
$region0: #{bottleneck_csp_forward.5}
  #allocation0 [shape = 'u32[]', space=smem, size = 0x4, offset = 0x4, fixed_abs, tag = 'smem constant byte address 0x4 - core index']
  #allocation1 [shape = 'u32[144,128]{1,0:T(1,128)}', space=vmem, size = 0x12000, scoped, tag = 'internal scratch']
  %s0 = inlined_call_operand.vmem [shape: bf16[512,128], index: 0, kind: input, shape index: {}]
  %s1 = inlined_call_operand.vmem [shape: bf16[512,128], index: 1, kind: input, shape index: {}]
  %s2 = inlined_call_operand.vmem [shape: bf16[128,128], index: 2, kind: input, shape index: {}]
  %s3 = inlined_call_operand.vmem [shape: f32[1,128], index: 3, kind: input, shape index: {}]
  %s4 = inlined_call_operand.vmem [shape: f32[1,128], index: 4, kind: input, shape index: {}]
  %s5 = inlined_call_operand.vmem [shape: f32[1,128], index: 5, kind: input, shape index: {}]
  %s6 = inlined_call_operand.vmem [shape: f32[1,128], index: 6, kind: input, shape index: {}]
  %s7 = inlined_call_operand.vmem [shape: bf16[128,128], index: 7, kind: input, shape index: {}]
  %s8 = inlined_call_operand.vmem [shape: bf16[128,128], index: 8, kind: input, shape index: {}]
  %s9 = inlined_call_operand.vmem [shape: f32[1,128], index: 9, kind: input, shape index: {}]
  %s10 = inlined_call_operand.vmem [shape: f32[1,128], index: 10, kind: input, shape index: {}]
  %s11 = inlined_call_operand.vmem [shape: f32[512,128], index: 11, kind: output, shape index: {}]
  %s12 = sld [smem:[#allocation0]]
  $region77: #{bottleneck_csp_forward.5} parent=0
    _
  %s14 = ssub.s32 1, %s12
  %s15 = scalar_select 0, %s14, %s12
  loop: start=0, step=1, limit=4
  $region2: #{bottleneck_csp_forward.5} parent=0 // loop_pre_header
    _
  $region3: #{bottleneck_csp_forward.5} parent=0 // loop_header
    %s17 = sphi 0, %s21
    %p18 = scmp.ge.s32.totalorder %s17, 4
    %s27 = sphi 0, %s29
    %s30 = sphi 0, %s27
    %s31 = sphi 0, %s30
    %s47 = sphi 0, %s31
    %s53 = sphi 0, %s55
    %s56 = sphi 0, %s53
    %s57 = sphi 0, %s56
    %s73 = sphi 0, %s57
    %s77 = sphi 0, %s77
    %s79 = sphi 0, %s77
    %s80 = sphi 0, %s79
    %s94 = sphi 0, %s80
    %s98 = sphi 0, %s98
    %s100 = sphi 0, %s98
    %s101 = sphi 0, %s100
    %s115 = sphi 0, %s101
    %s119 = sphi 0, %s119
    %s121 = sphi 0, %s119
    %s122 = sphi 0, %s121
    %s136 = sphi 0, %s122
    %s140 = sphi 0, %s140
    %s142 = sphi 0, %s140
    %s143 = sphi 0, %s142
    %s157 = sphi 0, %s143
    %s161 = sphi 0, %s161
    %s163 = sphi 0, %s161
    %s164 = sphi 0, %s163
    %s178 = sphi 0, %s164
    %s182 = sphi 0, %s182
    %s184 = sphi 0, %s182
    %s185 = sphi 0, %s184
    %s199 = sphi 0, %s185
    %s203 = sphi 0, %s203
    %s205 = sphi 0, %s203
    %s206 = sphi 0, %s205
    %s220 = sphi 0, %s206
    %s224 = sphi 0, %s224
    %s226 = sphi 0, %s224
    %s227 = sphi 0, %s226
    %s241 = sphi 0, %s227
    %s245 = sphi 0, %s245
    %s247 = sphi 0, %s245
    %s248 = sphi 0, %s247
    %s262 = sphi 0, %s248
    %s268 = sphi 0, %s270
    %s271 = sphi 0, %s268
    %s272 = sphi 0, %s271
    %s288 = sphi 0, %s272
  $region4: #{bottleneck_csp_forward.5} parent=0 // loop_header_branch
    %20 = sbr.rel (%p18) target = $region8
  $region5: #{bottleneck_csp_forward.5} parent=0 // loop_body
    %s22 = ssub.s32 %s17, 1
    %s23 = ssub.s32 %s17, 2
    %s24 = sadd.s32 %s17, 1
    %s25 = ssub.s32 %s17, %s24
    %p26 = scmp.eq.s32.totalorder %s25, 0
    %s28 = sadd.s32 %s27, 1
    %s29 = scalar_select %p26, %s27, %s28
    %p32 = pneg %p26
    %p33 = scmp.eq.s32.totalorder %s17, 1
    %p34 = por %p32, %p33
    %p35 = scmp.ne.s32.totalorder %s27, %s30
    %p36 = scmp.eq.s32.totalorder %s17, 0
    %p37 = por %p35, %p36
    %p38 = scmp.ne.s32.totalorder %s27, %s30
    %p39 = scmp.eq.s32.totalorder %s22, 1
    %p40 = por %p38, %p39
    %p41 = scmp.ne.s32.totalorder %s30, %s31
    %p42 = scmp.eq.s32.totalorder %s22, 0
    %p43 = por %p41, %p42
    %p44 = scmp.ne.s32.totalorder %s30, %s31
    %p45 = scmp.eq.s32.totalorder %s23, 1
    %p46 = por %p44, %p45
    %p48 = scmp.ne.s32.totalorder %s31, %s47
    %p49 = scmp.eq.s32.totalorder %s23, 0
    %p50 = por %p48, %p49
    %s51 = ssub.s32 %s17, %s24
    %p52 = scmp.eq.s32.totalorder %s51, 0
    %s54 = sadd.s32 %s53, 1
    %s55 = scalar_select %p52, %s53, %s54
    %p58 = pneg %p52
    %p59 = scmp.eq.s32.totalorder %s17, 1
    %p60 = por %p58, %p59
    %p61 = scmp.ne.s32.totalorder %s53, %s56
    %p62 = scmp.eq.s32.totalorder %s17, 0
    %p63 = por %p61, %p62
    %p64 = scmp.ne.s32.totalorder %s53, %s56
    %p65 = scmp.eq.s32.totalorder %s22, 1
    %p66 = por %p64, %p65
    %p67 = scmp.ne.s32.totalorder %s56, %s57
    %p68 = scmp.eq.s32.totalorder %s22, 0
    %p69 = por %p67, %p68
    %p70 = scmp.ne.s32.totalorder %s56, %s57
    %p71 = scmp.eq.s32.totalorder %s23, 1
    %p72 = por %p70, %p71
    %p74 = scmp.ne.s32.totalorder %s57, %s73
    %p75 = scmp.eq.s32.totalorder %s23, 0
    %p76 = por %p74, %p75
    %s78 = sadd.s32 %s77, 1
    %p81 = scmp.eq.s32.totalorder %s17, 1
    %p82 = scmp.ne.s32.totalorder %s77, %s79
    %p83 = scmp.eq.s32.totalorder %s17, 0
    %p84 = por %p82, %p83
    %p85 = scmp.ne.s32.totalorder %s77, %s79
    %p86 = scmp.eq.s32.totalorder %s22, 1
    %p87 = por %p85, %p86
    %p88 = scmp.ne.s32.totalorder %s79, %s80
    %p89 = scmp.eq.s32.totalorder %s22, 0
    %p90 = por %p88, %p89
    %p91 = scmp.ne.s32.totalorder %s79, %s80
    %p92 = scmp.eq.s32.totalorder %s23, 1
    %p93 = por %p91, %p92
    %p95 = scmp.ne.s32.totalorder %s80, %s94
    %p96 = scmp.eq.s32.totalorder %s23, 0
    %p97 = por %p95, %p96
    %s99 = sadd.s32 %s98, 1
    %p102 = scmp.eq.s32.totalorder %s17, 1
    %p103 = scmp.ne.s32.totalorder %s98, %s100
    %p104 = scmp.eq.s32.totalorder %s17, 0
    %p105 = por %p103, %p104
    %p106 = scmp.ne.s32.totalorder %s98, %s100
    %p107 = scmp.eq.s32.totalorder %s22, 1
    %p108 = por %p106, %p107
    %p109 = scmp.ne.s32.totalorder %s100, %s101
    %p110 = scmp.eq.s32.totalorder %s22, 0
    %p111 = por %p109, %p110
    %p112 = scmp.ne.s32.totalorder %s100, %s101
    %p113 = scmp.eq.s32.totalorder %s23, 1
    %p114 = por %p112, %p113
    %p116 = scmp.ne.s32.totalorder %s101, %s115
    %p117 = scmp.eq.s32.totalorder %s23, 0
    %p118 = por %p116, %p117
    %s120 = sadd.s32 %s119, 1
    %p123 = scmp.eq.s32.totalorder %s17, 1
    %p124 = scmp.ne.s32.totalorder %s119, %s121
    %p125 = scmp.eq.s32.totalorder %s17, 0
    %p126 = por %p124, %p125
    %p127 = scmp.ne.s32.totalorder %s119, %s121
    %p128 = scmp.eq.s32.totalorder %s22, 1
    %p129 = por %p127, %p128
    %p130 = scmp.ne.s32.totalorder %s121, %s122
    %p131 = scmp.eq.s32.totalorder %s22, 0
    %p132 = por %p130, %p131
    %p133 = scmp.ne.s32.totalorder %s121, %s122
    %p134 = scmp.eq.s32.totalorder %s23, 1
    %p135 = por %p133, %p134
    %p137 = scmp.ne.s32.totalorder %s122, %s136
    %p138 = scmp.eq.s32.totalorder %s23, 0
    %p139 = por %p137, %p138
    %s141 = sadd.s32 %s140, 1
    %p144 = scmp.eq.s32.totalorder %s17, 1
    %p145 = scmp.ne.s32.totalorder %s140, %s142
    %p146 = scmp.eq.s32.totalorder %s17, 0
    %p147 = por %p145, %p146
    %p148 = scmp.ne.s32.totalorder %s140, %s142
    %p149 = scmp.eq.s32.totalorder %s22, 1
    %p150 = por %p148, %p149
    %p151 = scmp.ne.s32.totalorder %s142, %s143
    %p152 = scmp.eq.s32.totalorder %s22, 0
    %p153 = por %p151, %p152
    %p154 = scmp.ne.s32.totalorder %s142, %s143
    %p155 = scmp.eq.s32.totalorder %s23, 1
    %p156 = por %p154, %p155
    %p158 = scmp.ne.s32.totalorder %s143, %s157
    %p159 = scmp.eq.s32.totalorder %s23, 0
    %p160 = por %p158, %p159
    %s162 = sadd.s32 %s161, 1
    %p165 = scmp.eq.s32.totalorder %s17, 1
    %p166 = scmp.ne.s32.totalorder %s161, %s163
    %p167 = scmp.eq.s32.totalorder %s17, 0
    %p168 = por %p166, %p167
    %p169 = scmp.ne.s32.totalorder %s161, %s163
    %p170 = scmp.eq.s32.totalorder %s22, 1
    %p171 = por %p169, %p170
    %p172 = scmp.ne.s32.totalorder %s163, %s164
    %p173 = scmp.eq.s32.totalorder %s22, 0
    %p174 = por %p172, %p173
    %p175 = scmp.ne.s32.totalorder %s163, %s164
    %p176 = scmp.eq.s32.totalorder %s23, 1
    %p177 = por %p175, %p176
    %p179 = scmp.ne.s32.totalorder %s164, %s178
    %p180 = scmp.eq.s32.totalorder %s23, 0
    %p181 = por %p179, %p180
    %s183 = sadd.s32 %s182, 1
    %p186 = scmp.eq.s32.totalorder %s17, 1
    %p187 = scmp.ne.s32.totalorder %s182, %s184
    %p188 = scmp.eq.s32.totalorder %s17, 0
    %p189 = por %p187, %p188
    %p190 = scmp.ne.s32.totalorder %s182, %s184
    %p191 = scmp.eq.s32.totalorder %s22, 1
    %p192 = por %p190, %p191
    %p193 = scmp.ne.s32.totalorder %s184, %s185
    %p194 = scmp.eq.s32.totalorder %s22, 0
    %p195 = por %p193, %p194
    %p196 = scmp.ne.s32.totalorder %s184, %s185
    %p197 = scmp.eq.s32.totalorder %s23, 1
    %p198 = por %p196, %p197
    %p200 = scmp.ne.s32.totalorder %s185, %s199
    %p201 = scmp.eq.s32.totalorder %s23, 0
    %p202 = por %p200, %p201
    %s204 = sadd.s32 %s203, 1
    %p207 = scmp.eq.s32.totalorder %s17, 1
    %p208 = scmp.ne.s32.totalorder %s203, %s205
    %p209 = scmp.eq.s32.totalorder %s17, 0
    %p210 = por %p208, %p209
    %p211 = scmp.ne.s32.totalorder %s203, %s205
    %p212 = scmp.eq.s32.totalorder %s22, 1
    %p213 = por %p211, %p212
    %p214 = scmp.ne.s32.totalorder %s205, %s206
    %p215 = scmp.eq.s32.totalorder %s22, 0
    %p216 = por %p214, %p215
    %p217 = scmp.ne.s32.totalorder %s205, %s206
    %p218 = scmp.eq.s32.totalorder %s23, 1
    %p219 = por %p217, %p218
    %p221 = scmp.ne.s32.totalorder %s206, %s220
    %p222 = scmp.eq.s32.totalorder %s23, 0
    %p223 = por %p221, %p222
    %s225 = sadd.s32 %s224, 1
    %p228 = scmp.eq.s32.totalorder %s17, 1
    %p229 = scmp.ne.s32.totalorder %s224, %s226
    %p230 = scmp.eq.s32.totalorder %s17, 0
    %p231 = por %p229, %p230
    %p232 = scmp.ne.s32.totalorder %s224, %s226
    %p233 = scmp.eq.s32.totalorder %s22, 1
    %p234 = por %p232, %p233
    %p235 = scmp.ne.s32.totalorder %s226, %s227
    %p236 = scmp.eq.s32.totalorder %s22, 0
    %p237 = por %p235, %p236
    %p238 = scmp.ne.s32.totalorder %s226, %s227
    %p239 = scmp.eq.s32.totalorder %s23, 1
    %p240 = por %p238, %p239
    %p242 = scmp.ne.s32.totalorder %s227, %s241
    %p243 = scmp.eq.s32.totalorder %s23, 0
    %p244 = por %p242, %p243
    %s246 = sadd.s32 %s245, 1
    %p249 = scmp.eq.s32.totalorder %s17, 1
    %p250 = scmp.ne.s32.totalorder %s245, %s247
    %p251 = scmp.eq.s32.totalorder %s17, 0
    %p252 = por %p250, %p251
    %p253 = scmp.ne.s32.totalorder %s245, %s247
    %p254 = scmp.eq.s32.totalorder %s22, 1
    %p255 = por %p253, %p254
    %p256 = scmp.ne.s32.totalorder %s247, %s248
    %p257 = scmp.eq.s32.totalorder %s22, 0
    %p258 = por %p256, %p257
    %p259 = scmp.ne.s32.totalorder %s247, %s248
    %p260 = scmp.eq.s32.totalorder %s23, 1
    %p261 = por %p259, %p260
    %p263 = scmp.ne.s32.totalorder %s248, %s262
    %p264 = scmp.eq.s32.totalorder %s23, 0
    %p265 = por %p263, %p264
    %s266 = ssub.s32 %s17, %s24
    %p267 = scmp.eq.s32.totalorder %s266, 0
    %s269 = sadd.s32 %s268, 1
    %s270 = scalar_select %p267, %s268, %s269
    %p273 = pneg %p267
    %p274 = scmp.eq.s32.totalorder %s17, 1
    %p275 = por %p273, %p274
    %p276 = scmp.ne.s32.totalorder %s268, %s271
    %p277 = scmp.eq.s32.totalorder %s17, 0
    %p278 = por %p276, %p277
    %p279 = scmp.ne.s32.totalorder %s268, %s271
    %p280 = scmp.eq.s32.totalorder %s22, 1
    %p281 = por %p279, %p280
    %p282 = scmp.ne.s32.totalorder %s271, %s272
    %p283 = scmp.eq.s32.totalorder %s22, 0
    %p284 = por %p282, %p283
    %p285 = scmp.ne.s32.totalorder %s271, %s272
    %p286 = scmp.eq.s32.totalorder %s23, 1
    %p287 = por %p285, %p286
    %p289 = scmp.ne.s32.totalorder %s272, %s288
    %p290 = scmp.eq.s32.totalorder %s23, 0
    %p291 = por %p289, %p290
    %p292 = scmp.le.s32.totalorder 1, %s17
    %p293 = scmp.lt.s32.totalorder %s17, 3
    %p294 = pnand %p292, %p293
    %p295 = pneg %p294
    // Predicated region
    $region9: #{bottleneck_csp_forward.5} parent=5 // pred_check
      _
    $region10: #{bottleneck_csp_forward.5} parent=5 // pred_check_branch
      %297 = sbr.rel (%p294) target = $region12
    $region11: #{bottleneck_csp_forward.5} parent=5 // pred_region
      %s298 = ssub.s32 %s17, 1
      // Predicated region
      $region13: #{bottleneck_csp_forward.5} parent=11 // pred_check
        %p299 = pneg %p90
      $region14: #{bottleneck_csp_forward.5} parent=11 // pred_check_branch
        %301 = sbr.rel (%p299) target = $region16
      $region15: #{bottleneck_csp_forward.5} parent=11 // pred_region
        _
      $region16: #{bottleneck_csp_forward.5} parent=11 // pred_fallthru
        _
      // Predicated region
      $region17: #{bottleneck_csp_forward.5} parent=11 // pred_check
        %p302 = pneg %p111
      $region18: #{bottleneck_csp_forward.5} parent=11 // pred_check_branch
        %304 = sbr.rel (%p302) target = $region20
      $region19: #{bottleneck_csp_forward.5} parent=11 // pred_region
        _
      $region20: #{bottleneck_csp_forward.5} parent=11 // pred_fallthru
        _
      // Predicated region
      $region21: #{bottleneck_csp_forward.5} parent=11 // pred_check
        %p305 = pneg %p132
      $region22: #{bottleneck_csp_forward.5} parent=11 // pred_check_branch
        %307 = sbr.rel (%p305) target = $region24
      $region23: #{bottleneck_csp_forward.5} parent=11 // pred_region
        _
      $region24: #{bottleneck_csp_forward.5} parent=11 // pred_fallthru
        _
      // Predicated region
      $region25: #{bottleneck_csp_forward.5} parent=11 // pred_check
        %p308 = pneg %p153
      $region26: #{bottleneck_csp_forward.5} parent=11 // pred_check_branch
        %310 = sbr.rel (%p308) target = $region28
      $region27: #{bottleneck_csp_forward.5} parent=11 // pred_region
        _
      $region28: #{bottleneck_csp_forward.5} parent=11 // pred_fallthru
        _
      // Predicated region
      $region29: #{bottleneck_csp_forward.5} parent=11 // pred_check
        %p311 = pneg %p174
      $region30: #{bottleneck_csp_forward.5} parent=11 // pred_check_branch
        %313 = sbr.rel (%p311) target = $region32
      $region31: #{bottleneck_csp_forward.5} parent=11 // pred_region
        _
      $region32: #{bottleneck_csp_forward.5} parent=11 // pred_fallthru
        _
      // Predicated region
      $region33: #{bottleneck_csp_forward.5} parent=11 // pred_check
        %p314 = pneg %p195
      $region34: #{bottleneck_csp_forward.5} parent=11 // pred_check_branch
        %316 = sbr.rel (%p314) target = $region36
      $region35: #{bottleneck_csp_forward.5} parent=11 // pred_region
        _
      $region36: #{bottleneck_csp_forward.5} parent=11 // pred_fallthru
        _
      // Predicated region
      $region37: #{bottleneck_csp_forward.5} parent=11 // pred_check
        %p317 = pneg %p216
      $region38: #{bottleneck_csp_forward.5} parent=11 // pred_check_branch
        %319 = sbr.rel (%p317) target = $region40
      $region39: #{bottleneck_csp_forward.5} parent=11 // pred_region
        _
      $region40: #{bottleneck_csp_forward.5} parent=11 // pred_fallthru
        _
      // Predicated region
      $region41: #{bottleneck_csp_forward.5} parent=11 // pred_check
        %p320 = pneg %p237
      $region42: #{bottleneck_csp_forward.5} parent=11 // pred_check_branch
        %322 = sbr.rel (%p320) target = $region44
      $region43: #{bottleneck_csp_forward.5} parent=11 // pred_region
        _
      $region44: #{bottleneck_csp_forward.5} parent=11 // pred_fallthru
        _
      // Predicated region
      $region45: #{bottleneck_csp_forward.5} parent=11 // pred_check
        %p323 = pneg %p258
      $region46: #{bottleneck_csp_forward.5} parent=11 // pred_check_branch
        %325 = sbr.rel (%p323) target = $region48
      $region47: #{bottleneck_csp_forward.5} parent=11 // pred_region
        _
      $region48: #{bottleneck_csp_forward.5} parent=11 // pred_fallthru
        _
    $region12: #{bottleneck_csp_forward.5} parent=5 // pred_fallthru
      _
    %p326 = scmp.lt.s32.totalorder %s17, 2
    // Predicated region
    $region49: #{bottleneck_csp_forward.5} parent=5 // pred_check
      %p327 = pneg %p326
    $region50: #{bottleneck_csp_forward.5} parent=5 // pred_check_branch
      %329 = sbr.rel (%p327) target = $region52
    $region51: #{bottleneck_csp_forward.5} parent=5 // pred_region
      // Predicated region
      $region53: #{bottleneck_csp_forward.5} parent=51 // pred_check
        %p330 = pneg %p37
      $region54: #{bottleneck_csp_forward.5} parent=51 // pred_check_branch
        %332 = sbr.rel (%p330) target = $region56
      $region55: #{bottleneck_csp_forward.5} parent=51 // pred_region
        %s333 = smul.u32 32, %s17
        %p334 = scmp.lt.s32.totalorder %s333, 63
        %s335 = scalar_select %p334, %s333, 63
        %s336 = smul.addr %s335, 4
        %s337 = scalar_lea.vmem %s0, %s336
        %s338 = smul.u32 32, %s17
      $region56: #{bottleneck_csp_forward.5} parent=51 // pred_fallthru
        _
      // Predicated region
      $region57: #{bottleneck_csp_forward.5} parent=51 // pred_check
        %p339 = pneg %p63
      $region58: #{bottleneck_csp_forward.5} parent=51 // pred_check_branch
        %341 = sbr.rel (%p339) target = $region60
      $region59: #{bottleneck_csp_forward.5} parent=51 // pred_region
        %s342 = smul.u32 32, %s17
        %p343 = scmp.lt.s32.totalorder %s342, 63
        %s344 = scalar_select %p343, %s342, 63
        %s345 = smul.addr %s344, 4
        %s346 = scalar_lea.vmem %s1, %s345
        %s347 = smul.u32 32, %s17
      $region60: #{bottleneck_csp_forward.5} parent=51 // pred_fallthru
        _
    $region52: #{bottleneck_csp_forward.5} parent=5 // pred_fallthru
      _
    %p348 = scmp.le.s32.totalorder 1, %s17
    %p349 = scmp.lt.s32.totalorder %s17, 3
    %p350 = pnand %p348, %p349
    %p351 = pneg %p350
    // Predicated region
    $region61: #{bottleneck_csp_forward.5} parent=5 // pred_check
      _
    $region62: #{bottleneck_csp_forward.5} parent=5 // pred_check_branch
      %353 = sbr.rel (%p350) target = $region64
    $region63: #{bottleneck_csp_forward.5} parent=5 // pred_region
      %s354 = ssub.s32 %s17, 1
      %s355 = smul.u32 32, %s22
      %p356 = scmp.lt.s32.totalorder %s355, 63
      %s357 = scalar_select %p356, %s355, 63
      %s358 = smul.addr %s357, 4
      %s359 = scalar_lea.vmem %s0, %s358
      %p360 = pneg %p43
      %p361 = pneg %p40
      %s362 = smul.u32 32, %s22
      %p363 = scmp.lt.s32.totalorder %s362, 63
      %s364 = scalar_select %p363, %s362, 63
      %s365 = smul.addr %s364, 4
      %s366 = scalar_lea.vmem %s1, %s365
      %p367 = pneg %p69
      %p368 = pneg %p66
      %p369 = pneg %p90
      %p370 = pneg %p87
      %p371 = pneg %p111
      %p372 = pneg %p108
      %p373 = pneg %p132
      %p374 = pneg %p129
      %p375 = pneg %p153
      %p376 = pneg %p150
      %p377 = pneg %p174
      %p378 = pneg %p171
      %p379 = pneg %p195
      %p380 = pneg %p192
      %p381 = pneg %p216
      %p382 = pneg %p213
      %p383 = pneg %p237
      %p384 = pneg %p234
      %p385 = pneg %p258
      %p386 = pneg %p255
      %p387 = pneg %p284
      %p388 = pneg %p281
      %s389 = smul.u32 32, %s22
      %p390 = scmp.lt.s32.totalorder %s389, 63
      %s391 = scalar_select %p390, %s389, 63
      %s392 = smul.addr %s391, 8
      %s393 = scalar_lea.vmem %s11, %s392
      %s394 = smul.u32 32, %s22
      %p395 = scmp.lt.s32.totalorder %s394, 63
      %s396 = scalar_select %p395, %s394, 63
      %s397 = smul.addr %s396, 4
      %s398 = scalar_lea.vmem %s0, %s397
      %s399 = smul.u32 32, %s22
      %s400 = smul.u32 32, %s22
      %p401 = scmp.lt.s32.totalorder %s400, 63
      %s402 = scalar_select %p401, %s400, 63
      %s403 = smul.addr %s402, 4
      %s404 = scalar_lea.vmem %s1, %s403
      %s405 = smul.u32 32, %s22
      %s406 = smul.u32 32, %s22
      %p407 = scmp.lt.s32.totalorder %s406, 63
      %s408 = scalar_select %p407, %s406, 63
      %s409 = smul.addr %s408, 8
      %s410 = scalar_lea.vmem %s11, %s409
      %s411 = smul.u32 32, %s22
      %v413 = vld [vmem:[%s398] sm:$0xf]
      %v414 = vld [vmem:[%s398 + $0x4] sm:$0xf]
      %v415 = vld [vmem:[%s398 + $0x8] sm:$0xf]
      %v416 = vld [vmem:[%s398 + $0xc] sm:$0xf]
      %v417 = vld [vmem:[%s398 + $0x10] sm:$0xf]
      %v418 = vld [vmem:[%s398 + $0x14] sm:$0xf]
      %v419 = vld [vmem:[%s398 + $0x18] sm:$0xf]
      %v420 = vld [vmem:[%s398 + $0x1c] sm:$0xf]
      %v421 = vld [vmem:[%s398 + $0x20] sm:$0xf]
      %v422 = vld [vmem:[%s398 + $0x24] sm:$0xf]
      %v423 = vld [vmem:[%s398 + $0x28] sm:$0xf]
      %v424 = vld [vmem:[%s398 + $0x2c] sm:$0xf]
      %v425 = vld [vmem:[%s398 + $0x30] sm:$0xf]
      %v426 = vld [vmem:[%s398 + $0x34] sm:$0xf]
      %v427 = vld [vmem:[%s398 + $0x38] sm:$0xf]
      %v428 = vld [vmem:[%s398 + $0x3c] sm:$0xf]
      %v429 = vld [vmem:[%s398 + $0x40] sm:$0xf]
      %v430 = vld [vmem:[%s398 + $0x44] sm:$0xf]
      %v431 = vld [vmem:[%s398 + $0x48] sm:$0xf]
      %v432 = vld [vmem:[%s398 + $0x4c] sm:$0xf]
      %v433 = vld [vmem:[%s398 + $0x50] sm:$0xf]
      %v434 = vld [vmem:[%s398 + $0x54] sm:$0xf]
      %v435 = vld [vmem:[%s398 + $0x58] sm:$0xf]
      %v436 = vld [vmem:[%s398 + $0x5c] sm:$0xf]
      %v437 = vld [vmem:[%s398 + $0x60] sm:$0xf]
      %v438 = vld [vmem:[%s398 + $0x64] sm:$0xf]
      %v439 = vld [vmem:[%s398 + $0x68] sm:$0xf]
      %v440 = vld [vmem:[%s398 + $0x6c] sm:$0xf]
      %v441 = vld [vmem:[%s398 + $0x70] sm:$0xf]
      %v442 = vld [vmem:[%s398 + $0x74] sm:$0xf]
      %v443 = vld [vmem:[%s398 + $0x78] sm:$0xf]
      %v444 = vld [vmem:[%s398 + $0x7c] sm:$0xf]
      %v445 = vld [vmem:[%s2] sm:$0xf]
      %v446 = vld [vmem:[%s2 + $0x4] sm:$0xf]
      %v447 = vld [vmem:[%s2 + $0x8] sm:$0xf]
      %v448 = vld [vmem:[%s2 + $0xc] sm:$0xf]
      %v449 = vld [vmem:[%s2 + $0x10] sm:$0xf]
      %v450 = vld [vmem:[%s2 + $0x14] sm:$0xf]
      %v451 = vld [vmem:[%s2 + $0x18] sm:$0xf]
      %v452 = vld [vmem:[%s2 + $0x1c] sm:$0xf]
      %v453 = vld [vmem:[%s2 + $0x20] sm:$0xf]
      %v454 = vld [vmem:[%s2 + $0x24] sm:$0xf]
      %v455 = vld [vmem:[%s2 + $0x28] sm:$0xf]
      %v456 = vld [vmem:[%s2 + $0x2c] sm:$0xf]
      %v457 = vld [vmem:[%s2 + $0x30] sm:$0xf]
      %v458 = vld [vmem:[%s2 + $0x34] sm:$0xf]
      %v459 = vld [vmem:[%s2 + $0x38] sm:$0xf]
      %v460 = vld [vmem:[%s2 + $0x3c] sm:$0xf]
      %v493 = vunpack.c.l.b16 %v413
      %v494 = vunpack.c.l.b16 %v414
      %v495 = vunpack.c.l.b16 %v415
      %v496 = vunpack.c.l.b16 %v416
      %v497 = vunpack.c.l.b16 %v417
      %v498 = vunpack.c.l.b16 %v418
      %v499 = vunpack.c.l.b16 %v419
      %v500 = vunpack.c.l.b16 %v420
      %v501 = vunpack.c.l.b16 %v421
      %v502 = vunpack.c.l.b16 %v422
      %v503 = vunpack.c.l.b16 %v423
      %v504 = vunpack.c.l.b16 %v424
      %v505 = vunpack.c.l.b16 %v425
      %v506 = vunpack.c.l.b16 %v426
      %v507 = vunpack.c.l.b16 %v427
      %v508 = vunpack.c.l.b16 %v428
      %v509 = vunpack.c.l.b16 %v429
      %v510 = vunpack.c.l.b16 %v430
      %v511 = vunpack.c.l.b16 %v431
      %v512 = vunpack.c.l.b16 %v432
      %v513 = vunpack.c.l.b16 %v433
      %v514 = vunpack.c.l.b16 %v434
      %v515 = vunpack.c.l.b16 %v435
      %v516 = vunpack.c.l.b16 %v436
      %v517 = vunpack.c.l.b16 %v437
      %v518 = vunpack.c.l.b16 %v438
      %v519 = vunpack.c.l.b16 %v439
      %v520 = vunpack.c.l.b16 %v440
      %v521 = vunpack.c.l.b16 %v441
      %v522 = vunpack.c.l.b16 %v442
      %v523 = vunpack.c.l.b16 %v443
      %v524 = vunpack.c.l.b16 %v444
      %v525 = vpack.c.b16 %v494, %v493
      %v526 = vpack.c.b16 %v496, %v495
      %v527 = vpack.c.b16 %v498, %v497
      %v528 = vpack.c.b16 %v500, %v499
      %v529 = vpack.c.b16 %v502, %v501
      %v530 = vpack.c.b16 %v504, %v503
      %v531 = vpack.c.b16 %v506, %v505
      %v532 = vpack.c.b16 %v508, %v507
      %v533 = vpack.c.b16 %v510, %v509
      %v534 = vpack.c.b16 %v512, %v511
      %v535 = vpack.c.b16 %v514, %v513
      %v536 = vpack.c.b16 %v516, %v515
      %v537 = vpack.c.b16 %v518, %v517
      %v538 = vpack.c.b16 %v520, %v519
      %v539 = vpack.c.b16 %v522, %v521
      %v540 = vpack.c.b16 %v524, %v523
      %v573 = vunpack.c.l.b16 %v445
      %v574 = vunpack.c.l.b16 %v446
      %v575 = vunpack.c.l.b16 %v447
      %v576 = vunpack.c.l.b16 %v448
      %v577 = vunpack.c.l.b16 %v449
      %v578 = vunpack.c.l.b16 %v450
      %v579 = vunpack.c.l.b16 %v451
      %v580 = vunpack.c.l.b16 %v452
      %v581 = vunpack.c.l.b16 %v453
      %v582 = vunpack.c.l.b16 %v454
      %v583 = vunpack.c.l.b16 %v455
      %v584 = vunpack.c.l.b16 %v456
      %v585 = vunpack.c.l.b16 %v457
      %v586 = vunpack.c.l.b16 %v458
      %v587 = vunpack.c.l.b16 %v459
      %v588 = vunpack.c.l.b16 %v460
      %v589 = vpack.c.b16 %v574, %v573
      %v590 = vpack.c.b16 %v576, %v575
      %v591 = vpack.c.b16 %v578, %v577
      %v592 = vpack.c.b16 %v580, %v579
      %v593 = vpack.c.b16 %v582, %v581
      %v594 = vpack.c.b16 %v584, %v583
      %v595 = vpack.c.b16 %v586, %v585
      %v596 = vpack.c.b16 %v588, %v587
      %605 = vmatprep.subr.bf16.mxu0 0
      %606 = vmatpush1.bf16.msra.mxu0 %v589
      %607 = vmatprep.subr.bf16.mxu0 0
      %608 = vmatpush1.bf16.msra.mxu0 %v590
      %609 = vmatprep.subr.bf16.mxu0 0
      %610 = vmatpush1.bf16.msra.mxu0 %v591
      %611 = vmatprep.subr.bf16.mxu0 0
      %612 = vmatpush1.bf16.msra.mxu0 %v592
      %613 = vmatprep.subr.bf16.mxu0 0
      %614 = vmatpush1.bf16.msra.mxu0 %v593
      %615 = vmatprep.subr.bf16.mxu0 0
      %616 = vmatpush1.bf16.msra.mxu0 %v594
      %617 = vmatprep.subr.bf16.mxu0 0
      %618 = vmatpush1.bf16.msra.mxu0 %v595
      %619 = vmatprep.subr.bf16.mxu0 0
      %620 = vmatpush1.bf16.msra.mxu0 %v596
      %621 = vmatprep.subr.bf16.mxu0 0
      %622 = vmatpush1.bf16.msra.mxu0 0
      %623 = vmatprep.subr.bf16.mxu0 0
      %624 = vmatpush1.bf16.msra.mxu0 0
      %625 = vmatprep.subr.bf16.mxu0 0
      %626 = vmatpush1.bf16.msra.mxu0 0
      %627 = vmatprep.subr.bf16.mxu0 0
      %628 = vmatpush1.bf16.msra.mxu0 0
      %629 = vmatprep.subr.bf16.mxu0 0
      %630 = vmatpush1.bf16.msra.mxu0 0
      %631 = vmatprep.subr.bf16.mxu0 0
      %632 = vmatpush1.bf16.msra.mxu0 0
      %633 = vmatprep.subr.bf16.mxu0 0
      %634 = vmatpush1.bf16.msra.mxu0 0
      %635 = vmatprep.subr.bf16.mxu0 0
      %636 = vmatpush1.bf16.msra.mxu0 0
      %637 = vmatprep.mubr.bf16.mxu0 0
      %638 = vmatmul.mubr.bf16.gmra.mrb[0].mxu0 %v525
      %v639 = vpop.f32.mrb[0].mxu0
      %v640 = vadd.f32 0.0, %v639
      %v641 = vpop.f32.mrb[0].mxu0
      %v642 = vpop.f32.mrb[0].mxu0
      %v643 = vadd.f32 0.0, %v642
      %v644 = vpop.f32.mrb[0].mxu0
      %645 = vmatprep.mubr.bf16.mxu0 0
      %646 = vmatmul.mubr.bf16.gmra.mrb[0].mxu0 %v526
      %v647 = vpop.f32.mrb[0].mxu0
      %v648 = vadd.f32 0.0, %v647
      %v649 = vpop.f32.mrb[0].mxu0
      %v650 = vpop.f32.mrb[0].mxu0
      %v651 = vadd.f32 0.0, %v650
      %v652 = vpop.f32.mrb[0].mxu0
      %653 = vmatprep.mubr.bf16.mxu0 0
      %654 = vmatmul.mubr.bf16.gmra.mrb[0].mxu0 %v527
      %v655 = vpop.f32.mrb[0].mxu0
      %v656 = vadd.f32 0.0, %v655
      %v657 = vpop.f32.mrb[0].mxu0
      %v658 = vpop.f32.mrb[0].mxu0
      %v659 = vadd.f32 0.0, %v658
      %v660 = vpop.f32.mrb[0].mxu0
      %661 = vmatprep.mubr.bf16.mxu0 0
      %662 = vmatmul.mubr.bf16.gmra.mrb[0].mxu0 %v528
      %v663 = vpop.f32.mrb[0].mxu0
      %v664 = vadd.f32 0.0, %v663
      %v665 = vpop.f32.mrb[0].mxu0
      %v666 = vpop.f32.mrb[0].mxu0
      %v667 = vadd.f32 0.0, %v666
      %v668 = vpop.f32.mrb[0].mxu0
      %669 = vmatprep.mubr.bf16.mxu0 0
      %670 = vmatmul.mubr.bf16.gmra.mrb[0].mxu0 %v529
      %v671 = vpop.f32.mrb[0].mxu0
      %v672 = vadd.f32 0.0, %v671
      %v673 = vpop.f32.mrb[0].mxu0
      %v674 = vpop.f32.mrb[0].mxu0
      %v675 = vadd.f32 0.0, %v674
      %v676 = vpop.f32.mrb[0].mxu0
      %677 = vmatprep.mubr.bf16.mxu0 0
      %678 = vmatmul.mubr.bf16.gmra.mrb[0].mxu0 %v530
      %v679 = vpop.f32.mrb[0].mxu0
      %v680 = vadd.f32 0.0, %v679
      %v681 = vpop.f32.mrb[0].mxu0
      %v682 = vpop.f32.mrb[0].mxu0
      %v683 = vadd.f32 0.0, %v682
      %v684 = vpop.f32.mrb[0].mxu0
      %685 = vmatprep.mubr.bf16.mxu0 0
      %686 = vmatmul.mubr.bf16.gmra.mrb[0].mxu0 %v531
      %v687 = vpop.f32.mrb[0].mxu0
      %v688 = vadd.f32 0.0, %v687
      %v689 = vpop.f32.mrb[0].mxu0
      %v690 = vpop.f32.mrb[0].mxu0
      %v691 = vadd.f32 0.0, %v690
      %v692 = vpop.f32.mrb[0].mxu0
      %693 = vmatprep.mubr.bf16.mxu0 0
      %694 = vmatmul.mubr.bf16.gmra.mrb[0].mxu0 %v532
      %v695 = vpop.f32.mrb[0].mxu0
      %v696 = vadd.f32 0.0, %v695
      %v697 = vpop.f32.mrb[0].mxu0
      %v698 = vpop.f32.mrb[0].mxu0
      %v699 = vadd.f32 0.0, %v698
      %v700 = vpop.f32.mrb[0].mxu0
      %701 = vmatprep.mubr.bf16.mxu0 0
      %702 = vmatmul.mubr.bf16.gmra.mrb[0].mxu0 %v533
      %v703 = vpop.f32.mrb[0].mxu0
      %v704 = vadd.f32 0.0, %v703
      %v705 = vpop.f32.mrb[0].mxu0
      %v706 = vpop.f32.mrb[0].mxu0
      %v707 = vadd.f32 0.0, %v706
      %v708 = vpop.f32.mrb[0].mxu0
      %709 = vmatprep.mubr.bf16.mxu0 0
      %710 = vmatmul.mubr.bf16.gmra.mrb[0].mxu0 %v534
      %v711 = vpop.f32.mrb[0].mxu0
      %v712 = vadd.f32 0.0, %v711
      %v713 = vpop.f32.mrb[0].mxu0
      %v714 = vpop.f32.mrb[0].mxu0
      %v715 = vadd.f32 0.0, %v714
      %v716 = vpop.f32.mrb[0].mxu0
      %717 = vmatprep.mubr.bf16.mxu0 0
      %718 = vmatmul.mubr.bf16.gmra.mrb[0].mxu0 %v535
      %v719 = vpop.f32.mrb[0].mxu0
      %v720 = vadd.f32 0.0, %v719
      %v721 = vpop.f32.mrb[0].mxu0
      %v722 = vpop.f32.mrb[0].mxu0
      %v723 = vadd.f32 0.0, %v722
      %v724 = vpop.f32.mrb[0].mxu0
      %725 = vmatprep.mubr.bf16.mxu0 0
      %726 = vmatmul.mubr.bf16.gmra.mrb[0].mxu0 %v536
      %v727 = vpop.f32.mrb[0].mxu0
      %v728 = vadd.f32 0.0, %v727
      %v729 = vpop.f32.mrb[0].mxu0
      %v730 = vpop.f32.mrb[0].mxu0
      %v731 = vadd.f32 0.0, %v730
      %v732 = vpop.f32.mrb[0].mxu0
      %733 = vmatprep.mubr.bf16.mxu0 0
      %734 = vmatmul.mubr.bf16.gmra.mrb[0].mxu0 %v537
      %v735 = vpop.f32.mrb[0].mxu0
      %v736 = vadd.f32 0.0, %v735
      %v737 = vpop.f32.mrb[0].mxu0
      %v738 = vpop.f32.mrb[0].mxu0
      %v739 = vadd.f32 0.0, %v738
      %v740 = vpop.f32.mrb[0].mxu0
      %741 = vmatprep.mubr.bf16.mxu0 0
      %742 = vmatmul.mubr.bf16.gmra.mrb[0].mxu0 %v538
      %v743 = vpop.f32.mrb[0].mxu0
      %v744 = vadd.f32 0.0, %v743
      %v745 = vpop.f32.mrb[0].mxu0
      %v746 = vpop.f32.mrb[0].mxu0
      %v747 = vadd.f32 0.0, %v746
      %v748 = vpop.f32.mrb[0].mxu0
      %749 = vmatprep.mubr.bf16.mxu0 0
      %750 = vmatmul.mubr.bf16.gmra.mrb[0].mxu0 %v539
      %v751 = vpop.f32.mrb[0].mxu0
      %v752 = vadd.f32 0.0, %v751
      %v753 = vpop.f32.mrb[0].mxu0
      %v754 = vpop.f32.mrb[0].mxu0
      %v755 = vadd.f32 0.0, %v754
      %v756 = vpop.f32.mrb[0].mxu0
      %757 = vmatprep.mubr.bf16.mxu0 0
      %758 = vmatmul.mubr.bf16.gmra.mrb[0].mxu0 %v540
      %v759 = vpop.f32.mrb[0].mxu0
      %v760 = vadd.f32 0.0, %v759
      %v761 = vpop.f32.mrb[0].mxu0
      %v762 = vpop.f32.mrb[0].mxu0
      %v763 = vadd.f32 0.0, %v762
      %v764 = vpop.f32.mrb[0].mxu0
      %765 = vdwg.mxu0
      %v766 = vld [vmem:[%s3] sm:$0x1]
      %v768 = vlaneseq
      %v769 = vshrl.u32 %v768, 7
      %v770 = vsub.s32 0, %v769
      %v771 = vrot.slane %v766, %v770
      %v773 = vmul.f32 %v640, %v771
      %v774 = vmul.f32 %v643, %v771
      %v775 = vmul.f32 %v648, %v771
      %v776 = vmul.f32 %v651, %v771
      %v777 = vmul.f32 %v656, %v771
      %v778 = vmul.f32 %v659, %v771
      %v779 = vmul.f32 %v664, %v771
      %v780 = vmul.f32 %v667, %v771
      %v781 = vmul.f32 %v672, %v771
      %v782 = vmul.f32 %v675, %v771
      %v783 = vmul.f32 %v680, %v771
      %v784 = vmul.f32 %v683, %v771
      %v785 = vmul.f32 %v688, %v771
      %v786 = vmul.f32 %v691, %v771
      %v787 = vmul.f32 %v696, %v771
      %v788 = vmul.f32 %v699, %v771
      %v789 = vmul.f32 %v704, %v771
      %v790 = vmul.f32 %v707, %v771
      %v791 = vmul.f32 %v712, %v771
      %v792 = vmul.f32 %v715, %v771
      %v793 = vmul.f32 %v720, %v771
      %v794 = vmul.f32 %v723, %v771
      %v795 = vmul.f32 %v728, %v771
      %v796 = vmul.f32 %v731, %v771
      %v797 = vmul.f32 %v736, %v771
      %v798 = vmul.f32 %v739, %v771
      %v799 = vmul.f32 %v744, %v771
      %v800 = vmul.f32 %v747, %v771
      %v801 = vmul.f32 %v752, %v771
      %v802 = vmul.f32 %v755, %v771
      %v803 = vmul.f32 %v760, %v771
      %v804 = vmul.f32 %v763, %v771
      %v805 = vld [vmem:[%s4] sm:$0x1]
      %v807 = vlaneseq
      %v808 = vshrl.u32 %v807, 7
      %v809 = vsub.s32 0, %v808
      %v810 = vrot.slane %v805, %v809
      %v812 = vadd.f32 %v773, %v810
      %v813 = vadd.f32 %v774, %v810
      %v814 = vadd.f32 %v775, %v810
      %v815 = vadd.f32 %v776, %v810
      %v816 = vadd.f32 %v777, %v810
      %v817 = vadd.f32 %v778, %v810
      %v818 = vadd.f32 %v779, %v810
      %v819 = vadd.f32 %v780, %v810
      %v820 = vadd.f32 %v781, %v810
      %v821 = vadd.f32 %v782, %v810
      %v822 = vadd.f32 %v783, %v810
      %v823 = vadd.f32 %v784, %v810
      %v824 = vadd.f32 %v785, %v810
      %v825 = vadd.f32 %v786, %v810
      %v826 = vadd.f32 %v787, %v810
      %v827 = vadd.f32 %v788, %v810
      %v828 = vadd.f32 %v789, %v810
      %v829 = vadd.f32 %v790, %v810
      %v830 = vadd.f32 %v791, %v810
      %v831 = vadd.f32 %v792, %v810
      %v832 = vadd.f32 %v793, %v810
      %v833 = vadd.f32 %v794, %v810
      %v834 = vadd.f32 %v795, %v810
      %v835 = vadd.f32 %v796, %v810
      %v836 = vadd.f32 %v797, %v810
      %v837 = vadd.f32 %v798, %v810
      %v838 = vadd.f32 %v799, %v810
      %v839 = vadd.f32 %v800, %v810
      %v840 = vadd.f32 %v801, %v810
      %v841 = vadd.f32 %v802, %v810
      %v842 = vadd.f32 %v803, %v810
      %v843 = vadd.f32 %v804, %v810
      %v844 = vxor.u32 %v812, 2147483648
      %v845 = vxor.u32 %v813, 2147483648
      %v846 = vxor.u32 %v814, 2147483648
      %v847 = vxor.u32 %v815, 2147483648
      %v848 = vxor.u32 %v816, 2147483648
      %v849 = vxor.u32 %v817, 2147483648
      %v850 = vxor.u32 %v818, 2147483648
      %v851 = vxor.u32 %v819, 2147483648
      %v852 = vxor.u32 %v820, 2147483648
      %v853 = vxor.u32 %v821, 2147483648
      %v854 = vxor.u32 %v822, 2147483648
      %v855 = vxor.u32 %v823, 2147483648
      %v856 = vxor.u32 %v824, 2147483648
      %v857 = vxor.u32 %v825, 2147483648
      %v858 = vxor.u32 %v826, 2147483648
      %v859 = vxor.u32 %v827, 2147483648
      %v860 = vxor.u32 %v828, 2147483648
      %v861 = vxor.u32 %v829, 2147483648
      %v862 = vxor.u32 %v830, 2147483648
      %v863 = vxor.u32 %v831, 2147483648
      %v864 = vxor.u32 %v832, 2147483648
      %v865 = vxor.u32 %v833, 2147483648
      %v866 = vxor.u32 %v834, 2147483648
      %v867 = vxor.u32 %v835, 2147483648
      %v868 = vxor.u32 %v836, 2147483648
      %v869 = vxor.u32 %v837, 2147483648
      %v870 = vxor.u32 %v838, 2147483648
      %v871 = vxor.u32 %v839, 2147483648
      %v872 = vxor.u32 %v840, 2147483648
      %v873 = vxor.u32 %v841, 2147483648
      %v874 = vxor.u32 %v842, 2147483648
      %v875 = vxor.u32 %v843, 2147483648
      %v876 = vmul.f32 %v844, 1.442695
      %v877 = vpow.pop %v876
      %v878 = vmul.f32 %v845, 1.442695
      %v879 = vpow.pop %v878
      %v880 = vmul.f32 %v846, 1.442695
      %v881 = vpow.pop %v880
      %v882 = vmul.f32 %v847, 1.442695
      %v883 = vpow.pop %v882
      %v884 = vmul.f32 %v848, 1.442695
      %v885 = vpow.pop %v884
      %v886 = vmul.f32 %v849, 1.442695
      %v887 = vpow.pop %v886
      %v888 = vmul.f32 %v850, 1.442695
      %v889 = vpow.pop %v888
      %v890 = vmul.f32 %v851, 1.442695
      %v891 = vpow.pop %v890
      %v892 = vmul.f32 %v852, 1.442695
      %v893 = vpow.pop %v892
      %v894 = vmul.f32 %v853, 1.442695
      %v895 = vpow.pop %v894
      %v896 = vmul.f32 %v854, 1.442695
      %v897 = vpow.pop %v896
      %v898 = vmul.f32 %v855, 1.442695
      %v899 = vpow.pop %v898
      %v900 = vmul.f32 %v856, 1.442695
      %v901 = vpow.pop %v900
      %v902 = vmul.f32 %v857, 1.442695
      %v903 = vpow.pop %v902
      %v904 = vmul.f32 %v858, 1.442695
      %v905 = vpow.pop %v904
      %v906 = vmul.f32 %v859, 1.442695
      %v907 = vpow.pop %v906
      %v908 = vmul.f32 %v860, 1.442695
      %v909 = vpow.pop %v908
      %v910 = vmul.f32 %v861, 1.442695
      %v911 = vpow.pop %v910
      %v912 = vmul.f32 %v862, 1.442695
      %v913 = vpow.pop %v912
      %v914 = vmul.f32 %v863, 1.442695
      %v915 = vpow.pop %v914
      %v916 = vmul.f32 %v864, 1.442695
      %v917 = vpow.pop %v916
      %v918 = vmul.f32 %v865, 1.442695
      %v919 = vpow.pop %v918
      %v920 = vmul.f32 %v866, 1.442695
      %v921 = vpow.pop %v920
      %v922 = vmul.f32 %v867, 1.442695
      %v923 = vpow.pop %v922
      %v924 = vmul.f32 %v868, 1.442695
      %v925 = vpow.pop %v924
      %v926 = vmul.f32 %v869, 1.442695
      %v927 = vpow.pop %v926
      %v928 = vmul.f32 %v870, 1.442695
      %v929 = vpow.pop %v928
      %v930 = vmul.f32 %v871, 1.442695
      %v931 = vpow.pop %v930
      %v932 = vmul.f32 %v872, 1.442695
      %v933 = vpow.pop %v932
      %v934 = vmul.f32 %v873, 1.442695
      %v935 = vpow.pop %v934
      %v936 = vmul.f32 %v874, 1.442695
      %v937 = vpow.pop %v936
      %v938 = vmul.f32 %v875, 1.442695
      %v939 = vpow.pop %v938
      %v940 = vadd.f32 %v877, 1.0
      %v941 = vadd.f32 %v879, 1.0
      %v942 = vadd.f32 %v881, 1.0
      %v943 = vadd.f32 %v883, 1.0
      %v944 = vadd.f32 %v885, 1.0
      %v945 = vadd.f32 %v887, 1.0
      %v946 = vadd.f32 %v889, 1.0
      %v947 = vadd.f32 %v891, 1.0
      %v948 = vadd.f32 %v893, 1.0
      %v949 = vadd.f32 %v895, 1.0
      %v950 = vadd.f32 %v897, 1.0
      %v951 = vadd.f32 %v899, 1.0
      %v952 = vadd.f32 %v901, 1.0
      %v953 = vadd.f32 %v903, 1.0
      %v954 = vadd.f32 %v905, 1.0
      %v955 = vadd.f32 %v907, 1.0
      %v956 = vadd.f32 %v909, 1.0
      %v957 = vadd.f32 %v911, 1.0
      %v958 = vadd.f32 %v913, 1.0
      %v959 = vadd.f32 %v915, 1.0
      %v960 = vadd.f32 %v917, 1.0
      %v961 = vadd.f32 %v919, 1.0
      %v962 = vadd.f32 %v921, 1.0
      %v963 = vadd.f32 %v923, 1.0
      %v964 = vadd.f32 %v925, 1.0
      %v965 = vadd.f32 %v927, 1.0
      %v966 = vadd.f32 %v929, 1.0
      %v967 = vadd.f32 %v931, 1.0
      %v968 = vadd.f32 %v933, 1.0
      %v969 = vadd.f32 %v935, 1.0
      %v970 = vadd.f32 %v937, 1.0
      %v971 = vadd.f32 %v939, 1.0
      %v972 = vrcp.pop %v940
      %v973 = vmul.f32 1.0, %v972
      %v974 = vrcp.pop %v941
      %v975 = vmul.f32 1.0, %v974
      %v976 = vrcp.pop %v942
      %v977 = vmul.f32 1.0, %v976
      %v978 = vrcp.pop %v943
      %v979 = vmul.f32 1.0, %v978
      %v980 = vrcp.pop %v944
      %v981 = vmul.f32 1.0, %v980
      %v982 = vrcp.pop %v945
      %v983 = vmul.f32 1.0, %v982
      %v984 = vrcp.pop %v946
      %v985 = vmul.f32 1.0, %v984
      %v986 = vrcp.pop %v947
      %v987 = vmul.f32 1.0, %v986
      %v988 = vrcp.pop %v948
      %v989 = vmul.f32 1.0, %v988
      %v990 = vrcp.pop %v949
      %v991 = vmul.f32 1.0, %v990
      %v992 = vrcp.pop %v950
      %v993 = vmul.f32 1.0, %v992
      %v994 = vrcp.pop %v951
      %v995 = vmul.f32 1.0, %v994
      %v996 = vrcp.pop %v952
      %v997 = vmul.f32 1.0, %v996
      %v998 = vrcp.pop %v953
      %v999 = vmul.f32 1.0, %v998
      %v1000 = vrcp.pop %v954
      %v1001 = vmul.f32 1.0, %v1000
      %v1002 = vrcp.pop %v955
      %v1003 = vmul.f32 1.0, %v1002
      %v1004 = vrcp.pop %v956
      %v1005 = vmul.f32 1.0, %v1004
      %v1006 = vrcp.pop %v957
      %v1007 = vmul.f32 1.0, %v1006
      %v1008 = vrcp.pop %v958
      %v1009 = vmul.f32 1.0, %v1008
      %v1010 = vrcp.pop %v959
      %v1011 = vmul.f32 1.0, %v1010
      %v1012 = vrcp.pop %v960
      %v1013 = vmul.f32 1.0, %v1012
      %v1014 = vrcp.pop %v961
      %v1015 = vmul.f32 1.0, %v1014
      %v1016 = vrcp.pop %v962
      %v1017 = vmul.f32 1.0, %v1016
      %v1018 = vrcp.pop %v963
      %v1019 = vmul.f32 1.0, %v1018
      %v1020 = vrcp.pop %v964
      %v1021 = vmul.f32 1.0, %v1020
      %v1022 = vrcp.pop %v965
      %v1023 = vmul.f32 1.0, %v1022
      %v1024 = vrcp.pop %v966
      %v1025 = vmul.f32 1.0, %v1024
      %v1026 = vrcp.pop %v967
      %v1027 = vmul.f32 1.0, %v1026
      %v1028 = vrcp.pop %v968
      %v1029 = vmul.f32 1.0, %v1028
      %v1030 = vrcp.pop %v969
      %v1031 = vmul.f32 1.0, %v1030
      %v1032 = vrcp.pop %v970
      %v1033 = vmul.f32 1.0, %v1032
      %v1034 = vrcp.pop %v971
      %v1035 = vmul.f32 1.0, %v1034
      %v1036 = vmul.f32 %v812, %v973
      %v1037 = vmul.f32 %v813, %v975
      %v1038 = vmul.f32 %v814, %v977
      %v1039 = vmul.f32 %v815, %v979
      %v1040 = vmul.f32 %v816, %v981
      %v1041 = vmul.f32 %v817, %v983
      %v1042 = vmul.f32 %v818, %v985
      %v1043 = vmul.f32 %v819, %v987
      %v1044 = vmul.f32 %v820, %v989
      %v1045 = vmul.f32 %v821, %v991
      %v1046 = vmul.f32 %v822, %v993
      %v1047 = vmul.f32 %v823, %v995
      %v1048 = vmul.f32 %v824, %v997
      %v1049 = vmul.f32 %v825, %v999
      %v1050 = vmul.f32 %v826, %v1001
      %v1051 = vmul.f32 %v827, %v1003
      %v1052 = vmul.f32 %v828, %v1005
      %v1053 = vmul.f32 %v829, %v1007
      %v1054 = vmul.f32 %v830, %v1009
      %v1055 = vmul.f32 %v831, %v1011
      %v1056 = vmul.f32 %v832, %v1013
      %v1057 = vmul.f32 %v833, %v1015
      %v1058 = vmul.f32 %v834, %v1017
      %v1059 = vmul.f32 %v835, %v1019
      %v1060 = vmul.f32 %v836, %v1021
      %v1061 = vmul.f32 %v837, %v1023
      %v1062 = vmul.f32 %v838, %v1025
      %v1063 = vmul.f32 %v839, %v1027
      %v1064 = vmul.f32 %v840, %v1029
      %v1065 = vmul.f32 %v841, %v1031
      %v1066 = vmul.f32 %v842, %v1033
      %v1067 = vmul.f32 %v843, %v1035
      %v1068 = vld [vmem:[%s404] sm:$0xf]
      %v1069 = vld [vmem:[%s404 + $0x4] sm:$0xf]
      %v1070 = vld [vmem:[%s404 + $0x8] sm:$0xf]
      %v1071 = vld [vmem:[%s404 + $0xc] sm:$0xf]
      %v1072 = vld [vmem:[%s404 + $0x10] sm:$0xf]
      %v1073 = vld [vmem:[%s404 + $0x14] sm:$0xf]
      %v1074 = vld [vmem:[%s404 + $0x18] sm:$0xf]
      %v1075 = vld [vmem:[%s404 + $0x1c] sm:$0xf]
      %v1076 = vld [vmem:[%s404 + $0x20] sm:$0xf]
      %v1077 = vld [vmem:[%s404 + $0x24] sm:$0xf]
      %v1078 = vld [vmem:[%s404 + $0x28] sm:$0xf]
      %v1079 = vld [vmem:[%s404 + $0x2c] sm:$0xf]
      %v1080 = vld [vmem:[%s404 + $0x30] sm:$0xf]
      %v1081 = vld [vmem:[%s404 + $0x34] sm:$0xf]
      %v1082 = vld [vmem:[%s404 + $0x38] sm:$0xf]
      %v1083 = vld [vmem:[%s404 + $0x3c] sm:$0xf]
      %v1084 = vld [vmem:[%s404 + $0x40] sm:$0xf]
      %v1085 = vld [vmem:[%s404 + $0x44] sm:$0xf]
      %v1086 = vld [vmem:[%s404 + $0x48] sm:$0xf]
      %v1087 = vld [vmem:[%s404 + $0x4c] sm:$0xf]
      %v1088 = vld [vmem:[%s404 + $0x50] sm:$0xf]
      %v1089 = vld [vmem:[%s404 + $0x54] sm:$0xf]
      %v1090 = vld [vmem:[%s404 + $0x58] sm:$0xf]
      %v1091 = vld [vmem:[%s404 + $0x5c] sm:$0xf]
      %v1092 = vld [vmem:[%s404 + $0x60] sm:$0xf]
      %v1093 = vld [vmem:[%s404 + $0x64] sm:$0xf]
      %v1094 = vld [vmem:[%s404 + $0x68] sm:$0xf]
      %v1095 = vld [vmem:[%s404 + $0x6c] sm:$0xf]
      %v1096 = vld [vmem:[%s404 + $0x70] sm:$0xf]
      %v1097 = vld [vmem:[%s404 + $0x74] sm:$0xf]
      %v1098 = vld [vmem:[%s404 + $0x78] sm:$0xf]
      %v1099 = vld [vmem:[%s404 + $0x7c] sm:$0xf]
      %v1100 = vunpack.c.l.bf16 %v1068
      %v1101 = vunpack.c.l.bf16 %v1069
      %v1102 = vunpack.c.l.bf16 %v1070
      %v1103 = vunpack.c.l.bf16 %v1071
      %v1104 = vunpack.c.l.bf16 %v1072
      %v1105 = vunpack.c.l.bf16 %v1073
      %v1106 = vunpack.c.l.bf16 %v1074
      %v1107 = vunpack.c.l.bf16 %v1075
      %v1108 = vunpack.c.l.bf16 %v1076
      %v1109 = vunpack.c.l.bf16 %v1077
      %v1110 = vunpack.c.l.bf16 %v1078
      %v1111 = vunpack.c.l.bf16 %v1079
      %v1112 = vunpack.c.l.bf16 %v1080
      %v1113 = vunpack.c.l.bf16 %v1081
      %v1114 = vunpack.c.l.bf16 %v1082
      %v1115 = vunpack.c.l.bf16 %v1083
      %v1116 = vunpack.c.l.bf16 %v1084
      %v1117 = vunpack.c.l.bf16 %v1085
      %v1118 = vunpack.c.l.bf16 %v1086
      %v1119 = vunpack.c.l.bf16 %v1087
      %v1120 = vunpack.c.l.bf16 %v1088
      %v1121 = vunpack.c.l.bf16 %v1089
      %v1122 = vunpack.c.l.bf16 %v1090
      %v1123 = vunpack.c.l.bf16 %v1091
      %v1124 = vunpack.c.l.bf16 %v1092
      %v1125 = vunpack.c.l.bf16 %v1093
      %v1126 = vunpack.c.l.bf16 %v1094
      %v1127 = vunpack.c.l.bf16 %v1095
      %v1128 = vunpack.c.l.bf16 %v1096
      %v1129 = vunpack.c.l.bf16 %v1097
      %v1130 = vunpack.c.l.bf16 %v1098
      %v1131 = vunpack.c.l.bf16 %v1099
      %v1132 = vld [vmem:[%s5] sm:$0x1]
      %v1134 = vlaneseq
      %v1135 = vshrl.u32 %v1134, 7
      %v1136 = vsub.s32 0, %v1135
      %v1137 = vrot.slane %v1132, %v1136
      %v1139 = vmul.f32 %v1100, %v1137
      %v1140 = vmul.f32 %v1101, %v1137
      %v1141 = vmul.f32 %v1102, %v1137
      %v1142 = vmul.f32 %v1103, %v1137
      %v1143 = vmul.f32 %v1104, %v1137
      %v1144 = vmul.f32 %v1105, %v1137
      %v1145 = vmul.f32 %v1106, %v1137
      %v1146 = vmul.f32 %v1107, %v1137
      %v1147 = vmul.f32 %v1108, %v1137
      %v1148 = vmul.f32 %v1109, %v1137
      %v1149 = vmul.f32 %v1110, %v1137
      %v1150 = vmul.f32 %v1111, %v1137
      %v1151 = vmul.f32 %v1112, %v1137
      %v1152 = vmul.f32 %v1113, %v1137
      %v1153 = vmul.f32 %v1114, %v1137
      %v1154 = vmul.f32 %v1115, %v1137
      %v1155 = vmul.f32 %v1116, %v1137
      %v1156 = vmul.f32 %v1117, %v1137
      %v1157 = vmul.f32 %v1118, %v1137
      %v1158 = vmul.f32 %v1119, %v1137
      %v1159 = vmul.f32 %v1120, %v1137
      %v1160 = vmul.f32 %v1121, %v1137
      %v1161 = vmul.f32 %v1122, %v1137
      %v1162 = vmul.f32 %v1123, %v1137
      %v1163 = vmul.f32 %v1124, %v1137
      %v1164 = vmul.f32 %v1125, %v1137
      %v1165 = vmul.f32 %v1126, %v1137
      %v1166 = vmul.f32 %v1127, %v1137
      %v1167 = vmul.f32 %v1128, %v1137
      %v1168 = vmul.f32 %v1129, %v1137
      %v1169 = vmul.f32 %v1130, %v1137
      %v1170 = vmul.f32 %v1131, %v1137
      %v1171 = vld [vmem:[%s6] sm:$0x1]
      %v1173 = vlaneseq
      %v1174 = vshrl.u32 %v1173, 7
      %v1175 = vsub.s32 0, %v1174
      %v1176 = vrot.slane %v1171, %v1175
      %v1178 = vadd.f32 %v1139, %v1176
      %v1179 = vadd.f32 %v1140, %v1176
      %v1180 = vadd.f32 %v1141, %v1176
      %v1181 = vadd.f32 %v1142, %v1176
      %v1182 = vadd.f32 %v1143, %v1176
      %v1183 = vadd.f32 %v1144, %v1176
      %v1184 = vadd.f32 %v1145, %v1176
      %v1185 = vadd.f32 %v1146, %v1176
      %v1186 = vadd.f32 %v1147, %v1176
      %v1187 = vadd.f32 %v1148, %v1176
      %v1188 = vadd.f32 %v1149, %v1176
      %v1189 = vadd.f32 %v1150, %v1176
      %v1190 = vadd.f32 %v1151, %v1176
      %v1191 = vadd.f32 %v1152, %v1176
      %v1192 = vadd.f32 %v1153, %v1176
      %v1193 = vadd.f32 %v1154, %v1176
      %v1194 = vadd.f32 %v1155, %v1176
      %v1195 = vadd.f32 %v1156, %v1176
      %v1196 = vadd.f32 %v1157, %v1176
      %v1197 = vadd.f32 %v1158, %v1176
      %v1198 = vadd.f32 %v1159, %v1176
      %v1199 = vadd.f32 %v1160, %v1176
      %v1200 = vadd.f32 %v1161, %v1176
      %v1201 = vadd.f32 %v1162, %v1176
      %v1202 = vadd.f32 %v1163, %v1176
      %v1203 = vadd.f32 %v1164, %v1176
      %v1204 = vadd.f32 %v1165, %v1176
      %v1205 = vadd.f32 %v1166, %v1176
      %v1206 = vadd.f32 %v1167, %v1176
      %v1207 = vadd.f32 %v1168, %v1176
      %v1208 = vadd.f32 %v1169, %v1176
      %v1209 = vadd.f32 %v1170, %v1176
      %v1210 = vxor.u32 %v1178, 2147483648
      %v1211 = vxor.u32 %v1179, 2147483648
      %v1212 = vxor.u32 %v1180, 2147483648
      %v1213 = vxor.u32 %v1181, 2147483648
      %v1214 = vxor.u32 %v1182, 2147483648
      %v1215 = vxor.u32 %v1183, 2147483648
      %v1216 = vxor.u32 %v1184, 2147483648
      %v1217 = vxor.u32 %v1185, 2147483648
      %v1218 = vxor.u32 %v1186, 2147483648
      %v1219 = vxor.u32 %v1187, 2147483648
      %v1220 = vxor.u32 %v1188, 2147483648
      %v1221 = vxor.u32 %v1189, 2147483648
      %v1222 = vxor.u32 %v1190, 2147483648
      %v1223 = vxor.u32 %v1191, 2147483648
      %v1224 = vxor.u32 %v1192, 2147483648
      %v1225 = vxor.u32 %v1193, 2147483648
      %v1226 = vxor.u32 %v1194, 2147483648
      %v1227 = vxor.u32 %v1195, 2147483648
      %v1228 = vxor.u32 %v1196, 2147483648
      %v1229 = vxor.u32 %v1197, 2147483648
      %v1230 = vxor.u32 %v1198, 2147483648
      %v1231 = vxor.u32 %v1199, 2147483648
      %v1232 = vxor.u32 %v1200, 2147483648
      %v1233 = vxor.u32 %v1201, 2147483648
      %v1234 = vxor.u32 %v1202, 2147483648
      %v1235 = vxor.u32 %v1203, 2147483648
      %v1236 = vxor.u32 %v1204, 2147483648
      %v1237 = vxor.u32 %v1205, 2147483648
      %v1238 = vxor.u32 %v1206, 2147483648
      %v1239 = vxor.u32 %v1207, 2147483648
      %v1240 = vxor.u32 %v1208, 2147483648
      %v1241 = vxor.u32 %v1209, 2147483648
      %v1242 = vmul.f32 %v1210, 1.442695
      %v1243 = vpow.pop %v1242
      %v1244 = vmul.f32 %v1211, 1.442695
      %v1245 = vpow.pop %v1244
      %v1246 = vmul.f32 %v1212, 1.442695
      %v1247 = vpow.pop %v1246
      %v1248 = vmul.f32 %v1213, 1.442695
      %v1249 = vpow.pop %v1248
      %v1250 = vmul.f32 %v1214, 1.442695
      %v1251 = vpow.pop %v1250
      %v1252 = vmul.f32 %v1215, 1.442695
      %v1253 = vpow.pop %v1252
      %v1254 = vmul.f32 %v1216, 1.442695
      %v1255 = vpow.pop %v1254
      %v1256 = vmul.f32 %v1217, 1.442695
      %v1257 = vpow.pop %v1256
      %v1258 = vmul.f32 %v1218, 1.442695
      %v1259 = vpow.pop %v1258
      %v1260 = vmul.f32 %v1219, 1.442695
      %v1261 = vpow.pop %v1260
      %v1262 = vmul.f32 %v1220, 1.442695
      %v1263 = vpow.pop %v1262
      %v1264 = vmul.f32 %v1221, 1.442695
      %v1265 = vpow.pop %v1264
      %v1266 = vmul.f32 %v1222, 1.442695
      %v1267 = vpow.pop %v1266
      %v1268 = vmul.f32 %v1223, 1.442695
      %v1269 = vpow.pop %v1268
      %v1270 = vmul.f32 %v1224, 1.442695
      %v1271 = vpow.pop %v1270
      %v1272 = vmul.f32 %v1225, 1.442695
      %v1273 = vpow.pop %v1272
      %v1274 = vmul.f32 %v1226, 1.442695
      %v1275 = vpow.pop %v1274
      %v1276 = vmul.f32 %v1227, 1.442695
      %v1277 = vpow.pop %v1276
      %v1278 = vmul.f32 %v1228, 1.442695
      %v1279 = vpow.pop %v1278
      %v1280 = vmul.f32 %v1229, 1.442695
      %v1281 = vpow.pop %v1280
      %v1282 = vmul.f32 %v1230, 1.442695
      %v1283 = vpow.pop %v1282
      %v1284 = vmul.f32 %v1231, 1.442695
      %v1285 = vpow.pop %v1284
      %v1286 = vmul.f32 %v1232, 1.442695
      %v1287 = vpow.pop %v1286
      %v1288 = vmul.f32 %v1233, 1.442695
      %v1289 = vpow.pop %v1288
      %v1290 = vmul.f32 %v1234, 1.442695
      %v1291 = vpow.pop %v1290
      %v1292 = vmul.f32 %v1235, 1.442695
      %v1293 = vpow.pop %v1292
      %v1294 = vmul.f32 %v1236, 1.442695
      %v1295 = vpow.pop %v1294
      %v1296 = vmul.f32 %v1237, 1.442695
      %v1297 = vpow.pop %v1296
      %v1298 = vmul.f32 %v1238, 1.442695
      %v1299 = vpow.pop %v1298
      %v1300 = vmul.f32 %v1239, 1.442695
      %v1301 = vpow.pop %v1300
      %v1302 = vmul.f32 %v1240, 1.442695
      %v1303 = vpow.pop %v1302
      %v1304 = vmul.f32 %v1241, 1.442695
      %v1305 = vpow.pop %v1304
      %v1306 = vadd.f32 %v1243, 1.0
      %v1307 = vadd.f32 %v1245, 1.0
      %v1308 = vadd.f32 %v1247, 1.0
      %v1309 = vadd.f32 %v1249, 1.0
      %v1310 = vadd.f32 %v1251, 1.0
      %v1311 = vadd.f32 %v1253, 1.0
      %v1312 = vadd.f32 %v1255, 1.0
      %v1313 = vadd.f32 %v1257, 1.0
      %v1314 = vadd.f32 %v1259, 1.0
      %v1315 = vadd.f32 %v1261, 1.0
      %v1316 = vadd.f32 %v1263, 1.0
      %v1317 = vadd.f32 %v1265, 1.0
      %v1318 = vadd.f32 %v1267, 1.0
      %v1319 = vadd.f32 %v1269, 1.0
      %v1320 = vadd.f32 %v1271, 1.0
      %v1321 = vadd.f32 %v1273, 1.0
      %v1322 = vadd.f32 %v1275, 1.0
      %v1323 = vadd.f32 %v1277, 1.0
      %v1324 = vadd.f32 %v1279, 1.0
      %v1325 = vadd.f32 %v1281, 1.0
      %v1326 = vadd.f32 %v1283, 1.0
      %v1327 = vadd.f32 %v1285, 1.0
      %v1328 = vadd.f32 %v1287, 1.0
      %v1329 = vadd.f32 %v1289, 1.0
      %v1330 = vadd.f32 %v1291, 1.0
      %v1331 = vadd.f32 %v1293, 1.0
      %v1332 = vadd.f32 %v1295, 1.0
      %v1333 = vadd.f32 %v1297, 1.0
      %v1334 = vadd.f32 %v1299, 1.0
      %v1335 = vadd.f32 %v1301, 1.0
      %v1336 = vadd.f32 %v1303, 1.0
      %v1337 = vadd.f32 %v1305, 1.0
      %v1338 = vrcp.pop %v1306
      %v1339 = vmul.f32 1.0, %v1338
      %v1340 = vrcp.pop %v1307
      %v1341 = vmul.f32 1.0, %v1340
      %v1342 = vrcp.pop %v1308
      %v1343 = vmul.f32 1.0, %v1342
      %v1344 = vrcp.pop %v1309
      %v1345 = vmul.f32 1.0, %v1344
      %v1346 = vrcp.pop %v1310
      %v1347 = vmul.f32 1.0, %v1346
      %v1348 = vrcp.pop %v1311
      %v1349 = vmul.f32 1.0, %v1348
      %v1350 = vrcp.pop %v1312
      %v1351 = vmul.f32 1.0, %v1350
      %v1352 = vrcp.pop %v1313
      %v1353 = vmul.f32 1.0, %v1352
      %v1354 = vrcp.pop %v1314
      %v1355 = vmul.f32 1.0, %v1354
      %v1356 = vrcp.pop %v1315
      %v1357 = vmul.f32 1.0, %v1356
      %v1358 = vrcp.pop %v1316
      %v1359 = vmul.f32 1.0, %v1358
      %v1360 = vrcp.pop %v1317
      %v1361 = vmul.f32 1.0, %v1360
      %v1362 = vrcp.pop %v1318
      %v1363 = vmul.f32 1.0, %v1362
      %v1364 = vrcp.pop %v1319
      %v1365 = vmul.f32 1.0, %v1364
      %v1366 = vrcp.pop %v1320
      %v1367 = vmul.f32 1.0, %v1366
      %v1368 = vrcp.pop %v1321
      %v1369 = vmul.f32 1.0, %v1368
      %v1370 = vrcp.pop %v1322
      %v1371 = vmul.f32 1.0, %v1370
      %v1372 = vrcp.pop %v1323
      %v1373 = vmul.f32 1.0, %v1372
      %v1374 = vrcp.pop %v1324
      %v1375 = vmul.f32 1.0, %v1374
      %v1376 = vrcp.pop %v1325
      %v1377 = vmul.f32 1.0, %v1376
      %v1378 = vrcp.pop %v1326
      %v1379 = vmul.f32 1.0, %v1378
      %v1380 = vrcp.pop %v1327
      %v1381 = vmul.f32 1.0, %v1380
      %v1382 = vrcp.pop %v1328
      %v1383 = vmul.f32 1.0, %v1382
      %v1384 = vrcp.pop %v1329
      %v1385 = vmul.f32 1.0, %v1384
      %v1386 = vrcp.pop %v1330
      %v1387 = vmul.f32 1.0, %v1386
      %v1388 = vrcp.pop %v1331
      %v1389 = vmul.f32 1.0, %v1388
      %v1390 = vrcp.pop %v1332
      %v1391 = vmul.f32 1.0, %v1390
      %v1392 = vrcp.pop %v1333
      %v1393 = vmul.f32 1.0, %v1392
      %v1394 = vrcp.pop %v1334
      %v1395 = vmul.f32 1.0, %v1394
      %v1396 = vrcp.pop %v1335
      %v1397 = vmul.f32 1.0, %v1396
      %v1398 = vrcp.pop %v1336
      %v1399 = vmul.f32 1.0, %v1398
      %v1400 = vrcp.pop %v1337
      %v1401 = vmul.f32 1.0, %v1400
      %v1402 = vmul.f32 %v1178, %v1339
      %v1403 = vmul.f32 %v1179, %v1341
      %v1404 = vmul.f32 %v1180, %v1343
      %v1405 = vmul.f32 %v1181, %v1345
      %v1406 = vmul.f32 %v1182, %v1347
      %v1407 = vmul.f32 %v1183, %v1349
      %v1408 = vmul.f32 %v1184, %v1351
      %v1409 = vmul.f32 %v1185, %v1353
      %v1410 = vmul.f32 %v1186, %v1355
      %v1411 = vmul.f32 %v1187, %v1357
      %v1412 = vmul.f32 %v1188, %v1359
      %v1413 = vmul.f32 %v1189, %v1361
      %v1414 = vmul.f32 %v1190, %v1363
      %v1415 = vmul.f32 %v1191, %v1365
      %v1416 = vmul.f32 %v1192, %v1367
      %v1417 = vmul.f32 %v1193, %v1369
      %v1418 = vmul.f32 %v1194, %v1371
      %v1419 = vmul.f32 %v1195, %v1373
      %v1420 = vmul.f32 %v1196, %v1375
      %v1421 = vmul.f32 %v1197, %v1377
      %v1422 = vmul.f32 %v1198, %v1379
      %v1423 = vmul.f32 %v1199, %v1381
      %v1424 = vmul.f32 %v1200, %v1383
      %v1425 = vmul.f32 %v1201, %v1385
      %v1426 = vmul.f32 %v1202, %v1387
      %v1427 = vmul.f32 %v1203, %v1389
      %v1428 = vmul.f32 %v1204, %v1391
      %v1429 = vmul.f32 %v1205, %v1393
      %v1430 = vmul.f32 %v1206, %v1395
      %v1431 = vmul.f32 %v1207, %v1397
      %v1432 = vmul.f32 %v1208, %v1399
      %v1433 = vmul.f32 %v1209, %v1401
      %v1434 = vpack.c.bf16 %v1037, %v1036
      %v1435 = vpack.c.bf16 %v1039, %v1038
      %v1436 = vpack.c.bf16 %v1041, %v1040
      %v1437 = vpack.c.bf16 %v1043, %v1042
      %v1438 = vpack.c.bf16 %v1045, %v1044
      %v1439 = vpack.c.bf16 %v1047, %v1046
      %v1440 = vpack.c.bf16 %v1049, %v1048
      %v1441 = vpack.c.bf16 %v1051, %v1050
      %v1442 = vpack.c.bf16 %v1053, %v1052
      %v1443 = vpack.c.bf16 %v1055, %v1054
      %v1444 = vpack.c.bf16 %v1057, %v1056
      %v1445 = vpack.c.bf16 %v1059, %v1058
      %v1446 = vpack.c.bf16 %v1061, %v1060
      %v1447 = vpack.c.bf16 %v1063, %v1062
      %v1448 = vpack.c.bf16 %v1065, %v1064
      %v1449 = vpack.c.bf16 %v1067, %v1066
      %v1450 = vld [vmem:[%s7] sm:$0xf]
      %v1451 = vld [vmem:[%s7 + $0x4] sm:$0xf]
      %v1452 = vld [vmem:[%s7 + $0x8] sm:$0xf]
      %v1453 = vld [vmem:[%s7 + $0xc] sm:$0xf]
      %v1454 = vld [vmem:[%s7 + $0x10] sm:$0xf]
      %v1455 = vld [vmem:[%s7 + $0x14] sm:$0xf]
      %v1456 = vld [vmem:[%s7 + $0x18] sm:$0xf]
      %v1457 = vld [vmem:[%s7 + $0x1c] sm:$0xf]
      %v1458 = vld [vmem:[%s7 + $0x20] sm:$0xf]
      %v1459 = vld [vmem:[%s7 + $0x24] sm:$0xf]
      %v1460 = vld [vmem:[%s7 + $0x28] sm:$0xf]
      %v1461 = vld [vmem:[%s7 + $0x2c] sm:$0xf]
      %v1462 = vld [vmem:[%s7 + $0x30] sm:$0xf]
      %v1463 = vld [vmem:[%s7 + $0x34] sm:$0xf]
      %v1464 = vld [vmem:[%s7 + $0x38] sm:$0xf]
      %v1465 = vld [vmem:[%s7 + $0x3c] sm:$0xf]
      %v1466 = vpack.c.bf16 %v1403, %v1402
      %v1467 = vpack.c.bf16 %v1405, %v1404
      %v1468 = vpack.c.bf16 %v1407, %v1406
      %v1469 = vpack.c.bf16 %v1409, %v1408
      %v1470 = vpack.c.bf16 %v1411, %v1410
      %v1471 = vpack.c.bf16 %v1413, %v1412
      %v1472 = vpack.c.bf16 %v1415, %v1414
      %v1473 = vpack.c.bf16 %v1417, %v1416
      %v1474 = vpack.c.bf16 %v1419, %v1418
      %v1475 = vpack.c.bf16 %v1421, %v1420
      %v1476 = vpack.c.bf16 %v1423, %v1422
      %v1477 = vpack.c.bf16 %v1425, %v1424
      %v1478 = vpack.c.bf16 %v1427, %v1426
      %v1479 = vpack.c.bf16 %v1429, %v1428
      %v1480 = vpack.c.bf16 %v1431, %v1430
      %v1481 = vpack.c.bf16 %v1433, %v1432
      %v1482 = vld [vmem:[%s8] sm:$0xf]
      %v1483 = vld [vmem:[%s8 + $0x4] sm:$0xf]
      %v1484 = vld [vmem:[%s8 + $0x8] sm:$0xf]
      %v1485 = vld [vmem:[%s8 + $0xc] sm:$0xf]
      %v1486 = vld [vmem:[%s8 + $0x10] sm:$0xf]
      %v1487 = vld [vmem:[%s8 + $0x14] sm:$0xf]
      %v1488 = vld [vmem:[%s8 + $0x18] sm:$0xf]
      %v1489 = vld [vmem:[%s8 + $0x1c] sm:$0xf]
      %v1490 = vld [vmem:[%s8 + $0x20] sm:$0xf]
      %v1491 = vld [vmem:[%s8 + $0x24] sm:$0xf]
      %v1492 = vld [vmem:[%s8 + $0x28] sm:$0xf]
      %v1493 = vld [vmem:[%s8 + $0x2c] sm:$0xf]
      %v1494 = vld [vmem:[%s8 + $0x30] sm:$0xf]
      %v1495 = vld [vmem:[%s8 + $0x34] sm:$0xf]
      %v1496 = vld [vmem:[%s8 + $0x38] sm:$0xf]
      %v1497 = vld [vmem:[%s8 + $0x3c] sm:$0xf]
      %v1514 = vunpack.c.l.b16 %v1482
      %v1515 = vunpack.c.l.b16 %v1483
      %v1516 = vunpack.c.l.b16 %v1484
      %v1517 = vunpack.c.l.b16 %v1485
      %v1518 = vunpack.c.l.b16 %v1486
      %v1519 = vunpack.c.l.b16 %v1487
      %v1520 = vunpack.c.l.b16 %v1488
      %v1521 = vunpack.c.l.b16 %v1489
      %v1522 = vunpack.c.l.b16 %v1490
      %v1523 = vunpack.c.l.b16 %v1491
      %v1524 = vunpack.c.l.b16 %v1492
      %v1525 = vunpack.c.l.b16 %v1493
      %v1526 = vunpack.c.l.b16 %v1494
      %v1527 = vunpack.c.l.b16 %v1495
      %v1528 = vunpack.c.l.b16 %v1496
      %v1529 = vunpack.c.l.b16 %v1497
      %v1530 = vpack.c.b16 %v1515, %v1514
      %v1531 = vpack.c.b16 %v1517, %v1516
      %v1532 = vpack.c.b16 %v1519, %v1518
      %v1533 = vpack.c.b16 %v1521, %v1520
      %v1534 = vpack.c.b16 %v1523, %v1522
      %v1535 = vpack.c.b16 %v1525, %v1524
      %v1536 = vpack.c.b16 %v1527, %v1526
      %v1537 = vpack.c.b16 %v1529, %v1528
      %1546 = vmatprep.subr.bf16.mxu0 0
      %1547 = vmatpush1.bf16.msra.mxu0 %v1530
      %1548 = vmatprep.subr.bf16.mxu0 0
      %1549 = vmatpush1.bf16.msra.mxu0 %v1531
      %1550 = vmatprep.subr.bf16.mxu0 0
      %1551 = vmatpush1.bf16.msra.mxu0 %v1532
      %1552 = vmatprep.subr.bf16.mxu0 0
      %1553 = vmatpush1.bf16.msra.mxu0 %v1533
      %1554 = vmatprep.subr.bf16.mxu0 0
      %1555 = vmatpush1.bf16.msra.mxu0 %v1534
      %1556 = vmatprep.subr.bf16.mxu0 0
      %1557 = vmatpush1.bf16.msra.mxu0 %v1535
      %1558 = vmatprep.subr.bf16.mxu0 0
      %1559 = vmatpush1.bf16.msra.mxu0 %v1536
      %1560 = vmatprep.subr.bf16.mxu0 0
      %1561 = vmatpush1.bf16.msra.mxu0 %v1537
      %1562 = vmatprep.subr.bf16.mxu0 0
      %1563 = vmatpush1.bf16.msra.mxu0 0
      %1564 = vmatprep.subr.bf16.mxu0 0
      %1565 = vmatpush1.bf16.msra.mxu0 0
      %1566 = vmatprep.subr.bf16.mxu0 0
      %1567 = vmatpush1.bf16.msra.mxu0 0
      %1568 = vmatprep.subr.bf16.mxu0 0
      %1569 = vmatpush1.bf16.msra.mxu0 0
      %1570 = vmatprep.subr.bf16.mxu0 0
      %1571 = vmatpush1.bf16.msra.mxu0 0
      %1572 = vmatprep.subr.bf16.mxu0 0
      %1573 = vmatpush1.bf16.msra.mxu0 0
      %1574 = vmatprep.subr.bf16.mxu0 0
      %1575 = vmatpush1.bf16.msra.mxu0 0
      %1576 = vmatprep.subr.bf16.mxu0 0
      %1577 = vmatpush1.bf16.msra.mxu0 0
      %1578 = vmatprep.mubr.bf16.mxu0 0
      %1579 = vmatmul.mubr.bf16.gmra.mrb[0].mxu0 %v1466
      %v1580 = vpop.f32.mrb[0].mxu0
      %v1581 = vadd.f32 0.0, %v1580
      %v1582 = vpop.f32.mrb[0].mxu0
      %v1583 = vpop.f32.mrb[0].mxu0
      %v1584 = vadd.f32 0.0, %v1583
      %v1585 = vpop.f32.mrb[0].mxu0
      %1586 = vmatprep.mubr.bf16.mxu0 0
      %1587 = vmatmul.mubr.bf16.gmra.mrb[0].mxu0 %v1467
      %v1588 = vpop.f32.mrb[0].mxu0
      %v1589 = vadd.f32 0.0, %v1588
      %v1590 = vpop.f32.mrb[0].mxu0
      %v1591 = vpop.f32.mrb[0].mxu0
      %v1592 = vadd.f32 0.0, %v1591
      %v1593 = vpop.f32.mrb[0].mxu0
      %1594 = vmatprep.mubr.bf16.mxu0 0
      %1595 = vmatmul.mubr.bf16.gmra.mrb[0].mxu0 %v1468
      %v1596 = vpop.f32.mrb[0].mxu0
      %v1597 = vadd.f32 0.0, %v1596
      %v1598 = vpop.f32.mrb[0].mxu0
      %v1599 = vpop.f32.mrb[0].mxu0
      %v1600 = vadd.f32 0.0, %v1599
      %v1601 = vpop.f32.mrb[0].mxu0
      %1602 = vmatprep.mubr.bf16.mxu0 0
      %1603 = vmatmul.mubr.bf16.gmra.mrb[0].mxu0 %v1469
      %v1604 = vpop.f32.mrb[0].mxu0
      %v1605 = vadd.f32 0.0, %v1604
      %v1606 = vpop.f32.mrb[0].mxu0
      %v1607 = vpop.f32.mrb[0].mxu0
      %v1608 = vadd.f32 0.0, %v1607
      %v1609 = vpop.f32.mrb[0].mxu0
      %1610 = vmatprep.mubr.bf16.mxu0 0
      %1611 = vmatmul.mubr.bf16.gmra.mrb[0].mxu0 %v1470
      %v1612 = vpop.f32.mrb[0].mxu0
      %v1613 = vadd.f32 0.0, %v1612
      %v1614 = vpop.f32.mrb[0].mxu0
      %v1615 = vpop.f32.mrb[0].mxu0
      %v1616 = vadd.f32 0.0, %v1615
      %v1617 = vpop.f32.mrb[0].mxu0
      %1618 = vmatprep.mubr.bf16.mxu0 0
      %1619 = vmatmul.mubr.bf16.gmra.mrb[0].mxu0 %v1471
      %v1620 = vpop.f32.mrb[0].mxu0
      %v1621 = vadd.f32 0.0, %v1620
      %v1622 = vpop.f32.mrb[0].mxu0
      %v1623 = vpop.f32.mrb[0].mxu0
      %v1624 = vadd.f32 0.0, %v1623
      %v1625 = vpop.f32.mrb[0].mxu0
      %1626 = vmatprep.mubr.bf16.mxu0 0
      %1627 = vmatmul.mubr.bf16.gmra.mrb[0].mxu0 %v1472
      %v1628 = vpop.f32.mrb[0].mxu0
      %v1629 = vadd.f32 0.0, %v1628
      %v1630 = vpop.f32.mrb[0].mxu0
      %v1631 = vpop.f32.mrb[0].mxu0
      %v1632 = vadd.f32 0.0, %v1631
      %v1633 = vpop.f32.mrb[0].mxu0
      %1634 = vmatprep.mubr.bf16.mxu0 0
      %1635 = vmatmul.mubr.bf16.gmra.mrb[0].mxu0 %v1473
      %v1636 = vpop.f32.mrb[0].mxu0
      %v1637 = vadd.f32 0.0, %v1636
      %v1638 = vpop.f32.mrb[0].mxu0
      %v1639 = vpop.f32.mrb[0].mxu0
      %v1640 = vadd.f32 0.0, %v1639
      %v1641 = vpop.f32.mrb[0].mxu0
      %1642 = vmatprep.mubr.bf16.mxu0 0
      %1643 = vmatmul.mubr.bf16.gmra.mrb[0].mxu0 %v1474
      %v1644 = vpop.f32.mrb[0].mxu0
      %v1645 = vadd.f32 0.0, %v1644
      %v1646 = vpop.f32.mrb[0].mxu0
      %v1647 = vpop.f32.mrb[0].mxu0
      %v1648 = vadd.f32 0.0, %v1647
      %v1649 = vpop.f32.mrb[0].mxu0
      %1650 = vmatprep.mubr.bf16.mxu0 0
      %1651 = vmatmul.mubr.bf16.gmra.mrb[0].mxu0 %v1475
      %v1652 = vpop.f32.mrb[0].mxu0
      %v1653 = vadd.f32 0.0, %v1652
      %v1654 = vpop.f32.mrb[0].mxu0
      %v1655 = vpop.f32.mrb[0].mxu0
      %v1656 = vadd.f32 0.0, %v1655
      %v1657 = vpop.f32.mrb[0].mxu0
      %1658 = vmatprep.mubr.bf16.mxu0 0
      %1659 = vmatmul.mubr.bf16.gmra.mrb[0].mxu0 %v1476
      %v1660 = vpop.f32.mrb[0].mxu0
      %v1661 = vadd.f32 0.0, %v1660
      %v1662 = vpop.f32.mrb[0].mxu0
      %v1663 = vpop.f32.mrb[0].mxu0
      %v1664 = vadd.f32 0.0, %v1663
      %v1665 = vpop.f32.mrb[0].mxu0
      %1666 = vmatprep.mubr.bf16.mxu0 0
      %1667 = vmatmul.mubr.bf16.gmra.mrb[0].mxu0 %v1477
      %v1668 = vpop.f32.mrb[0].mxu0
      %v1669 = vadd.f32 0.0, %v1668
      %v1670 = vpop.f32.mrb[0].mxu0
      %v1671 = vpop.f32.mrb[0].mxu0
      %v1672 = vadd.f32 0.0, %v1671
      %v1673 = vpop.f32.mrb[0].mxu0
      %1674 = vmatprep.mubr.bf16.mxu0 0
      %1675 = vmatmul.mubr.bf16.gmra.mrb[0].mxu0 %v1478
      %v1676 = vpop.f32.mrb[0].mxu0
      %v1677 = vadd.f32 0.0, %v1676
      %v1678 = vpop.f32.mrb[0].mxu0
      %v1679 = vpop.f32.mrb[0].mxu0
      %v1680 = vadd.f32 0.0, %v1679
      %v1681 = vpop.f32.mrb[0].mxu0
      %1682 = vmatprep.mubr.bf16.mxu0 0
      %1683 = vmatmul.mubr.bf16.gmra.mrb[0].mxu0 %v1479
      %v1684 = vpop.f32.mrb[0].mxu0
      %v1685 = vadd.f32 0.0, %v1684
      %v1686 = vpop.f32.mrb[0].mxu0
      %v1687 = vpop.f32.mrb[0].mxu0
      %v1688 = vadd.f32 0.0, %v1687
      %v1689 = vpop.f32.mrb[0].mxu0
      %1690 = vmatprep.mubr.bf16.mxu0 0
      %1691 = vmatmul.mubr.bf16.gmra.mrb[0].mxu0 %v1480
      %v1692 = vpop.f32.mrb[0].mxu0
      %v1693 = vadd.f32 0.0, %v1692
      %v1694 = vpop.f32.mrb[0].mxu0
      %v1695 = vpop.f32.mrb[0].mxu0
      %v1696 = vadd.f32 0.0, %v1695
      %v1697 = vpop.f32.mrb[0].mxu0
      %1698 = vmatprep.mubr.bf16.mxu0 0
      %1699 = vmatmul.mubr.bf16.gmra.mrb[0].mxu0 %v1481
      %v1700 = vpop.f32.mrb[0].mxu0
      %v1701 = vadd.f32 0.0, %v1700
      %v1702 = vpop.f32.mrb[0].mxu0
      %v1703 = vpop.f32.mrb[0].mxu0
      %v1704 = vadd.f32 0.0, %v1703
      %v1705 = vpop.f32.mrb[0].mxu0
      %1706 = vdwg.mxu0
      %v1723 = vunpack.c.l.b16 %v1450
      %v1724 = vunpack.c.l.b16 %v1451
      %v1725 = vunpack.c.l.b16 %v1452
      %v1726 = vunpack.c.l.b16 %v1453
      %v1727 = vunpack.c.l.b16 %v1454
      %v1728 = vunpack.c.l.b16 %v1455
      %v1729 = vunpack.c.l.b16 %v1456
      %v1730 = vunpack.c.l.b16 %v1457
      %v1731 = vunpack.c.l.b16 %v1458
      %v1732 = vunpack.c.l.b16 %v1459
      %v1733 = vunpack.c.l.b16 %v1460
      %v1734 = vunpack.c.l.b16 %v1461
      %v1735 = vunpack.c.l.b16 %v1462
      %v1736 = vunpack.c.l.b16 %v1463
      %v1737 = vunpack.c.l.b16 %v1464
      %v1738 = vunpack.c.l.b16 %v1465
      %v1739 = vpack.c.b16 %v1724, %v1723
      %v1740 = vpack.c.b16 %v1726, %v1725
      %v1741 = vpack.c.b16 %v1728, %v1727
      %v1742 = vpack.c.b16 %v1730, %v1729
      %v1743 = vpack.c.b16 %v1732, %v1731
      %v1744 = vpack.c.b16 %v1734, %v1733
      %v1745 = vpack.c.b16 %v1736, %v1735
      %v1746 = vpack.c.b16 %v1738, %v1737
      %1755 = vmatprep.subr.bf16.mxu0 0
      %1756 = vmatpush1.bf16.msra.mxu0 %v1739
      %1757 = vmatprep.subr.bf16.mxu0 0
      %1758 = vmatpush1.bf16.msra.mxu0 %v1740
      %1759 = vmatprep.subr.bf16.mxu0 0
      %1760 = vmatpush1.bf16.msra.mxu0 %v1741
      %1761 = vmatprep.subr.bf16.mxu0 0
      %1762 = vmatpush1.bf16.msra.mxu0 %v1742
      %1763 = vmatprep.subr.bf16.mxu0 0
      %1764 = vmatpush1.bf16.msra.mxu0 %v1743
      %1765 = vmatprep.subr.bf16.mxu0 0
      %1766 = vmatpush1.bf16.msra.mxu0 %v1744
      %1767 = vmatprep.subr.bf16.mxu0 0
      %1768 = vmatpush1.bf16.msra.mxu0 %v1745
      %1769 = vmatprep.subr.bf16.mxu0 0
      %1770 = vmatpush1.bf16.msra.mxu0 %v1746
      %1771 = vmatprep.subr.bf16.mxu0 0
      %1772 = vmatpush1.bf16.msra.mxu0 0
      %1773 = vmatprep.subr.bf16.mxu0 0
      %1774 = vmatpush1.bf16.msra.mxu0 0
      %1775 = vmatprep.subr.bf16.mxu0 0
      %1776 = vmatpush1.bf16.msra.mxu0 0
      %1777 = vmatprep.subr.bf16.mxu0 0
      %1778 = vmatpush1.bf16.msra.mxu0 0
      %1779 = vmatprep.subr.bf16.mxu0 0
      %1780 = vmatpush1.bf16.msra.mxu0 0
      %1781 = vmatprep.subr.bf16.mxu0 0
      %1782 = vmatpush1.bf16.msra.mxu0 0
      %1783 = vmatprep.subr.bf16.mxu0 0
      %1784 = vmatpush1.bf16.msra.mxu0 0
      %1785 = vmatprep.subr.bf16.mxu0 0
      %1786 = vmatpush1.bf16.msra.mxu0 0
      %1787 = vmatprep.mubr.bf16.mxu0 0
      %1788 = vmatmul.mubr.bf16.gmra.mrb[0].mxu0 %v1434
      %v1789 = vpop.f32.mrb[0].mxu0
      %v1790 = vadd.f32 %v1581, %v1789
      %v1791 = vpop.f32.mrb[0].mxu0
      %v1792 = vpop.f32.mrb[0].mxu0
      %v1793 = vadd.f32 %v1584, %v1792
      %v1794 = vpop.f32.mrb[0].mxu0
      %1795 = vmatprep.mubr.bf16.mxu0 0
      %1796 = vmatmul.mubr.bf16.gmra.mrb[0].mxu0 %v1435
      %v1797 = vpop.f32.mrb[0].mxu0
      %v1798 = vadd.f32 %v1589, %v1797
      %v1799 = vpop.f32.mrb[0].mxu0
      %v1800 = vpop.f32.mrb[0].mxu0
      %v1801 = vadd.f32 %v1592, %v1800
      %v1802 = vpop.f32.mrb[0].mxu0
      %1803 = vmatprep.mubr.bf16.mxu0 0
      %1804 = vmatmul.mubr.bf16.gmra.mrb[0].mxu0 %v1436
      %v1805 = vpop.f32.mrb[0].mxu0
      %v1806 = vadd.f32 %v1597, %v1805
      %v1807 = vpop.f32.mrb[0].mxu0
      %v1808 = vpop.f32.mrb[0].mxu0
      %v1809 = vadd.f32 %v1600, %v1808
      %v1810 = vpop.f32.mrb[0].mxu0
      %1811 = vmatprep.mubr.bf16.mxu0 0
      %1812 = vmatmul.mubr.bf16.gmra.mrb[0].mxu0 %v1437
      %v1813 = vpop.f32.mrb[0].mxu0
      %v1814 = vadd.f32 %v1605, %v1813
      %v1815 = vpop.f32.mrb[0].mxu0
      %v1816 = vpop.f32.mrb[0].mxu0
      %v1817 = vadd.f32 %v1608, %v1816
      %v1818 = vpop.f32.mrb[0].mxu0
      %1819 = vmatprep.mubr.bf16.mxu0 0
      %1820 = vmatmul.mubr.bf16.gmra.mrb[0].mxu0 %v1438
      %v1821 = vpop.f32.mrb[0].mxu0
      %v1822 = vadd.f32 %v1613, %v1821
      %v1823 = vpop.f32.mrb[0].mxu0
      %v1824 = vpop.f32.mrb[0].mxu0
      %v1825 = vadd.f32 %v1616, %v1824
      %v1826 = vpop.f32.mrb[0].mxu0
      %1827 = vmatprep.mubr.bf16.mxu0 0
      %1828 = vmatmul.mubr.bf16.gmra.mrb[0].mxu0 %v1439
      %v1829 = vpop.f32.mrb[0].mxu0
      %v1830 = vadd.f32 %v1621, %v1829
      %v1831 = vpop.f32.mrb[0].mxu0
      %v1832 = vpop.f32.mrb[0].mxu0
      %v1833 = vadd.f32 %v1624, %v1832
      %v1834 = vpop.f32.mrb[0].mxu0
      %1835 = vmatprep.mubr.bf16.mxu0 0
      %1836 = vmatmul.mubr.bf16.gmra.mrb[0].mxu0 %v1440
      %v1837 = vpop.f32.mrb[0].mxu0
      %v1838 = vadd.f32 %v1629, %v1837
      %v1839 = vpop.f32.mrb[0].mxu0
      %v1840 = vpop.f32.mrb[0].mxu0
      %v1841 = vadd.f32 %v1632, %v1840
      %v1842 = vpop.f32.mrb[0].mxu0
      %1843 = vmatprep.mubr.bf16.mxu0 0
      %1844 = vmatmul.mubr.bf16.gmra.mrb[0].mxu0 %v1441
      %v1845 = vpop.f32.mrb[0].mxu0
      %v1846 = vadd.f32 %v1637, %v1845
      %v1847 = vpop.f32.mrb[0].mxu0
      %v1848 = vpop.f32.mrb[0].mxu0
      %v1849 = vadd.f32 %v1640, %v1848
      %v1850 = vpop.f32.mrb[0].mxu0
      %1851 = vmatprep.mubr.bf16.mxu0 0
      %1852 = vmatmul.mubr.bf16.gmra.mrb[0].mxu0 %v1442
      %v1853 = vpop.f32.mrb[0].mxu0
      %v1854 = vadd.f32 %v1645, %v1853
      %v1855 = vpop.f32.mrb[0].mxu0
      %v1856 = vpop.f32.mrb[0].mxu0
      %v1857 = vadd.f32 %v1648, %v1856
      %v1858 = vpop.f32.mrb[0].mxu0
      %1859 = vmatprep.mubr.bf16.mxu0 0
      %1860 = vmatmul.mubr.bf16.gmra.mrb[0].mxu0 %v1443
      %v1861 = vpop.f32.mrb[0].mxu0
      %v1862 = vadd.f32 %v1653, %v1861
      %v1863 = vpop.f32.mrb[0].mxu0
      %v1864 = vpop.f32.mrb[0].mxu0
      %v1865 = vadd.f32 %v1656, %v1864
      %v1866 = vpop.f32.mrb[0].mxu0
      %1867 = vmatprep.mubr.bf16.mxu0 0
      %1868 = vmatmul.mubr.bf16.gmra.mrb[0].mxu0 %v1444
      %v1869 = vpop.f32.mrb[0].mxu0
      %v1870 = vadd.f32 %v1661, %v1869
      %v1871 = vpop.f32.mrb[0].mxu0
      %v1872 = vpop.f32.mrb[0].mxu0
      %v1873 = vadd.f32 %v1664, %v1872
      %v1874 = vpop.f32.mrb[0].mxu0
      %1875 = vmatprep.mubr.bf16.mxu0 0
      %1876 = vmatmul.mubr.bf16.gmra.mrb[0].mxu0 %v1445
      %v1877 = vpop.f32.mrb[0].mxu0
      %v1878 = vadd.f32 %v1669, %v1877
      %v1879 = vpop.f32.mrb[0].mxu0
      %v1880 = vpop.f32.mrb[0].mxu0
      %v1881 = vadd.f32 %v1672, %v1880
      %v1882 = vpop.f32.mrb[0].mxu0
      %1883 = vmatprep.mubr.bf16.mxu0 0
      %1884 = vmatmul.mubr.bf16.gmra.mrb[0].mxu0 %v1446
      %v1885 = vpop.f32.mrb[0].mxu0
      %v1886 = vadd.f32 %v1677, %v1885
      %v1887 = vpop.f32.mrb[0].mxu0
      %v1888 = vpop.f32.mrb[0].mxu0
      %v1889 = vadd.f32 %v1680, %v1888
      %v1890 = vpop.f32.mrb[0].mxu0
      %1891 = vmatprep.mubr.bf16.mxu0 0
      %1892 = vmatmul.mubr.bf16.gmra.mrb[0].mxu0 %v1447
      %v1893 = vpop.f32.mrb[0].mxu0
      %v1894 = vadd.f32 %v1685, %v1893
      %v1895 = vpop.f32.mrb[0].mxu0
      %v1896 = vpop.f32.mrb[0].mxu0
      %v1897 = vadd.f32 %v1688, %v1896
      %v1898 = vpop.f32.mrb[0].mxu0
      %1899 = vmatprep.mubr.bf16.mxu0 0
      %1900 = vmatmul.mubr.bf16.gmra.mrb[0].mxu0 %v1448
      %v1901 = vpop.f32.mrb[0].mxu0
      %v1902 = vadd.f32 %v1693, %v1901
      %v1903 = vpop.f32.mrb[0].mxu0
      %v1904 = vpop.f32.mrb[0].mxu0
      %v1905 = vadd.f32 %v1696, %v1904
      %v1906 = vpop.f32.mrb[0].mxu0
      %1907 = vmatprep.mubr.bf16.mxu0 0
      %1908 = vmatmul.mubr.bf16.gmra.mrb[0].mxu0 %v1449
      %v1909 = vpop.f32.mrb[0].mxu0
      %v1910 = vadd.f32 %v1701, %v1909
      %v1911 = vpop.f32.mrb[0].mxu0
      %v1912 = vpop.f32.mrb[0].mxu0
      %v1913 = vadd.f32 %v1704, %v1912
      %v1914 = vpop.f32.mrb[0].mxu0
      %1915 = vdwg.mxu0
      %v1916 = vld [vmem:[%s9] sm:$0x1]
      %v1918 = vlaneseq
      %v1919 = vshrl.u32 %v1918, 7
      %v1920 = vsub.s32 0, %v1919
      %v1921 = vrot.slane %v1916, %v1920
      %v1923 = vmul.f32 %v1790, %v1921
      %v1924 = vmul.f32 %v1793, %v1921
      %v1925 = vmul.f32 %v1798, %v1921
      %v1926 = vmul.f32 %v1801, %v1921
      %v1927 = vmul.f32 %v1806, %v1921
      %v1928 = vmul.f32 %v1809, %v1921
      %v1929 = vmul.f32 %v1814, %v1921
      %v1930 = vmul.f32 %v1817, %v1921
      %v1931 = vmul.f32 %v1822, %v1921
      %v1932 = vmul.f32 %v1825, %v1921
      %v1933 = vmul.f32 %v1830, %v1921
      %v1934 = vmul.f32 %v1833, %v1921
      %v1935 = vmul.f32 %v1838, %v1921
      %v1936 = vmul.f32 %v1841, %v1921
      %v1937 = vmul.f32 %v1846, %v1921
      %v1938 = vmul.f32 %v1849, %v1921
      %v1939 = vmul.f32 %v1854, %v1921
      %v1940 = vmul.f32 %v1857, %v1921
      %v1941 = vmul.f32 %v1862, %v1921
      %v1942 = vmul.f32 %v1865, %v1921
      %v1943 = vmul.f32 %v1870, %v1921
      %v1944 = vmul.f32 %v1873, %v1921
      %v1945 = vmul.f32 %v1878, %v1921
      %v1946 = vmul.f32 %v1881, %v1921
      %v1947 = vmul.f32 %v1886, %v1921
      %v1948 = vmul.f32 %v1889, %v1921
      %v1949 = vmul.f32 %v1894, %v1921
      %v1950 = vmul.f32 %v1897, %v1921
      %v1951 = vmul.f32 %v1902, %v1921
      %v1952 = vmul.f32 %v1905, %v1921
      %v1953 = vmul.f32 %v1910, %v1921
      %v1954 = vmul.f32 %v1913, %v1921
      %v1955 = vld [vmem:[%s10] sm:$0x1]
      %v1957 = vlaneseq
      %v1958 = vshrl.u32 %v1957, 7
      %v1959 = vsub.s32 0, %v1958
      %v1960 = vrot.slane %v1955, %v1959
      %v1962 = vadd.f32 %v1923, %v1960
      %v1963 = vadd.f32 %v1924, %v1960
      %v1964 = vadd.f32 %v1925, %v1960
      %v1965 = vadd.f32 %v1926, %v1960
      %v1966 = vadd.f32 %v1927, %v1960
      %v1967 = vadd.f32 %v1928, %v1960
      %v1968 = vadd.f32 %v1929, %v1960
      %v1969 = vadd.f32 %v1930, %v1960
      %v1970 = vadd.f32 %v1931, %v1960
      %v1971 = vadd.f32 %v1932, %v1960
      %v1972 = vadd.f32 %v1933, %v1960
      %v1973 = vadd.f32 %v1934, %v1960
      %v1974 = vadd.f32 %v1935, %v1960
      %v1975 = vadd.f32 %v1936, %v1960
      %v1976 = vadd.f32 %v1937, %v1960
      %v1977 = vadd.f32 %v1938, %v1960
      %v1978 = vadd.f32 %v1939, %v1960
      %v1979 = vadd.f32 %v1940, %v1960
      %v1980 = vadd.f32 %v1941, %v1960
      %v1981 = vadd.f32 %v1942, %v1960
      %v1982 = vadd.f32 %v1943, %v1960
      %v1983 = vadd.f32 %v1944, %v1960
      %v1984 = vadd.f32 %v1945, %v1960
      %v1985 = vadd.f32 %v1946, %v1960
      %v1986 = vadd.f32 %v1947, %v1960
      %v1987 = vadd.f32 %v1948, %v1960
      %v1988 = vadd.f32 %v1949, %v1960
      %v1989 = vadd.f32 %v1950, %v1960
      %v1990 = vadd.f32 %v1951, %v1960
      %v1991 = vadd.f32 %v1952, %v1960
      %v1992 = vadd.f32 %v1953, %v1960
      %v1993 = vadd.f32 %v1954, %v1960
      %v1994 = vxor.u32 %v1962, 2147483648
      %v1995 = vxor.u32 %v1963, 2147483648
      %v1996 = vxor.u32 %v1964, 2147483648
      %v1997 = vxor.u32 %v1965, 2147483648
      %v1998 = vxor.u32 %v1966, 2147483648
      %v1999 = vxor.u32 %v1967, 2147483648
      %v2000 = vxor.u32 %v1968, 2147483648
      %v2001 = vxor.u32 %v1969, 2147483648
      %v2002 = vxor.u32 %v1970, 2147483648
      %v2003 = vxor.u32 %v1971, 2147483648
      %v2004 = vxor.u32 %v1972, 2147483648
      %v2005 = vxor.u32 %v1973, 2147483648
      %v2006 = vxor.u32 %v1974, 2147483648
      %v2007 = vxor.u32 %v1975, 2147483648
      %v2008 = vxor.u32 %v1976, 2147483648
      %v2009 = vxor.u32 %v1977, 2147483648
      %v2010 = vxor.u32 %v1978, 2147483648
      %v2011 = vxor.u32 %v1979, 2147483648
      %v2012 = vxor.u32 %v1980, 2147483648
      %v2013 = vxor.u32 %v1981, 2147483648
      %v2014 = vxor.u32 %v1982, 2147483648
      %v2015 = vxor.u32 %v1983, 2147483648
      %v2016 = vxor.u32 %v1984, 2147483648
      %v2017 = vxor.u32 %v1985, 2147483648
      %v2018 = vxor.u32 %v1986, 2147483648
      %v2019 = vxor.u32 %v1987, 2147483648
      %v2020 = vxor.u32 %v1988, 2147483648
      %v2021 = vxor.u32 %v1989, 2147483648
      %v2022 = vxor.u32 %v1990, 2147483648
      %v2023 = vxor.u32 %v1991, 2147483648
      %v2024 = vxor.u32 %v1992, 2147483648
      %v2025 = vxor.u32 %v1993, 2147483648
      %v2026 = vmul.f32 %v1994, 1.442695
      %v2027 = vpow.pop %v2026
      %v2028 = vmul.f32 %v1995, 1.442695
      %v2029 = vpow.pop %v2028
      %v2030 = vmul.f32 %v1996, 1.442695
      %v2031 = vpow.pop %v2030
      %v2032 = vmul.f32 %v1997, 1.442695
      %v2033 = vpow.pop %v2032
      %v2034 = vmul.f32 %v1998, 1.442695
      %v2035 = vpow.pop %v2034
      %v2036 = vmul.f32 %v1999, 1.442695
      %v2037 = vpow.pop %v2036
      %v2038 = vmul.f32 %v2000, 1.442695
      %v2039 = vpow.pop %v2038
      %v2040 = vmul.f32 %v2001, 1.442695
      %v2041 = vpow.pop %v2040
      %v2042 = vmul.f32 %v2002, 1.442695
      %v2043 = vpow.pop %v2042
      %v2044 = vmul.f32 %v2003, 1.442695
      %v2045 = vpow.pop %v2044
      %v2046 = vmul.f32 %v2004, 1.442695
      %v2047 = vpow.pop %v2046
      %v2048 = vmul.f32 %v2005, 1.442695
      %v2049 = vpow.pop %v2048
      %v2050 = vmul.f32 %v2006, 1.442695
      %v2051 = vpow.pop %v2050
      %v2052 = vmul.f32 %v2007, 1.442695
      %v2053 = vpow.pop %v2052
      %v2054 = vmul.f32 %v2008, 1.442695
      %v2055 = vpow.pop %v2054
      %v2056 = vmul.f32 %v2009, 1.442695
      %v2057 = vpow.pop %v2056
      %v2058 = vmul.f32 %v2010, 1.442695
      %v2059 = vpow.pop %v2058
      %v2060 = vmul.f32 %v2011, 1.442695
      %v2061 = vpow.pop %v2060
      %v2062 = vmul.f32 %v2012, 1.442695
      %v2063 = vpow.pop %v2062
      %v2064 = vmul.f32 %v2013, 1.442695
      %v2065 = vpow.pop %v2064
      %v2066 = vmul.f32 %v2014, 1.442695
      %v2067 = vpow.pop %v2066
      %v2068 = vmul.f32 %v2015, 1.442695
      %v2069 = vpow.pop %v2068
      %v2070 = vmul.f32 %v2016, 1.442695
      %v2071 = vpow.pop %v2070
      %v2072 = vmul.f32 %v2017, 1.442695
      %v2073 = vpow.pop %v2072
      %v2074 = vmul.f32 %v2018, 1.442695
      %v2075 = vpow.pop %v2074
      %v2076 = vmul.f32 %v2019, 1.442695
      %v2077 = vpow.pop %v2076
      %v2078 = vmul.f32 %v2020, 1.442695
      %v2079 = vpow.pop %v2078
      %v2080 = vmul.f32 %v2021, 1.442695
      %v2081 = vpow.pop %v2080
      %v2082 = vmul.f32 %v2022, 1.442695
      %v2083 = vpow.pop %v2082
      %v2084 = vmul.f32 %v2023, 1.442695
      %v2085 = vpow.pop %v2084
      %v2086 = vmul.f32 %v2024, 1.442695
      %v2087 = vpow.pop %v2086
      %v2088 = vmul.f32 %v2025, 1.442695
      %v2089 = vpow.pop %v2088
      %v2090 = vadd.f32 %v2027, 1.0
      %v2091 = vadd.f32 %v2029, 1.0
      %v2092 = vadd.f32 %v2031, 1.0
      %v2093 = vadd.f32 %v2033, 1.0
      %v2094 = vadd.f32 %v2035, 1.0
      %v2095 = vadd.f32 %v2037, 1.0
      %v2096 = vadd.f32 %v2039, 1.0
      %v2097 = vadd.f32 %v2041, 1.0
      %v2098 = vadd.f32 %v2043, 1.0
      %v2099 = vadd.f32 %v2045, 1.0
      %v2100 = vadd.f32 %v2047, 1.0
      %v2101 = vadd.f32 %v2049, 1.0
      %v2102 = vadd.f32 %v2051, 1.0
      %v2103 = vadd.f32 %v2053, 1.0
      %v2104 = vadd.f32 %v2055, 1.0
      %v2105 = vadd.f32 %v2057, 1.0
      %v2106 = vadd.f32 %v2059, 1.0
      %v2107 = vadd.f32 %v2061, 1.0
      %v2108 = vadd.f32 %v2063, 1.0
      %v2109 = vadd.f32 %v2065, 1.0
      %v2110 = vadd.f32 %v2067, 1.0
      %v2111 = vadd.f32 %v2069, 1.0
      %v2112 = vadd.f32 %v2071, 1.0
      %v2113 = vadd.f32 %v2073, 1.0
      %v2114 = vadd.f32 %v2075, 1.0
      %v2115 = vadd.f32 %v2077, 1.0
      %v2116 = vadd.f32 %v2079, 1.0
      %v2117 = vadd.f32 %v2081, 1.0
      %v2118 = vadd.f32 %v2083, 1.0
      %v2119 = vadd.f32 %v2085, 1.0
      %v2120 = vadd.f32 %v2087, 1.0
      %v2121 = vadd.f32 %v2089, 1.0
      %v2122 = vrcp.pop %v2090
      %v2123 = vmul.f32 1.0, %v2122
      %v2124 = vrcp.pop %v2091
      %v2125 = vmul.f32 1.0, %v2124
      %v2126 = vrcp.pop %v2092
      %v2127 = vmul.f32 1.0, %v2126
      %v2128 = vrcp.pop %v2093
      %v2129 = vmul.f32 1.0, %v2128
      %v2130 = vrcp.pop %v2094
      %v2131 = vmul.f32 1.0, %v2130
      %v2132 = vrcp.pop %v2095
      %v2133 = vmul.f32 1.0, %v2132
      %v2134 = vrcp.pop %v2096
      %v2135 = vmul.f32 1.0, %v2134
      %v2136 = vrcp.pop %v2097
      %v2137 = vmul.f32 1.0, %v2136
      %v2138 = vrcp.pop %v2098
      %v2139 = vmul.f32 1.0, %v2138
      %v2140 = vrcp.pop %v2099
      %v2141 = vmul.f32 1.0, %v2140
      %v2142 = vrcp.pop %v2100
      %v2143 = vmul.f32 1.0, %v2142
      %v2144 = vrcp.pop %v2101
      %v2145 = vmul.f32 1.0, %v2144
      %v2146 = vrcp.pop %v2102
      %v2147 = vmul.f32 1.0, %v2146
      %v2148 = vrcp.pop %v2103
      %v2149 = vmul.f32 1.0, %v2148
      %v2150 = vrcp.pop %v2104
      %v2151 = vmul.f32 1.0, %v2150
      %v2152 = vrcp.pop %v2105
      %v2153 = vmul.f32 1.0, %v2152
      %v2154 = vrcp.pop %v2106
      %v2155 = vmul.f32 1.0, %v2154
      %v2156 = vrcp.pop %v2107
      %v2157 = vmul.f32 1.0, %v2156
      %v2158 = vrcp.pop %v2108
      %v2159 = vmul.f32 1.0, %v2158
      %v2160 = vrcp.pop %v2109
      %v2161 = vmul.f32 1.0, %v2160
      %v2162 = vrcp.pop %v2110
      %v2163 = vmul.f32 1.0, %v2162
      %v2164 = vrcp.pop %v2111
      %v2165 = vmul.f32 1.0, %v2164
      %v2166 = vrcp.pop %v2112
      %v2167 = vmul.f32 1.0, %v2166
      %v2168 = vrcp.pop %v2113
      %v2169 = vmul.f32 1.0, %v2168
      %v2170 = vrcp.pop %v2114
      %v2171 = vmul.f32 1.0, %v2170
      %v2172 = vrcp.pop %v2115
      %v2173 = vmul.f32 1.0, %v2172
      %v2174 = vrcp.pop %v2116
      %v2175 = vmul.f32 1.0, %v2174
      %v2176 = vrcp.pop %v2117
      %v2177 = vmul.f32 1.0, %v2176
      %v2178 = vrcp.pop %v2118
      %v2179 = vmul.f32 1.0, %v2178
      %v2180 = vrcp.pop %v2119
      %v2181 = vmul.f32 1.0, %v2180
      %v2182 = vrcp.pop %v2120
      %v2183 = vmul.f32 1.0, %v2182
      %v2184 = vrcp.pop %v2121
      %v2185 = vmul.f32 1.0, %v2184
      %v2186 = vmul.f32 %v1962, %v2123
      %v2187 = vmul.f32 %v1963, %v2125
      %v2188 = vmul.f32 %v1964, %v2127
      %v2189 = vmul.f32 %v1965, %v2129
      %v2190 = vmul.f32 %v1966, %v2131
      %v2191 = vmul.f32 %v1967, %v2133
      %v2192 = vmul.f32 %v1968, %v2135
      %v2193 = vmul.f32 %v1969, %v2137
      %v2194 = vmul.f32 %v1970, %v2139
      %v2195 = vmul.f32 %v1971, %v2141
      %v2196 = vmul.f32 %v1972, %v2143
      %v2197 = vmul.f32 %v1973, %v2145
      %v2198 = vmul.f32 %v1974, %v2147
      %v2199 = vmul.f32 %v1975, %v2149
      %v2200 = vmul.f32 %v1976, %v2151
      %v2201 = vmul.f32 %v1977, %v2153
      %v2202 = vmul.f32 %v1978, %v2155
      %v2203 = vmul.f32 %v1979, %v2157
      %v2204 = vmul.f32 %v1980, %v2159
      %v2205 = vmul.f32 %v1981, %v2161
      %v2206 = vmul.f32 %v1982, %v2163
      %v2207 = vmul.f32 %v1983, %v2165
      %v2208 = vmul.f32 %v1984, %v2167
      %v2209 = vmul.f32 %v1985, %v2169
      %v2210 = vmul.f32 %v1986, %v2171
      %v2211 = vmul.f32 %v1987, %v2173
      %v2212 = vmul.f32 %v1988, %v2175
      %v2213 = vmul.f32 %v1989, %v2177
      %v2214 = vmul.f32 %v1990, %v2179
      %v2215 = vmul.f32 %v1991, %v2181
      %v2216 = vmul.f32 %v1992, %v2183
      %v2217 = vmul.f32 %v1993, %v2185
      %2218 = vst [vmem:[%s410] sm:$0xff] %v2186
      %2219 = vst [vmem:[%s410 + $0x8] sm:$0xff] %v2187
      %2220 = vst [vmem:[%s410 + $0x10] sm:$0xff] %v2188
      %2221 = vst [vmem:[%s410 + $0x18] sm:$0xff] %v2189
      %2222 = vst [vmem:[%s410 + $0x20] sm:$0xff] %v2190
      %2223 = vst [vmem:[%s410 + $0x28] sm:$0xff] %v2191
      %2224 = vst [vmem:[%s410 + $0x30] sm:$0xff] %v2192
      %2225 = vst [vmem:[%s410 + $0x38] sm:$0xff] %v2193
      %2226 = vst [vmem:[%s410 + $0x40] sm:$0xff] %v2194
      %2227 = vst [vmem:[%s410 + $0x48] sm:$0xff] %v2195
      %2228 = vst [vmem:[%s410 + $0x50] sm:$0xff] %v2196
      %2229 = vst [vmem:[%s410 + $0x58] sm:$0xff] %v2197
      %2230 = vst [vmem:[%s410 + $0x60] sm:$0xff] %v2198
      %2231 = vst [vmem:[%s410 + $0x68] sm:$0xff] %v2199
      %2232 = vst [vmem:[%s410 + $0x70] sm:$0xff] %v2200
      %2233 = vst [vmem:[%s410 + $0x78] sm:$0xff] %v2201
      %2234 = vst [vmem:[%s410 + $0x80] sm:$0xff] %v2202
      %2235 = vst [vmem:[%s410 + $0x88] sm:$0xff] %v2203
      %2236 = vst [vmem:[%s410 + $0x90] sm:$0xff] %v2204
      %2237 = vst [vmem:[%s410 + $0x98] sm:$0xff] %v2205
      %2238 = vst [vmem:[%s410 + $0xa0] sm:$0xff] %v2206
      %2239 = vst [vmem:[%s410 + $0xa8] sm:$0xff] %v2207
      %2240 = vst [vmem:[%s410 + $0xb0] sm:$0xff] %v2208
      %2241 = vst [vmem:[%s410 + $0xb8] sm:$0xff] %v2209
      %2242 = vst [vmem:[%s410 + $0xc0] sm:$0xff] %v2210
      %2243 = vst [vmem:[%s410 + $0xc8] sm:$0xff] %v2211
      %2244 = vst [vmem:[%s410 + $0xd0] sm:$0xff] %v2212
      %2245 = vst [vmem:[%s410 + $0xd8] sm:$0xff] %v2213
      %2246 = vst [vmem:[%s410 + $0xe0] sm:$0xff] %v2214
      %2247 = vst [vmem:[%s410 + $0xe8] sm:$0xff] %v2215
      %2248 = vst [vmem:[%s410 + $0xf0] sm:$0xff] %v2216
      %2249 = vst [vmem:[%s410 + $0xf8] sm:$0xff] %v2217
      %s2250 = smul.u32 32, %s22
      %p2251 = scmp.lt.s32.totalorder %s2250, 63
      %s2252 = scalar_select %p2251, %s2250, 63
      %s2253 = smul.addr %s2252, 8
      %s2254 = scalar_lea.vmem %s11, %s2253
      // Predicated region
      $region65: #{bottleneck_csp_forward.5} parent=63 // pred_check
        %p2255 = pneg %p281
      $region66: #{bottleneck_csp_forward.5} parent=63 // pred_check_branch
        %2257 = sbr.rel (%p2255) target = $region68
      $region67: #{bottleneck_csp_forward.5} parent=63 // pred_region
        %s2258 = smul.u32 32, %s22
      $region68: #{bottleneck_csp_forward.5} parent=63 // pred_fallthru
        _
    $region64: #{bottleneck_csp_forward.5} parent=5 // pred_fallthru
      _
    %p2259 = scmp.le.s32.totalorder 2, %s17
    // Predicated region
    $region69: #{bottleneck_csp_forward.5} parent=5 // pred_check
      %p2260 = pneg %p2259
    $region70: #{bottleneck_csp_forward.5} parent=5 // pred_check_branch
      %2262 = sbr.rel (%p2260) target = $region72
    $region71: #{bottleneck_csp_forward.5} parent=5 // pred_region
      %s2263 = ssub.s32 %s17, 2
      // Predicated region
      $region73: #{bottleneck_csp_forward.5} parent=71 // pred_check
        %p2264 = pneg %p287
      $region74: #{bottleneck_csp_forward.5} parent=71 // pred_check_branch
        %2266 = sbr.rel (%p2264) target = $region76
      $region75: #{bottleneck_csp_forward.5} parent=71 // pred_region
        %s2267 = smul.u32 32, %s23
        %p2268 = scmp.lt.s32.totalorder %s2267, 63
        %s2269 = scalar_select %p2268, %s2267, 63
        %s2270 = smul.addr %s2269, 8
        %s2271 = scalar_lea.vmem %s11, %s2270
      $region76: #{bottleneck_csp_forward.5} parent=71 // pred_fallthru
        _
    $region72: #{bottleneck_csp_forward.5} parent=5 // pred_fallthru
      _
  $region6: #{bottleneck_csp_forward.5} parent=0 // loop_footer
    %s21 = sadd.s32 1, %s17
  $region7: #{bottleneck_csp_forward.5} parent=0 // loop_footer_branch
    %16 = sbr.rel target = $region3
  $region8: #{bottleneck_csp_forward.5} parent=0 // loop_exit
    _

// kernel: bottleneck_csp_forward.4
$region0: #{bottleneck_csp_forward.4}
  #allocation0 [shape = 'u32[]', space=smem, size = 0x4, offset = 0x4, fixed_abs, tag = 'smem constant byte address 0x4 - core index']
  #allocation1 [shape = 'u32[144,128]{1,0:T(1,128)}', space=vmem, size = 0x12000, scoped, tag = 'internal scratch']
  #allocation2 [shape = 'bf16[10,18,128]{2,1,0:T(8,128)(2,1)}', space=vmem, size = 0xf000, scoped, tag = 'scratch operand']
  %s0 = inlined_call_operand.vmem [shape: bf16[2,16,16,128], index: 0, kind: input, shape index: {}, may-alias: {0,1,2}]
  %s1 = inlined_call_operand.vmem [shape: bf16[2,16,16,128], index: 1, kind: input, shape index: {}, may-alias: {0,1,2}]
  %s2 = inlined_call_operand.vmem [shape: bf16[2,16,16,128], index: 2, kind: input, shape index: {}, may-alias: {0,1,2}]
  %s3 = inlined_call_operand.vmem [shape: bf16[128,128], index: 3, kind: input, shape index: {}]
  %s4 = inlined_call_operand.vmem [shape: f32[1,128], index: 4, kind: input, shape index: {}]
  %s5 = inlined_call_operand.vmem [shape: f32[1,128], index: 5, kind: input, shape index: {}]
  %s6 = inlined_call_operand.vmem [shape: bf16[3,3,128,128], index: 6, kind: input, shape index: {}]
  %s7 = inlined_call_operand.vmem [shape: f32[1,128], index: 7, kind: input, shape index: {}]
  %s8 = inlined_call_operand.vmem [shape: f32[1,128], index: 8, kind: input, shape index: {}]
  %s9 = inlined_call_operand.vmem [shape: bf16[2,16,16,128], index: 9, kind: output, shape index: {}]
  %s10 = sld [smem:[#allocation0]]
  $region69: #{bottleneck_csp_forward.4} parent=0
    _
  %s12 = ssub.s32 1, %s10
  %s13 = scalar_select 0, %s12, %s10
  loop: start=0, step=1, limit=6
  $region2: #{bottleneck_csp_forward.4} parent=0 // loop_pre_header
    _
  $region3: #{bottleneck_csp_forward.4} parent=0 // loop_header
    %s15 = sphi 0, %s19
    %p16 = scmp.ge.s32.totalorder %s15, 6
    %s22 = sphi 0, %s34
    %s23 = sphi 0, %s30
    %s24 = sphi 0, %s22
    %s25 = sphi 0, %s23
    %s26 = sphi 0, %s24
    %s27 = sphi 0, %s25
    %s39 = sphi 0, %s41
    %s42 = sphi 0, %s39
    %s43 = sphi 0, %s42
    %s59 = sphi 0, %s43
    %s73 = sphi 0, %s75
    %s76 = sphi 0, %s73
    %s77 = sphi 0, %s76
    %s93 = sphi 0, %s77
    %s107 = sphi 0, %s109
    %s110 = sphi 0, %s107
    %s111 = sphi 0, %s110
    %s127 = sphi 0, %s111
    %s131 = sphi 0, %s131
    %s133 = sphi 0, %s131
    %s134 = sphi 0, %s133
    %s148 = sphi 0, %s134
    %s152 = sphi 0, %s152
    %s154 = sphi 0, %s152
    %s155 = sphi 0, %s154
    %s169 = sphi 0, %s155
    %s173 = sphi 0, %s173
    %s175 = sphi 0, %s173
    %s176 = sphi 0, %s175
    %s190 = sphi 0, %s176
    %s194 = sphi 0, %s194
    %s196 = sphi 0, %s194
    %s197 = sphi 0, %s196
    %s211 = sphi 0, %s197
    %s215 = sphi 0, %s215
    %s217 = sphi 0, %s215
    %s218 = sphi 0, %s217
    %s232 = sphi 0, %s218
    %s236 = sphi 0, %s236
    %s238 = sphi 0, %s236
    %s239 = sphi 0, %s238
    %s253 = sphi 0, %s239
    %s261 = sphi 0, %s263
    %s264 = sphi 0, %s261
    %s265 = sphi 0, %s264
    %s281 = sphi 0, %s265
  $region4: #{bottleneck_csp_forward.4} parent=0 // loop_header_branch
    %18 = sbr.rel (%p16) target = $region8
  $region5: #{bottleneck_csp_forward.4} parent=0 // loop_body
    %s20 = ssub.s32 %s15, 1
    %s21 = ssub.s32 %s15, 2
    %s28 = sadd.s32 1, %s23
    %p29 = scmp.ge.s32.totalorder %s28, 2
    %s30 = scalar_select %p29, 0, %s28
    %s31 = sadd.s32 1, %s22
    %s32 = scalar_select %p29, %s31, %s22
    %p33 = scmp.ge.s32.totalorder %s32, 2
    %s34 = scalar_select %p33, 0, %s32
    %s35 = ssub.s32 %s22, %s34
    %s36 = ssub.s32 %s23, %s30
    %s37 = sor.u32 %s35, %s36
    %p38 = scmp.eq.s32.totalorder %s37, 0
    %s40 = sadd.s32 %s39, 1
    %s41 = scalar_select %p38, %s39, %s40
    %p44 = pneg %p38
    %p45 = scmp.eq.s32.totalorder %s15, 3
    %p46 = por %p44, %p45
    %p47 = scmp.ne.s32.totalorder %s39, %s42
    %p48 = scmp.eq.s32.totalorder %s15, 0
    %p49 = por %p47, %p48
    %p50 = scmp.ne.s32.totalorder %s39, %s42
    %p51 = scmp.eq.s32.totalorder %s20, 3
    %p52 = por %p50, %p51
    %p53 = scmp.ne.s32.totalorder %s42, %s43
    %p54 = scmp.eq.s32.totalorder %s20, 0
    %p55 = por %p53, %p54
    %p56 = scmp.ne.s32.totalorder %s42, %s43
    %p57 = scmp.eq.s32.totalorder %s21, 3
    %p58 = por %p56, %p57
    %p60 = scmp.ne.s32.totalorder %s43, %s59
    %p61 = scmp.eq.s32.totalorder %s21, 0
    %p62 = por %p60, %p61
    %s63 = ssub.s32 %s23, 1
    %p64 = scmp.gt.s32.totalorder %s63, 0
    %s65 = scalar_select %p64, %s63, 0
    %s66 = ssub.s32 %s30, 1
    %p67 = scmp.gt.s32.totalorder %s66, 0
    %s68 = scalar_select %p67, %s66, 0
    %s69 = ssub.s32 %s22, %s34
    %s70 = ssub.s32 %s65, %s68
    %s71 = sor.u32 %s69, %s70
    %p72 = scmp.eq.s32.totalorder %s71, 0
    %s74 = sadd.s32 %s73, 1
    %s75 = scalar_select %p72, %s73, %s74
    %p78 = pneg %p72
    %p79 = scmp.eq.s32.totalorder %s15, 3
    %p80 = por %p78, %p79
    %p81 = scmp.ne.s32.totalorder %s73, %s76
    %p82 = scmp.eq.s32.totalorder %s15, 0
    %p83 = por %p81, %p82
    %p84 = scmp.ne.s32.totalorder %s73, %s76
    %p85 = scmp.eq.s32.totalorder %s20, 3
    %p86 = por %p84, %p85
    %p87 = scmp.ne.s32.totalorder %s76, %s77
    %p88 = scmp.eq.s32.totalorder %s20, 0
    %p89 = por %p87, %p88
    %p90 = scmp.ne.s32.totalorder %s76, %s77
    %p91 = scmp.eq.s32.totalorder %s21, 3
    %p92 = por %p90, %p91
    %p94 = scmp.ne.s32.totalorder %s77, %s93
    %p95 = scmp.eq.s32.totalorder %s21, 0
    %p96 = por %p94, %p95
    %s97 = sadd.s32 %s23, 1
    %p98 = scmp.lt.s32.totalorder %s97, 1
    %s99 = scalar_select %p98, %s97, 1
    %s100 = sadd.s32 %s30, 1
    %p101 = scmp.lt.s32.totalorder %s100, 1
    %s102 = scalar_select %p101, %s100, 1
    %s103 = ssub.s32 %s22, %s34
    %s104 = ssub.s32 %s99, %s102
    %s105 = sor.u32 %s103, %s104
    %p106 = scmp.eq.s32.totalorder %s105, 0
    %s108 = sadd.s32 %s107, 1
    %s109 = scalar_select %p106, %s107, %s108
    %p112 = pneg %p106
    %p113 = scmp.eq.s32.totalorder %s15, 3
    %p114 = por %p112, %p113
    %p115 = scmp.ne.s32.totalorder %s107, %s110
    %p116 = scmp.eq.s32.totalorder %s15, 0
    %p117 = por %p115, %p116
    %p118 = scmp.ne.s32.totalorder %s107, %s110
    %p119 = scmp.eq.s32.totalorder %s20, 3
    %p120 = por %p118, %p119
    %p121 = scmp.ne.s32.totalorder %s110, %s111
    %p122 = scmp.eq.s32.totalorder %s20, 0
    %p123 = por %p121, %p122
    %p124 = scmp.ne.s32.totalorder %s110, %s111
    %p125 = scmp.eq.s32.totalorder %s21, 3
    %p126 = por %p124, %p125
    %p128 = scmp.ne.s32.totalorder %s111, %s127
    %p129 = scmp.eq.s32.totalorder %s21, 0
    %p130 = por %p128, %p129
    %s132 = sadd.s32 %s131, 1
    %p135 = scmp.eq.s32.totalorder %s15, 3
    %p136 = scmp.ne.s32.totalorder %s131, %s133
    %p137 = scmp.eq.s32.totalorder %s15, 0
    %p138 = por %p136, %p137
    %p139 = scmp.ne.s32.totalorder %s131, %s133
    %p140 = scmp.eq.s32.totalorder %s20, 3
    %p141 = por %p139, %p140
    %p142 = scmp.ne.s32.totalorder %s133, %s134
    %p143 = scmp.eq.s32.totalorder %s20, 0
    %p144 = por %p142, %p143
    %p145 = scmp.ne.s32.totalorder %s133, %s134
    %p146 = scmp.eq.s32.totalorder %s21, 3
    %p147 = por %p145, %p146
    %p149 = scmp.ne.s32.totalorder %s134, %s148
    %p150 = scmp.eq.s32.totalorder %s21, 0
    %p151 = por %p149, %p150
    %s153 = sadd.s32 %s152, 1
    %p156 = scmp.eq.s32.totalorder %s15, 3
    %p157 = scmp.ne.s32.totalorder %s152, %s154
    %p158 = scmp.eq.s32.totalorder %s15, 0
    %p159 = por %p157, %p158
    %p160 = scmp.ne.s32.totalorder %s152, %s154
    %p161 = scmp.eq.s32.totalorder %s20, 3
    %p162 = por %p160, %p161
    %p163 = scmp.ne.s32.totalorder %s154, %s155
    %p164 = scmp.eq.s32.totalorder %s20, 0
    %p165 = por %p163, %p164
    %p166 = scmp.ne.s32.totalorder %s154, %s155
    %p167 = scmp.eq.s32.totalorder %s21, 3
    %p168 = por %p166, %p167
    %p170 = scmp.ne.s32.totalorder %s155, %s169
    %p171 = scmp.eq.s32.totalorder %s21, 0
    %p172 = por %p170, %p171
    %s174 = sadd.s32 %s173, 1
    %p177 = scmp.eq.s32.totalorder %s15, 3
    %p178 = scmp.ne.s32.totalorder %s173, %s175
    %p179 = scmp.eq.s32.totalorder %s15, 0
    %p180 = por %p178, %p179
    %p181 = scmp.ne.s32.totalorder %s173, %s175
    %p182 = scmp.eq.s32.totalorder %s20, 3
    %p183 = por %p181, %p182
    %p184 = scmp.ne.s32.totalorder %s175, %s176
    %p185 = scmp.eq.s32.totalorder %s20, 0
    %p186 = por %p184, %p185
    %p187 = scmp.ne.s32.totalorder %s175, %s176
    %p188 = scmp.eq.s32.totalorder %s21, 3
    %p189 = por %p187, %p188
    %p191 = scmp.ne.s32.totalorder %s176, %s190
    %p192 = scmp.eq.s32.totalorder %s21, 0
    %p193 = por %p191, %p192
    %s195 = sadd.s32 %s194, 1
    %p198 = scmp.eq.s32.totalorder %s15, 3
    %p199 = scmp.ne.s32.totalorder %s194, %s196
    %p200 = scmp.eq.s32.totalorder %s15, 0
    %p201 = por %p199, %p200
    %p202 = scmp.ne.s32.totalorder %s194, %s196
    %p203 = scmp.eq.s32.totalorder %s20, 3
    %p204 = por %p202, %p203
    %p205 = scmp.ne.s32.totalorder %s196, %s197
    %p206 = scmp.eq.s32.totalorder %s20, 0
    %p207 = por %p205, %p206
    %p208 = scmp.ne.s32.totalorder %s196, %s197
    %p209 = scmp.eq.s32.totalorder %s21, 3
    %p210 = por %p208, %p209
    %p212 = scmp.ne.s32.totalorder %s197, %s211
    %p213 = scmp.eq.s32.totalorder %s21, 0
    %p214 = por %p212, %p213
    %s216 = sadd.s32 %s215, 1
    %p219 = scmp.eq.s32.totalorder %s15, 3
    %p220 = scmp.ne.s32.totalorder %s215, %s217
    %p221 = scmp.eq.s32.totalorder %s15, 0
    %p222 = por %p220, %p221
    %p223 = scmp.ne.s32.totalorder %s215, %s217
    %p224 = scmp.eq.s32.totalorder %s20, 3
    %p225 = por %p223, %p224
    %p226 = scmp.ne.s32.totalorder %s217, %s218
    %p227 = scmp.eq.s32.totalorder %s20, 0
    %p228 = por %p226, %p227
    %p229 = scmp.ne.s32.totalorder %s217, %s218
    %p230 = scmp.eq.s32.totalorder %s21, 3
    %p231 = por %p229, %p230
    %p233 = scmp.ne.s32.totalorder %s218, %s232
    %p234 = scmp.eq.s32.totalorder %s21, 0
    %p235 = por %p233, %p234
    %s237 = sadd.s32 %s236, 1
    %p240 = scmp.eq.s32.totalorder %s15, 3
    %p241 = scmp.ne.s32.totalorder %s236, %s238
    %p242 = scmp.eq.s32.totalorder %s15, 0
    %p243 = por %p241, %p242
    %p244 = scmp.ne.s32.totalorder %s236, %s238
    %p245 = scmp.eq.s32.totalorder %s20, 3
    %p246 = por %p244, %p245
    %p247 = scmp.ne.s32.totalorder %s238, %s239
    %p248 = scmp.eq.s32.totalorder %s20, 0
    %p249 = por %p247, %p248
    %p250 = scmp.ne.s32.totalorder %s238, %s239
    %p251 = scmp.eq.s32.totalorder %s21, 3
    %p252 = por %p250, %p251
    %p254 = scmp.ne.s32.totalorder %s239, %s253
    %p255 = scmp.eq.s32.totalorder %s21, 0
    %p256 = por %p254, %p255
    %s257 = ssub.s32 %s22, %s34
    %s258 = ssub.s32 %s23, %s30
    %s259 = sor.u32 %s257, %s258
    %p260 = scmp.eq.s32.totalorder %s259, 0
    %s262 = sadd.s32 %s261, 1
    %s263 = scalar_select %p260, %s261, %s262
    %p266 = pneg %p260
    %p267 = scmp.eq.s32.totalorder %s15, 3
    %p268 = por %p266, %p267
    %p269 = scmp.ne.s32.totalorder %s261, %s264
    %p270 = scmp.eq.s32.totalorder %s15, 0
    %p271 = por %p269, %p270
    %p272 = scmp.ne.s32.totalorder %s261, %s264
    %p273 = scmp.eq.s32.totalorder %s20, 3
    %p274 = por %p272, %p273
    %p275 = scmp.ne.s32.totalorder %s264, %s265
    %p276 = scmp.eq.s32.totalorder %s20, 0
    %p277 = por %p275, %p276
    %p278 = scmp.ne.s32.totalorder %s264, %s265
    %p279 = scmp.eq.s32.totalorder %s21, 3
    %p280 = por %p278, %p279
    %p282 = scmp.ne.s32.totalorder %s265, %s281
    %p283 = scmp.eq.s32.totalorder %s21, 0
    %p284 = por %p282, %p283
    %p285 = scmp.le.s32.totalorder 1, %s15
    %p286 = scmp.lt.s32.totalorder %s15, 5
    %p287 = pnand %p285, %p286
    %p288 = pneg %p287
    // Predicated region
    $region9: #{bottleneck_csp_forward.4} parent=5 // pred_check
      _
    $region10: #{bottleneck_csp_forward.4} parent=5 // pred_check_branch
      %290 = sbr.rel (%p287) target = $region12
    $region11: #{bottleneck_csp_forward.4} parent=5 // pred_region
      %s291 = ssub.s32 %s15, 1
      // Predicated region
      $region13: #{bottleneck_csp_forward.4} parent=11 // pred_check
        %p292 = pneg %p144
      $region14: #{bottleneck_csp_forward.4} parent=11 // pred_check_branch
        %294 = sbr.rel (%p292) target = $region16
      $region15: #{bottleneck_csp_forward.4} parent=11 // pred_region
        _
      $region16: #{bottleneck_csp_forward.4} parent=11 // pred_fallthru
        _
      // Predicated region
      $region17: #{bottleneck_csp_forward.4} parent=11 // pred_check
        %p295 = pneg %p165
      $region18: #{bottleneck_csp_forward.4} parent=11 // pred_check_branch
        %297 = sbr.rel (%p295) target = $region20
      $region19: #{bottleneck_csp_forward.4} parent=11 // pred_region
        _
      $region20: #{bottleneck_csp_forward.4} parent=11 // pred_fallthru
        _
      // Predicated region
      $region21: #{bottleneck_csp_forward.4} parent=11 // pred_check
        %p298 = pneg %p186
      $region22: #{bottleneck_csp_forward.4} parent=11 // pred_check_branch
        %300 = sbr.rel (%p298) target = $region24
      $region23: #{bottleneck_csp_forward.4} parent=11 // pred_region
        _
      $region24: #{bottleneck_csp_forward.4} parent=11 // pred_fallthru
        _
      // Predicated region
      $region25: #{bottleneck_csp_forward.4} parent=11 // pred_check
        %p301 = pneg %p207
      $region26: #{bottleneck_csp_forward.4} parent=11 // pred_check_branch
        %303 = sbr.rel (%p301) target = $region28
      $region27: #{bottleneck_csp_forward.4} parent=11 // pred_region
        _
      $region28: #{bottleneck_csp_forward.4} parent=11 // pred_fallthru
        _
      // Predicated region
      $region29: #{bottleneck_csp_forward.4} parent=11 // pred_check
        %p304 = pneg %p228
      $region30: #{bottleneck_csp_forward.4} parent=11 // pred_check_branch
        %306 = sbr.rel (%p304) target = $region32
      $region31: #{bottleneck_csp_forward.4} parent=11 // pred_region
        _
      $region32: #{bottleneck_csp_forward.4} parent=11 // pred_fallthru
        _
      // Predicated region
      $region33: #{bottleneck_csp_forward.4} parent=11 // pred_check
        %p307 = pneg %p249
      $region34: #{bottleneck_csp_forward.4} parent=11 // pred_check_branch
        %309 = sbr.rel (%p307) target = $region36
      $region35: #{bottleneck_csp_forward.4} parent=11 // pred_region
        _
      $region36: #{bottleneck_csp_forward.4} parent=11 // pred_fallthru
        _
    $region12: #{bottleneck_csp_forward.4} parent=5 // pred_fallthru
      _
    %p310 = scmp.lt.s32.totalorder %s15, 4
    // Predicated region
    $region37: #{bottleneck_csp_forward.4} parent=5 // pred_check
      %p311 = pneg %p310
    $region38: #{bottleneck_csp_forward.4} parent=5 // pred_check_branch
      %313 = sbr.rel (%p311) target = $region40
    $region39: #{bottleneck_csp_forward.4} parent=5 // pred_region
      // Predicated region
      $region41: #{bottleneck_csp_forward.4} parent=39 // pred_check
        %p314 = pneg %p49
      $region42: #{bottleneck_csp_forward.4} parent=39 // pred_check_branch
        %316 = sbr.rel (%p314) target = $region44
      $region43: #{bottleneck_csp_forward.4} parent=39 // pred_region
        %s317 = smul.u32 8, %s23
        %p318 = scmp.lt.s32.totalorder %s22, 1
        %s319 = scalar_select %p318, %s22, 1
        %p320 = scmp.lt.s32.totalorder %s317, 15
        %s321 = scalar_select %p320, %s317, 15
        %s322 = smul.addr %s321, 2
        %s323 = smul.addr %s319, 32
        %s324 = sadd.s32 %s322, %s323
        %s325 = smul.addr %s324, 4
        %s326 = scalar_lea.vmem %s0, %s325
        %s327 = smul.u32 8, %s23
      $region44: #{bottleneck_csp_forward.4} parent=39 // pred_fallthru
        _
      // Predicated region
      $region45: #{bottleneck_csp_forward.4} parent=39 // pred_check
        %p328 = pneg %p83
      $region46: #{bottleneck_csp_forward.4} parent=39 // pred_check_branch
        %330 = sbr.rel (%p328) target = $region48
      $region47: #{bottleneck_csp_forward.4} parent=39 // pred_region
        %s331 = ssub.s32 %s23, 1
        %p332 = scmp.gt.s32.totalorder %s331, 0
        %s333 = scalar_select %p332, %s331, 0
        %s334 = smul.u32 8, %s333
        %p335 = scmp.lt.s32.totalorder %s22, 1
        %s336 = scalar_select %p335, %s22, 1
        %p337 = scmp.lt.s32.totalorder %s334, 15
        %s338 = scalar_select %p337, %s334, 15
        %s339 = smul.addr %s338, 2
        %s340 = smul.addr %s336, 32
        %s341 = sadd.s32 %s339, %s340
        %s342 = smul.addr %s341, 4
        %s343 = scalar_lea.vmem %s1, %s342
        %s344 = ssub.s32 %s23, 1
        %p345 = scmp.gt.s32.totalorder %s344, 0
        %s346 = scalar_select %p345, %s344, 0
        %s347 = smul.u32 8, %s346
      $region48: #{bottleneck_csp_forward.4} parent=39 // pred_fallthru
        _
      // Predicated region
      $region49: #{bottleneck_csp_forward.4} parent=39 // pred_check
        %p348 = pneg %p117
      $region50: #{bottleneck_csp_forward.4} parent=39 // pred_check_branch
        %350 = sbr.rel (%p348) target = $region52
      $region51: #{bottleneck_csp_forward.4} parent=39 // pred_region
        %s351 = sadd.s32 %s23, 1
        %p352 = scmp.lt.s32.totalorder %s351, 1
        %s353 = scalar_select %p352, %s351, 1
        %s354 = smul.u32 8, %s353
        %p355 = scmp.lt.s32.totalorder %s22, 1
        %s356 = scalar_select %p355, %s22, 1
        %p357 = scmp.lt.s32.totalorder %s354, 15
        %s358 = scalar_select %p357, %s354, 15
        %s359 = smul.addr %s358, 2
        %s360 = smul.addr %s356, 32
        %s361 = sadd.s32 %s359, %s360
        %s362 = smul.addr %s361, 4
        %s363 = scalar_lea.vmem %s2, %s362
        %s364 = sadd.s32 %s23, 1
        %p365 = scmp.lt.s32.totalorder %s364, 1
        %s366 = scalar_select %p365, %s364, 1
        %s367 = smul.u32 8, %s366
      $region52: #{bottleneck_csp_forward.4} parent=39 // pred_fallthru
        _
    $region40: #{bottleneck_csp_forward.4} parent=5 // pred_fallthru
      _
    %p368 = scmp.le.s32.totalorder 1, %s15
    %p369 = scmp.lt.s32.totalorder %s15, 5
    %p370 = pnand %p368, %p369
    %p371 = pneg %p370
    // Predicated region
    $region53: #{bottleneck_csp_forward.4} parent=5 // pred_check
      _
    $region54: #{bottleneck_csp_forward.4} parent=5 // pred_check_branch
      %373 = sbr.rel (%p370) target = $region56
    $region55: #{bottleneck_csp_forward.4} parent=5 // pred_region
      %s374 = ssub.s32 %s15, 1
      %s375 = smul.u32 8, %s25
      %p376 = scmp.lt.s32.totalorder %s24, 1
      %s377 = scalar_select %p376, %s24, 1
      %p378 = scmp.lt.s32.totalorder %s375, 15
      %s379 = scalar_select %p378, %s375, 15
      %s380 = smul.addr %s379, 2
      %s381 = smul.addr %s377, 32
      %s382 = sadd.s32 %s380, %s381
      %s383 = smul.addr %s382, 4
      %s384 = scalar_lea.vmem %s0, %s383
      %p385 = pneg %p55
      %p386 = pneg %p52
      %s387 = ssub.s32 %s25, 1
      %p388 = scmp.gt.s32.totalorder %s387, 0
      %s389 = scalar_select %p388, %s387, 0
      %s390 = smul.u32 8, %s389
      %p391 = scmp.lt.s32.totalorder %s24, 1
      %s392 = scalar_select %p391, %s24, 1
      %p393 = scmp.lt.s32.totalorder %s390, 15
      %s394 = scalar_select %p393, %s390, 15
      %s395 = smul.addr %s394, 2
      %s396 = smul.addr %s392, 32
      %s397 = sadd.s32 %s395, %s396
      %s398 = smul.addr %s397, 4
      %s399 = scalar_lea.vmem %s1, %s398
      %p400 = pneg %p89
      %p401 = pneg %p86
      %s402 = sadd.s32 %s25, 1
      %p403 = scmp.lt.s32.totalorder %s402, 1
      %s404 = scalar_select %p403, %s402, 1
      %s405 = smul.u32 8, %s404
      %p406 = scmp.lt.s32.totalorder %s24, 1
      %s407 = scalar_select %p406, %s24, 1
      %p408 = scmp.lt.s32.totalorder %s405, 15
      %s409 = scalar_select %p408, %s405, 15
      %s410 = smul.addr %s409, 2
      %s411 = smul.addr %s407, 32
      %s412 = sadd.s32 %s410, %s411
      %s413 = smul.addr %s412, 4
      %s414 = scalar_lea.vmem %s2, %s413
      %p415 = pneg %p123
      %p416 = pneg %p120
      %p417 = pneg %p144
      %p418 = pneg %p141
      %p419 = pneg %p165
      %p420 = pneg %p162
      %p421 = pneg %p186
      %p422 = pneg %p183
      %p423 = pneg %p207
      %p424 = pneg %p204
      %p425 = pneg %p228
      %p426 = pneg %p225
      %p427 = pneg %p249
      %p428 = pneg %p246
      %p429 = pneg %p277
      %p430 = pneg %p274
      %s431 = smul.u32 8, %s25
      %p432 = scmp.lt.s32.totalorder %s24, 1
      %s433 = scalar_select %p432, %s24, 1
      %p434 = scmp.lt.s32.totalorder %s431, 15
      %s435 = scalar_select %p434, %s431, 15
      %s436 = smul.addr %s435, 2
      %s437 = smul.addr %s433, 32
      %s438 = sadd.s32 %s436, %s437
      %s439 = smul.addr %s438, 4
      %s440 = scalar_lea.vmem %s9, %s439
      %s441 = smul.u32 8, %s25
      %p442 = scmp.lt.s32.totalorder %s24, 1
      %s443 = scalar_select %p442, %s24, 1
      %p444 = scmp.lt.s32.totalorder %s441, 15
      %s445 = scalar_select %p444, %s441, 15
      %s446 = smul.addr %s445, 2
      %s447 = smul.addr %s443, 32
      %s448 = sadd.s32 %s446, %s447
      %s449 = smul.addr %s448, 4
      %s450 = scalar_lea.vmem %s0, %s449
      %s451 = smul.u32 8, %s25
      %s452 = ssub.s32 %s25, 1
      %p453 = scmp.gt.s32.totalorder %s452, 0
      %s454 = scalar_select %p453, %s452, 0
      %s455 = smul.u32 8, %s454
      %p456 = scmp.lt.s32.totalorder %s24, 1
      %s457 = scalar_select %p456, %s24, 1
      %p458 = scmp.lt.s32.totalorder %s455, 15
      %s459 = scalar_select %p458, %s455, 15
      %s460 = smul.addr %s459, 2
      %s461 = smul.addr %s457, 32
      %s462 = sadd.s32 %s460, %s461
      %s463 = smul.addr %s462, 4
      %s464 = scalar_lea.vmem %s1, %s463
      %s465 = ssub.s32 %s25, 1
      %p466 = scmp.gt.s32.totalorder %s465, 0
      %s467 = scalar_select %p466, %s465, 0
      %s468 = smul.u32 8, %s467
      %s469 = sadd.s32 %s25, 1
      %p470 = scmp.lt.s32.totalorder %s469, 1
      %s471 = scalar_select %p470, %s469, 1
      %s472 = smul.u32 8, %s471
      %p473 = scmp.lt.s32.totalorder %s24, 1
      %s474 = scalar_select %p473, %s24, 1
      %p475 = scmp.lt.s32.totalorder %s472, 15
      %s476 = scalar_select %p475, %s472, 15
      %s477 = smul.addr %s476, 2
      %s478 = smul.addr %s474, 32
      %s479 = sadd.s32 %s477, %s478
      %s480 = smul.addr %s479, 4
      %s481 = scalar_lea.vmem %s2, %s480
      %s482 = sadd.s32 %s25, 1
      %p483 = scmp.lt.s32.totalorder %s482, 1
      %s484 = scalar_select %p483, %s482, 1
      %s485 = smul.u32 8, %s484
      %s486 = smul.u32 8, %s25
      %p487 = scmp.lt.s32.totalorder %s24, 1
      %s488 = scalar_select %p487, %s24, 1
      %p489 = scmp.lt.s32.totalorder %s486, 15
      %s490 = scalar_select %p489, %s486, 15
      %s491 = smul.addr %s490, 2
      %s492 = smul.addr %s488, 32
      %s493 = sadd.s32 %s491, %s492
      %s494 = smul.addr %s493, 4
      %s495 = scalar_lea.vmem %s9, %s494
      %s496 = smul.u32 8, %s25
      %v498 = vld [vmem:[%s3] sm:$0xf]
      %v499 = vld [vmem:[%s3 + $0x4] sm:$0xf]
      %v500 = vld [vmem:[%s3 + $0x8] sm:$0xf]
      %v501 = vld [vmem:[%s3 + $0xc] sm:$0xf]
      %v502 = vld [vmem:[%s3 + $0x10] sm:$0xf]
      %v503 = vld [vmem:[%s3 + $0x14] sm:$0xf]
      %v504 = vld [vmem:[%s3 + $0x18] sm:$0xf]
      %v505 = vld [vmem:[%s3 + $0x1c] sm:$0xf]
      %v506 = vld [vmem:[%s3 + $0x20] sm:$0xf]
      %v507 = vld [vmem:[%s3 + $0x24] sm:$0xf]
      %v508 = vld [vmem:[%s3 + $0x28] sm:$0xf]
      %v509 = vld [vmem:[%s3 + $0x2c] sm:$0xf]
      %v510 = vld [vmem:[%s3 + $0x30] sm:$0xf]
      %v511 = vld [vmem:[%s3 + $0x34] sm:$0xf]
      %v512 = vld [vmem:[%s3 + $0x38] sm:$0xf]
      %v513 = vld [vmem:[%s3 + $0x3c] sm:$0xf]
      %v514 = vld [vmem:[%s4] sm:$0x1]
      %v515 = vld [vmem:[%s5] sm:$0x1]
      %v516 = vld [vmem:[%s450] sm:$0xf]
      %v517 = vld [vmem:[%s450 + $0x4] sm:$0xf]
      %v518 = vld [vmem:[%s450 + $0x8] sm:$0xf]
      %v519 = vld [vmem:[%s450 + $0xc] sm:$0xf]
      %v520 = vld [vmem:[%s450 + $0x10] sm:$0xf]
      %v521 = vld [vmem:[%s450 + $0x14] sm:$0xf]
      %v522 = vld [vmem:[%s450 + $0x18] sm:$0xf]
      %v523 = vld [vmem:[%s450 + $0x1c] sm:$0xf]
      %v524 = vld [vmem:[%s450 + $0x20] sm:$0xf]
      %v525 = vld [vmem:[%s450 + $0x24] sm:$0xf]
      %v526 = vld [vmem:[%s450 + $0x28] sm:$0xf]
      %v527 = vld [vmem:[%s450 + $0x2c] sm:$0xf]
      %v528 = vld [vmem:[%s450 + $0x30] sm:$0xf]
      %v529 = vld [vmem:[%s450 + $0x34] sm:$0xf]
      %v530 = vld [vmem:[%s450 + $0x38] sm:$0xf]
      %v531 = vld [vmem:[%s450 + $0x3c] sm:$0xf]
      %v548 = vunpack.c.l.b16 %v516
      %v549 = vunpack.c.l.b16 %v517
      %v550 = vunpack.c.l.b16 %v518
      %v551 = vunpack.c.l.b16 %v519
      %v552 = vunpack.c.l.b16 %v520
      %v553 = vunpack.c.l.b16 %v521
      %v554 = vunpack.c.l.b16 %v522
      %v555 = vunpack.c.l.b16 %v523
      %v556 = vunpack.c.l.b16 %v524
      %v557 = vunpack.c.l.b16 %v525
      %v558 = vunpack.c.l.b16 %v526
      %v559 = vunpack.c.l.b16 %v527
      %v560 = vunpack.c.l.b16 %v528
      %v561 = vunpack.c.l.b16 %v529
      %v562 = vunpack.c.l.b16 %v530
      %v563 = vunpack.c.l.b16 %v531
      %v564 = vpack.c.b16 %v549, %v548
      %v565 = vpack.c.b16 %v551, %v550
      %v566 = vpack.c.b16 %v553, %v552
      %v567 = vpack.c.b16 %v555, %v554
      %v568 = vpack.c.b16 %v557, %v556
      %v569 = vpack.c.b16 %v559, %v558
      %v570 = vpack.c.b16 %v561, %v560
      %v571 = vpack.c.b16 %v563, %v562
      %v596 = vunpack.c.l.b16 %v498
      %v597 = vunpack.c.l.b16 %v499
      %v598 = vunpack.c.l.b16 %v500
      %v599 = vunpack.c.l.b16 %v501
      %v600 = vunpack.c.l.b16 %v502
      %v601 = vunpack.c.l.b16 %v503
      %v602 = vunpack.c.l.b16 %v504
      %v603 = vunpack.c.l.b16 %v505
      %v604 = vunpack.c.l.b16 %v506
      %v605 = vunpack.c.l.b16 %v507
      %v606 = vunpack.c.l.b16 %v508
      %v607 = vunpack.c.l.b16 %v509
      %v608 = vunpack.c.l.b16 %v510
      %v609 = vunpack.c.l.b16 %v511
      %v610 = vunpack.c.l.b16 %v512
      %v611 = vunpack.c.l.b16 %v513
      %v612 = vpack.c.b16 %v597, %v596
      %v613 = vpack.c.b16 %v599, %v598
      %v614 = vpack.c.b16 %v601, %v600
      %v615 = vpack.c.b16 %v603, %v602
      %v616 = vpack.c.b16 %v605, %v604
      %v617 = vpack.c.b16 %v607, %v606
      %v618 = vpack.c.b16 %v609, %v608
      %v619 = vpack.c.b16 %v611, %v610
      %628 = vmatprep.subr.bf16.mxu0 0
      %629 = vmatpush1.bf16.msra.mxu0 %v612
      %630 = vmatprep.subr.bf16.mxu0 0
      %631 = vmatpush1.bf16.msra.mxu0 %v613
      %632 = vmatprep.subr.bf16.mxu0 0
      %633 = vmatpush1.bf16.msra.mxu0 %v614
      %634 = vmatprep.subr.bf16.mxu0 0
      %635 = vmatpush1.bf16.msra.mxu0 %v615
      %636 = vmatprep.subr.bf16.mxu0 0
      %637 = vmatpush1.bf16.msra.mxu0 %v616
      %638 = vmatprep.subr.bf16.mxu0 0
      %639 = vmatpush1.bf16.msra.mxu0 %v617
      %640 = vmatprep.subr.bf16.mxu0 0
      %641 = vmatpush1.bf16.msra.mxu0 %v618
      %642 = vmatprep.subr.bf16.mxu0 0
      %643 = vmatpush1.bf16.msra.mxu0 %v619
      %644 = vmatprep.subr.bf16.mxu0 0
      %645 = vmatpush1.bf16.msra.mxu0 0
      %646 = vmatprep.subr.bf16.mxu0 0
      %647 = vmatpush1.bf16.msra.mxu0 0
      %648 = vmatprep.subr.bf16.mxu0 0
      %649 = vmatpush1.bf16.msra.mxu0 0
      %650 = vmatprep.subr.bf16.mxu0 0
      %651 = vmatpush1.bf16.msra.mxu0 0
      %652 = vmatprep.subr.bf16.mxu0 0
      %653 = vmatpush1.bf16.msra.mxu0 0
      %654 = vmatprep.subr.bf16.mxu0 0
      %655 = vmatpush1.bf16.msra.mxu0 0
      %656 = vmatprep.subr.bf16.mxu0 0
      %657 = vmatpush1.bf16.msra.mxu0 0
      %658 = vmatprep.subr.bf16.mxu0 0
      %659 = vmatpush1.bf16.msra.mxu0 0
      %660 = vmatprep.mubr.bf16.mxu0 0
      %661 = vmatmul.mubr.bf16.gmra.mrb[0].mxu0 %v564
      %v662 = vpop.f32.mrb[0].mxu0
      %v663 = vadd.f32 0.0, %v662
      %v664 = vpop.f32.mrb[0].mxu0
      %v665 = vpop.f32.mrb[0].mxu0
      %v666 = vadd.f32 0.0, %v665
      %v667 = vpop.f32.mrb[0].mxu0
      %668 = vmatprep.mubr.bf16.mxu0 0
      %669 = vmatmul.mubr.bf16.gmra.mrb[0].mxu0 %v565
      %v670 = vpop.f32.mrb[0].mxu0
      %v671 = vadd.f32 0.0, %v670
      %v672 = vpop.f32.mrb[0].mxu0
      %v673 = vpop.f32.mrb[0].mxu0
      %v674 = vadd.f32 0.0, %v673
      %v675 = vpop.f32.mrb[0].mxu0
      %676 = vmatprep.mubr.bf16.mxu0 0
      %677 = vmatmul.mubr.bf16.gmra.mrb[0].mxu0 %v566
      %v678 = vpop.f32.mrb[0].mxu0
      %v679 = vadd.f32 0.0, %v678
      %v680 = vpop.f32.mrb[0].mxu0
      %v681 = vpop.f32.mrb[0].mxu0
      %v682 = vadd.f32 0.0, %v681
      %v683 = vpop.f32.mrb[0].mxu0
      %684 = vmatprep.mubr.bf16.mxu0 0
      %685 = vmatmul.mubr.bf16.gmra.mrb[0].mxu0 %v567
      %v686 = vpop.f32.mrb[0].mxu0
      %v687 = vadd.f32 0.0, %v686
      %v688 = vpop.f32.mrb[0].mxu0
      %v689 = vpop.f32.mrb[0].mxu0
      %v690 = vadd.f32 0.0, %v689
      %v691 = vpop.f32.mrb[0].mxu0
      %692 = vmatprep.mubr.bf16.mxu0 0
      %693 = vmatmul.mubr.bf16.gmra.mrb[0].mxu0 %v568
      %v694 = vpop.f32.mrb[0].mxu0
      %v695 = vadd.f32 0.0, %v694
      %v696 = vpop.f32.mrb[0].mxu0
      %v697 = vpop.f32.mrb[0].mxu0
      %v698 = vadd.f32 0.0, %v697
      %v699 = vpop.f32.mrb[0].mxu0
      %700 = vmatprep.mubr.bf16.mxu0 0
      %701 = vmatmul.mubr.bf16.gmra.mrb[0].mxu0 %v569
      %v702 = vpop.f32.mrb[0].mxu0
      %v703 = vadd.f32 0.0, %v702
      %v704 = vpop.f32.mrb[0].mxu0
      %v705 = vpop.f32.mrb[0].mxu0
      %v706 = vadd.f32 0.0, %v705
      %v707 = vpop.f32.mrb[0].mxu0
      %708 = vmatprep.mubr.bf16.mxu0 0
      %709 = vmatmul.mubr.bf16.gmra.mrb[0].mxu0 %v570
      %v710 = vpop.f32.mrb[0].mxu0
      %v711 = vadd.f32 0.0, %v710
      %v712 = vpop.f32.mrb[0].mxu0
      %v713 = vpop.f32.mrb[0].mxu0
      %v714 = vadd.f32 0.0, %v713
      %v715 = vpop.f32.mrb[0].mxu0
      %716 = vmatprep.mubr.bf16.mxu0 0
      %717 = vmatmul.mubr.bf16.gmra.mrb[0].mxu0 %v571
      %v718 = vpop.f32.mrb[0].mxu0
      %v719 = vadd.f32 0.0, %v718
      %v720 = vpop.f32.mrb[0].mxu0
      %v721 = vpop.f32.mrb[0].mxu0
      %v722 = vadd.f32 0.0, %v721
      %v723 = vpop.f32.mrb[0].mxu0
      %724 = vdwg.mxu0
      %v726 = vlaneseq
      %v727 = vshrl.u32 %v726, 7
      %v728 = vsub.s32 0, %v727
      %v729 = vrot.slane %v514, %v728
      %v731 = vmul.f32 %v663, %v729
      %v732 = vmul.f32 %v666, %v729
      %v733 = vmul.f32 %v671, %v729
      %v734 = vmul.f32 %v674, %v729
      %v735 = vmul.f32 %v679, %v729
      %v736 = vmul.f32 %v682, %v729
      %v737 = vmul.f32 %v687, %v729
      %v738 = vmul.f32 %v690, %v729
      %v739 = vmul.f32 %v695, %v729
      %v740 = vmul.f32 %v698, %v729
      %v741 = vmul.f32 %v703, %v729
      %v742 = vmul.f32 %v706, %v729
      %v743 = vmul.f32 %v711, %v729
      %v744 = vmul.f32 %v714, %v729
      %v745 = vmul.f32 %v719, %v729
      %v746 = vmul.f32 %v722, %v729
      %v748 = vlaneseq
      %v749 = vshrl.u32 %v748, 7
      %v750 = vsub.s32 0, %v749
      %v751 = vrot.slane %v515, %v750
      %v753 = vadd.f32 %v731, %v751
      %v754 = vadd.f32 %v732, %v751
      %v755 = vadd.f32 %v733, %v751
      %v756 = vadd.f32 %v734, %v751
      %v757 = vadd.f32 %v735, %v751
      %v758 = vadd.f32 %v736, %v751
      %v759 = vadd.f32 %v737, %v751
      %v760 = vadd.f32 %v738, %v751
      %v761 = vadd.f32 %v739, %v751
      %v762 = vadd.f32 %v740, %v751
      %v763 = vadd.f32 %v741, %v751
      %v764 = vadd.f32 %v742, %v751
      %v765 = vadd.f32 %v743, %v751
      %v766 = vadd.f32 %v744, %v751
      %v767 = vadd.f32 %v745, %v751
      %v768 = vadd.f32 %v746, %v751
      %v769 = vxor.u32 %v753, 2147483648
      %v770 = vxor.u32 %v754, 2147483648
      %v771 = vxor.u32 %v755, 2147483648
      %v772 = vxor.u32 %v756, 2147483648
      %v773 = vxor.u32 %v757, 2147483648
      %v774 = vxor.u32 %v758, 2147483648
      %v775 = vxor.u32 %v759, 2147483648
      %v776 = vxor.u32 %v760, 2147483648
      %v777 = vxor.u32 %v761, 2147483648
      %v778 = vxor.u32 %v762, 2147483648
      %v779 = vxor.u32 %v763, 2147483648
      %v780 = vxor.u32 %v764, 2147483648
      %v781 = vxor.u32 %v765, 2147483648
      %v782 = vxor.u32 %v766, 2147483648
      %v783 = vxor.u32 %v767, 2147483648
      %v784 = vxor.u32 %v768, 2147483648
      %v785 = vmul.f32 %v769, 1.442695
      %v786 = vpow.pop %v785
      %v787 = vmul.f32 %v770, 1.442695
      %v788 = vpow.pop %v787
      %v789 = vmul.f32 %v771, 1.442695
      %v790 = vpow.pop %v789
      %v791 = vmul.f32 %v772, 1.442695
      %v792 = vpow.pop %v791
      %v793 = vmul.f32 %v773, 1.442695
      %v794 = vpow.pop %v793
      %v795 = vmul.f32 %v774, 1.442695
      %v796 = vpow.pop %v795
      %v797 = vmul.f32 %v775, 1.442695
      %v798 = vpow.pop %v797
      %v799 = vmul.f32 %v776, 1.442695
      %v800 = vpow.pop %v799
      %v801 = vmul.f32 %v777, 1.442695
      %v802 = vpow.pop %v801
      %v803 = vmul.f32 %v778, 1.442695
      %v804 = vpow.pop %v803
      %v805 = vmul.f32 %v779, 1.442695
      %v806 = vpow.pop %v805
      %v807 = vmul.f32 %v780, 1.442695
      %v808 = vpow.pop %v807
      %v809 = vmul.f32 %v781, 1.442695
      %v810 = vpow.pop %v809
      %v811 = vmul.f32 %v782, 1.442695
      %v812 = vpow.pop %v811
      %v813 = vmul.f32 %v783, 1.442695
      %v814 = vpow.pop %v813
      %v815 = vmul.f32 %v784, 1.442695
      %v816 = vpow.pop %v815
      %v817 = vadd.f32 %v786, 1.0
      %v818 = vadd.f32 %v788, 1.0
      %v819 = vadd.f32 %v790, 1.0
      %v820 = vadd.f32 %v792, 1.0
      %v821 = vadd.f32 %v794, 1.0
      %v822 = vadd.f32 %v796, 1.0
      %v823 = vadd.f32 %v798, 1.0
      %v824 = vadd.f32 %v800, 1.0
      %v825 = vadd.f32 %v802, 1.0
      %v826 = vadd.f32 %v804, 1.0
      %v827 = vadd.f32 %v806, 1.0
      %v828 = vadd.f32 %v808, 1.0
      %v829 = vadd.f32 %v810, 1.0
      %v830 = vadd.f32 %v812, 1.0
      %v831 = vadd.f32 %v814, 1.0
      %v832 = vadd.f32 %v816, 1.0
      %v833 = vrcp.pop %v817
      %v834 = vmul.f32 1.0, %v833
      %v835 = vrcp.pop %v818
      %v836 = vmul.f32 1.0, %v835
      %v837 = vrcp.pop %v819
      %v838 = vmul.f32 1.0, %v837
      %v839 = vrcp.pop %v820
      %v840 = vmul.f32 1.0, %v839
      %v841 = vrcp.pop %v821
      %v842 = vmul.f32 1.0, %v841
      %v843 = vrcp.pop %v822
      %v844 = vmul.f32 1.0, %v843
      %v845 = vrcp.pop %v823
      %v846 = vmul.f32 1.0, %v845
      %v847 = vrcp.pop %v824
      %v848 = vmul.f32 1.0, %v847
      %v849 = vrcp.pop %v825
      %v850 = vmul.f32 1.0, %v849
      %v851 = vrcp.pop %v826
      %v852 = vmul.f32 1.0, %v851
      %v853 = vrcp.pop %v827
      %v854 = vmul.f32 1.0, %v853
      %v855 = vrcp.pop %v828
      %v856 = vmul.f32 1.0, %v855
      %v857 = vrcp.pop %v829
      %v858 = vmul.f32 1.0, %v857
      %v859 = vrcp.pop %v830
      %v860 = vmul.f32 1.0, %v859
      %v861 = vrcp.pop %v831
      %v862 = vmul.f32 1.0, %v861
      %v863 = vrcp.pop %v832
      %v864 = vmul.f32 1.0, %v863
      %v865 = vmul.f32 %v753, %v834
      %v866 = vmul.f32 %v754, %v836
      %v867 = vmul.f32 %v755, %v838
      %v868 = vmul.f32 %v756, %v840
      %v869 = vmul.f32 %v757, %v842
      %v870 = vmul.f32 %v758, %v844
      %v871 = vmul.f32 %v759, %v846
      %v872 = vmul.f32 %v760, %v848
      %v873 = vmul.f32 %v761, %v850
      %v874 = vmul.f32 %v762, %v852
      %v875 = vmul.f32 %v763, %v854
      %v876 = vmul.f32 %v764, %v856
      %v877 = vmul.f32 %v765, %v858
      %v878 = vmul.f32 %v766, %v860
      %v879 = vmul.f32 %v767, %v862
      %v880 = vmul.f32 %v768, %v864
      %s881 = scalar_lea.vmem %s464, 56
      %v882 = vld [vmem:[%s881] sm:$0xf]
      %v883 = vld [vmem:[%s881 + $0x4] sm:$0xf]
      %v884 = vld [vmem:[%s481] sm:$0xf]
      %v885 = vld [vmem:[%s481 + $0x4] sm:$0xf]
      %v888 = vunpack.c.l.b16 %v882
      %v889 = vunpack.c.l.b16 %v883
      %v890 = vpack.c.b16 %v889, %v888
      %892 = vmatprep.subr.bf16.mxu0 0
      %893 = vmatpush1.bf16.msra.mxu0 %v612
      %894 = vmatprep.subr.bf16.mxu0 0
      %895 = vmatpush1.bf16.msra.mxu0 %v613
      %896 = vmatprep.subr.bf16.mxu0 0
      %897 = vmatpush1.bf16.msra.mxu0 %v614
      %898 = vmatprep.subr.bf16.mxu0 0
      %899 = vmatpush1.bf16.msra.mxu0 %v615
      %900 = vmatprep.subr.bf16.mxu0 0
      %901 = vmatpush1.bf16.msra.mxu0 %v616
      %902 = vmatprep.subr.bf16.mxu0 0
      %903 = vmatpush1.bf16.msra.mxu0 %v617
      %904 = vmatprep.subr.bf16.mxu0 0
      %905 = vmatpush1.bf16.msra.mxu0 %v618
      %906 = vmatprep.subr.bf16.mxu0 0
      %907 = vmatpush1.bf16.msra.mxu0 %v619
      %908 = vmatprep.subr.bf16.mxu0 0
      %909 = vmatpush1.bf16.msra.mxu0 0
      %910 = vmatprep.subr.bf16.mxu0 0
      %911 = vmatpush1.bf16.msra.mxu0 0
      %912 = vmatprep.subr.bf16.mxu0 0
      %913 = vmatpush1.bf16.msra.mxu0 0
      %914 = vmatprep.subr.bf16.mxu0 0
      %915 = vmatpush1.bf16.msra.mxu0 0
      %916 = vmatprep.subr.bf16.mxu0 0
      %917 = vmatpush1.bf16.msra.mxu0 0
      %918 = vmatprep.subr.bf16.mxu0 0
      %919 = vmatpush1.bf16.msra.mxu0 0
      %920 = vmatprep.subr.bf16.mxu0 0
      %921 = vmatpush1.bf16.msra.mxu0 0
      %922 = vmatprep.subr.bf16.mxu0 0
      %923 = vmatpush1.bf16.msra.mxu0 0
      %924 = vmatprep.mubr.bf16.mxu0 0
      %925 = vmatmul.mubr.bf16.gmra.mrb[0].mxu0 %v890
      %v926 = vpop.f32.mrb[0].mxu0
      %v927 = vadd.f32 0.0, %v926
      %v928 = vpop.f32.mrb[0].mxu0
      %v929 = vpop.f32.mrb[0].mxu0
      %v930 = vadd.f32 0.0, %v929
      %v931 = vpop.f32.mrb[0].mxu0
      %932 = vdwg.mxu0
      %v933 = vmul.f32 %v927, %v729
      %v934 = vmul.f32 %v930, %v729
      %v935 = vadd.f32 %v933, %v751
      %v936 = vadd.f32 %v934, %v751
      %v937 = vxor.u32 %v935, 2147483648
      %v938 = vxor.u32 %v936, 2147483648
      %v939 = vmul.f32 %v937, 1.442695
      %v940 = vpow.pop %v939
      %v941 = vmul.f32 %v938, 1.442695
      %v942 = vpow.pop %v941
      %v943 = vadd.f32 %v940, 1.0
      %v944 = vadd.f32 %v942, 1.0
      %v945 = vrcp.pop %v943
      %v946 = vmul.f32 1.0, %v945
      %v947 = vrcp.pop %v944
      %v948 = vmul.f32 1.0, %v947
      %v949 = vmul.f32 %v935, %v946
      %v950 = vmul.f32 %v936, %v948
      %v953 = vunpack.c.l.b16 %v884
      %v954 = vunpack.c.l.b16 %v885
      %v955 = vpack.c.b16 %v954, %v953
      %957 = vmatprep.subr.bf16.mxu0 0
      %958 = vmatpush1.bf16.msra.mxu0 %v612
      %959 = vmatprep.subr.bf16.mxu0 0
      %960 = vmatpush1.bf16.msra.mxu0 %v613
      %961 = vmatprep.subr.bf16.mxu0 0
      %962 = vmatpush1.bf16.msra.mxu0 %v614
      %963 = vmatprep.subr.bf16.mxu0 0
      %964 = vmatpush1.bf16.msra.mxu0 %v615
      %965 = vmatprep.subr.bf16.mxu0 0
      %966 = vmatpush1.bf16.msra.mxu0 %v616
      %967 = vmatprep.subr.bf16.mxu0 0
      %968 = vmatpush1.bf16.msra.mxu0 %v617
      %969 = vmatprep.subr.bf16.mxu0 0
      %970 = vmatpush1.bf16.msra.mxu0 %v618
      %971 = vmatprep.subr.bf16.mxu0 0
      %972 = vmatpush1.bf16.msra.mxu0 %v619
      %973 = vmatprep.subr.bf16.mxu0 0
      %974 = vmatpush1.bf16.msra.mxu0 0
      %975 = vmatprep.subr.bf16.mxu0 0
      %976 = vmatpush1.bf16.msra.mxu0 0
      %977 = vmatprep.subr.bf16.mxu0 0
      %978 = vmatpush1.bf16.msra.mxu0 0
      %979 = vmatprep.subr.bf16.mxu0 0
      %980 = vmatpush1.bf16.msra.mxu0 0
      %981 = vmatprep.subr.bf16.mxu0 0
      %982 = vmatpush1.bf16.msra.mxu0 0
      %983 = vmatprep.subr.bf16.mxu0 0
      %984 = vmatpush1.bf16.msra.mxu0 0
      %985 = vmatprep.subr.bf16.mxu0 0
      %986 = vmatpush1.bf16.msra.mxu0 0
      %987 = vmatprep.subr.bf16.mxu0 0
      %988 = vmatpush1.bf16.msra.mxu0 0
      %989 = vmatprep.mubr.bf16.mxu0 0
      %990 = vmatmul.mubr.bf16.gmra.mrb[0].mxu0 %v955
      %v991 = vpop.f32.mrb[0].mxu0
      %v992 = vadd.f32 0.0, %v991
      %v993 = vpop.f32.mrb[0].mxu0
      %v994 = vpop.f32.mrb[0].mxu0
      %v995 = vadd.f32 0.0, %v994
      %v996 = vpop.f32.mrb[0].mxu0
      %997 = vdwg.mxu0
      %v998 = vmul.f32 %v992, %v729
      %v999 = vmul.f32 %v995, %v729
      %v1000 = vadd.f32 %v998, %v751
      %v1001 = vadd.f32 %v999, %v751
      %v1002 = vxor.u32 %v1000, 2147483648
      %v1003 = vxor.u32 %v1001, 2147483648
      %v1004 = vmul.f32 %v1002, 1.442695
      %v1005 = vpow.pop %v1004
      %v1006 = vmul.f32 %v1003, 1.442695
      %v1007 = vpow.pop %v1006
      %v1008 = vadd.f32 %v1005, 1.0
      %v1009 = vadd.f32 %v1007, 1.0
      %v1010 = vrcp.pop %v1008
      %v1011 = vmul.f32 1.0, %v1010
      %v1012 = vrcp.pop %v1009
      %v1013 = vmul.f32 1.0, %v1012
      %v1014 = vmul.f32 %v1000, %v1011
      %v1015 = vmul.f32 %v1001, %v1013
      %p1016 = scmp.gt.s32.totalorder %s25, 0
      %s1017 = scalar_select %p1016, 1, 0
      %s1018 = scvt.s32.f32 %s1017
      %v1019 = vstv %s1018
      %v1020 = vmul.f32 %v949, %v1019
      %v1021 = vmul.f32 %v950, %v1019
      %p1022 = scmp.lt.s32.totalorder %s25, 1
      %s1023 = scalar_select %p1022, 1, 0
      %s1024 = scvt.s32.f32 %s1023
      %v1025 = vstv %s1024
      %v1026 = vmul.f32 %v1014, %v1025
      %v1027 = vmul.f32 %v1015, %v1025
      %1028 = vst [vmem:[#allocation2] sm:$0xf] 0
      %1029 = vst [vmem:[#allocation2 + $0x4] sm:$0xf] 0
      %1030 = vst [vmem:[#allocation2 + $0x8] sm:$0x1] 0
      %1031 = vst [vmem:[#allocation2 + $0xc] sm:$0xf] 0
      %1032 = vst [vmem:[#allocation2 + $0x10] sm:$0xf] 0
      %1033 = vst [vmem:[#allocation2 + $0x14] sm:$0x1] 0
      %1034 = vst [vmem:[#allocation2 + $0x18] sm:$0xf] 0
      %1035 = vst [vmem:[#allocation2 + $0x1c] sm:$0xf] 0
      %1036 = vst [vmem:[#allocation2 + $0x20] sm:$0x1] 0
      %1037 = vst [vmem:[#allocation2 + $0x24] sm:$0xf] 0
      %1038 = vst [vmem:[#allocation2 + $0x28] sm:$0xf] 0
      %1039 = vst [vmem:[#allocation2 + $0x2c] sm:$0x1] 0
      %1040 = vst [vmem:[#allocation2 + $0x30] sm:$0xf] 0
      %1041 = vst [vmem:[#allocation2 + $0x34] sm:$0xf] 0
      %1042 = vst [vmem:[#allocation2 + $0x38] sm:$0x1] 0
      %1043 = vst [vmem:[#allocation2 + $0x3c] sm:$0xf] 0
      %1044 = vst [vmem:[#allocation2 + $0x40] sm:$0xf] 0
      %1045 = vst [vmem:[#allocation2 + $0x44] sm:$0x1] 0
      %1046 = vst [vmem:[#allocation2 + $0x48] sm:$0xf] 0
      %1047 = vst [vmem:[#allocation2 + $0x4c] sm:$0xf] 0
      %1048 = vst [vmem:[#allocation2 + $0x50] sm:$0x1] 0
      %1049 = vst [vmem:[#allocation2 + $0x54] sm:$0xf] 0
      %1050 = vst [vmem:[#allocation2 + $0x58] sm:$0xf] 0
      %1051 = vst [vmem:[#allocation2 + $0x5c] sm:$0x1] 0
      %1052 = vst [vmem:[#allocation2 + $0x60] sm:$0xf] 0
      %1053 = vst [vmem:[#allocation2 + $0x64] sm:$0xf] 0
      %1054 = vst [vmem:[#allocation2 + $0x68] sm:$0x1] 0
      %1055 = vst [vmem:[#allocation2 + $0x6c] sm:$0xf] 0
      %1056 = vst [vmem:[#allocation2 + $0x70] sm:$0xf] 0
      %1057 = vst [vmem:[#allocation2 + $0x74] sm:$0x1] 0
      %v1058 = vpack.c.bf16 %v1021, %v1020
      %v1060 = vunpack.c.l.b16 %v1058
      %v1061 = vunpack.c.h.b16 %v1058
      %v1062 = vpack.c.b16 %v1060, %v1060
      %v1063 = vpack.c.b16 %v1061, %v1061
      %vm1064 = vsmask.f32 256
      %vm1065 = vsmask.f32 4368
      %vm1066 = vmor %vm1064, %vm1065
      %v1068 = vshrl.u32 %v1062, 16
      %v1070 = vrot.slane %v1068, 7
      %v1071 = vshll.u32 %v1062, 16
      %v1073 = vor.u32 %v1070, %v1071
      %v1074 = vrot.slane %v1070, 4
      %v1076 = vshrl.u32 %v1063, 16
      %v1078 = vrot.slane %v1076, 7
      %v1079 = vshll.u32 %v1063, 16
      %v1081 = vor.u32 %v1078, %v1079
      %v1082 = vsel %vm1066, %v1074, %v1081
      %v1083 = vrot.slane %v1078, 4
      %vm1087 = vcmask 1043456
      %vm1088 = vsmask.f32 7938
      %vm1089 = vmand %vm1087, %vm1088
      %v1090 = vld [vmem:[#allocation2] sm:$0xf]
      %v1091 = vsel %vm1089, %v1073, %v1090
      %1092 = vst [vmem:[#allocation2] sm:$0xf] %v1091
      %1093 = vst [vmem:[#allocation2 + $0x4] sm:$0xf] %v1082
      %vm1094 = vcmask 1040384
      %vm1095 = vmand %vm1094, %vm1064
      %v1096 = vld [vmem:[#allocation2 + $0x8] sm:$0x1]
      %v1097 = vsel %vm1095, %v1083, %v1096
      %1098 = vst [vmem:[#allocation2 + $0x8] sm:$0x1] %v1097
      %v1099 = vpack.c.bf16 %v1027, %v1026
      %v1101 = vunpack.c.l.b16 %v1099
      %v1102 = vunpack.c.h.b16 %v1099
      %v1103 = vpack.c.b16 %v1101, %v1101
      %v1104 = vpack.c.b16 %v1102, %v1102
      %v1106 = vshrl.u32 %v1103, 16
      %v1108 = vrot.slane %v1106, 7
      %v1109 = vshll.u32 %v1103, 16
      %v1111 = vor.u32 %v1108, %v1109
      %v1112 = vrot.slane %v1108, 4
      %v1114 = vshrl.u32 %v1104, 16
      %v1116 = vrot.slane %v1114, 7
      %v1117 = vshll.u32 %v1104, 16
      %v1119 = vor.u32 %v1116, %v1117
      %v1120 = vsel %vm1066, %v1112, %v1119
      %v1121 = vrot.slane %v1116, 4
      %s1125 = scalar_lea.vmem [#allocation2], 108
      %v1126 = vld [vmem:[%s1125] sm:$0xf]
      %v1127 = vsel %vm1089, %v1111, %v1126
      %1128 = vst [vmem:[%s1125] sm:$0xf] %v1127
      %1129 = vst [vmem:[%s1125 + $0x4] sm:$0xf] %v1120
      %v1130 = vld [vmem:[%s1125 + $0x8] sm:$0x1]
      %v1131 = vsel %vm1095, %v1121, %v1130
      %1132 = vst [vmem:[%s1125 + $0x8] sm:$0x1] %v1131
      %v1133 = vpack.c.bf16 %v866, %v865
      %v1134 = vpack.c.bf16 %v868, %v867
      %v1135 = vpack.c.bf16 %v870, %v869
      %v1136 = vpack.c.bf16 %v872, %v871
      %v1137 = vpack.c.bf16 %v874, %v873
      %v1138 = vpack.c.bf16 %v876, %v875
      %v1139 = vpack.c.bf16 %v878, %v877
      %v1140 = vpack.c.bf16 %v880, %v879
      %v1149 = vunpack.c.l.b16 %v1133
      %v1150 = vunpack.c.h.b16 %v1133
      %v1151 = vunpack.c.l.b16 %v1134
      %v1152 = vunpack.c.h.b16 %v1134
      %v1153 = vunpack.c.l.b16 %v1135
      %v1154 = vunpack.c.h.b16 %v1135
      %v1155 = vunpack.c.l.b16 %v1136
      %v1156 = vunpack.c.h.b16 %v1136
      %v1157 = vunpack.c.l.b16 %v1137
      %v1158 = vunpack.c.h.b16 %v1137
      %v1159 = vunpack.c.l.b16 %v1138
      %v1160 = vunpack.c.h.b16 %v1138
      %v1161 = vunpack.c.l.b16 %v1139
      %v1162 = vunpack.c.h.b16 %v1139
      %v1163 = vunpack.c.l.b16 %v1140
      %v1164 = vunpack.c.h.b16 %v1140
      %v1165 = vpack.c.b16 %v1149, %v1149
      %v1166 = vpack.c.b16 %v1150, %v1150
      %v1167 = vpack.c.b16 %v1151, %v1151
      %v1168 = vpack.c.b16 %v1152, %v1152
      %v1169 = vpack.c.b16 %v1153, %v1153
      %v1170 = vpack.c.b16 %v1154, %v1154
      %v1171 = vpack.c.b16 %v1155, %v1155
      %v1172 = vpack.c.b16 %v1156, %v1156
      %v1173 = vpack.c.b16 %v1157, %v1157
      %v1174 = vpack.c.b16 %v1158, %v1158
      %v1175 = vpack.c.b16 %v1159, %v1159
      %v1176 = vpack.c.b16 %v1160, %v1160
      %v1177 = vpack.c.b16 %v1161, %v1161
      %v1178 = vpack.c.b16 %v1162, %v1162
      %v1179 = vpack.c.b16 %v1163, %v1163
      %v1180 = vpack.c.b16 %v1164, %v1164
      %v1182 = vshrl.u32 %v1165, 16
      %v1184 = vrot.slane %v1182, 7
      %v1185 = vshll.u32 %v1165, 16
      %v1187 = vor.u32 %v1184, %v1185
      %v1188 = vrot.slane %v1184, 4
      %v1190 = vshrl.u32 %v1166, 16
      %v1192 = vrot.slane %v1190, 7
      %v1193 = vshll.u32 %v1166, 16
      %v1195 = vor.u32 %v1192, %v1193
      %v1196 = vsel %vm1066, %v1188, %v1195
      %v1197 = vrot.slane %v1192, 4
      %v1199 = vshrl.u32 %v1167, 16
      %v1201 = vrot.slane %v1199, 7
      %v1202 = vshll.u32 %v1167, 16
      %v1204 = vor.u32 %v1201, %v1202
      %v1205 = vrot.slane %v1201, 4
      %v1207 = vshrl.u32 %v1168, 16
      %v1209 = vrot.slane %v1207, 7
      %v1210 = vshll.u32 %v1168, 16
      %v1212 = vor.u32 %v1209, %v1210
      %v1213 = vsel %vm1066, %v1205, %v1212
      %v1214 = vrot.slane %v1209, 4
      %v1216 = vshrl.u32 %v1169, 16
      %v1218 = vrot.slane %v1216, 7
      %v1219 = vshll.u32 %v1169, 16
      %v1221 = vor.u32 %v1218, %v1219
      %v1222 = vrot.slane %v1218, 4
      %v1224 = vshrl.u32 %v1170, 16
      %v1226 = vrot.slane %v1224, 7
      %v1227 = vshll.u32 %v1170, 16
      %v1229 = vor.u32 %v1226, %v1227
      %v1230 = vsel %vm1066, %v1222, %v1229
      %v1231 = vrot.slane %v1226, 4
      %v1233 = vshrl.u32 %v1171, 16
      %v1235 = vrot.slane %v1233, 7
      %v1236 = vshll.u32 %v1171, 16
      %v1238 = vor.u32 %v1235, %v1236
      %v1239 = vrot.slane %v1235, 4
      %v1241 = vshrl.u32 %v1172, 16
      %v1243 = vrot.slane %v1241, 7
      %v1244 = vshll.u32 %v1172, 16
      %v1246 = vor.u32 %v1243, %v1244
      %v1247 = vsel %vm1066, %v1239, %v1246
      %v1248 = vrot.slane %v1243, 4
      %v1250 = vshrl.u32 %v1173, 16
      %v1252 = vrot.slane %v1250, 7
      %v1253 = vshll.u32 %v1173, 16
      %v1255 = vor.u32 %v1252, %v1253
      %v1256 = vrot.slane %v1252, 4
      %v1258 = vshrl.u32 %v1174, 16
      %v1260 = vrot.slane %v1258, 7
      %v1261 = vshll.u32 %v1174, 16
      %v1263 = vor.u32 %v1260, %v1261
      %v1264 = vsel %vm1066, %v1256, %v1263
      %v1265 = vrot.slane %v1260, 4
      %v1267 = vshrl.u32 %v1175, 16
      %v1269 = vrot.slane %v1267, 7
      %v1270 = vshll.u32 %v1175, 16
      %v1272 = vor.u32 %v1269, %v1270
      %v1273 = vrot.slane %v1269, 4
      %v1275 = vshrl.u32 %v1176, 16
      %v1277 = vrot.slane %v1275, 7
      %v1278 = vshll.u32 %v1176, 16
      %v1280 = vor.u32 %v1277, %v1278
      %v1281 = vsel %vm1066, %v1273, %v1280
      %v1282 = vrot.slane %v1277, 4
      %v1284 = vshrl.u32 %v1177, 16
      %v1286 = vrot.slane %v1284, 7
      %v1287 = vshll.u32 %v1177, 16
      %v1289 = vor.u32 %v1286, %v1287
      %v1290 = vrot.slane %v1286, 4
      %v1292 = vshrl.u32 %v1178, 16
      %v1294 = vrot.slane %v1292, 7
      %v1295 = vshll.u32 %v1178, 16
      %v1297 = vor.u32 %v1294, %v1295
      %v1298 = vsel %vm1066, %v1290, %v1297
      %v1299 = vrot.slane %v1294, 4
      %v1301 = vshrl.u32 %v1179, 16
      %v1303 = vrot.slane %v1301, 7
      %v1304 = vshll.u32 %v1179, 16
      %v1306 = vor.u32 %v1303, %v1304
      %v1307 = vrot.slane %v1303, 4
      %v1309 = vshrl.u32 %v1180, 16
      %v1311 = vrot.slane %v1309, 7
      %v1312 = vshll.u32 %v1180, 16
      %v1314 = vor.u32 %v1311, %v1312
      %v1315 = vsel %vm1066, %v1307, %v1314
      %v1316 = vrot.slane %v1311, 4
      %s1341 = scalar_lea.vmem [#allocation2], 12
      %v1342 = vld [vmem:[%s1341] sm:$0xf]
      %v1343 = vsel %vm1089, %v1187, %v1342
      %1344 = vst [vmem:[%s1341] sm:$0xf] %v1343
      %1345 = vst [vmem:[%s1341 + $0x4] sm:$0xf] %v1196
      %v1346 = vld [vmem:[%s1341 + $0x8] sm:$0x1]
      %v1347 = vsel %vm1095, %v1197, %v1346
      %1348 = vst [vmem:[%s1341 + $0x8] sm:$0x1] %v1347
      %v1349 = vld [vmem:[%s1341 + $0xc] sm:$0xf]
      %v1350 = vsel %vm1089, %v1204, %v1349
      %1351 = vst [vmem:[%s1341 + $0xc] sm:$0xf] %v1350
      %1352 = vst [vmem:[%s1341 + $0x10] sm:$0xf] %v1213
      %v1353 = vld [vmem:[%s1341 + $0x14] sm:$0x1]
      %v1354 = vsel %vm1095, %v1214, %v1353
      %1355 = vst [vmem:[%s1341 + $0x14] sm:$0x1] %v1354
      %v1356 = vld [vmem:[%s1341 + $0x18] sm:$0xf]
      %v1357 = vsel %vm1089, %v1221, %v1356
      %1358 = vst [vmem:[%s1341 + $0x18] sm:$0xf] %v1357
      %1359 = vst [vmem:[%s1341 + $0x1c] sm:$0xf] %v1230
      %v1360 = vld [vmem:[%s1341 + $0x20] sm:$0x1]
      %v1361 = vsel %vm1095, %v1231, %v1360
      %1362 = vst [vmem:[%s1341 + $0x20] sm:$0x1] %v1361
      %v1363 = vld [vmem:[%s1341 + $0x24] sm:$0xf]
      %v1364 = vsel %vm1089, %v1238, %v1363
      %1365 = vst [vmem:[%s1341 + $0x24] sm:$0xf] %v1364
      %1366 = vst [vmem:[%s1341 + $0x28] sm:$0xf] %v1247
      %v1367 = vld [vmem:[%s1341 + $0x2c] sm:$0x1]
      %v1368 = vsel %vm1095, %v1248, %v1367
      %1369 = vst [vmem:[%s1341 + $0x2c] sm:$0x1] %v1368
      %v1370 = vld [vmem:[%s1341 + $0x30] sm:$0xf]
      %v1371 = vsel %vm1089, %v1255, %v1370
      %1372 = vst [vmem:[%s1341 + $0x30] sm:$0xf] %v1371
      %1373 = vst [vmem:[%s1341 + $0x34] sm:$0xf] %v1264
      %v1374 = vld [vmem:[%s1341 + $0x38] sm:$0x1]
      %v1375 = vsel %vm1095, %v1265, %v1374
      %1376 = vst [vmem:[%s1341 + $0x38] sm:$0x1] %v1375
      %v1377 = vld [vmem:[%s1341 + $0x3c] sm:$0xf]
      %v1378 = vsel %vm1089, %v1272, %v1377
      %1379 = vst [vmem:[%s1341 + $0x3c] sm:$0xf] %v1378
      %1380 = vst [vmem:[%s1341 + $0x40] sm:$0xf] %v1281
      %v1381 = vld [vmem:[%s1341 + $0x44] sm:$0x1]
      %v1382 = vsel %vm1095, %v1282, %v1381
      %1383 = vst [vmem:[%s1341 + $0x44] sm:$0x1] %v1382
      %v1384 = vld [vmem:[%s1341 + $0x48] sm:$0xf]
      %v1385 = vsel %vm1089, %v1289, %v1384
      %1386 = vst [vmem:[%s1341 + $0x48] sm:$0xf] %v1385
      %1387 = vst [vmem:[%s1341 + $0x4c] sm:$0xf] %v1298
      %v1388 = vld [vmem:[%s1341 + $0x50] sm:$0x1]
      %v1389 = vsel %vm1095, %v1299, %v1388
      %1390 = vst [vmem:[%s1341 + $0x50] sm:$0x1] %v1389
      %v1391 = vld [vmem:[%s1341 + $0x54] sm:$0xf]
      %v1392 = vsel %vm1089, %v1306, %v1391
      %1393 = vst [vmem:[%s1341 + $0x54] sm:$0xf] %v1392
      %1394 = vst [vmem:[%s1341 + $0x58] sm:$0xf] %v1315
      %v1395 = vld [vmem:[%s1341 + $0x5c] sm:$0x1]
      %v1396 = vsel %vm1095, %v1316, %v1395
      %1397 = vst [vmem:[%s1341 + $0x5c] sm:$0x1] %v1396
      %v1398 = vld [vmem:[#allocation2] sm:$0xf]
      %v1399 = vld [vmem:[#allocation2 + $0x4] sm:$0xf]
      %v1400 = vld [vmem:[#allocation2 + $0xc] sm:$0xf]
      %v1401 = vld [vmem:[#allocation2 + $0x10] sm:$0xf]
      %v1402 = vld [vmem:[#allocation2 + $0x18] sm:$0xf]
      %v1403 = vld [vmem:[#allocation2 + $0x1c] sm:$0xf]
      %v1404 = vld [vmem:[#allocation2 + $0x24] sm:$0xf]
      %v1405 = vld [vmem:[#allocation2 + $0x28] sm:$0xf]
      %v1406 = vld [vmem:[#allocation2 + $0x30] sm:$0xf]
      %v1407 = vld [vmem:[#allocation2 + $0x34] sm:$0xf]
      %v1408 = vld [vmem:[#allocation2 + $0x3c] sm:$0xf]
      %v1409 = vld [vmem:[#allocation2 + $0x40] sm:$0xf]
      %v1410 = vld [vmem:[#allocation2 + $0x48] sm:$0xf]
      %v1411 = vld [vmem:[#allocation2 + $0x4c] sm:$0xf]
      %v1412 = vld [vmem:[#allocation2 + $0x54] sm:$0xf]
      %v1413 = vld [vmem:[#allocation2 + $0x58] sm:$0xf]
      %v1414 = vld [vmem:[%s6] sm:$0xf]
      %v1415 = vld [vmem:[%s6 + $0x4] sm:$0xf]
      %v1416 = vld [vmem:[%s6 + $0x8] sm:$0xf]
      %v1417 = vld [vmem:[%s6 + $0xc] sm:$0xf]
      %v1418 = vld [vmem:[%s6 + $0x10] sm:$0xf]
      %v1419 = vld [vmem:[%s6 + $0x14] sm:$0xf]
      %v1420 = vld [vmem:[%s6 + $0x18] sm:$0xf]
      %v1421 = vld [vmem:[%s6 + $0x1c] sm:$0xf]
      %v1422 = vld [vmem:[%s6 + $0x20] sm:$0xf]
      %v1423 = vld [vmem:[%s6 + $0x24] sm:$0xf]
      %v1424 = vld [vmem:[%s6 + $0x28] sm:$0xf]
      %v1425 = vld [vmem:[%s6 + $0x2c] sm:$0xf]
      %v1426 = vld [vmem:[%s6 + $0x30] sm:$0xf]
      %v1427 = vld [vmem:[%s6 + $0x34] sm:$0xf]
      %v1428 = vld [vmem:[%s6 + $0x38] sm:$0xf]
      %v1429 = vld [vmem:[%s6 + $0x3c] sm:$0xf]
      %v1430 = vld [vmem:[#allocation2 + $0x8] sm:$0x1]
      %v1431 = vld [vmem:[#allocation2 + $0x14] sm:$0x1]
      %v1432 = vld [vmem:[#allocation2 + $0x20] sm:$0x1]
      %v1433 = vld [vmem:[#allocation2 + $0x2c] sm:$0x1]
      %v1434 = vld [vmem:[#allocation2 + $0x38] sm:$0x1]
      %v1435 = vld [vmem:[#allocation2 + $0x44] sm:$0x1]
      %v1436 = vld [vmem:[#allocation2 + $0x50] sm:$0x1]
      %v1437 = vld [vmem:[#allocation2 + $0x5c] sm:$0x1]
      %vm1438 = vsmask.f32 3328
      %vm1439 = vsmask.f32 7440
      %vm1440 = vmor %vm1438, %vm1439
      %v1442 = vshrl.u32 %v1398, 16
      %v1444 = vrot.slane %v1442, 4
      %v1445 = vshll.u32 %v1398, 16
      %v1447 = vrot.slane %v1445, 5
      %v1448 = vor.u32 %v1444, %v1447
      %v1449 = vrot.slane %v1448, 4
      %v1451 = vshll.u32 %v1399, 16
      %v1453 = vrot.slane %v1451, 5
      %v1454 = vsel %vm1440, %v1449, %v1453
      %v1455 = vshrl.u32 %v1399, 16
      %v1457 = vrot.slane %v1455, 4
      %v1458 = vor.u32 %v1457, %v1453
      %v1459 = vrot.slane %v1458, 4
      %v1461 = vshll.u32 %v1430, 16
      %v1463 = vrot.slane %v1461, 5
      %v1464 = vsel %vm1440, %v1459, %v1463
      %v1466 = vshrl.u32 %v1400, 16
      %v1468 = vrot.slane %v1466, 4
      %v1469 = vshll.u32 %v1400, 16
      %v1471 = vrot.slane %v1469, 5
      %v1472 = vor.u32 %v1468, %v1471
      %v1473 = vrot.slane %v1472, 4
      %v1475 = vshll.u32 %v1401, 16
      %v1477 = vrot.slane %v1475, 5
      %v1478 = vsel %vm1440, %v1473, %v1477
      %v1479 = vshrl.u32 %v1401, 16
      %v1481 = vrot.slane %v1479, 4
      %v1482 = vor.u32 %v1481, %v1477
      %v1483 = vrot.slane %v1482, 4
      %v1485 = vshll.u32 %v1431, 16
      %v1487 = vrot.slane %v1485, 5
      %v1488 = vsel %vm1440, %v1483, %v1487
      %v1490 = vshrl.u32 %v1402, 16
      %v1492 = vrot.slane %v1490, 4
      %v1493 = vshll.u32 %v1402, 16
      %v1495 = vrot.slane %v1493, 5
      %v1496 = vor.u32 %v1492, %v1495
      %v1497 = vrot.slane %v1496, 4
      %v1499 = vshll.u32 %v1403, 16
      %v1501 = vrot.slane %v1499, 5
      %v1502 = vsel %vm1440, %v1497, %v1501
      %v1503 = vshrl.u32 %v1403, 16
      %v1505 = vrot.slane %v1503, 4
      %v1506 = vor.u32 %v1505, %v1501
      %v1507 = vrot.slane %v1506, 4
      %v1509 = vshll.u32 %v1432, 16
      %v1511 = vrot.slane %v1509, 5
      %v1512 = vsel %vm1440, %v1507, %v1511
      %v1514 = vshrl.u32 %v1404, 16
      %v1516 = vrot.slane %v1514, 4
      %v1517 = vshll.u32 %v1404, 16
      %v1519 = vrot.slane %v1517, 5
      %v1520 = vor.u32 %v1516, %v1519
      %v1521 = vrot.slane %v1520, 4
      %v1523 = vshll.u32 %v1405, 16
      %v1525 = vrot.slane %v1523, 5
      %v1526 = vsel %vm1440, %v1521, %v1525
      %v1527 = vshrl.u32 %v1405, 16
      %v1529 = vrot.slane %v1527, 4
      %v1530 = vor.u32 %v1529, %v1525
      %v1531 = vrot.slane %v1530, 4
      %v1533 = vshll.u32 %v1433, 16
      %v1535 = vrot.slane %v1533, 5
      %v1536 = vsel %vm1440, %v1531, %v1535
      %v1538 = vshrl.u32 %v1406, 16
      %v1540 = vrot.slane %v1538, 4
      %v1541 = vshll.u32 %v1406, 16
      %v1543 = vrot.slane %v1541, 5
      %v1544 = vor.u32 %v1540, %v1543
      %v1545 = vrot.slane %v1544, 4
      %v1547 = vshll.u32 %v1407, 16
      %v1549 = vrot.slane %v1547, 5
      %v1550 = vsel %vm1440, %v1545, %v1549
      %v1551 = vshrl.u32 %v1407, 16
      %v1553 = vrot.slane %v1551, 4
      %v1554 = vor.u32 %v1553, %v1549
      %v1555 = vrot.slane %v1554, 4
      %v1557 = vshll.u32 %v1434, 16
      %v1559 = vrot.slane %v1557, 5
      %v1560 = vsel %vm1440, %v1555, %v1559
      %v1562 = vshrl.u32 %v1408, 16
      %v1564 = vrot.slane %v1562, 4
      %v1565 = vshll.u32 %v1408, 16
      %v1567 = vrot.slane %v1565, 5
      %v1568 = vor.u32 %v1564, %v1567
      %v1569 = vrot.slane %v1568, 4
      %v1571 = vshll.u32 %v1409, 16
      %v1573 = vrot.slane %v1571, 5
      %v1574 = vsel %vm1440, %v1569, %v1573
      %v1575 = vshrl.u32 %v1409, 16
      %v1577 = vrot.slane %v1575, 4
      %v1578 = vor.u32 %v1577, %v1573
      %v1579 = vrot.slane %v1578, 4
      %v1581 = vshll.u32 %v1435, 16
      %v1583 = vrot.slane %v1581, 5
      %v1584 = vsel %vm1440, %v1579, %v1583
      %v1586 = vshrl.u32 %v1410, 16
      %v1588 = vrot.slane %v1586, 4
      %v1589 = vshll.u32 %v1410, 16
      %v1591 = vrot.slane %v1589, 5
      %v1592 = vor.u32 %v1588, %v1591
      %v1593 = vrot.slane %v1592, 4
      %v1595 = vshll.u32 %v1411, 16
      %v1597 = vrot.slane %v1595, 5
      %v1598 = vsel %vm1440, %v1593, %v1597
      %v1599 = vshrl.u32 %v1411, 16
      %v1601 = vrot.slane %v1599, 4
      %v1602 = vor.u32 %v1601, %v1597
      %v1603 = vrot.slane %v1602, 4
      %v1605 = vshll.u32 %v1436, 16
      %v1607 = vrot.slane %v1605, 5
      %v1608 = vsel %vm1440, %v1603, %v1607
      %v1610 = vshrl.u32 %v1412, 16
      %v1612 = vrot.slane %v1610, 4
      %v1613 = vshll.u32 %v1412, 16
      %v1615 = vrot.slane %v1613, 5
      %v1616 = vor.u32 %v1612, %v1615
      %v1617 = vrot.slane %v1616, 4
      %v1619 = vshll.u32 %v1413, 16
      %v1621 = vrot.slane %v1619, 5
      %v1622 = vsel %vm1440, %v1617, %v1621
      %v1623 = vshrl.u32 %v1413, 16
      %v1625 = vrot.slane %v1623, 4
      %v1626 = vor.u32 %v1625, %v1621
      %v1627 = vrot.slane %v1626, 4
      %v1629 = vshll.u32 %v1437, 16
      %v1631 = vrot.slane %v1629, 5
      %v1632 = vsel %vm1440, %v1627, %v1631
      %s1633 = scalar_lea.vmem %s6, 64
      %v1634 = vld [vmem:[%s1633] sm:$0xf]
      %v1635 = vld [vmem:[%s1633 + $0x4] sm:$0xf]
      %v1636 = vld [vmem:[%s1633 + $0x8] sm:$0xf]
      %v1637 = vld [vmem:[%s1633 + $0xc] sm:$0xf]
      %v1638 = vld [vmem:[%s1633 + $0x10] sm:$0xf]
      %v1639 = vld [vmem:[%s1633 + $0x14] sm:$0xf]
      %v1640 = vld [vmem:[%s1633 + $0x18] sm:$0xf]
      %v1641 = vld [vmem:[%s1633 + $0x1c] sm:$0xf]
      %v1642 = vld [vmem:[%s1633 + $0x20] sm:$0xf]
      %v1643 = vld [vmem:[%s1633 + $0x24] sm:$0xf]
      %v1644 = vld [vmem:[%s1633 + $0x28] sm:$0xf]
      %v1645 = vld [vmem:[%s1633 + $0x2c] sm:$0xf]
      %v1646 = vld [vmem:[%s1633 + $0x30] sm:$0xf]
      %v1647 = vld [vmem:[%s1633 + $0x34] sm:$0xf]
      %v1648 = vld [vmem:[%s1633 + $0x38] sm:$0xf]
      %v1649 = vld [vmem:[%s1633 + $0x3c] sm:$0xf]
      %v1650 = vunpack.c.l.b16 %v1454
      %v1651 = vunpack.c.l.b16 %v1464
      %v1652 = vunpack.c.l.b16 %v1478
      %v1653 = vunpack.c.l.b16 %v1488
      %v1654 = vunpack.c.l.b16 %v1502
      %v1655 = vunpack.c.l.b16 %v1512
      %v1656 = vunpack.c.l.b16 %v1526
      %v1657 = vunpack.c.l.b16 %v1536
      %v1658 = vunpack.c.l.b16 %v1550
      %v1659 = vunpack.c.l.b16 %v1560
      %v1660 = vunpack.c.l.b16 %v1574
      %v1661 = vunpack.c.l.b16 %v1584
      %v1662 = vunpack.c.l.b16 %v1598
      %v1663 = vunpack.c.l.b16 %v1608
      %v1664 = vunpack.c.l.b16 %v1622
      %v1665 = vunpack.c.l.b16 %v1632
      %v1666 = vpack.c.b16 %v1651, %v1650
      %v1667 = vpack.c.b16 %v1653, %v1652
      %v1668 = vpack.c.b16 %v1655, %v1654
      %v1669 = vpack.c.b16 %v1657, %v1656
      %v1670 = vpack.c.b16 %v1659, %v1658
      %v1671 = vpack.c.b16 %v1661, %v1660
      %v1672 = vpack.c.b16 %v1663, %v1662
      %v1673 = vpack.c.b16 %v1665, %v1664
      %v1698 = vunpack.c.l.b16 %v1634
      %v1699 = vunpack.c.l.b16 %v1635
      %v1700 = vunpack.c.l.b16 %v1636
      %v1701 = vunpack.c.l.b16 %v1637
      %v1702 = vunpack.c.l.b16 %v1638
      %v1703 = vunpack.c.l.b16 %v1639
      %v1704 = vunpack.c.l.b16 %v1640
      %v1705 = vunpack.c.l.b16 %v1641
      %v1706 = vunpack.c.l.b16 %v1642
      %v1707 = vunpack.c.l.b16 %v1643
      %v1708 = vunpack.c.l.b16 %v1644
      %v1709 = vunpack.c.l.b16 %v1645
      %v1710 = vunpack.c.l.b16 %v1646
      %v1711 = vunpack.c.l.b16 %v1647
      %v1712 = vunpack.c.l.b16 %v1648
      %v1713 = vunpack.c.l.b16 %v1649
      %v1714 = vpack.c.b16 %v1699, %v1698
      %v1715 = vpack.c.b16 %v1701, %v1700
      %v1716 = vpack.c.b16 %v1703, %v1702
      %v1717 = vpack.c.b16 %v1705, %v1704
      %v1718 = vpack.c.b16 %v1707, %v1706
      %v1719 = vpack.c.b16 %v1709, %v1708
      %v1720 = vpack.c.b16 %v1711, %v1710
      %v1721 = vpack.c.b16 %v1713, %v1712
      %1730 = vmatprep.subr.bf16.mxu0 0
      %1731 = vmatpush1.bf16.msra.mxu0 %v1714
      %1732 = vmatprep.subr.bf16.mxu0 0
      %1733 = vmatpush1.bf16.msra.mxu0 %v1715
      %1734 = vmatprep.subr.bf16.mxu0 0
      %1735 = vmatpush1.bf16.msra.mxu0 %v1716
      %1736 = vmatprep.subr.bf16.mxu0 0
      %1737 = vmatpush1.bf16.msra.mxu0 %v1717
      %1738 = vmatprep.subr.bf16.mxu0 0
      %1739 = vmatpush1.bf16.msra.mxu0 %v1718
      %1740 = vmatprep.subr.bf16.mxu0 0
      %1741 = vmatpush1.bf16.msra.mxu0 %v1719
      %1742 = vmatprep.subr.bf16.mxu0 0
      %1743 = vmatpush1.bf16.msra.mxu0 %v1720
      %1744 = vmatprep.subr.bf16.mxu0 0
      %1745 = vmatpush1.bf16.msra.mxu0 %v1721
      %1746 = vmatprep.subr.bf16.mxu0 0
      %1747 = vmatpush1.bf16.msra.mxu0 0
      %1748 = vmatprep.subr.bf16.mxu0 0
      %1749 = vmatpush1.bf16.msra.mxu0 0
      %1750 = vmatprep.subr.bf16.mxu0 0
      %1751 = vmatpush1.bf16.msra.mxu0 0
      %1752 = vmatprep.subr.bf16.mxu0 0
      %1753 = vmatpush1.bf16.msra.mxu0 0
      %1754 = vmatprep.subr.bf16.mxu0 0
      %1755 = vmatpush1.bf16.msra.mxu0 0
      %1756 = vmatprep.subr.bf16.mxu0 0
      %1757 = vmatpush1.bf16.msra.mxu0 0
      %1758 = vmatprep.subr.bf16.mxu0 0
      %1759 = vmatpush1.bf16.msra.mxu0 0
      %1760 = vmatprep.subr.bf16.mxu0 0
      %1761 = vmatpush1.bf16.msra.mxu0 0
      %1762 = vmatprep.mubr.bf16.mxu0 0
      %1763 = vmatmul.mubr.bf16.gmra.mrb[0].mxu0 %v1666
      %v1764 = vpop.f32.mrb[0].mxu0
      %v1765 = vadd.f32 0.0, %v1764
      %v1766 = vpop.f32.mrb[0].mxu0
      %v1767 = vpop.f32.mrb[0].mxu0
      %v1768 = vadd.f32 0.0, %v1767
      %v1769 = vpop.f32.mrb[0].mxu0
      %1770 = vmatprep.mubr.bf16.mxu0 0
      %1771 = vmatmul.mubr.bf16.gmra.mrb[0].mxu0 %v1667
      %v1772 = vpop.f32.mrb[0].mxu0
      %v1773 = vadd.f32 0.0, %v1772
      %v1774 = vpop.f32.mrb[0].mxu0
      %v1775 = vpop.f32.mrb[0].mxu0
      %v1776 = vadd.f32 0.0, %v1775
      %v1777 = vpop.f32.mrb[0].mxu0
      %1778 = vmatprep.mubr.bf16.mxu0 0
      %1779 = vmatmul.mubr.bf16.gmra.mrb[0].mxu0 %v1668
      %v1780 = vpop.f32.mrb[0].mxu0
      %v1781 = vadd.f32 0.0, %v1780
      %v1782 = vpop.f32.mrb[0].mxu0
      %v1783 = vpop.f32.mrb[0].mxu0
      %v1784 = vadd.f32 0.0, %v1783
      %v1785 = vpop.f32.mrb[0].mxu0
      %1786 = vmatprep.mubr.bf16.mxu0 0
      %1787 = vmatmul.mubr.bf16.gmra.mrb[0].mxu0 %v1669
      %v1788 = vpop.f32.mrb[0].mxu0
      %v1789 = vadd.f32 0.0, %v1788
      %v1790 = vpop.f32.mrb[0].mxu0
      %v1791 = vpop.f32.mrb[0].mxu0
      %v1792 = vadd.f32 0.0, %v1791
      %v1793 = vpop.f32.mrb[0].mxu0
      %1794 = vmatprep.mubr.bf16.mxu0 0
      %1795 = vmatmul.mubr.bf16.gmra.mrb[0].mxu0 %v1670
      %v1796 = vpop.f32.mrb[0].mxu0
      %v1797 = vadd.f32 0.0, %v1796
      %v1798 = vpop.f32.mrb[0].mxu0
      %v1799 = vpop.f32.mrb[0].mxu0
      %v1800 = vadd.f32 0.0, %v1799
      %v1801 = vpop.f32.mrb[0].mxu0
      %1802 = vmatprep.mubr.bf16.mxu0 0
      %1803 = vmatmul.mubr.bf16.gmra.mrb[0].mxu0 %v1671
      %v1804 = vpop.f32.mrb[0].mxu0
      %v1805 = vadd.f32 0.0, %v1804
      %v1806 = vpop.f32.mrb[0].mxu0
      %v1807 = vpop.f32.mrb[0].mxu0
      %v1808 = vadd.f32 0.0, %v1807
      %v1809 = vpop.f32.mrb[0].mxu0
      %1810 = vmatprep.mubr.bf16.mxu0 0
      %1811 = vmatmul.mubr.bf16.gmra.mrb[0].mxu0 %v1672
      %v1812 = vpop.f32.mrb[0].mxu0
      %v1813 = vadd.f32 0.0, %v1812
      %v1814 = vpop.f32.mrb[0].mxu0
      %v1815 = vpop.f32.mrb[0].mxu0
      %v1816 = vadd.f32 0.0, %v1815
      %v1817 = vpop.f32.mrb[0].mxu0
      %1818 = vmatprep.mubr.bf16.mxu0 0
      %1819 = vmatmul.mubr.bf16.gmra.mrb[0].mxu0 %v1673
      %v1820 = vpop.f32.mrb[0].mxu0
      %v1821 = vadd.f32 0.0, %v1820
      %v1822 = vpop.f32.mrb[0].mxu0
      %v1823 = vpop.f32.mrb[0].mxu0
      %v1824 = vadd.f32 0.0, %v1823
      %v1825 = vpop.f32.mrb[0].mxu0
      %1826 = vdwg.mxu0
      %v1843 = vunpack.c.l.b16 %v1398
      %v1844 = vunpack.c.l.b16 %v1399
      %v1845 = vunpack.c.l.b16 %v1400
      %v1846 = vunpack.c.l.b16 %v1401
      %v1847 = vunpack.c.l.b16 %v1402
      %v1848 = vunpack.c.l.b16 %v1403
      %v1849 = vunpack.c.l.b16 %v1404
      %v1850 = vunpack.c.l.b16 %v1405
      %v1851 = vunpack.c.l.b16 %v1406
      %v1852 = vunpack.c.l.b16 %v1407
      %v1853 = vunpack.c.l.b16 %v1408
      %v1854 = vunpack.c.l.b16 %v1409
      %v1855 = vunpack.c.l.b16 %v1410
      %v1856 = vunpack.c.l.b16 %v1411
      %v1857 = vunpack.c.l.b16 %v1412
      %v1858 = vunpack.c.l.b16 %v1413
      %v1859 = vpack.c.b16 %v1844, %v1843
      %v1860 = vpack.c.b16 %v1846, %v1845
      %v1861 = vpack.c.b16 %v1848, %v1847
      %v1862 = vpack.c.b16 %v1850, %v1849
      %v1863 = vpack.c.b16 %v1852, %v1851
      %v1864 = vpack.c.b16 %v1854, %v1853
      %v1865 = vpack.c.b16 %v1856, %v1855
      %v1866 = vpack.c.b16 %v1858, %v1857
      %v1891 = vunpack.c.l.b16 %v1414
      %v1892 = vunpack.c.l.b16 %v1415
      %v1893 = vunpack.c.l.b16 %v1416
      %v1894 = vunpack.c.l.b16 %v1417
      %v1895 = vunpack.c.l.b16 %v1418
      %v1896 = vunpack.c.l.b16 %v1419
      %v1897 = vunpack.c.l.b16 %v1420
      %v1898 = vunpack.c.l.b16 %v1421
      %v1899 = vunpack.c.l.b16 %v1422
      %v1900 = vunpack.c.l.b16 %v1423
      %v1901 = vunpack.c.l.b16 %v1424
      %v1902 = vunpack.c.l.b16 %v1425
      %v1903 = vunpack.c.l.b16 %v1426
      %v1904 = vunpack.c.l.b16 %v1427
      %v1905 = vunpack.c.l.b16 %v1428
      %v1906 = vunpack.c.l.b16 %v1429
      %v1907 = vpack.c.b16 %v1892, %v1891
      %v1908 = vpack.c.b16 %v1894, %v1893
      %v1909 = vpack.c.b16 %v1896, %v1895
      %v1910 = vpack.c.b16 %v1898, %v1897
      %v1911 = vpack.c.b16 %v1900, %v1899
      %v1912 = vpack.c.b16 %v1902, %v1901
      %v1913 = vpack.c.b16 %v1904, %v1903
      %v1914 = vpack.c.b16 %v1906, %v1905
      %1923 = vmatprep.subr.bf16.mxu0 0
      %1924 = vmatpush1.bf16.msra.mxu0 %v1907
      %1925 = vmatprep.subr.bf16.mxu0 0
      %1926 = vmatpush1.bf16.msra.mxu0 %v1908
      %1927 = vmatprep.subr.bf16.mxu0 0
      %1928 = vmatpush1.bf16.msra.mxu0 %v1909
      %1929 = vmatprep.subr.bf16.mxu0 0
      %1930 = vmatpush1.bf16.msra.mxu0 %v1910
      %1931 = vmatprep.subr.bf16.mxu0 0
      %1932 = vmatpush1.bf16.msra.mxu0 %v1911
      %1933 = vmatprep.subr.bf16.mxu0 0
      %1934 = vmatpush1.bf16.msra.mxu0 %v1912
      %1935 = vmatprep.subr.bf16.mxu0 0
      %1936 = vmatpush1.bf16.msra.mxu0 %v1913
      %1937 = vmatprep.subr.bf16.mxu0 0
      %1938 = vmatpush1.bf16.msra.mxu0 %v1914
      %1939 = vmatprep.subr.bf16.mxu0 0
      %1940 = vmatpush1.bf16.msra.mxu0 0
      %1941 = vmatprep.subr.bf16.mxu0 0
      %1942 = vmatpush1.bf16.msra.mxu0 0
      %1943 = vmatprep.subr.bf16.mxu0 0
      %1944 = vmatpush1.bf16.msra.mxu0 0
      %1945 = vmatprep.subr.bf16.mxu0 0
      %1946 = vmatpush1.bf16.msra.mxu0 0
      %1947 = vmatprep.subr.bf16.mxu0 0
      %1948 = vmatpush1.bf16.msra.mxu0 0
      %1949 = vmatprep.subr.bf16.mxu0 0
      %1950 = vmatpush1.bf16.msra.mxu0 0
      %1951 = vmatprep.subr.bf16.mxu0 0
      %1952 = vmatpush1.bf16.msra.mxu0 0
      %1953 = vmatprep.subr.bf16.mxu0 0
      %1954 = vmatpush1.bf16.msra.mxu0 0
      %1955 = vmatprep.mubr.bf16.mxu0 0
      %1956 = vmatmul.mubr.bf16.gmra.mrb[0].mxu0 %v1859
      %v1957 = vpop.f32.mrb[0].mxu0
      %v1958 = vadd.f32 %v1765, %v1957
      %v1959 = vpop.f32.mrb[0].mxu0
      %v1960 = vpop.f32.mrb[0].mxu0
      %v1961 = vadd.f32 %v1768, %v1960
      %v1962 = vpop.f32.mrb[0].mxu0
      %1963 = vmatprep.mubr.bf16.mxu0 0
      %1964 = vmatmul.mubr.bf16.gmra.mrb[0].mxu0 %v1860
      %v1965 = vpop.f32.mrb[0].mxu0
      %v1966 = vadd.f32 %v1773, %v1965
      %v1967 = vpop.f32.mrb[0].mxu0
      %v1968 = vpop.f32.mrb[0].mxu0
      %v1969 = vadd.f32 %v1776, %v1968
      %v1970 = vpop.f32.mrb[0].mxu0
      %1971 = vmatprep.mubr.bf16.mxu0 0
      %1972 = vmatmul.mubr.bf16.gmra.mrb[0].mxu0 %v1861
      %v1973 = vpop.f32.mrb[0].mxu0
      %v1974 = vadd.f32 %v1781, %v1973
      %v1975 = vpop.f32.mrb[0].mxu0
      %v1976 = vpop.f32.mrb[0].mxu0
      %v1977 = vadd.f32 %v1784, %v1976
      %v1978 = vpop.f32.mrb[0].mxu0
      %1979 = vmatprep.mubr.bf16.mxu0 0
      %1980 = vmatmul.mubr.bf16.gmra.mrb[0].mxu0 %v1862
      %v1981 = vpop.f32.mrb[0].mxu0
      %v1982 = vadd.f32 %v1789, %v1981
      %v1983 = vpop.f32.mrb[0].mxu0
      %v1984 = vpop.f32.mrb[0].mxu0
      %v1985 = vadd.f32 %v1792, %v1984
      %v1986 = vpop.f32.mrb[0].mxu0
      %1987 = vmatprep.mubr.bf16.mxu0 0
      %1988 = vmatmul.mubr.bf16.gmra.mrb[0].mxu0 %v1863
      %v1989 = vpop.f32.mrb[0].mxu0
      %v1990 = vadd.f32 %v1797, %v1989
      %v1991 = vpop.f32.mrb[0].mxu0
      %v1992 = vpop.f32.mrb[0].mxu0
      %v1993 = vadd.f32 %v1800, %v1992
      %v1994 = vpop.f32.mrb[0].mxu0
      %1995 = vmatprep.mubr.bf16.mxu0 0
      %1996 = vmatmul.mubr.bf16.gmra.mrb[0].mxu0 %v1864
      %v1997 = vpop.f32.mrb[0].mxu0
      %v1998 = vadd.f32 %v1805, %v1997
      %v1999 = vpop.f32.mrb[0].mxu0
      %v2000 = vpop.f32.mrb[0].mxu0
      %v2001 = vadd.f32 %v1808, %v2000
      %v2002 = vpop.f32.mrb[0].mxu0
      %2003 = vmatprep.mubr.bf16.mxu0 0
      %2004 = vmatmul.mubr.bf16.gmra.mrb[0].mxu0 %v1865
      %v2005 = vpop.f32.mrb[0].mxu0
      %v2006 = vadd.f32 %v1813, %v2005
      %v2007 = vpop.f32.mrb[0].mxu0
      %v2008 = vpop.f32.mrb[0].mxu0
      %v2009 = vadd.f32 %v1816, %v2008
      %v2010 = vpop.f32.mrb[0].mxu0
      %2011 = vmatprep.mubr.bf16.mxu0 0
      %2012 = vmatmul.mubr.bf16.gmra.mrb[0].mxu0 %v1866
      %v2013 = vpop.f32.mrb[0].mxu0
      %v2014 = vadd.f32 %v1821, %v2013
      %v2015 = vpop.f32.mrb[0].mxu0
      %v2016 = vpop.f32.mrb[0].mxu0
      %v2017 = vadd.f32 %v1824, %v2016
      %v2018 = vpop.f32.mrb[0].mxu0
      %2019 = vdwg.mxu0
      %v2020 = vld [vmem:[#allocation2] sm:$0xe]
      %v2021 = vld [vmem:[#allocation2 + $0xc] sm:$0xe]
      %v2022 = vld [vmem:[#allocation2 + $0x18] sm:$0xe]
      %v2023 = vld [vmem:[#allocation2 + $0x24] sm:$0xe]
      %v2024 = vld [vmem:[#allocation2 + $0x30] sm:$0xe]
      %v2025 = vld [vmem:[#allocation2 + $0x3c] sm:$0xe]
      %v2026 = vld [vmem:[#allocation2 + $0x48] sm:$0xe]
      %v2027 = vld [vmem:[#allocation2 + $0x54] sm:$0xe]
      %vm2044 = vcmask 1042432
      %vm2045 = vcmask 1046532
      %vm2046 = vmor %vm2044, %vm2045
      %v2047 = vrot.slane %v2020, 5
      %v2048 = vrot.slane %v2047, 4
      %v2049 = vrot.slane %v1399, 5
      %v2050 = vsel %vm2046, %v2048, %v2049
      %v2051 = vrot.slane %v2049, 4
      %v2052 = vrot.slane %v1430, 5
      %v2053 = vsel %vm2046, %v2051, %v2052
      %v2054 = vrot.slane %v2021, 5
      %v2055 = vrot.slane %v2054, 4
      %v2056 = vrot.slane %v1401, 5
      %v2057 = vsel %vm2046, %v2055, %v2056
      %v2058 = vrot.slane %v2056, 4
      %v2059 = vrot.slane %v1431, 5
      %v2060 = vsel %vm2046, %v2058, %v2059
      %v2061 = vrot.slane %v2022, 5
      %v2062 = vrot.slane %v2061, 4
      %v2063 = vrot.slane %v1403, 5
      %v2064 = vsel %vm2046, %v2062, %v2063
      %v2065 = vrot.slane %v2063, 4
      %v2066 = vrot.slane %v1432, 5
      %v2067 = vsel %vm2046, %v2065, %v2066
      %v2068 = vrot.slane %v2023, 5
      %v2069 = vrot.slane %v2068, 4
      %v2070 = vrot.slane %v1405, 5
      %v2071 = vsel %vm2046, %v2069, %v2070
      %v2072 = vrot.slane %v2070, 4
      %v2073 = vrot.slane %v1433, 5
      %v2074 = vsel %vm2046, %v2072, %v2073
      %v2075 = vrot.slane %v2024, 5
      %v2076 = vrot.slane %v2075, 4
      %v2077 = vrot.slane %v1407, 5
      %v2078 = vsel %vm2046, %v2076, %v2077
      %v2079 = vrot.slane %v2077, 4
      %v2080 = vrot.slane %v1434, 5
      %v2081 = vsel %vm2046, %v2079, %v2080
      %v2082 = vrot.slane %v2025, 5
      %v2083 = vrot.slane %v2082, 4
      %v2084 = vrot.slane %v1409, 5
      %v2085 = vsel %vm2046, %v2083, %v2084
      %v2086 = vrot.slane %v2084, 4
      %v2087 = vrot.slane %v1435, 5
      %v2088 = vsel %vm2046, %v2086, %v2087
      %v2089 = vrot.slane %v2026, 5
      %v2090 = vrot.slane %v2089, 4
      %v2091 = vrot.slane %v1411, 5
      %v2092 = vsel %vm2046, %v2090, %v2091
      %v2093 = vrot.slane %v2091, 4
      %v2094 = vrot.slane %v1436, 5
      %v2095 = vsel %vm2046, %v2093, %v2094
      %v2096 = vrot.slane %v2027, 5
      %v2097 = vrot.slane %v2096, 4
      %v2098 = vrot.slane %v1413, 5
      %v2099 = vsel %vm2046, %v2097, %v2098
      %v2100 = vrot.slane %v2098, 4
      %v2101 = vrot.slane %v1437, 5
      %v2102 = vsel %vm2046, %v2100, %v2101
      %s2103 = scalar_lea.vmem %s6, 128
      %v2104 = vld [vmem:[%s2103] sm:$0xf]
      %v2105 = vld [vmem:[%s2103 + $0x4] sm:$0xf]
      %v2106 = vld [vmem:[%s2103 + $0x8] sm:$0xf]
      %v2107 = vld [vmem:[%s2103 + $0xc] sm:$0xf]
      %v2108 = vld [vmem:[%s2103 + $0x10] sm:$0xf]
      %v2109 = vld [vmem:[%s2103 + $0x14] sm:$0xf]
      %v2110 = vld [vmem:[%s2103 + $0x18] sm:$0xf]
      %v2111 = vld [vmem:[%s2103 + $0x1c] sm:$0xf]
      %v2112 = vld [vmem:[%s2103 + $0x20] sm:$0xf]
      %v2113 = vld [vmem:[%s2103 + $0x24] sm:$0xf]
      %v2114 = vld [vmem:[%s2103 + $0x28] sm:$0xf]
      %v2115 = vld [vmem:[%s2103 + $0x2c] sm:$0xf]
      %v2116 = vld [vmem:[%s2103 + $0x30] sm:$0xf]
      %v2117 = vld [vmem:[%s2103 + $0x34] sm:$0xf]
      %v2118 = vld [vmem:[%s2103 + $0x38] sm:$0xf]
      %v2119 = vld [vmem:[%s2103 + $0x3c] sm:$0xf]
      %v2120 = vunpack.c.l.b16 %v2050
      %v2121 = vunpack.c.l.b16 %v2053
      %v2122 = vunpack.c.l.b16 %v2057
      %v2123 = vunpack.c.l.b16 %v2060
      %v2124 = vunpack.c.l.b16 %v2064
      %v2125 = vunpack.c.l.b16 %v2067
      %v2126 = vunpack.c.l.b16 %v2071
      %v2127 = vunpack.c.l.b16 %v2074
      %v2128 = vunpack.c.l.b16 %v2078
      %v2129 = vunpack.c.l.b16 %v2081
      %v2130 = vunpack.c.l.b16 %v2085
      %v2131 = vunpack.c.l.b16 %v2088
      %v2132 = vunpack.c.l.b16 %v2092
      %v2133 = vunpack.c.l.b16 %v2095
      %v2134 = vunpack.c.l.b16 %v2099
      %v2135 = vunpack.c.l.b16 %v2102
      %v2136 = vpack.c.b16 %v2121, %v2120
      %v2137 = vpack.c.b16 %v2123, %v2122
      %v2138 = vpack.c.b16 %v2125, %v2124
      %v2139 = vpack.c.b16 %v2127, %v2126
      %v2140 = vpack.c.b16 %v2129, %v2128
      %v2141 = vpack.c.b16 %v2131, %v2130
      %v2142 = vpack.c.b16 %v2133, %v2132
      %v2143 = vpack.c.b16 %v2135, %v2134
      %v2168 = vunpack.c.l.b16 %v2104
      %v2169 = vunpack.c.l.b16 %v2105
      %v2170 = vunpack.c.l.b16 %v2106
      %v2171 = vunpack.c.l.b16 %v2107
      %v2172 = vunpack.c.l.b16 %v2108
      %v2173 = vunpack.c.l.b16 %v2109
      %v2174 = vunpack.c.l.b16 %v2110
      %v2175 = vunpack.c.l.b16 %v2111
      %v2176 = vunpack.c.l.b16 %v2112
      %v2177 = vunpack.c.l.b16 %v2113
      %v2178 = vunpack.c.l.b16 %v2114
      %v2179 = vunpack.c.l.b16 %v2115
      %v2180 = vunpack.c.l.b16 %v2116
      %v2181 = vunpack.c.l.b16 %v2117
      %v2182 = vunpack.c.l.b16 %v2118
      %v2183 = vunpack.c.l.b16 %v2119
      %v2184 = vpack.c.b16 %v2169, %v2168
      %v2185 = vpack.c.b16 %v2171, %v2170
      %v2186 = vpack.c.b16 %v2173, %v2172
      %v2187 = vpack.c.b16 %v2175, %v2174
      %v2188 = vpack.c.b16 %v2177, %v2176
      %v2189 = vpack.c.b16 %v2179, %v2178
      %v2190 = vpack.c.b16 %v2181, %v2180
      %v2191 = vpack.c.b16 %v2183, %v2182
      %2200 = vmatprep.subr.bf16.mxu0 0
      %2201 = vmatpush1.bf16.msra.mxu0 %v2184
      %2202 = vmatprep.subr.bf16.mxu0 0
      %2203 = vmatpush1.bf16.msra.mxu0 %v2185
      %2204 = vmatprep.subr.bf16.mxu0 0
      %2205 = vmatpush1.bf16.msra.mxu0 %v2186
      %2206 = vmatprep.subr.bf16.mxu0 0
      %2207 = vmatpush1.bf16.msra.mxu0 %v2187
      %2208 = vmatprep.subr.bf16.mxu0 0
      %2209 = vmatpush1.bf16.msra.mxu0 %v2188
      %2210 = vmatprep.subr.bf16.mxu0 0
      %2211 = vmatpush1.bf16.msra.mxu0 %v2189
      %2212 = vmatprep.subr.bf16.mxu0 0
      %2213 = vmatpush1.bf16.msra.mxu0 %v2190
      %2214 = vmatprep.subr.bf16.mxu0 0
      %2215 = vmatpush1.bf16.msra.mxu0 %v2191
      %2216 = vmatprep.subr.bf16.mxu0 0
      %2217 = vmatpush1.bf16.msra.mxu0 0
      %2218 = vmatprep.subr.bf16.mxu0 0
      %2219 = vmatpush1.bf16.msra.mxu0 0
      %2220 = vmatprep.subr.bf16.mxu0 0
      %2221 = vmatpush1.bf16.msra.mxu0 0
      %2222 = vmatprep.subr.bf16.mxu0 0
      %2223 = vmatpush1.bf16.msra.mxu0 0
      %2224 = vmatprep.subr.bf16.mxu0 0
      %2225 = vmatpush1.bf16.msra.mxu0 0
      %2226 = vmatprep.subr.bf16.mxu0 0
      %2227 = vmatpush1.bf16.msra.mxu0 0
      %2228 = vmatprep.subr.bf16.mxu0 0
      %2229 = vmatpush1.bf16.msra.mxu0 0
      %2230 = vmatprep.subr.bf16.mxu0 0
      %2231 = vmatpush1.bf16.msra.mxu0 0
      %2232 = vmatprep.mubr.bf16.mxu0 0
      %2233 = vmatmul.mubr.bf16.gmra.mrb[0].mxu0 %v2136
      %v2234 = vpop.f32.mrb[0].mxu0
      %v2235 = vadd.f32 0.0, %v2234
      %v2236 = vpop.f32.mrb[0].mxu0
      %v2237 = vpop.f32.mrb[0].mxu0
      %v2238 = vadd.f32 0.0, %v2237
      %v2239 = vpop.f32.mrb[0].mxu0
      %2240 = vmatprep.mubr.bf16.mxu0 0
      %2241 = vmatmul.mubr.bf16.gmra.mrb[0].mxu0 %v2137
      %v2242 = vpop.f32.mrb[0].mxu0
      %v2243 = vadd.f32 0.0, %v2242
      %v2244 = vpop.f32.mrb[0].mxu0
      %v2245 = vpop.f32.mrb[0].mxu0
      %v2246 = vadd.f32 0.0, %v2245
      %v2247 = vpop.f32.mrb[0].mxu0
      %2248 = vmatprep.mubr.bf16.mxu0 0
      %2249 = vmatmul.mubr.bf16.gmra.mrb[0].mxu0 %v2138
      %v2250 = vpop.f32.mrb[0].mxu0
      %v2251 = vadd.f32 0.0, %v2250
      %v2252 = vpop.f32.mrb[0].mxu0
      %v2253 = vpop.f32.mrb[0].mxu0
      %v2254 = vadd.f32 0.0, %v2253
      %v2255 = vpop.f32.mrb[0].mxu0
      %2256 = vmatprep.mubr.bf16.mxu0 0
      %2257 = vmatmul.mubr.bf16.gmra.mrb[0].mxu0 %v2139
      %v2258 = vpop.f32.mrb[0].mxu0
      %v2259 = vadd.f32 0.0, %v2258
      %v2260 = vpop.f32.mrb[0].mxu0
      %v2261 = vpop.f32.mrb[0].mxu0
      %v2262 = vadd.f32 0.0, %v2261
      %v2263 = vpop.f32.mrb[0].mxu0
      %2264 = vmatprep.mubr.bf16.mxu0 0
      %2265 = vmatmul.mubr.bf16.gmra.mrb[0].mxu0 %v2140
      %v2266 = vpop.f32.mrb[0].mxu0
      %v2267 = vadd.f32 0.0, %v2266
      %v2268 = vpop.f32.mrb[0].mxu0
      %v2269 = vpop.f32.mrb[0].mxu0
      %v2270 = vadd.f32 0.0, %v2269
      %v2271 = vpop.f32.mrb[0].mxu0
      %2272 = vmatprep.mubr.bf16.mxu0 0
      %2273 = vmatmul.mubr.bf16.gmra.mrb[0].mxu0 %v2141
      %v2274 = vpop.f32.mrb[0].mxu0
      %v2275 = vadd.f32 0.0, %v2274
      %v2276 = vpop.f32.mrb[0].mxu0
      %v2277 = vpop.f32.mrb[0].mxu0
      %v2278 = vadd.f32 0.0, %v2277
      %v2279 = vpop.f32.mrb[0].mxu0
      %2280 = vmatprep.mubr.bf16.mxu0 0
      %2281 = vmatmul.mubr.bf16.gmra.mrb[0].mxu0 %v2142
      %v2282 = vpop.f32.mrb[0].mxu0
      %v2283 = vadd.f32 0.0, %v2282
      %v2284 = vpop.f32.mrb[0].mxu0
      %v2285 = vpop.f32.mrb[0].mxu0
      %v2286 = vadd.f32 0.0, %v2285
      %v2287 = vpop.f32.mrb[0].mxu0
      %2288 = vmatprep.mubr.bf16.mxu0 0
      %2289 = vmatmul.mubr.bf16.gmra.mrb[0].mxu0 %v2143
      %v2290 = vpop.f32.mrb[0].mxu0
      %v2291 = vadd.f32 0.0, %v2290
      %v2292 = vpop.f32.mrb[0].mxu0
      %v2293 = vpop.f32.mrb[0].mxu0
      %v2294 = vadd.f32 0.0, %v2293
      %v2295 = vpop.f32.mrb[0].mxu0
      %2296 = vdwg.mxu0
      %v2297 = vadd.f32 %v1958, %v2235
      %v2298 = vadd.f32 %v1961, %v2238
      %v2299 = vadd.f32 %v1966, %v2243
      %v2300 = vadd.f32 %v1969, %v2246
      %v2301 = vadd.f32 %v1974, %v2251
      %v2302 = vadd.f32 %v1977, %v2254
      %v2303 = vadd.f32 %v1982, %v2259
      %v2304 = vadd.f32 %v1985, %v2262
      %v2305 = vadd.f32 %v1990, %v2267
      %v2306 = vadd.f32 %v1993, %v2270
      %v2307 = vadd.f32 %v1998, %v2275
      %v2308 = vadd.f32 %v2001, %v2278
      %v2309 = vadd.f32 %v2006, %v2283
      %v2310 = vadd.f32 %v2009, %v2286
      %v2311 = vadd.f32 %v2014, %v2291
      %v2312 = vadd.f32 %v2017, %v2294
      %v2313 = vld [vmem:[%s1341] sm:$0xf]
      %v2314 = vld [vmem:[%s1341 + $0x4] sm:$0xf]
      %v2315 = vld [vmem:[%s1341 + $0xc] sm:$0xf]
      %v2316 = vld [vmem:[%s1341 + $0x10] sm:$0xf]
      %v2317 = vld [vmem:[%s1341 + $0x18] sm:$0xf]
      %v2318 = vld [vmem:[%s1341 + $0x1c] sm:$0xf]
      %v2319 = vld [vmem:[%s1341 + $0x24] sm:$0xf]
      %v2320 = vld [vmem:[%s1341 + $0x28] sm:$0xf]
      %v2321 = vld [vmem:[%s1341 + $0x30] sm:$0xf]
      %v2322 = vld [vmem:[%s1341 + $0x34] sm:$0xf]
      %v2323 = vld [vmem:[%s1341 + $0x3c] sm:$0xf]
      %v2324 = vld [vmem:[%s1341 + $0x40] sm:$0xf]
      %v2325 = vld [vmem:[%s1341 + $0x48] sm:$0xf]
      %v2326 = vld [vmem:[%s1341 + $0x4c] sm:$0xf]
      %v2327 = vld [vmem:[%s1341 + $0x54] sm:$0xf]
      %v2328 = vld [vmem:[%s1341 + $0x58] sm:$0xf]
      %s2329 = scalar_lea.vmem %s6, 192
      %v2330 = vld [vmem:[%s2329] sm:$0xf]
      %v2331 = vld [vmem:[%s2329 + $0x4] sm:$0xf]
      %v2332 = vld [vmem:[%s2329 + $0x8] sm:$0xf]
      %v2333 = vld [vmem:[%s2329 + $0xc] sm:$0xf]
      %v2334 = vld [vmem:[%s2329 + $0x10] sm:$0xf]
      %v2335 = vld [vmem:[%s2329 + $0x14] sm:$0xf]
      %v2336 = vld [vmem:[%s2329 + $0x18] sm:$0xf]
      %v2337 = vld [vmem:[%s2329 + $0x1c] sm:$0xf]
      %v2338 = vld [vmem:[%s2329 + $0x20] sm:$0xf]
      %v2339 = vld [vmem:[%s2329 + $0x24] sm:$0xf]
      %v2340 = vld [vmem:[%s2329 + $0x28] sm:$0xf]
      %v2341 = vld [vmem:[%s2329 + $0x2c] sm:$0xf]
      %v2342 = vld [vmem:[%s2329 + $0x30] sm:$0xf]
      %v2343 = vld [vmem:[%s2329 + $0x34] sm:$0xf]
      %v2344 = vld [vmem:[%s2329 + $0x38] sm:$0xf]
      %v2345 = vld [vmem:[%s2329 + $0x3c] sm:$0xf]
      %v2362 = vunpack.c.l.b16 %v2313
      %v2363 = vunpack.c.l.b16 %v2314
      %v2364 = vunpack.c.l.b16 %v2315
      %v2365 = vunpack.c.l.b16 %v2316
      %v2366 = vunpack.c.l.b16 %v2317
      %v2367 = vunpack.c.l.b16 %v2318
      %v2368 = vunpack.c.l.b16 %v2319
      %v2369 = vunpack.c.l.b16 %v2320
      %v2370 = vunpack.c.l.b16 %v2321
      %v2371 = vunpack.c.l.b16 %v2322
      %v2372 = vunpack.c.l.b16 %v2323
      %v2373 = vunpack.c.l.b16 %v2324
      %v2374 = vunpack.c.l.b16 %v2325
      %v2375 = vunpack.c.l.b16 %v2326
      %v2376 = vunpack.c.l.b16 %v2327
      %v2377 = vunpack.c.l.b16 %v2328
      %v2378 = vpack.c.b16 %v2363, %v2362
      %v2379 = vpack.c.b16 %v2365, %v2364
      %v2380 = vpack.c.b16 %v2367, %v2366
      %v2381 = vpack.c.b16 %v2369, %v2368
      %v2382 = vpack.c.b16 %v2371, %v2370
      %v2383 = vpack.c.b16 %v2373, %v2372
      %v2384 = vpack.c.b16 %v2375, %v2374
      %v2385 = vpack.c.b16 %v2377, %v2376
      %v2410 = vunpack.c.l.b16 %v2330
      %v2411 = vunpack.c.l.b16 %v2331
      %v2412 = vunpack.c.l.b16 %v2332
      %v2413 = vunpack.c.l.b16 %v2333
      %v2414 = vunpack.c.l.b16 %v2334
      %v2415 = vunpack.c.l.b16 %v2335
      %v2416 = vunpack.c.l.b16 %v2336
      %v2417 = vunpack.c.l.b16 %v2337
      %v2418 = vunpack.c.l.b16 %v2338
      %v2419 = vunpack.c.l.b16 %v2339
      %v2420 = vunpack.c.l.b16 %v2340
      %v2421 = vunpack.c.l.b16 %v2341
      %v2422 = vunpack.c.l.b16 %v2342
      %v2423 = vunpack.c.l.b16 %v2343
      %v2424 = vunpack.c.l.b16 %v2344
      %v2425 = vunpack.c.l.b16 %v2345
      %v2426 = vpack.c.b16 %v2411, %v2410
      %v2427 = vpack.c.b16 %v2413, %v2412
      %v2428 = vpack.c.b16 %v2415, %v2414
      %v2429 = vpack.c.b16 %v2417, %v2416
      %v2430 = vpack.c.b16 %v2419, %v2418
      %v2431 = vpack.c.b16 %v2421, %v2420
      %v2432 = vpack.c.b16 %v2423, %v2422
      %v2433 = vpack.c.b16 %v2425, %v2424
      %2442 = vmatprep.subr.bf16.mxu0 0
      %2443 = vmatpush1.bf16.msra.mxu0 %v2426
      %2444 = vmatprep.subr.bf16.mxu0 0
      %2445 = vmatpush1.bf16.msra.mxu0 %v2427
      %2446 = vmatprep.subr.bf16.mxu0 0
      %2447 = vmatpush1.bf16.msra.mxu0 %v2428
      %2448 = vmatprep.subr.bf16.mxu0 0
      %2449 = vmatpush1.bf16.msra.mxu0 %v2429
      %2450 = vmatprep.subr.bf16.mxu0 0
      %2451 = vmatpush1.bf16.msra.mxu0 %v2430
      %2452 = vmatprep.subr.bf16.mxu0 0
      %2453 = vmatpush1.bf16.msra.mxu0 %v2431
      %2454 = vmatprep.subr.bf16.mxu0 0
      %2455 = vmatpush1.bf16.msra.mxu0 %v2432
      %2456 = vmatprep.subr.bf16.mxu0 0
      %2457 = vmatpush1.bf16.msra.mxu0 %v2433
      %2458 = vmatprep.subr.bf16.mxu0 0
      %2459 = vmatpush1.bf16.msra.mxu0 0
      %2460 = vmatprep.subr.bf16.mxu0 0
      %2461 = vmatpush1.bf16.msra.mxu0 0
      %2462 = vmatprep.subr.bf16.mxu0 0
      %2463 = vmatpush1.bf16.msra.mxu0 0
      %2464 = vmatprep.subr.bf16.mxu0 0
      %2465 = vmatpush1.bf16.msra.mxu0 0
      %2466 = vmatprep.subr.bf16.mxu0 0
      %2467 = vmatpush1.bf16.msra.mxu0 0
      %2468 = vmatprep.subr.bf16.mxu0 0
      %2469 = vmatpush1.bf16.msra.mxu0 0
      %2470 = vmatprep.subr.bf16.mxu0 0
      %2471 = vmatpush1.bf16.msra.mxu0 0
      %2472 = vmatprep.subr.bf16.mxu0 0
      %2473 = vmatpush1.bf16.msra.mxu0 0
      %2474 = vmatprep.mubr.bf16.mxu0 0
      %2475 = vmatmul.mubr.bf16.gmra.mrb[0].mxu0 %v2378
      %v2476 = vpop.f32.mrb[0].mxu0
      %v2477 = vadd.f32 0.0, %v2476
      %v2478 = vpop.f32.mrb[0].mxu0
      %v2479 = vpop.f32.mrb[0].mxu0
      %v2480 = vadd.f32 0.0, %v2479
      %v2481 = vpop.f32.mrb[0].mxu0
      %2482 = vmatprep.mubr.bf16.mxu0 0
      %2483 = vmatmul.mubr.bf16.gmra.mrb[0].mxu0 %v2379
      %v2484 = vpop.f32.mrb[0].mxu0
      %v2485 = vadd.f32 0.0, %v2484
      %v2486 = vpop.f32.mrb[0].mxu0
      %v2487 = vpop.f32.mrb[0].mxu0
      %v2488 = vadd.f32 0.0, %v2487
      %v2489 = vpop.f32.mrb[0].mxu0
      %2490 = vmatprep.mubr.bf16.mxu0 0
      %2491 = vmatmul.mubr.bf16.gmra.mrb[0].mxu0 %v2380
      %v2492 = vpop.f32.mrb[0].mxu0
      %v2493 = vadd.f32 0.0, %v2492
      %v2494 = vpop.f32.mrb[0].mxu0
      %v2495 = vpop.f32.mrb[0].mxu0
      %v2496 = vadd.f32 0.0, %v2495
      %v2497 = vpop.f32.mrb[0].mxu0
      %2498 = vmatprep.mubr.bf16.mxu0 0
      %2499 = vmatmul.mubr.bf16.gmra.mrb[0].mxu0 %v2381
      %v2500 = vpop.f32.mrb[0].mxu0
      %v2501 = vadd.f32 0.0, %v2500
      %v2502 = vpop.f32.mrb[0].mxu0
      %v2503 = vpop.f32.mrb[0].mxu0
      %v2504 = vadd.f32 0.0, %v2503
      %v2505 = vpop.f32.mrb[0].mxu0
      %2506 = vmatprep.mubr.bf16.mxu0 0
      %2507 = vmatmul.mubr.bf16.gmra.mrb[0].mxu0 %v2382
      %v2508 = vpop.f32.mrb[0].mxu0
      %v2509 = vadd.f32 0.0, %v2508
      %v2510 = vpop.f32.mrb[0].mxu0
      %v2511 = vpop.f32.mrb[0].mxu0
      %v2512 = vadd.f32 0.0, %v2511
      %v2513 = vpop.f32.mrb[0].mxu0
      %2514 = vmatprep.mubr.bf16.mxu0 0
      %2515 = vmatmul.mubr.bf16.gmra.mrb[0].mxu0 %v2383
      %v2516 = vpop.f32.mrb[0].mxu0
      %v2517 = vadd.f32 0.0, %v2516
      %v2518 = vpop.f32.mrb[0].mxu0
      %v2519 = vpop.f32.mrb[0].mxu0
      %v2520 = vadd.f32 0.0, %v2519
      %v2521 = vpop.f32.mrb[0].mxu0
      %2522 = vmatprep.mubr.bf16.mxu0 0
      %2523 = vmatmul.mubr.bf16.gmra.mrb[0].mxu0 %v2384
      %v2524 = vpop.f32.mrb[0].mxu0
      %v2525 = vadd.f32 0.0, %v2524
      %v2526 = vpop.f32.mrb[0].mxu0
      %v2527 = vpop.f32.mrb[0].mxu0
      %v2528 = vadd.f32 0.0, %v2527
      %v2529 = vpop.f32.mrb[0].mxu0
      %2530 = vmatprep.mubr.bf16.mxu0 0
      %2531 = vmatmul.mubr.bf16.gmra.mrb[0].mxu0 %v2385
      %v2532 = vpop.f32.mrb[0].mxu0
      %v2533 = vadd.f32 0.0, %v2532
      %v2534 = vpop.f32.mrb[0].mxu0
      %v2535 = vpop.f32.mrb[0].mxu0
      %v2536 = vadd.f32 0.0, %v2535
      %v2537 = vpop.f32.mrb[0].mxu0
      %2538 = vdwg.mxu0
      %v2539 = vadd.f32 %v2297, %v2477
      %v2540 = vadd.f32 %v2298, %v2480
      %v2541 = vadd.f32 %v2299, %v2485
      %v2542 = vadd.f32 %v2300, %v2488
      %v2543 = vadd.f32 %v2301, %v2493
      %v2544 = vadd.f32 %v2302, %v2496
      %v2545 = vadd.f32 %v2303, %v2501
      %v2546 = vadd.f32 %v2304, %v2504
      %v2547 = vadd.f32 %v2305, %v2509
      %v2548 = vadd.f32 %v2306, %v2512
      %v2549 = vadd.f32 %v2307, %v2517
      %v2550 = vadd.f32 %v2308, %v2520
      %v2551 = vadd.f32 %v2309, %v2525
      %v2552 = vadd.f32 %v2310, %v2528
      %v2553 = vadd.f32 %v2311, %v2533
      %v2554 = vadd.f32 %v2312, %v2536
      %v2555 = vld [vmem:[%s1341] sm:$0xf]
      %v2556 = vld [vmem:[%s1341 + $0x4] sm:$0xf]
      %v2557 = vld [vmem:[%s1341 + $0x8] sm:$0x1]
      %v2558 = vld [vmem:[%s1341 + $0xc] sm:$0xf]
      %v2559 = vld [vmem:[%s1341 + $0x10] sm:$0xf]
      %v2560 = vld [vmem:[%s1341 + $0x14] sm:$0x1]
      %v2561 = vld [vmem:[%s1341 + $0x18] sm:$0xf]
      %v2562 = vld [vmem:[%s1341 + $0x1c] sm:$0xf]
      %v2563 = vld [vmem:[%s1341 + $0x20] sm:$0x1]
      %v2564 = vld [vmem:[%s1341 + $0x24] sm:$0xf]
      %v2565 = vld [vmem:[%s1341 + $0x28] sm:$0xf]
      %v2566 = vld [vmem:[%s1341 + $0x2c] sm:$0x1]
      %v2567 = vld [vmem:[%s1341 + $0x30] sm:$0xf]
      %v2568 = vld [vmem:[%s1341 + $0x34] sm:$0xf]
      %v2569 = vld [vmem:[%s1341 + $0x38] sm:$0x1]
      %v2570 = vld [vmem:[%s1341 + $0x3c] sm:$0xf]
      %v2571 = vld [vmem:[%s1341 + $0x40] sm:$0xf]
      %v2572 = vld [vmem:[%s1341 + $0x44] sm:$0x1]
      %v2573 = vld [vmem:[%s1341 + $0x48] sm:$0xf]
      %v2574 = vld [vmem:[%s1341 + $0x4c] sm:$0xf]
      %v2575 = vld [vmem:[%s1341 + $0x50] sm:$0x1]
      %v2576 = vld [vmem:[%s1341 + $0x54] sm:$0xf]
      %v2577 = vld [vmem:[%s1341 + $0x58] sm:$0xf]
      %v2578 = vld [vmem:[%s1341 + $0x5c] sm:$0x1]
      %v2580 = vshrl.u32 %v2555, 16
      %v2582 = vrot.slane %v2580, 4
      %v2583 = vshll.u32 %v2555, 16
      %v2585 = vrot.slane %v2583, 5
      %v2586 = vor.u32 %v2582, %v2585
      %v2587 = vrot.slane %v2586, 4
      %v2589 = vshll.u32 %v2556, 16
      %v2591 = vrot.slane %v2589, 5
      %v2592 = vsel %vm1440, %v2587, %v2591
      %v2593 = vshrl.u32 %v2556, 16
      %v2595 = vrot.slane %v2593, 4
      %v2596 = vor.u32 %v2595, %v2591
      %v2597 = vrot.slane %v2596, 4
      %v2599 = vshll.u32 %v2557, 16
      %v2601 = vrot.slane %v2599, 5
      %v2602 = vsel %vm1440, %v2597, %v2601
      %v2604 = vshrl.u32 %v2558, 16
      %v2606 = vrot.slane %v2604, 4
      %v2607 = vshll.u32 %v2558, 16
      %v2609 = vrot.slane %v2607, 5
      %v2610 = vor.u32 %v2606, %v2609
      %v2611 = vrot.slane %v2610, 4
      %v2613 = vshll.u32 %v2559, 16
      %v2615 = vrot.slane %v2613, 5
      %v2616 = vsel %vm1440, %v2611, %v2615
      %v2617 = vshrl.u32 %v2559, 16
      %v2619 = vrot.slane %v2617, 4
      %v2620 = vor.u32 %v2619, %v2615
      %v2621 = vrot.slane %v2620, 4
      %v2623 = vshll.u32 %v2560, 16
      %v2625 = vrot.slane %v2623, 5
      %v2626 = vsel %vm1440, %v2621, %v2625
      %v2628 = vshrl.u32 %v2561, 16
      %v2630 = vrot.slane %v2628, 4
      %v2631 = vshll.u32 %v2561, 16
      %v2633 = vrot.slane %v2631, 5
      %v2634 = vor.u32 %v2630, %v2633
      %v2635 = vrot.slane %v2634, 4
      %v2637 = vshll.u32 %v2562, 16
      %v2639 = vrot.slane %v2637, 5
      %v2640 = vsel %vm1440, %v2635, %v2639
      %v2641 = vshrl.u32 %v2562, 16
      %v2643 = vrot.slane %v2641, 4
      %v2644 = vor.u32 %v2643, %v2639
      %v2645 = vrot.slane %v2644, 4
      %v2647 = vshll.u32 %v2563, 16
      %v2649 = vrot.slane %v2647, 5
      %v2650 = vsel %vm1440, %v2645, %v2649
      %v2652 = vshrl.u32 %v2564, 16
      %v2654 = vrot.slane %v2652, 4
      %v2655 = vshll.u32 %v2564, 16
      %v2657 = vrot.slane %v2655, 5
      %v2658 = vor.u32 %v2654, %v2657
      %v2659 = vrot.slane %v2658, 4
      %v2661 = vshll.u32 %v2565, 16
      %v2663 = vrot.slane %v2661, 5
      %v2664 = vsel %vm1440, %v2659, %v2663
      %v2665 = vshrl.u32 %v2565, 16
      %v2667 = vrot.slane %v2665, 4
      %v2668 = vor.u32 %v2667, %v2663
      %v2669 = vrot.slane %v2668, 4
      %v2671 = vshll.u32 %v2566, 16
      %v2673 = vrot.slane %v2671, 5
      %v2674 = vsel %vm1440, %v2669, %v2673
      %v2676 = vshrl.u32 %v2567, 16
      %v2678 = vrot.slane %v2676, 4
      %v2679 = vshll.u32 %v2567, 16
      %v2681 = vrot.slane %v2679, 5
      %v2682 = vor.u32 %v2678, %v2681
      %v2683 = vrot.slane %v2682, 4
      %v2685 = vshll.u32 %v2568, 16
      %v2687 = vrot.slane %v2685, 5
      %v2688 = vsel %vm1440, %v2683, %v2687
      %v2689 = vshrl.u32 %v2568, 16
      %v2691 = vrot.slane %v2689, 4
      %v2692 = vor.u32 %v2691, %v2687
      %v2693 = vrot.slane %v2692, 4
      %v2695 = vshll.u32 %v2569, 16
      %v2697 = vrot.slane %v2695, 5
      %v2698 = vsel %vm1440, %v2693, %v2697
      %v2700 = vshrl.u32 %v2570, 16
      %v2702 = vrot.slane %v2700, 4
      %v2703 = vshll.u32 %v2570, 16
      %v2705 = vrot.slane %v2703, 5
      %v2706 = vor.u32 %v2702, %v2705
      %v2707 = vrot.slane %v2706, 4
      %v2709 = vshll.u32 %v2571, 16
      %v2711 = vrot.slane %v2709, 5
      %v2712 = vsel %vm1440, %v2707, %v2711
      %v2713 = vshrl.u32 %v2571, 16
      %v2715 = vrot.slane %v2713, 4
      %v2716 = vor.u32 %v2715, %v2711
      %v2717 = vrot.slane %v2716, 4
      %v2719 = vshll.u32 %v2572, 16
      %v2721 = vrot.slane %v2719, 5
      %v2722 = vsel %vm1440, %v2717, %v2721
      %v2724 = vshrl.u32 %v2573, 16
      %v2726 = vrot.slane %v2724, 4
      %v2727 = vshll.u32 %v2573, 16
      %v2729 = vrot.slane %v2727, 5
      %v2730 = vor.u32 %v2726, %v2729
      %v2731 = vrot.slane %v2730, 4
      %v2733 = vshll.u32 %v2574, 16
      %v2735 = vrot.slane %v2733, 5
      %v2736 = vsel %vm1440, %v2731, %v2735
      %v2737 = vshrl.u32 %v2574, 16
      %v2739 = vrot.slane %v2737, 4
      %v2740 = vor.u32 %v2739, %v2735
      %v2741 = vrot.slane %v2740, 4
      %v2743 = vshll.u32 %v2575, 16
      %v2745 = vrot.slane %v2743, 5
      %v2746 = vsel %vm1440, %v2741, %v2745
      %v2748 = vshrl.u32 %v2576, 16
      %v2750 = vrot.slane %v2748, 4
      %v2751 = vshll.u32 %v2576, 16
      %v2753 = vrot.slane %v2751, 5
      %v2754 = vor.u32 %v2750, %v2753
      %v2755 = vrot.slane %v2754, 4
      %v2757 = vshll.u32 %v2577, 16
      %v2759 = vrot.slane %v2757, 5
      %v2760 = vsel %vm1440, %v2755, %v2759
      %v2761 = vshrl.u32 %v2577, 16
      %v2763 = vrot.slane %v2761, 4
      %v2764 = vor.u32 %v2763, %v2759
      %v2765 = vrot.slane %v2764, 4
      %v2767 = vshll.u32 %v2578, 16
      %v2769 = vrot.slane %v2767, 5
      %v2770 = vsel %vm1440, %v2765, %v2769
      %s2771 = scalar_lea.vmem %s6, 256
      %v2772 = vld [vmem:[%s2771] sm:$0xf]
      %v2773 = vld [vmem:[%s2771 + $0x4] sm:$0xf]
      %v2774 = vld [vmem:[%s2771 + $0x8] sm:$0xf]
      %v2775 = vld [vmem:[%s2771 + $0xc] sm:$0xf]
      %v2776 = vld [vmem:[%s2771 + $0x10] sm:$0xf]
      %v2777 = vld [vmem:[%s2771 + $0x14] sm:$0xf]
      %v2778 = vld [vmem:[%s2771 + $0x18] sm:$0xf]
      %v2779 = vld [vmem:[%s2771 + $0x1c] sm:$0xf]
      %v2780 = vld [vmem:[%s2771 + $0x20] sm:$0xf]
      %v2781 = vld [vmem:[%s2771 + $0x24] sm:$0xf]
      %v2782 = vld [vmem:[%s2771 + $0x28] sm:$0xf]
      %v2783 = vld [vmem:[%s2771 + $0x2c] sm:$0xf]
      %v2784 = vld [vmem:[%s2771 + $0x30] sm:$0xf]
      %v2785 = vld [vmem:[%s2771 + $0x34] sm:$0xf]
      %v2786 = vld [vmem:[%s2771 + $0x38] sm:$0xf]
      %v2787 = vld [vmem:[%s2771 + $0x3c] sm:$0xf]
      %v2788 = vunpack.c.l.b16 %v2592
      %v2789 = vunpack.c.l.b16 %v2602
      %v2790 = vunpack.c.l.b16 %v2616
      %v2791 = vunpack.c.l.b16 %v2626
      %v2792 = vunpack.c.l.b16 %v2640
      %v2793 = vunpack.c.l.b16 %v2650
      %v2794 = vunpack.c.l.b16 %v2664
      %v2795 = vunpack.c.l.b16 %v2674
      %v2796 = vunpack.c.l.b16 %v2688
      %v2797 = vunpack.c.l.b16 %v2698
      %v2798 = vunpack.c.l.b16 %v2712
      %v2799 = vunpack.c.l.b16 %v2722
      %v2800 = vunpack.c.l.b16 %v2736
      %v2801 = vunpack.c.l.b16 %v2746
      %v2802 = vunpack.c.l.b16 %v2760
      %v2803 = vunpack.c.l.b16 %v2770
      %v2804 = vpack.c.b16 %v2789, %v2788
      %v2805 = vpack.c.b16 %v2791, %v2790
      %v2806 = vpack.c.b16 %v2793, %v2792
      %v2807 = vpack.c.b16 %v2795, %v2794
      %v2808 = vpack.c.b16 %v2797, %v2796
      %v2809 = vpack.c.b16 %v2799, %v2798
      %v2810 = vpack.c.b16 %v2801, %v2800
      %v2811 = vpack.c.b16 %v2803, %v2802
      %v2836 = vunpack.c.l.b16 %v2772
      %v2837 = vunpack.c.l.b16 %v2773
      %v2838 = vunpack.c.l.b16 %v2774
      %v2839 = vunpack.c.l.b16 %v2775
      %v2840 = vunpack.c.l.b16 %v2776
      %v2841 = vunpack.c.l.b16 %v2777
      %v2842 = vunpack.c.l.b16 %v2778
      %v2843 = vunpack.c.l.b16 %v2779
      %v2844 = vunpack.c.l.b16 %v2780
      %v2845 = vunpack.c.l.b16 %v2781
      %v2846 = vunpack.c.l.b16 %v2782
      %v2847 = vunpack.c.l.b16 %v2783
      %v2848 = vunpack.c.l.b16 %v2784
      %v2849 = vunpack.c.l.b16 %v2785
      %v2850 = vunpack.c.l.b16 %v2786
      %v2851 = vunpack.c.l.b16 %v2787
      %v2852 = vpack.c.b16 %v2837, %v2836
      %v2853 = vpack.c.b16 %v2839, %v2838
      %v2854 = vpack.c.b16 %v2841, %v2840
      %v2855 = vpack.c.b16 %v2843, %v2842
      %v2856 = vpack.c.b16 %v2845, %v2844
      %v2857 = vpack.c.b16 %v2847, %v2846
      %v2858 = vpack.c.b16 %v2849, %v2848
      %v2859 = vpack.c.b16 %v2851, %v2850
      %2868 = vmatprep.subr.bf16.mxu0 0
      %2869 = vmatpush1.bf16.msra.mxu0 %v2852
      %2870 = vmatprep.subr.bf16.mxu0 0
      %2871 = vmatpush1.bf16.msra.mxu0 %v2853
      %2872 = vmatprep.subr.bf16.mxu0 0
      %2873 = vmatpush1.bf16.msra.mxu0 %v2854
      %2874 = vmatprep.subr.bf16.mxu0 0
      %2875 = vmatpush1.bf16.msra.mxu0 %v2855
      %2876 = vmatprep.subr.bf16.mxu0 0
      %2877 = vmatpush1.bf16.msra.mxu0 %v2856
      %2878 = vmatprep.subr.bf16.mxu0 0
      %2879 = vmatpush1.bf16.msra.mxu0 %v2857
      %2880 = vmatprep.subr.bf16.mxu0 0
      %2881 = vmatpush1.bf16.msra.mxu0 %v2858
      %2882 = vmatprep.subr.bf16.mxu0 0
      %2883 = vmatpush1.bf16.msra.mxu0 %v2859
      %2884 = vmatprep.subr.bf16.mxu0 0
      %2885 = vmatpush1.bf16.msra.mxu0 0
      %2886 = vmatprep.subr.bf16.mxu0 0
      %2887 = vmatpush1.bf16.msra.mxu0 0
      %2888 = vmatprep.subr.bf16.mxu0 0
      %2889 = vmatpush1.bf16.msra.mxu0 0
      %2890 = vmatprep.subr.bf16.mxu0 0
      %2891 = vmatpush1.bf16.msra.mxu0 0
      %2892 = vmatprep.subr.bf16.mxu0 0
      %2893 = vmatpush1.bf16.msra.mxu0 0
      %2894 = vmatprep.subr.bf16.mxu0 0
      %2895 = vmatpush1.bf16.msra.mxu0 0
      %2896 = vmatprep.subr.bf16.mxu0 0
      %2897 = vmatpush1.bf16.msra.mxu0 0
      %2898 = vmatprep.subr.bf16.mxu0 0
      %2899 = vmatpush1.bf16.msra.mxu0 0
      %2900 = vmatprep.mubr.bf16.mxu0 0
      %2901 = vmatmul.mubr.bf16.gmra.mrb[0].mxu0 %v2804
      %v2902 = vpop.f32.mrb[0].mxu0
      %v2903 = vadd.f32 0.0, %v2902
      %v2904 = vpop.f32.mrb[0].mxu0
      %v2905 = vpop.f32.mrb[0].mxu0
      %v2906 = vadd.f32 0.0, %v2905
      %v2907 = vpop.f32.mrb[0].mxu0
      %2908 = vmatprep.mubr.bf16.mxu0 0
      %2909 = vmatmul.mubr.bf16.gmra.mrb[0].mxu0 %v2805
      %v2910 = vpop.f32.mrb[0].mxu0
      %v2911 = vadd.f32 0.0, %v2910
      %v2912 = vpop.f32.mrb[0].mxu0
      %v2913 = vpop.f32.mrb[0].mxu0
      %v2914 = vadd.f32 0.0, %v2913
      %v2915 = vpop.f32.mrb[0].mxu0
      %2916 = vmatprep.mubr.bf16.mxu0 0
      %2917 = vmatmul.mubr.bf16.gmra.mrb[0].mxu0 %v2806
      %v2918 = vpop.f32.mrb[0].mxu0
      %v2919 = vadd.f32 0.0, %v2918
      %v2920 = vpop.f32.mrb[0].mxu0
      %v2921 = vpop.f32.mrb[0].mxu0
      %v2922 = vadd.f32 0.0, %v2921
      %v2923 = vpop.f32.mrb[0].mxu0
      %2924 = vmatprep.mubr.bf16.mxu0 0
      %2925 = vmatmul.mubr.bf16.gmra.mrb[0].mxu0 %v2807
      %v2926 = vpop.f32.mrb[0].mxu0
      %v2927 = vadd.f32 0.0, %v2926
      %v2928 = vpop.f32.mrb[0].mxu0
      %v2929 = vpop.f32.mrb[0].mxu0
      %v2930 = vadd.f32 0.0, %v2929
      %v2931 = vpop.f32.mrb[0].mxu0
      %2932 = vmatprep.mubr.bf16.mxu0 0
      %2933 = vmatmul.mubr.bf16.gmra.mrb[0].mxu0 %v2808
      %v2934 = vpop.f32.mrb[0].mxu0
      %v2935 = vadd.f32 0.0, %v2934
      %v2936 = vpop.f32.mrb[0].mxu0
      %v2937 = vpop.f32.mrb[0].mxu0
      %v2938 = vadd.f32 0.0, %v2937
      %v2939 = vpop.f32.mrb[0].mxu0
      %2940 = vmatprep.mubr.bf16.mxu0 0
      %2941 = vmatmul.mubr.bf16.gmra.mrb[0].mxu0 %v2809
      %v2942 = vpop.f32.mrb[0].mxu0
      %v2943 = vadd.f32 0.0, %v2942
      %v2944 = vpop.f32.mrb[0].mxu0
      %v2945 = vpop.f32.mrb[0].mxu0
      %v2946 = vadd.f32 0.0, %v2945
      %v2947 = vpop.f32.mrb[0].mxu0
      %2948 = vmatprep.mubr.bf16.mxu0 0
      %2949 = vmatmul.mubr.bf16.gmra.mrb[0].mxu0 %v2810
      %v2950 = vpop.f32.mrb[0].mxu0
      %v2951 = vadd.f32 0.0, %v2950
      %v2952 = vpop.f32.mrb[0].mxu0
      %v2953 = vpop.f32.mrb[0].mxu0
      %v2954 = vadd.f32 0.0, %v2953
      %v2955 = vpop.f32.mrb[0].mxu0
      %2956 = vmatprep.mubr.bf16.mxu0 0
      %2957 = vmatmul.mubr.bf16.gmra.mrb[0].mxu0 %v2811
      %v2958 = vpop.f32.mrb[0].mxu0
      %v2959 = vadd.f32 0.0, %v2958
      %v2960 = vpop.f32.mrb[0].mxu0
      %v2961 = vpop.f32.mrb[0].mxu0
      %v2962 = vadd.f32 0.0, %v2961
      %v2963 = vpop.f32.mrb[0].mxu0
      %2964 = vdwg.mxu0
      %v2965 = vadd.f32 %v2539, %v2903
      %v2966 = vadd.f32 %v2540, %v2906
      %v2967 = vadd.f32 %v2541, %v2911
      %v2968 = vadd.f32 %v2542, %v2914
      %v2969 = vadd.f32 %v2543, %v2919
      %v2970 = vadd.f32 %v2544, %v2922
      %v2971 = vadd.f32 %v2545, %v2927
      %v2972 = vadd.f32 %v2546, %v2930
      %v2973 = vadd.f32 %v2547, %v2935
      %v2974 = vadd.f32 %v2548, %v2938
      %v2975 = vadd.f32 %v2549, %v2943
      %v2976 = vadd.f32 %v2550, %v2946
      %v2977 = vadd.f32 %v2551, %v2951
      %v2978 = vadd.f32 %v2552, %v2954
      %v2979 = vadd.f32 %v2553, %v2959
      %v2980 = vadd.f32 %v2554, %v2962
      %v2981 = vld [vmem:[%s1341] sm:$0xe]
      %v2982 = vld [vmem:[%s1341 + $0xc] sm:$0xe]
      %v2983 = vld [vmem:[%s1341 + $0x18] sm:$0xe]
      %v2984 = vld [vmem:[%s1341 + $0x24] sm:$0xe]
      %v2985 = vld [vmem:[%s1341 + $0x30] sm:$0xe]
      %v2986 = vld [vmem:[%s1341 + $0x3c] sm:$0xe]
      %v2987 = vld [vmem:[%s1341 + $0x48] sm:$0xe]
      %v2988 = vld [vmem:[%s1341 + $0x54] sm:$0xe]
      %v3013 = vrot.slane %v2981, 5
      %v3014 = vrot.slane %v3013, 4
      %v3015 = vrot.slane %v2556, 5
      %v3016 = vsel %vm2046, %v3014, %v3015
      %v3017 = vrot.slane %v3015, 4
      %v3018 = vrot.slane %v2557, 5
      %v3019 = vsel %vm2046, %v3017, %v3018
      %v3020 = vrot.slane %v2982, 5
      %v3021 = vrot.slane %v3020, 4
      %v3022 = vrot.slane %v2559, 5
      %v3023 = vsel %vm2046, %v3021, %v3022
      %v3024 = vrot.slane %v3022, 4
      %v3025 = vrot.slane %v2560, 5
      %v3026 = vsel %vm2046, %v3024, %v3025
      %v3027 = vrot.slane %v2983, 5
      %v3028 = vrot.slane %v3027, 4
      %v3029 = vrot.slane %v2562, 5
      %v3030 = vsel %vm2046, %v3028, %v3029
      %v3031 = vrot.slane %v3029, 4
      %v3032 = vrot.slane %v2563, 5
      %v3033 = vsel %vm2046, %v3031, %v3032
      %v3034 = vrot.slane %v2984, 5
      %v3035 = vrot.slane %v3034, 4
      %v3036 = vrot.slane %v2565, 5
      %v3037 = vsel %vm2046, %v3035, %v3036
      %v3038 = vrot.slane %v3036, 4
      %v3039 = vrot.slane %v2566, 5
      %v3040 = vsel %vm2046, %v3038, %v3039
      %v3041 = vrot.slane %v2985, 5
      %v3042 = vrot.slane %v3041, 4
      %v3043 = vrot.slane %v2568, 5
      %v3044 = vsel %vm2046, %v3042, %v3043
      %v3045 = vrot.slane %v3043, 4
      %v3046 = vrot.slane %v2569, 5
      %v3047 = vsel %vm2046, %v3045, %v3046
      %v3048 = vrot.slane %v2986, 5
      %v3049 = vrot.slane %v3048, 4
      %v3050 = vrot.slane %v2571, 5
      %v3051 = vsel %vm2046, %v3049, %v3050
      %v3052 = vrot.slane %v3050, 4
      %v3053 = vrot.slane %v2572, 5
      %v3054 = vsel %vm2046, %v3052, %v3053
      %v3055 = vrot.slane %v2987, 5
      %v3056 = vrot.slane %v3055, 4
      %v3057 = vrot.slane %v2574, 5
      %v3058 = vsel %vm2046, %v3056, %v3057
      %v3059 = vrot.slane %v3057, 4
      %v3060 = vrot.slane %v2575, 5
      %v3061 = vsel %vm2046, %v3059, %v3060
      %v3062 = vrot.slane %v2988, 5
      %v3063 = vrot.slane %v3062, 4
      %v3064 = vrot.slane %v2577, 5
      %v3065 = vsel %vm2046, %v3063, %v3064
      %v3066 = vrot.slane %v3064, 4
      %v3067 = vrot.slane %v2578, 5
      %v3068 = vsel %vm2046, %v3066, %v3067
      %s3069 = scalar_lea.vmem %s6, 320
      %v3070 = vld [vmem:[%s3069] sm:$0xf]
      %v3071 = vld [vmem:[%s3069 + $0x4] sm:$0xf]
      %v3072 = vld [vmem:[%s3069 + $0x8] sm:$0xf]
      %v3073 = vld [vmem:[%s3069 + $0xc] sm:$0xf]
      %v3074 = vld [vmem:[%s3069 + $0x10] sm:$0xf]
      %v3075 = vld [vmem:[%s3069 + $0x14] sm:$0xf]
      %v3076 = vld [vmem:[%s3069 + $0x18] sm:$0xf]
      %v3077 = vld [vmem:[%s3069 + $0x1c] sm:$0xf]
      %v3078 = vld [vmem:[%s3069 + $0x20] sm:$0xf]
      %v3079 = vld [vmem:[%s3069 + $0x24] sm:$0xf]
      %v3080 = vld [vmem:[%s3069 + $0x28] sm:$0xf]
      %v3081 = vld [vmem:[%s3069 + $0x2c] sm:$0xf]
      %v3082 = vld [vmem:[%s3069 + $0x30] sm:$0xf]
      %v3083 = vld [vmem:[%s3069 + $0x34] sm:$0xf]
      %v3084 = vld [vmem:[%s3069 + $0x38] sm:$0xf]
      %v3085 = vld [vmem:[%s3069 + $0x3c] sm:$0xf]
      %v3086 = vunpack.c.l.b16 %v3016
      %v3087 = vunpack.c.l.b16 %v3019
      %v3088 = vunpack.c.l.b16 %v3023
      %v3089 = vunpack.c.l.b16 %v3026
      %v3090 = vunpack.c.l.b16 %v3030
      %v3091 = vunpack.c.l.b16 %v3033
      %v3092 = vunpack.c.l.b16 %v3037
      %v3093 = vunpack.c.l.b16 %v3040
      %v3094 = vunpack.c.l.b16 %v3044
      %v3095 = vunpack.c.l.b16 %v3047
      %v3096 = vunpack.c.l.b16 %v3051
      %v3097 = vunpack.c.l.b16 %v3054
      %v3098 = vunpack.c.l.b16 %v3058
      %v3099 = vunpack.c.l.b16 %v3061
      %v3100 = vunpack.c.l.b16 %v3065
      %v3101 = vunpack.c.l.b16 %v3068
      %v3102 = vpack.c.b16 %v3087, %v3086
      %v3103 = vpack.c.b16 %v3089, %v3088
      %v3104 = vpack.c.b16 %v3091, %v3090
      %v3105 = vpack.c.b16 %v3093, %v3092
      %v3106 = vpack.c.b16 %v3095, %v3094
      %v3107 = vpack.c.b16 %v3097, %v3096
      %v3108 = vpack.c.b16 %v3099, %v3098
      %v3109 = vpack.c.b16 %v3101, %v3100
      %v3134 = vunpack.c.l.b16 %v3070
      %v3135 = vunpack.c.l.b16 %v3071
      %v3136 = vunpack.c.l.b16 %v3072
      %v3137 = vunpack.c.l.b16 %v3073
      %v3138 = vunpack.c.l.b16 %v3074
      %v3139 = vunpack.c.l.b16 %v3075
      %v3140 = vunpack.c.l.b16 %v3076
      %v3141 = vunpack.c.l.b16 %v3077
      %v3142 = vunpack.c.l.b16 %v3078
      %v3143 = vunpack.c.l.b16 %v3079
      %v3144 = vunpack.c.l.b16 %v3080
      %v3145 = vunpack.c.l.b16 %v3081
      %v3146 = vunpack.c.l.b16 %v3082
      %v3147 = vunpack.c.l.b16 %v3083
      %v3148 = vunpack.c.l.b16 %v3084
      %v3149 = vunpack.c.l.b16 %v3085
      %v3150 = vpack.c.b16 %v3135, %v3134
      %v3151 = vpack.c.b16 %v3137, %v3136
      %v3152 = vpack.c.b16 %v3139, %v3138
      %v3153 = vpack.c.b16 %v3141, %v3140
      %v3154 = vpack.c.b16 %v3143, %v3142
      %v3155 = vpack.c.b16 %v3145, %v3144
      %v3156 = vpack.c.b16 %v3147, %v3146
      %v3157 = vpack.c.b16 %v3149, %v3148
      %3166 = vmatprep.subr.bf16.mxu0 0
      %3167 = vmatpush1.bf16.msra.mxu0 %v3150
      %3168 = vmatprep.subr.bf16.mxu0 0
      %3169 = vmatpush1.bf16.msra.mxu0 %v3151
      %3170 = vmatprep.subr.bf16.mxu0 0
      %3171 = vmatpush1.bf16.msra.mxu0 %v3152
      %3172 = vmatprep.subr.bf16.mxu0 0
      %3173 = vmatpush1.bf16.msra.mxu0 %v3153
      %3174 = vmatprep.subr.bf16.mxu0 0
      %3175 = vmatpush1.bf16.msra.mxu0 %v3154
      %3176 = vmatprep.subr.bf16.mxu0 0
      %3177 = vmatpush1.bf16.msra.mxu0 %v3155
      %3178 = vmatprep.subr.bf16.mxu0 0
      %3179 = vmatpush1.bf16.msra.mxu0 %v3156
      %3180 = vmatprep.subr.bf16.mxu0 0
      %3181 = vmatpush1.bf16.msra.mxu0 %v3157
      %3182 = vmatprep.subr.bf16.mxu0 0
      %3183 = vmatpush1.bf16.msra.mxu0 0
      %3184 = vmatprep.subr.bf16.mxu0 0
      %3185 = vmatpush1.bf16.msra.mxu0 0
      %3186 = vmatprep.subr.bf16.mxu0 0
      %3187 = vmatpush1.bf16.msra.mxu0 0
      %3188 = vmatprep.subr.bf16.mxu0 0
      %3189 = vmatpush1.bf16.msra.mxu0 0
      %3190 = vmatprep.subr.bf16.mxu0 0
      %3191 = vmatpush1.bf16.msra.mxu0 0
      %3192 = vmatprep.subr.bf16.mxu0 0
      %3193 = vmatpush1.bf16.msra.mxu0 0
      %3194 = vmatprep.subr.bf16.mxu0 0
      %3195 = vmatpush1.bf16.msra.mxu0 0
      %3196 = vmatprep.subr.bf16.mxu0 0
      %3197 = vmatpush1.bf16.msra.mxu0 0
      %3198 = vmatprep.mubr.bf16.mxu0 0
      %3199 = vmatmul.mubr.bf16.gmra.mrb[0].mxu0 %v3102
      %v3200 = vpop.f32.mrb[0].mxu0
      %v3201 = vadd.f32 0.0, %v3200
      %v3202 = vpop.f32.mrb[0].mxu0
      %v3203 = vpop.f32.mrb[0].mxu0
      %v3204 = vadd.f32 0.0, %v3203
      %v3205 = vpop.f32.mrb[0].mxu0
      %3206 = vmatprep.mubr.bf16.mxu0 0
      %3207 = vmatmul.mubr.bf16.gmra.mrb[0].mxu0 %v3103
      %v3208 = vpop.f32.mrb[0].mxu0
      %v3209 = vadd.f32 0.0, %v3208
      %v3210 = vpop.f32.mrb[0].mxu0
      %v3211 = vpop.f32.mrb[0].mxu0
      %v3212 = vadd.f32 0.0, %v3211
      %v3213 = vpop.f32.mrb[0].mxu0
      %3214 = vmatprep.mubr.bf16.mxu0 0
      %3215 = vmatmul.mubr.bf16.gmra.mrb[0].mxu0 %v3104
      %v3216 = vpop.f32.mrb[0].mxu0
      %v3217 = vadd.f32 0.0, %v3216
      %v3218 = vpop.f32.mrb[0].mxu0
      %v3219 = vpop.f32.mrb[0].mxu0
      %v3220 = vadd.f32 0.0, %v3219
      %v3221 = vpop.f32.mrb[0].mxu0
      %3222 = vmatprep.mubr.bf16.mxu0 0
      %3223 = vmatmul.mubr.bf16.gmra.mrb[0].mxu0 %v3105
      %v3224 = vpop.f32.mrb[0].mxu0
      %v3225 = vadd.f32 0.0, %v3224
      %v3226 = vpop.f32.mrb[0].mxu0
      %v3227 = vpop.f32.mrb[0].mxu0
      %v3228 = vadd.f32 0.0, %v3227
      %v3229 = vpop.f32.mrb[0].mxu0
      %3230 = vmatprep.mubr.bf16.mxu0 0
      %3231 = vmatmul.mubr.bf16.gmra.mrb[0].mxu0 %v3106
      %v3232 = vpop.f32.mrb[0].mxu0
      %v3233 = vadd.f32 0.0, %v3232
      %v3234 = vpop.f32.mrb[0].mxu0
      %v3235 = vpop.f32.mrb[0].mxu0
      %v3236 = vadd.f32 0.0, %v3235
      %v3237 = vpop.f32.mrb[0].mxu0
      %3238 = vmatprep.mubr.bf16.mxu0 0
      %3239 = vmatmul.mubr.bf16.gmra.mrb[0].mxu0 %v3107
      %v3240 = vpop.f32.mrb[0].mxu0
      %v3241 = vadd.f32 0.0, %v3240
      %v3242 = vpop.f32.mrb[0].mxu0
      %v3243 = vpop.f32.mrb[0].mxu0
      %v3244 = vadd.f32 0.0, %v3243
      %v3245 = vpop.f32.mrb[0].mxu0
      %3246 = vmatprep.mubr.bf16.mxu0 0
      %3247 = vmatmul.mubr.bf16.gmra.mrb[0].mxu0 %v3108
      %v3248 = vpop.f32.mrb[0].mxu0
      %v3249 = vadd.f32 0.0, %v3248
      %v3250 = vpop.f32.mrb[0].mxu0
      %v3251 = vpop.f32.mrb[0].mxu0
      %v3252 = vadd.f32 0.0, %v3251
      %v3253 = vpop.f32.mrb[0].mxu0
      %3254 = vmatprep.mubr.bf16.mxu0 0
      %3255 = vmatmul.mubr.bf16.gmra.mrb[0].mxu0 %v3109
      %v3256 = vpop.f32.mrb[0].mxu0
      %v3257 = vadd.f32 0.0, %v3256
      %v3258 = vpop.f32.mrb[0].mxu0
      %v3259 = vpop.f32.mrb[0].mxu0
      %v3260 = vadd.f32 0.0, %v3259
      %v3261 = vpop.f32.mrb[0].mxu0
      %3262 = vdwg.mxu0
      %v3263 = vadd.f32 %v2965, %v3201
      %v3264 = vadd.f32 %v2966, %v3204
      %v3265 = vadd.f32 %v2967, %v3209
      %v3266 = vadd.f32 %v2968, %v3212
      %v3267 = vadd.f32 %v2969, %v3217
      %v3268 = vadd.f32 %v2970, %v3220
      %v3269 = vadd.f32 %v2971, %v3225
      %v3270 = vadd.f32 %v2972, %v3228
      %v3271 = vadd.f32 %v2973, %v3233
      %v3272 = vadd.f32 %v2974, %v3236
      %v3273 = vadd.f32 %v2975, %v3241
      %v3274 = vadd.f32 %v2976, %v3244
      %v3275 = vadd.f32 %v2977, %v3249
      %v3276 = vadd.f32 %v2978, %v3252
      %v3277 = vadd.f32 %v2979, %v3257
      %v3278 = vadd.f32 %v2980, %v3260
      %s3279 = scalar_lea.vmem [#allocation2], 24
      %v3280 = vld [vmem:[%s3279] sm:$0xf]
      %v3281 = vld [vmem:[%s3279 + $0x4] sm:$0xf]
      %v3282 = vld [vmem:[%s3279 + $0xc] sm:$0xf]
      %v3283 = vld [vmem:[%s3279 + $0x10] sm:$0xf]
      %v3284 = vld [vmem:[%s3279 + $0x18] sm:$0xf]
      %v3285 = vld [vmem:[%s3279 + $0x1c] sm:$0xf]
      %v3286 = vld [vmem:[%s3279 + $0x24] sm:$0xf]
      %v3287 = vld [vmem:[%s3279 + $0x28] sm:$0xf]
      %v3288 = vld [vmem:[%s3279 + $0x30] sm:$0xf]
      %v3289 = vld [vmem:[%s3279 + $0x34] sm:$0xf]
      %v3290 = vld [vmem:[%s3279 + $0x3c] sm:$0xf]
      %v3291 = vld [vmem:[%s3279 + $0x40] sm:$0xf]
      %v3292 = vld [vmem:[%s3279 + $0x48] sm:$0xf]
      %v3293 = vld [vmem:[%s3279 + $0x4c] sm:$0xf]
      %v3294 = vld [vmem:[%s3279 + $0x54] sm:$0xf]
      %v3295 = vld [vmem:[%s3279 + $0x58] sm:$0xf]
      %s3296 = scalar_lea.vmem %s6, 384
      %v3297 = vld [vmem:[%s3296] sm:$0xf]
      %v3298 = vld [vmem:[%s3296 + $0x4] sm:$0xf]
      %v3299 = vld [vmem:[%s3296 + $0x8] sm:$0xf]
      %v3300 = vld [vmem:[%s3296 + $0xc] sm:$0xf]
      %v3301 = vld [vmem:[%s3296 + $0x10] sm:$0xf]
      %v3302 = vld [vmem:[%s3296 + $0x14] sm:$0xf]
      %v3303 = vld [vmem:[%s3296 + $0x18] sm:$0xf]
      %v3304 = vld [vmem:[%s3296 + $0x1c] sm:$0xf]
      %v3305 = vld [vmem:[%s3296 + $0x20] sm:$0xf]
      %v3306 = vld [vmem:[%s3296 + $0x24] sm:$0xf]
      %v3307 = vld [vmem:[%s3296 + $0x28] sm:$0xf]
      %v3308 = vld [vmem:[%s3296 + $0x2c] sm:$0xf]
      %v3309 = vld [vmem:[%s3296 + $0x30] sm:$0xf]
      %v3310 = vld [vmem:[%s3296 + $0x34] sm:$0xf]
      %v3311 = vld [vmem:[%s3296 + $0x38] sm:$0xf]
      %v3312 = vld [vmem:[%s3296 + $0x3c] sm:$0xf]
      %v3329 = vunpack.c.l.b16 %v3280
      %v3330 = vunpack.c.l.b16 %v3281
      %v3331 = vunpack.c.l.b16 %v3282
      %v3332 = vunpack.c.l.b16 %v3283
      %v3333 = vunpack.c.l.b16 %v3284
      %v3334 = vunpack.c.l.b16 %v3285
      %v3335 = vunpack.c.l.b16 %v3286
      %v3336 = vunpack.c.l.b16 %v3287
      %v3337 = vunpack.c.l.b16 %v3288
      %v3338 = vunpack.c.l.b16 %v3289
      %v3339 = vunpack.c.l.b16 %v3290
      %v3340 = vunpack.c.l.b16 %v3291
      %v3341 = vunpack.c.l.b16 %v3292
      %v3342 = vunpack.c.l.b16 %v3293
      %v3343 = vunpack.c.l.b16 %v3294
      %v3344 = vunpack.c.l.b16 %v3295
      %v3345 = vpack.c.b16 %v3330, %v3329
      %v3346 = vpack.c.b16 %v3332, %v3331
      %v3347 = vpack.c.b16 %v3334, %v3333
      %v3348 = vpack.c.b16 %v3336, %v3335
      %v3349 = vpack.c.b16 %v3338, %v3337
      %v3350 = vpack.c.b16 %v3340, %v3339
      %v3351 = vpack.c.b16 %v3342, %v3341
      %v3352 = vpack.c.b16 %v3344, %v3343
      %v3377 = vunpack.c.l.b16 %v3297
      %v3378 = vunpack.c.l.b16 %v3298
      %v3379 = vunpack.c.l.b16 %v3299
      %v3380 = vunpack.c.l.b16 %v3300
      %v3381 = vunpack.c.l.b16 %v3301
      %v3382 = vunpack.c.l.b16 %v3302
      %v3383 = vunpack.c.l.b16 %v3303
      %v3384 = vunpack.c.l.b16 %v3304
      %v3385 = vunpack.c.l.b16 %v3305
      %v3386 = vunpack.c.l.b16 %v3306
      %v3387 = vunpack.c.l.b16 %v3307
      %v3388 = vunpack.c.l.b16 %v3308
      %v3389 = vunpack.c.l.b16 %v3309
      %v3390 = vunpack.c.l.b16 %v3310
      %v3391 = vunpack.c.l.b16 %v3311
      %v3392 = vunpack.c.l.b16 %v3312
      %v3393 = vpack.c.b16 %v3378, %v3377
      %v3394 = vpack.c.b16 %v3380, %v3379
      %v3395 = vpack.c.b16 %v3382, %v3381
      %v3396 = vpack.c.b16 %v3384, %v3383
      %v3397 = vpack.c.b16 %v3386, %v3385
      %v3398 = vpack.c.b16 %v3388, %v3387
      %v3399 = vpack.c.b16 %v3390, %v3389
      %v3400 = vpack.c.b16 %v3392, %v3391
      %3409 = vmatprep.subr.bf16.mxu0 0
      %3410 = vmatpush1.bf16.msra.mxu0 %v3393
      %3411 = vmatprep.subr.bf16.mxu0 0
      %3412 = vmatpush1.bf16.msra.mxu0 %v3394
      %3413 = vmatprep.subr.bf16.mxu0 0
      %3414 = vmatpush1.bf16.msra.mxu0 %v3395
      %3415 = vmatprep.subr.bf16.mxu0 0
      %3416 = vmatpush1.bf16.msra.mxu0 %v3396
      %3417 = vmatprep.subr.bf16.mxu0 0
      %3418 = vmatpush1.bf16.msra.mxu0 %v3397
      %3419 = vmatprep.subr.bf16.mxu0 0
      %3420 = vmatpush1.bf16.msra.mxu0 %v3398
      %3421 = vmatprep.subr.bf16.mxu0 0
      %3422 = vmatpush1.bf16.msra.mxu0 %v3399
      %3423 = vmatprep.subr.bf16.mxu0 0
      %3424 = vmatpush1.bf16.msra.mxu0 %v3400
      %3425 = vmatprep.subr.bf16.mxu0 0
      %3426 = vmatpush1.bf16.msra.mxu0 0
      %3427 = vmatprep.subr.bf16.mxu0 0
      %3428 = vmatpush1.bf16.msra.mxu0 0
      %3429 = vmatprep.subr.bf16.mxu0 0
      %3430 = vmatpush1.bf16.msra.mxu0 0
      %3431 = vmatprep.subr.bf16.mxu0 0
      %3432 = vmatpush1.bf16.msra.mxu0 0
      %3433 = vmatprep.subr.bf16.mxu0 0
      %3434 = vmatpush1.bf16.msra.mxu0 0
      %3435 = vmatprep.subr.bf16.mxu0 0
      %3436 = vmatpush1.bf16.msra.mxu0 0
      %3437 = vmatprep.subr.bf16.mxu0 0
      %3438 = vmatpush1.bf16.msra.mxu0 0
      %3439 = vmatprep.subr.bf16.mxu0 0
      %3440 = vmatpush1.bf16.msra.mxu0 0
      %3441 = vmatprep.mubr.bf16.mxu0 0
      %3442 = vmatmul.mubr.bf16.gmra.mrb[0].mxu0 %v3345
      %v3443 = vpop.f32.mrb[0].mxu0
      %v3444 = vadd.f32 0.0, %v3443
      %v3445 = vpop.f32.mrb[0].mxu0
      %v3446 = vpop.f32.mrb[0].mxu0
      %v3447 = vadd.f32 0.0, %v3446
      %v3448 = vpop.f32.mrb[0].mxu0
      %3449 = vmatprep.mubr.bf16.mxu0 0
      %3450 = vmatmul.mubr.bf16.gmra.mrb[0].mxu0 %v3346
      %v3451 = vpop.f32.mrb[0].mxu0
      %v3452 = vadd.f32 0.0, %v3451
      %v3453 = vpop.f32.mrb[0].mxu0
      %v3454 = vpop.f32.mrb[0].mxu0
      %v3455 = vadd.f32 0.0, %v3454
      %v3456 = vpop.f32.mrb[0].mxu0
      %3457 = vmatprep.mubr.bf16.mxu0 0
      %3458 = vmatmul.mubr.bf16.gmra.mrb[0].mxu0 %v3347
      %v3459 = vpop.f32.mrb[0].mxu0
      %v3460 = vadd.f32 0.0, %v3459
      %v3461 = vpop.f32.mrb[0].mxu0
      %v3462 = vpop.f32.mrb[0].mxu0
      %v3463 = vadd.f32 0.0, %v3462
      %v3464 = vpop.f32.mrb[0].mxu0
      %3465 = vmatprep.mubr.bf16.mxu0 0
      %3466 = vmatmul.mubr.bf16.gmra.mrb[0].mxu0 %v3348
      %v3467 = vpop.f32.mrb[0].mxu0
      %v3468 = vadd.f32 0.0, %v3467
      %v3469 = vpop.f32.mrb[0].mxu0
      %v3470 = vpop.f32.mrb[0].mxu0
      %v3471 = vadd.f32 0.0, %v3470
      %v3472 = vpop.f32.mrb[0].mxu0
      %3473 = vmatprep.mubr.bf16.mxu0 0
      %3474 = vmatmul.mubr.bf16.gmra.mrb[0].mxu0 %v3349
      %v3475 = vpop.f32.mrb[0].mxu0
      %v3476 = vadd.f32 0.0, %v3475
      %v3477 = vpop.f32.mrb[0].mxu0
      %v3478 = vpop.f32.mrb[0].mxu0
      %v3479 = vadd.f32 0.0, %v3478
      %v3480 = vpop.f32.mrb[0].mxu0
      %3481 = vmatprep.mubr.bf16.mxu0 0
      %3482 = vmatmul.mubr.bf16.gmra.mrb[0].mxu0 %v3350
      %v3483 = vpop.f32.mrb[0].mxu0
      %v3484 = vadd.f32 0.0, %v3483
      %v3485 = vpop.f32.mrb[0].mxu0
      %v3486 = vpop.f32.mrb[0].mxu0
      %v3487 = vadd.f32 0.0, %v3486
      %v3488 = vpop.f32.mrb[0].mxu0
      %3489 = vmatprep.mubr.bf16.mxu0 0
      %3490 = vmatmul.mubr.bf16.gmra.mrb[0].mxu0 %v3351
      %v3491 = vpop.f32.mrb[0].mxu0
      %v3492 = vadd.f32 0.0, %v3491
      %v3493 = vpop.f32.mrb[0].mxu0
      %v3494 = vpop.f32.mrb[0].mxu0
      %v3495 = vadd.f32 0.0, %v3494
      %v3496 = vpop.f32.mrb[0].mxu0
      %3497 = vmatprep.mubr.bf16.mxu0 0
      %3498 = vmatmul.mubr.bf16.gmra.mrb[0].mxu0 %v3352
      %v3499 = vpop.f32.mrb[0].mxu0
      %v3500 = vadd.f32 0.0, %v3499
      %v3501 = vpop.f32.mrb[0].mxu0
      %v3502 = vpop.f32.mrb[0].mxu0
      %v3503 = vadd.f32 0.0, %v3502
      %v3504 = vpop.f32.mrb[0].mxu0
      %3505 = vdwg.mxu0
      %v3506 = vadd.f32 %v3263, %v3444
      %v3507 = vadd.f32 %v3264, %v3447
      %v3508 = vadd.f32 %v3265, %v3452
      %v3509 = vadd.f32 %v3266, %v3455
      %v3510 = vadd.f32 %v3267, %v3460
      %v3511 = vadd.f32 %v3268, %v3463
      %v3512 = vadd.f32 %v3269, %v3468
      %v3513 = vadd.f32 %v3270, %v3471
      %v3514 = vadd.f32 %v3271, %v3476
      %v3515 = vadd.f32 %v3272, %v3479
      %v3516 = vadd.f32 %v3273, %v3484
      %v3517 = vadd.f32 %v3274, %v3487
      %v3518 = vadd.f32 %v3275, %v3492
      %v3519 = vadd.f32 %v3276, %v3495
      %v3520 = vadd.f32 %v3277, %v3500
      %v3521 = vadd.f32 %v3278, %v3503
      %v3522 = vld [vmem:[%s3279] sm:$0xf]
      %v3523 = vld [vmem:[%s3279 + $0x4] sm:$0xf]
      %v3524 = vld [vmem:[%s3279 + $0x8] sm:$0x1]
      %v3525 = vld [vmem:[%s3279 + $0xc] sm:$0xf]
      %v3526 = vld [vmem:[%s3279 + $0x10] sm:$0xf]
      %v3527 = vld [vmem:[%s3279 + $0x14] sm:$0x1]
      %v3528 = vld [vmem:[%s3279 + $0x18] sm:$0xf]
      %v3529 = vld [vmem:[%s3279 + $0x1c] sm:$0xf]
      %v3530 = vld [vmem:[%s3279 + $0x20] sm:$0x1]
      %v3531 = vld [vmem:[%s3279 + $0x24] sm:$0xf]
      %v3532 = vld [vmem:[%s3279 + $0x28] sm:$0xf]
      %v3533 = vld [vmem:[%s3279 + $0x2c] sm:$0x1]
      %v3534 = vld [vmem:[%s3279 + $0x30] sm:$0xf]
      %v3535 = vld [vmem:[%s3279 + $0x34] sm:$0xf]
      %v3536 = vld [vmem:[%s3279 + $0x38] sm:$0x1]
      %v3537 = vld [vmem:[%s3279 + $0x3c] sm:$0xf]
      %v3538 = vld [vmem:[%s3279 + $0x40] sm:$0xf]
      %v3539 = vld [vmem:[%s3279 + $0x44] sm:$0x1]
      %v3540 = vld [vmem:[%s3279 + $0x48] sm:$0xf]
      %v3541 = vld [vmem:[%s3279 + $0x4c] sm:$0xf]
      %v3542 = vld [vmem:[%s3279 + $0x50] sm:$0x1]
      %v3543 = vld [vmem:[%s3279 + $0x54] sm:$0xf]
      %v3544 = vld [vmem:[%s3279 + $0x58] sm:$0xf]
      %v3545 = vld [vmem:[%s3279 + $0x5c] sm:$0x1]
      %v3547 = vshrl.u32 %v3522, 16
      %v3549 = vrot.slane %v3547, 4
      %v3550 = vshll.u32 %v3522, 16
      %v3552 = vrot.slane %v3550, 5
      %v3553 = vor.u32 %v3549, %v3552
      %v3554 = vrot.slane %v3553, 4
      %v3556 = vshll.u32 %v3523, 16
      %v3558 = vrot.slane %v3556, 5
      %v3559 = vsel %vm1440, %v3554, %v3558
      %v3560 = vshrl.u32 %v3523, 16
      %v3562 = vrot.slane %v3560, 4
      %v3563 = vor.u32 %v3562, %v3558
      %v3564 = vrot.slane %v3563, 4
      %v3566 = vshll.u32 %v3524, 16
      %v3568 = vrot.slane %v3566, 5
      %v3569 = vsel %vm1440, %v3564, %v3568
      %v3571 = vshrl.u32 %v3525, 16
      %v3573 = vrot.slane %v3571, 4
      %v3574 = vshll.u32 %v3525, 16
      %v3576 = vrot.slane %v3574, 5
      %v3577 = vor.u32 %v3573, %v3576
      %v3578 = vrot.slane %v3577, 4
      %v3580 = vshll.u32 %v3526, 16
      %v3582 = vrot.slane %v3580, 5
      %v3583 = vsel %vm1440, %v3578, %v3582
      %v3584 = vshrl.u32 %v3526, 16
      %v3586 = vrot.slane %v3584, 4
      %v3587 = vor.u32 %v3586, %v3582
      %v3588 = vrot.slane %v3587, 4
      %v3590 = vshll.u32 %v3527, 16
      %v3592 = vrot.slane %v3590, 5
      %v3593 = vsel %vm1440, %v3588, %v3592
      %v3595 = vshrl.u32 %v3528, 16
      %v3597 = vrot.slane %v3595, 4
      %v3598 = vshll.u32 %v3528, 16
      %v3600 = vrot.slane %v3598, 5
      %v3601 = vor.u32 %v3597, %v3600
      %v3602 = vrot.slane %v3601, 4
      %v3604 = vshll.u32 %v3529, 16
      %v3606 = vrot.slane %v3604, 5
      %v3607 = vsel %vm1440, %v3602, %v3606
      %v3608 = vshrl.u32 %v3529, 16
      %v3610 = vrot.slane %v3608, 4
      %v3611 = vor.u32 %v3610, %v3606
      %v3612 = vrot.slane %v3611, 4
      %v3614 = vshll.u32 %v3530, 16
      %v3616 = vrot.slane %v3614, 5
      %v3617 = vsel %vm1440, %v3612, %v3616
      %v3619 = vshrl.u32 %v3531, 16
      %v3621 = vrot.slane %v3619, 4
      %v3622 = vshll.u32 %v3531, 16
      %v3624 = vrot.slane %v3622, 5
      %v3625 = vor.u32 %v3621, %v3624
      %v3626 = vrot.slane %v3625, 4
      %v3628 = vshll.u32 %v3532, 16
      %v3630 = vrot.slane %v3628, 5
      %v3631 = vsel %vm1440, %v3626, %v3630
      %v3632 = vshrl.u32 %v3532, 16
      %v3634 = vrot.slane %v3632, 4
      %v3635 = vor.u32 %v3634, %v3630
      %v3636 = vrot.slane %v3635, 4
      %v3638 = vshll.u32 %v3533, 16
      %v3640 = vrot.slane %v3638, 5
      %v3641 = vsel %vm1440, %v3636, %v3640
      %v3643 = vshrl.u32 %v3534, 16
      %v3645 = vrot.slane %v3643, 4
      %v3646 = vshll.u32 %v3534, 16
      %v3648 = vrot.slane %v3646, 5
      %v3649 = vor.u32 %v3645, %v3648
      %v3650 = vrot.slane %v3649, 4
      %v3652 = vshll.u32 %v3535, 16
      %v3654 = vrot.slane %v3652, 5
      %v3655 = vsel %vm1440, %v3650, %v3654
      %v3656 = vshrl.u32 %v3535, 16
      %v3658 = vrot.slane %v3656, 4
      %v3659 = vor.u32 %v3658, %v3654
      %v3660 = vrot.slane %v3659, 4
      %v3662 = vshll.u32 %v3536, 16
      %v3664 = vrot.slane %v3662, 5
      %v3665 = vsel %vm1440, %v3660, %v3664
      %v3667 = vshrl.u32 %v3537, 16
      %v3669 = vrot.slane %v3667, 4
      %v3670 = vshll.u32 %v3537, 16
      %v3672 = vrot.slane %v3670, 5
      %v3673 = vor.u32 %v3669, %v3672
      %v3674 = vrot.slane %v3673, 4
      %v3676 = vshll.u32 %v3538, 16
      %v3678 = vrot.slane %v3676, 5
      %v3679 = vsel %vm1440, %v3674, %v3678
      %v3680 = vshrl.u32 %v3538, 16
      %v3682 = vrot.slane %v3680, 4
      %v3683 = vor.u32 %v3682, %v3678
      %v3684 = vrot.slane %v3683, 4
      %v3686 = vshll.u32 %v3539, 16
      %v3688 = vrot.slane %v3686, 5
      %v3689 = vsel %vm1440, %v3684, %v3688
      %v3691 = vshrl.u32 %v3540, 16
      %v3693 = vrot.slane %v3691, 4
      %v3694 = vshll.u32 %v3540, 16
      %v3696 = vrot.slane %v3694, 5
      %v3697 = vor.u32 %v3693, %v3696
      %v3698 = vrot.slane %v3697, 4
      %v3700 = vshll.u32 %v3541, 16
      %v3702 = vrot.slane %v3700, 5
      %v3703 = vsel %vm1440, %v3698, %v3702
      %v3704 = vshrl.u32 %v3541, 16
      %v3706 = vrot.slane %v3704, 4
      %v3707 = vor.u32 %v3706, %v3702
      %v3708 = vrot.slane %v3707, 4
      %v3710 = vshll.u32 %v3542, 16
      %v3712 = vrot.slane %v3710, 5
      %v3713 = vsel %vm1440, %v3708, %v3712
      %v3715 = vshrl.u32 %v3543, 16
      %v3717 = vrot.slane %v3715, 4
      %v3718 = vshll.u32 %v3543, 16
      %v3720 = vrot.slane %v3718, 5
      %v3721 = vor.u32 %v3717, %v3720
      %v3722 = vrot.slane %v3721, 4
      %v3724 = vshll.u32 %v3544, 16
      %v3726 = vrot.slane %v3724, 5
      %v3727 = vsel %vm1440, %v3722, %v3726
      %v3728 = vshrl.u32 %v3544, 16
      %v3730 = vrot.slane %v3728, 4
      %v3731 = vor.u32 %v3730, %v3726
      %v3732 = vrot.slane %v3731, 4
      %v3734 = vshll.u32 %v3545, 16
      %v3736 = vrot.slane %v3734, 5
      %v3737 = vsel %vm1440, %v3732, %v3736
      %s3738 = scalar_lea.vmem %s6, 448
      %v3739 = vld [vmem:[%s3738] sm:$0xf]
      %v3740 = vld [vmem:[%s3738 + $0x4] sm:$0xf]
      %v3741 = vld [vmem:[%s3738 + $0x8] sm:$0xf]
      %v3742 = vld [vmem:[%s3738 + $0xc] sm:$0xf]
      %v3743 = vld [vmem:[%s3738 + $0x10] sm:$0xf]
      %v3744 = vld [vmem:[%s3738 + $0x14] sm:$0xf]
      %v3745 = vld [vmem:[%s3738 + $0x18] sm:$0xf]
      %v3746 = vld [vmem:[%s3738 + $0x1c] sm:$0xf]
      %v3747 = vld [vmem:[%s3738 + $0x20] sm:$0xf]
      %v3748 = vld [vmem:[%s3738 + $0x24] sm:$0xf]
      %v3749 = vld [vmem:[%s3738 + $0x28] sm:$0xf]
      %v3750 = vld [vmem:[%s3738 + $0x2c] sm:$0xf]
      %v3751 = vld [vmem:[%s3738 + $0x30] sm:$0xf]
      %v3752 = vld [vmem:[%s3738 + $0x34] sm:$0xf]
      %v3753 = vld [vmem:[%s3738 + $0x38] sm:$0xf]
      %v3754 = vld [vmem:[%s3738 + $0x3c] sm:$0xf]
      %v3755 = vunpack.c.l.b16 %v3559
      %v3756 = vunpack.c.l.b16 %v3569
      %v3757 = vunpack.c.l.b16 %v3583
      %v3758 = vunpack.c.l.b16 %v3593
      %v3759 = vunpack.c.l.b16 %v3607
      %v3760 = vunpack.c.l.b16 %v3617
      %v3761 = vunpack.c.l.b16 %v3631
      %v3762 = vunpack.c.l.b16 %v3641
      %v3763 = vunpack.c.l.b16 %v3655
      %v3764 = vunpack.c.l.b16 %v3665
      %v3765 = vunpack.c.l.b16 %v3679
      %v3766 = vunpack.c.l.b16 %v3689
      %v3767 = vunpack.c.l.b16 %v3703
      %v3768 = vunpack.c.l.b16 %v3713
      %v3769 = vunpack.c.l.b16 %v3727
      %v3770 = vunpack.c.l.b16 %v3737
      %v3771 = vpack.c.b16 %v3756, %v3755
      %v3772 = vpack.c.b16 %v3758, %v3757
      %v3773 = vpack.c.b16 %v3760, %v3759
      %v3774 = vpack.c.b16 %v3762, %v3761
      %v3775 = vpack.c.b16 %v3764, %v3763
      %v3776 = vpack.c.b16 %v3766, %v3765
      %v3777 = vpack.c.b16 %v3768, %v3767
      %v3778 = vpack.c.b16 %v3770, %v3769
      %v3803 = vunpack.c.l.b16 %v3739
      %v3804 = vunpack.c.l.b16 %v3740
      %v3805 = vunpack.c.l.b16 %v3741
      %v3806 = vunpack.c.l.b16 %v3742
      %v3807 = vunpack.c.l.b16 %v3743
      %v3808 = vunpack.c.l.b16 %v3744
      %v3809 = vunpack.c.l.b16 %v3745
      %v3810 = vunpack.c.l.b16 %v3746
      %v3811 = vunpack.c.l.b16 %v3747
      %v3812 = vunpack.c.l.b16 %v3748
      %v3813 = vunpack.c.l.b16 %v3749
      %v3814 = vunpack.c.l.b16 %v3750
      %v3815 = vunpack.c.l.b16 %v3751
      %v3816 = vunpack.c.l.b16 %v3752
      %v3817 = vunpack.c.l.b16 %v3753
      %v3818 = vunpack.c.l.b16 %v3754
      %v3819 = vpack.c.b16 %v3804, %v3803
      %v3820 = vpack.c.b16 %v3806, %v3805
      %v3821 = vpack.c.b16 %v3808, %v3807
      %v3822 = vpack.c.b16 %v3810, %v3809
      %v3823 = vpack.c.b16 %v3812, %v3811
      %v3824 = vpack.c.b16 %v3814, %v3813
      %v3825 = vpack.c.b16 %v3816, %v3815
      %v3826 = vpack.c.b16 %v3818, %v3817
      %3835 = vmatprep.subr.bf16.mxu0 0
      %3836 = vmatpush1.bf16.msra.mxu0 %v3819
      %3837 = vmatprep.subr.bf16.mxu0 0
      %3838 = vmatpush1.bf16.msra.mxu0 %v3820
      %3839 = vmatprep.subr.bf16.mxu0 0
      %3840 = vmatpush1.bf16.msra.mxu0 %v3821
      %3841 = vmatprep.subr.bf16.mxu0 0
      %3842 = vmatpush1.bf16.msra.mxu0 %v3822
      %3843 = vmatprep.subr.bf16.mxu0 0
      %3844 = vmatpush1.bf16.msra.mxu0 %v3823
      %3845 = vmatprep.subr.bf16.mxu0 0
      %3846 = vmatpush1.bf16.msra.mxu0 %v3824
      %3847 = vmatprep.subr.bf16.mxu0 0
      %3848 = vmatpush1.bf16.msra.mxu0 %v3825
      %3849 = vmatprep.subr.bf16.mxu0 0
      %3850 = vmatpush1.bf16.msra.mxu0 %v3826
      %3851 = vmatprep.subr.bf16.mxu0 0
      %3852 = vmatpush1.bf16.msra.mxu0 0
      %3853 = vmatprep.subr.bf16.mxu0 0
      %3854 = vmatpush1.bf16.msra.mxu0 0
      %3855 = vmatprep.subr.bf16.mxu0 0
      %3856 = vmatpush1.bf16.msra.mxu0 0
      %3857 = vmatprep.subr.bf16.mxu0 0
      %3858 = vmatpush1.bf16.msra.mxu0 0
      %3859 = vmatprep.subr.bf16.mxu0 0
      %3860 = vmatpush1.bf16.msra.mxu0 0
      %3861 = vmatprep.subr.bf16.mxu0 0
      %3862 = vmatpush1.bf16.msra.mxu0 0
      %3863 = vmatprep.subr.bf16.mxu0 0
      %3864 = vmatpush1.bf16.msra.mxu0 0
      %3865 = vmatprep.subr.bf16.mxu0 0
      %3866 = vmatpush1.bf16.msra.mxu0 0
      %3867 = vmatprep.mubr.bf16.mxu0 0
      %3868 = vmatmul.mubr.bf16.gmra.mrb[0].mxu0 %v3771
      %v3869 = vpop.f32.mrb[0].mxu0
      %v3870 = vadd.f32 0.0, %v3869
      %v3871 = vpop.f32.mrb[0].mxu0
      %v3872 = vpop.f32.mrb[0].mxu0
      %v3873 = vadd.f32 0.0, %v3872
      %v3874 = vpop.f32.mrb[0].mxu0
      %3875 = vmatprep.mubr.bf16.mxu0 0
      %3876 = vmatmul.mubr.bf16.gmra.mrb[0].mxu0 %v3772
      %v3877 = vpop.f32.mrb[0].mxu0
      %v3878 = vadd.f32 0.0, %v3877
      %v3879 = vpop.f32.mrb[0].mxu0
      %v3880 = vpop.f32.mrb[0].mxu0
      %v3881 = vadd.f32 0.0, %v3880
      %v3882 = vpop.f32.mrb[0].mxu0
      %3883 = vmatprep.mubr.bf16.mxu0 0
      %3884 = vmatmul.mubr.bf16.gmra.mrb[0].mxu0 %v3773
      %v3885 = vpop.f32.mrb[0].mxu0
      %v3886 = vadd.f32 0.0, %v3885
      %v3887 = vpop.f32.mrb[0].mxu0
      %v3888 = vpop.f32.mrb[0].mxu0
      %v3889 = vadd.f32 0.0, %v3888
      %v3890 = vpop.f32.mrb[0].mxu0
      %3891 = vmatprep.mubr.bf16.mxu0 0
      %3892 = vmatmul.mubr.bf16.gmra.mrb[0].mxu0 %v3774
      %v3893 = vpop.f32.mrb[0].mxu0
      %v3894 = vadd.f32 0.0, %v3893
      %v3895 = vpop.f32.mrb[0].mxu0
      %v3896 = vpop.f32.mrb[0].mxu0
      %v3897 = vadd.f32 0.0, %v3896
      %v3898 = vpop.f32.mrb[0].mxu0
      %3899 = vmatprep.mubr.bf16.mxu0 0
      %3900 = vmatmul.mubr.bf16.gmra.mrb[0].mxu0 %v3775
      %v3901 = vpop.f32.mrb[0].mxu0
      %v3902 = vadd.f32 0.0, %v3901
      %v3903 = vpop.f32.mrb[0].mxu0
      %v3904 = vpop.f32.mrb[0].mxu0
      %v3905 = vadd.f32 0.0, %v3904
      %v3906 = vpop.f32.mrb[0].mxu0
      %3907 = vmatprep.mubr.bf16.mxu0 0
      %3908 = vmatmul.mubr.bf16.gmra.mrb[0].mxu0 %v3776
      %v3909 = vpop.f32.mrb[0].mxu0
      %v3910 = vadd.f32 0.0, %v3909
      %v3911 = vpop.f32.mrb[0].mxu0
      %v3912 = vpop.f32.mrb[0].mxu0
      %v3913 = vadd.f32 0.0, %v3912
      %v3914 = vpop.f32.mrb[0].mxu0
      %3915 = vmatprep.mubr.bf16.mxu0 0
      %3916 = vmatmul.mubr.bf16.gmra.mrb[0].mxu0 %v3777
      %v3917 = vpop.f32.mrb[0].mxu0
      %v3918 = vadd.f32 0.0, %v3917
      %v3919 = vpop.f32.mrb[0].mxu0
      %v3920 = vpop.f32.mrb[0].mxu0
      %v3921 = vadd.f32 0.0, %v3920
      %v3922 = vpop.f32.mrb[0].mxu0
      %3923 = vmatprep.mubr.bf16.mxu0 0
      %3924 = vmatmul.mubr.bf16.gmra.mrb[0].mxu0 %v3778
      %v3925 = vpop.f32.mrb[0].mxu0
      %v3926 = vadd.f32 0.0, %v3925
      %v3927 = vpop.f32.mrb[0].mxu0
      %v3928 = vpop.f32.mrb[0].mxu0
      %v3929 = vadd.f32 0.0, %v3928
      %v3930 = vpop.f32.mrb[0].mxu0
      %3931 = vdwg.mxu0
      %v3932 = vadd.f32 %v3506, %v3870
      %v3933 = vadd.f32 %v3507, %v3873
      %v3934 = vadd.f32 %v3508, %v3878
      %v3935 = vadd.f32 %v3509, %v3881
      %v3936 = vadd.f32 %v3510, %v3886
      %v3937 = vadd.f32 %v3511, %v3889
      %v3938 = vadd.f32 %v3512, %v3894
      %v3939 = vadd.f32 %v3513, %v3897
      %v3940 = vadd.f32 %v3514, %v3902
      %v3941 = vadd.f32 %v3515, %v3905
      %v3942 = vadd.f32 %v3516, %v3910
      %v3943 = vadd.f32 %v3517, %v3913
      %v3944 = vadd.f32 %v3518, %v3918
      %v3945 = vadd.f32 %v3519, %v3921
      %v3946 = vadd.f32 %v3520, %v3926
      %v3947 = vadd.f32 %v3521, %v3929
      %v3948 = vld [vmem:[%s3279] sm:$0xe]
      %v3949 = vld [vmem:[%s3279 + $0xc] sm:$0xe]
      %v3950 = vld [vmem:[%s3279 + $0x18] sm:$0xe]
      %v3951 = vld [vmem:[%s3279 + $0x24] sm:$0xe]
      %v3952 = vld [vmem:[%s3279 + $0x30] sm:$0xe]
      %v3953 = vld [vmem:[%s3279 + $0x3c] sm:$0xe]
      %v3954 = vld [vmem:[%s3279 + $0x48] sm:$0xe]
      %v3955 = vld [vmem:[%s3279 + $0x54] sm:$0xe]
      %v3980 = vrot.slane %v3948, 5
      %v3981 = vrot.slane %v3980, 4
      %v3982 = vrot.slane %v3523, 5
      %v3983 = vsel %vm2046, %v3981, %v3982
      %v3984 = vrot.slane %v3982, 4
      %v3985 = vrot.slane %v3524, 5
      %v3986 = vsel %vm2046, %v3984, %v3985
      %v3987 = vrot.slane %v3949, 5
      %v3988 = vrot.slane %v3987, 4
      %v3989 = vrot.slane %v3526, 5
      %v3990 = vsel %vm2046, %v3988, %v3989
      %v3991 = vrot.slane %v3989, 4
      %v3992 = vrot.slane %v3527, 5
      %v3993 = vsel %vm2046, %v3991, %v3992
      %v3994 = vrot.slane %v3950, 5
      %v3995 = vrot.slane %v3994, 4
      %v3996 = vrot.slane %v3529, 5
      %v3997 = vsel %vm2046, %v3995, %v3996
      %v3998 = vrot.slane %v3996, 4
      %v3999 = vrot.slane %v3530, 5
      %v4000 = vsel %vm2046, %v3998, %v3999
      %v4001 = vrot.slane %v3951, 5
      %v4002 = vrot.slane %v4001, 4
      %v4003 = vrot.slane %v3532, 5
      %v4004 = vsel %vm2046, %v4002, %v4003
      %v4005 = vrot.slane %v4003, 4
      %v4006 = vrot.slane %v3533, 5
      %v4007 = vsel %vm2046, %v4005, %v4006
      %v4008 = vrot.slane %v3952, 5
      %v4009 = vrot.slane %v4008, 4
      %v4010 = vrot.slane %v3535, 5
      %v4011 = vsel %vm2046, %v4009, %v4010
      %v4012 = vrot.slane %v4010, 4
      %v4013 = vrot.slane %v3536, 5
      %v4014 = vsel %vm2046, %v4012, %v4013
      %v4015 = vrot.slane %v3953, 5
      %v4016 = vrot.slane %v4015, 4
      %v4017 = vrot.slane %v3538, 5
      %v4018 = vsel %vm2046, %v4016, %v4017
      %v4019 = vrot.slane %v4017, 4
      %v4020 = vrot.slane %v3539, 5
      %v4021 = vsel %vm2046, %v4019, %v4020
      %v4022 = vrot.slane %v3954, 5
      %v4023 = vrot.slane %v4022, 4
      %v4024 = vrot.slane %v3541, 5
      %v4025 = vsel %vm2046, %v4023, %v4024
      %v4026 = vrot.slane %v4024, 4
      %v4027 = vrot.slane %v3542, 5
      %v4028 = vsel %vm2046, %v4026, %v4027
      %v4029 = vrot.slane %v3955, 5
      %v4030 = vrot.slane %v4029, 4
      %v4031 = vrot.slane %v3544, 5
      %v4032 = vsel %vm2046, %v4030, %v4031
      %v4033 = vrot.slane %v4031, 4
      %v4034 = vrot.slane %v3545, 5
      %v4035 = vsel %vm2046, %v4033, %v4034
      %s4036 = scalar_lea.vmem %s6, 512
      %v4037 = vld [vmem:[%s4036] sm:$0xf]
      %v4038 = vld [vmem:[%s4036 + $0x4] sm:$0xf]
      %v4039 = vld [vmem:[%s4036 + $0x8] sm:$0xf]
      %v4040 = vld [vmem:[%s4036 + $0xc] sm:$0xf]
      %v4041 = vld [vmem:[%s4036 + $0x10] sm:$0xf]
      %v4042 = vld [vmem:[%s4036 + $0x14] sm:$0xf]
      %v4043 = vld [vmem:[%s4036 + $0x18] sm:$0xf]
      %v4044 = vld [vmem:[%s4036 + $0x1c] sm:$0xf]
      %v4045 = vld [vmem:[%s4036 + $0x20] sm:$0xf]
      %v4046 = vld [vmem:[%s4036 + $0x24] sm:$0xf]
      %v4047 = vld [vmem:[%s4036 + $0x28] sm:$0xf]
      %v4048 = vld [vmem:[%s4036 + $0x2c] sm:$0xf]
      %v4049 = vld [vmem:[%s4036 + $0x30] sm:$0xf]
      %v4050 = vld [vmem:[%s4036 + $0x34] sm:$0xf]
      %v4051 = vld [vmem:[%s4036 + $0x38] sm:$0xf]
      %v4052 = vld [vmem:[%s4036 + $0x3c] sm:$0xf]
      %v4053 = vunpack.c.l.b16 %v3983
      %v4054 = vunpack.c.l.b16 %v3986
      %v4055 = vunpack.c.l.b16 %v3990
      %v4056 = vunpack.c.l.b16 %v3993
      %v4057 = vunpack.c.l.b16 %v3997
      %v4058 = vunpack.c.l.b16 %v4000
      %v4059 = vunpack.c.l.b16 %v4004
      %v4060 = vunpack.c.l.b16 %v4007
      %v4061 = vunpack.c.l.b16 %v4011
      %v4062 = vunpack.c.l.b16 %v4014
      %v4063 = vunpack.c.l.b16 %v4018
      %v4064 = vunpack.c.l.b16 %v4021
      %v4065 = vunpack.c.l.b16 %v4025
      %v4066 = vunpack.c.l.b16 %v4028
      %v4067 = vunpack.c.l.b16 %v4032
      %v4068 = vunpack.c.l.b16 %v4035
      %v4069 = vpack.c.b16 %v4054, %v4053
      %v4070 = vpack.c.b16 %v4056, %v4055
      %v4071 = vpack.c.b16 %v4058, %v4057
      %v4072 = vpack.c.b16 %v4060, %v4059
      %v4073 = vpack.c.b16 %v4062, %v4061
      %v4074 = vpack.c.b16 %v4064, %v4063
      %v4075 = vpack.c.b16 %v4066, %v4065
      %v4076 = vpack.c.b16 %v4068, %v4067
      %v4101 = vunpack.c.l.b16 %v4037
      %v4102 = vunpack.c.l.b16 %v4038
      %v4103 = vunpack.c.l.b16 %v4039
      %v4104 = vunpack.c.l.b16 %v4040
      %v4105 = vunpack.c.l.b16 %v4041
      %v4106 = vunpack.c.l.b16 %v4042
      %v4107 = vunpack.c.l.b16 %v4043
      %v4108 = vunpack.c.l.b16 %v4044
      %v4109 = vunpack.c.l.b16 %v4045
      %v4110 = vunpack.c.l.b16 %v4046
      %v4111 = vunpack.c.l.b16 %v4047
      %v4112 = vunpack.c.l.b16 %v4048
      %v4113 = vunpack.c.l.b16 %v4049
      %v4114 = vunpack.c.l.b16 %v4050
      %v4115 = vunpack.c.l.b16 %v4051
      %v4116 = vunpack.c.l.b16 %v4052
      %v4117 = vpack.c.b16 %v4102, %v4101
      %v4118 = vpack.c.b16 %v4104, %v4103
      %v4119 = vpack.c.b16 %v4106, %v4105
      %v4120 = vpack.c.b16 %v4108, %v4107
      %v4121 = vpack.c.b16 %v4110, %v4109
      %v4122 = vpack.c.b16 %v4112, %v4111
      %v4123 = vpack.c.b16 %v4114, %v4113
      %v4124 = vpack.c.b16 %v4116, %v4115
      %4133 = vmatprep.subr.bf16.mxu0 0
      %4134 = vmatpush1.bf16.msra.mxu0 %v4117
      %4135 = vmatprep.subr.bf16.mxu0 0
      %4136 = vmatpush1.bf16.msra.mxu0 %v4118
      %4137 = vmatprep.subr.bf16.mxu0 0
      %4138 = vmatpush1.bf16.msra.mxu0 %v4119
      %4139 = vmatprep.subr.bf16.mxu0 0
      %4140 = vmatpush1.bf16.msra.mxu0 %v4120
      %4141 = vmatprep.subr.bf16.mxu0 0
      %4142 = vmatpush1.bf16.msra.mxu0 %v4121
      %4143 = vmatprep.subr.bf16.mxu0 0
      %4144 = vmatpush1.bf16.msra.mxu0 %v4122
      %4145 = vmatprep.subr.bf16.mxu0 0
      %4146 = vmatpush1.bf16.msra.mxu0 %v4123
      %4147 = vmatprep.subr.bf16.mxu0 0
      %4148 = vmatpush1.bf16.msra.mxu0 %v4124
      %4149 = vmatprep.subr.bf16.mxu0 0
      %4150 = vmatpush1.bf16.msra.mxu0 0
      %4151 = vmatprep.subr.bf16.mxu0 0
      %4152 = vmatpush1.bf16.msra.mxu0 0
      %4153 = vmatprep.subr.bf16.mxu0 0
      %4154 = vmatpush1.bf16.msra.mxu0 0
      %4155 = vmatprep.subr.bf16.mxu0 0
      %4156 = vmatpush1.bf16.msra.mxu0 0
      %4157 = vmatprep.subr.bf16.mxu0 0
      %4158 = vmatpush1.bf16.msra.mxu0 0
      %4159 = vmatprep.subr.bf16.mxu0 0
      %4160 = vmatpush1.bf16.msra.mxu0 0
      %4161 = vmatprep.subr.bf16.mxu0 0
      %4162 = vmatpush1.bf16.msra.mxu0 0
      %4163 = vmatprep.subr.bf16.mxu0 0
      %4164 = vmatpush1.bf16.msra.mxu0 0
      %4165 = vmatprep.mubr.bf16.mxu0 0
      %4166 = vmatmul.mubr.bf16.gmra.mrb[0].mxu0 %v4069
      %v4167 = vpop.f32.mrb[0].mxu0
      %v4168 = vadd.f32 0.0, %v4167
      %v4169 = vpop.f32.mrb[0].mxu0
      %v4170 = vpop.f32.mrb[0].mxu0
      %v4171 = vadd.f32 0.0, %v4170
      %v4172 = vpop.f32.mrb[0].mxu0
      %4173 = vmatprep.mubr.bf16.mxu0 0
      %4174 = vmatmul.mubr.bf16.gmra.mrb[0].mxu0 %v4070
      %v4175 = vpop.f32.mrb[0].mxu0
      %v4176 = vadd.f32 0.0, %v4175
      %v4177 = vpop.f32.mrb[0].mxu0
      %v4178 = vpop.f32.mrb[0].mxu0
      %v4179 = vadd.f32 0.0, %v4178
      %v4180 = vpop.f32.mrb[0].mxu0
      %4181 = vmatprep.mubr.bf16.mxu0 0
      %4182 = vmatmul.mubr.bf16.gmra.mrb[0].mxu0 %v4071
      %v4183 = vpop.f32.mrb[0].mxu0
      %v4184 = vadd.f32 0.0, %v4183
      %v4185 = vpop.f32.mrb[0].mxu0
      %v4186 = vpop.f32.mrb[0].mxu0
      %v4187 = vadd.f32 0.0, %v4186
      %v4188 = vpop.f32.mrb[0].mxu0
      %4189 = vmatprep.mubr.bf16.mxu0 0
      %4190 = vmatmul.mubr.bf16.gmra.mrb[0].mxu0 %v4072
      %v4191 = vpop.f32.mrb[0].mxu0
      %v4192 = vadd.f32 0.0, %v4191
      %v4193 = vpop.f32.mrb[0].mxu0
      %v4194 = vpop.f32.mrb[0].mxu0
      %v4195 = vadd.f32 0.0, %v4194
      %v4196 = vpop.f32.mrb[0].mxu0
      %4197 = vmatprep.mubr.bf16.mxu0 0
      %4198 = vmatmul.mubr.bf16.gmra.mrb[0].mxu0 %v4073
      %v4199 = vpop.f32.mrb[0].mxu0
      %v4200 = vadd.f32 0.0, %v4199
      %v4201 = vpop.f32.mrb[0].mxu0
      %v4202 = vpop.f32.mrb[0].mxu0
      %v4203 = vadd.f32 0.0, %v4202
      %v4204 = vpop.f32.mrb[0].mxu0
      %4205 = vmatprep.mubr.bf16.mxu0 0
      %4206 = vmatmul.mubr.bf16.gmra.mrb[0].mxu0 %v4074
      %v4207 = vpop.f32.mrb[0].mxu0
      %v4208 = vadd.f32 0.0, %v4207
      %v4209 = vpop.f32.mrb[0].mxu0
      %v4210 = vpop.f32.mrb[0].mxu0
      %v4211 = vadd.f32 0.0, %v4210
      %v4212 = vpop.f32.mrb[0].mxu0
      %4213 = vmatprep.mubr.bf16.mxu0 0
      %4214 = vmatmul.mubr.bf16.gmra.mrb[0].mxu0 %v4075
      %v4215 = vpop.f32.mrb[0].mxu0
      %v4216 = vadd.f32 0.0, %v4215
      %v4217 = vpop.f32.mrb[0].mxu0
      %v4218 = vpop.f32.mrb[0].mxu0
      %v4219 = vadd.f32 0.0, %v4218
      %v4220 = vpop.f32.mrb[0].mxu0
      %4221 = vmatprep.mubr.bf16.mxu0 0
      %4222 = vmatmul.mubr.bf16.gmra.mrb[0].mxu0 %v4076
      %v4223 = vpop.f32.mrb[0].mxu0
      %v4224 = vadd.f32 0.0, %v4223
      %v4225 = vpop.f32.mrb[0].mxu0
      %v4226 = vpop.f32.mrb[0].mxu0
      %v4227 = vadd.f32 0.0, %v4226
      %v4228 = vpop.f32.mrb[0].mxu0
      %4229 = vdwg.mxu0
      %v4230 = vadd.f32 %v3932, %v4168
      %v4231 = vadd.f32 %v3933, %v4171
      %v4232 = vadd.f32 %v3934, %v4176
      %v4233 = vadd.f32 %v3935, %v4179
      %v4234 = vadd.f32 %v3936, %v4184
      %v4235 = vadd.f32 %v3937, %v4187
      %v4236 = vadd.f32 %v3938, %v4192
      %v4237 = vadd.f32 %v3939, %v4195
      %v4238 = vadd.f32 %v3940, %v4200
      %v4239 = vadd.f32 %v3941, %v4203
      %v4240 = vadd.f32 %v3942, %v4208
      %v4241 = vadd.f32 %v3943, %v4211
      %v4242 = vadd.f32 %v3944, %v4216
      %v4243 = vadd.f32 %v3945, %v4219
      %v4244 = vadd.f32 %v3946, %v4224
      %v4245 = vadd.f32 %v3947, %v4227
      %v4246 = vld [vmem:[%s7] sm:$0x1]
      %v4248 = vlaneseq
      %v4249 = vshrl.u32 %v4248, 7
      %v4250 = vsub.s32 0, %v4249
      %v4251 = vrot.slane %v4246, %v4250
      %v4253 = vmul.f32 %v4230, %v4251
      %v4254 = vmul.f32 %v4231, %v4251
      %v4255 = vmul.f32 %v4232, %v4251
      %v4256 = vmul.f32 %v4233, %v4251
      %v4257 = vmul.f32 %v4234, %v4251
      %v4258 = vmul.f32 %v4235, %v4251
      %v4259 = vmul.f32 %v4236, %v4251
      %v4260 = vmul.f32 %v4237, %v4251
      %v4261 = vmul.f32 %v4238, %v4251
      %v4262 = vmul.f32 %v4239, %v4251
      %v4263 = vmul.f32 %v4240, %v4251
      %v4264 = vmul.f32 %v4241, %v4251
      %v4265 = vmul.f32 %v4242, %v4251
      %v4266 = vmul.f32 %v4243, %v4251
      %v4267 = vmul.f32 %v4244, %v4251
      %v4268 = vmul.f32 %v4245, %v4251
      %v4269 = vld [vmem:[%s8] sm:$0x1]
      %v4271 = vlaneseq
      %v4272 = vshrl.u32 %v4271, 7
      %v4273 = vsub.s32 0, %v4272
      %v4274 = vrot.slane %v4269, %v4273
      %v4276 = vadd.f32 %v4253, %v4274
      %v4277 = vadd.f32 %v4254, %v4274
      %v4278 = vadd.f32 %v4255, %v4274
      %v4279 = vadd.f32 %v4256, %v4274
      %v4280 = vadd.f32 %v4257, %v4274
      %v4281 = vadd.f32 %v4258, %v4274
      %v4282 = vadd.f32 %v4259, %v4274
      %v4283 = vadd.f32 %v4260, %v4274
      %v4284 = vadd.f32 %v4261, %v4274
      %v4285 = vadd.f32 %v4262, %v4274
      %v4286 = vadd.f32 %v4263, %v4274
      %v4287 = vadd.f32 %v4264, %v4274
      %v4288 = vadd.f32 %v4265, %v4274
      %v4289 = vadd.f32 %v4266, %v4274
      %v4290 = vadd.f32 %v4267, %v4274
      %v4291 = vadd.f32 %v4268, %v4274
      %v4292 = vxor.u32 %v4276, 2147483648
      %v4293 = vxor.u32 %v4277, 2147483648
      %v4294 = vxor.u32 %v4278, 2147483648
      %v4295 = vxor.u32 %v4279, 2147483648
      %v4296 = vxor.u32 %v4280, 2147483648
      %v4297 = vxor.u32 %v4281, 2147483648
      %v4298 = vxor.u32 %v4282, 2147483648
      %v4299 = vxor.u32 %v4283, 2147483648
      %v4300 = vxor.u32 %v4284, 2147483648
      %v4301 = vxor.u32 %v4285, 2147483648
      %v4302 = vxor.u32 %v4286, 2147483648
      %v4303 = vxor.u32 %v4287, 2147483648
      %v4304 = vxor.u32 %v4288, 2147483648
      %v4305 = vxor.u32 %v4289, 2147483648
      %v4306 = vxor.u32 %v4290, 2147483648
      %v4307 = vxor.u32 %v4291, 2147483648
      %v4308 = vmul.f32 %v4292, 1.442695
      %v4309 = vpow.pop %v4308
      %v4310 = vmul.f32 %v4293, 1.442695
      %v4311 = vpow.pop %v4310
      %v4312 = vmul.f32 %v4294, 1.442695
      %v4313 = vpow.pop %v4312
      %v4314 = vmul.f32 %v4295, 1.442695
      %v4315 = vpow.pop %v4314
      %v4316 = vmul.f32 %v4296, 1.442695
      %v4317 = vpow.pop %v4316
      %v4318 = vmul.f32 %v4297, 1.442695
      %v4319 = vpow.pop %v4318
      %v4320 = vmul.f32 %v4298, 1.442695
      %v4321 = vpow.pop %v4320
      %v4322 = vmul.f32 %v4299, 1.442695
      %v4323 = vpow.pop %v4322
      %v4324 = vmul.f32 %v4300, 1.442695
      %v4325 = vpow.pop %v4324
      %v4326 = vmul.f32 %v4301, 1.442695
      %v4327 = vpow.pop %v4326
      %v4328 = vmul.f32 %v4302, 1.442695
      %v4329 = vpow.pop %v4328
      %v4330 = vmul.f32 %v4303, 1.442695
      %v4331 = vpow.pop %v4330
      %v4332 = vmul.f32 %v4304, 1.442695
      %v4333 = vpow.pop %v4332
      %v4334 = vmul.f32 %v4305, 1.442695
      %v4335 = vpow.pop %v4334
      %v4336 = vmul.f32 %v4306, 1.442695
      %v4337 = vpow.pop %v4336
      %v4338 = vmul.f32 %v4307, 1.442695
      %v4339 = vpow.pop %v4338
      %v4340 = vadd.f32 %v4309, 1.0
      %v4341 = vadd.f32 %v4311, 1.0
      %v4342 = vadd.f32 %v4313, 1.0
      %v4343 = vadd.f32 %v4315, 1.0
      %v4344 = vadd.f32 %v4317, 1.0
      %v4345 = vadd.f32 %v4319, 1.0
      %v4346 = vadd.f32 %v4321, 1.0
      %v4347 = vadd.f32 %v4323, 1.0
      %v4348 = vadd.f32 %v4325, 1.0
      %v4349 = vadd.f32 %v4327, 1.0
      %v4350 = vadd.f32 %v4329, 1.0
      %v4351 = vadd.f32 %v4331, 1.0
      %v4352 = vadd.f32 %v4333, 1.0
      %v4353 = vadd.f32 %v4335, 1.0
      %v4354 = vadd.f32 %v4337, 1.0
      %v4355 = vadd.f32 %v4339, 1.0
      %v4356 = vrcp.pop %v4340
      %v4357 = vmul.f32 1.0, %v4356
      %v4358 = vrcp.pop %v4341
      %v4359 = vmul.f32 1.0, %v4358
      %v4360 = vrcp.pop %v4342
      %v4361 = vmul.f32 1.0, %v4360
      %v4362 = vrcp.pop %v4343
      %v4363 = vmul.f32 1.0, %v4362
      %v4364 = vrcp.pop %v4344
      %v4365 = vmul.f32 1.0, %v4364
      %v4366 = vrcp.pop %v4345
      %v4367 = vmul.f32 1.0, %v4366
      %v4368 = vrcp.pop %v4346
      %v4369 = vmul.f32 1.0, %v4368
      %v4370 = vrcp.pop %v4347
      %v4371 = vmul.f32 1.0, %v4370
      %v4372 = vrcp.pop %v4348
      %v4373 = vmul.f32 1.0, %v4372
      %v4374 = vrcp.pop %v4349
      %v4375 = vmul.f32 1.0, %v4374
      %v4376 = vrcp.pop %v4350
      %v4377 = vmul.f32 1.0, %v4376
      %v4378 = vrcp.pop %v4351
      %v4379 = vmul.f32 1.0, %v4378
      %v4380 = vrcp.pop %v4352
      %v4381 = vmul.f32 1.0, %v4380
      %v4382 = vrcp.pop %v4353
      %v4383 = vmul.f32 1.0, %v4382
      %v4384 = vrcp.pop %v4354
      %v4385 = vmul.f32 1.0, %v4384
      %v4386 = vrcp.pop %v4355
      %v4387 = vmul.f32 1.0, %v4386
      %v4388 = vmul.f32 %v4276, %v4357
      %v4389 = vmul.f32 %v4277, %v4359
      %v4390 = vmul.f32 %v4278, %v4361
      %v4391 = vmul.f32 %v4279, %v4363
      %v4392 = vmul.f32 %v4280, %v4365
      %v4393 = vmul.f32 %v4281, %v4367
      %v4394 = vmul.f32 %v4282, %v4369
      %v4395 = vmul.f32 %v4283, %v4371
      %v4396 = vmul.f32 %v4284, %v4373
      %v4397 = vmul.f32 %v4285, %v4375
      %v4398 = vmul.f32 %v4286, %v4377
      %v4399 = vmul.f32 %v4287, %v4379
      %v4400 = vmul.f32 %v4288, %v4381
      %v4401 = vmul.f32 %v4289, %v4383
      %v4402 = vmul.f32 %v4290, %v4385
      %v4403 = vmul.f32 %v4291, %v4387
      %v4404 = vunpack.c.l.bf16 %v516
      %v4405 = vunpack.c.l.bf16 %v517
      %v4406 = vunpack.c.l.bf16 %v518
      %v4407 = vunpack.c.l.bf16 %v519
      %v4408 = vunpack.c.l.bf16 %v520
      %v4409 = vunpack.c.l.bf16 %v521
      %v4410 = vunpack.c.l.bf16 %v522
      %v4411 = vunpack.c.l.bf16 %v523
      %v4412 = vunpack.c.l.bf16 %v524
      %v4413 = vunpack.c.l.bf16 %v525
      %v4414 = vunpack.c.l.bf16 %v526
      %v4415 = vunpack.c.l.bf16 %v527
      %v4416 = vunpack.c.l.bf16 %v528
      %v4417 = vunpack.c.l.bf16 %v529
      %v4418 = vunpack.c.l.bf16 %v530
      %v4419 = vunpack.c.l.bf16 %v531
      %v4420 = vadd.f32 %v4388, %v4404
      %v4421 = vadd.f32 %v4389, %v4405
      %v4422 = vadd.f32 %v4390, %v4406
      %v4423 = vadd.f32 %v4391, %v4407
      %v4424 = vadd.f32 %v4392, %v4408
      %v4425 = vadd.f32 %v4393, %v4409
      %v4426 = vadd.f32 %v4394, %v4410
      %v4427 = vadd.f32 %v4395, %v4411
      %v4428 = vadd.f32 %v4396, %v4412
      %v4429 = vadd.f32 %v4397, %v4413
      %v4430 = vadd.f32 %v4398, %v4414
      %v4431 = vadd.f32 %v4399, %v4415
      %v4432 = vadd.f32 %v4400, %v4416
      %v4433 = vadd.f32 %v4401, %v4417
      %v4434 = vadd.f32 %v4402, %v4418
      %v4435 = vadd.f32 %v4403, %v4419
      %v4436 = vpack.c.bf16 %v4421, %v4420
      %v4437 = vpack.c.bf16 %v4423, %v4422
      %v4438 = vpack.c.bf16 %v4425, %v4424
      %v4439 = vpack.c.bf16 %v4427, %v4426
      %v4440 = vpack.c.bf16 %v4429, %v4428
      %v4441 = vpack.c.bf16 %v4431, %v4430
      %v4442 = vpack.c.bf16 %v4433, %v4432
      %v4443 = vpack.c.bf16 %v4435, %v4434
      %v4452 = vunpack.c.l.b16 %v4436
      %v4453 = vunpack.c.h.b16 %v4436
      %v4454 = vunpack.c.l.b16 %v4437
      %v4455 = vunpack.c.h.b16 %v4437
      %v4456 = vunpack.c.l.b16 %v4438
      %v4457 = vunpack.c.h.b16 %v4438
      %v4458 = vunpack.c.l.b16 %v4439
      %v4459 = vunpack.c.h.b16 %v4439
      %v4460 = vunpack.c.l.b16 %v4440
      %v4461 = vunpack.c.h.b16 %v4440
      %v4462 = vunpack.c.l.b16 %v4441
      %v4463 = vunpack.c.h.b16 %v4441
      %v4464 = vunpack.c.l.b16 %v4442
      %v4465 = vunpack.c.h.b16 %v4442
      %v4466 = vunpack.c.l.b16 %v4443
      %v4467 = vunpack.c.h.b16 %v4443
      %v4468 = vpack.c.b16 %v4452, %v4452
      %v4469 = vpack.c.b16 %v4453, %v4453
      %v4470 = vpack.c.b16 %v4454, %v4454
      %v4471 = vpack.c.b16 %v4455, %v4455
      %v4472 = vpack.c.b16 %v4456, %v4456
      %v4473 = vpack.c.b16 %v4457, %v4457
      %v4474 = vpack.c.b16 %v4458, %v4458
      %v4475 = vpack.c.b16 %v4459, %v4459
      %v4476 = vpack.c.b16 %v4460, %v4460
      %v4477 = vpack.c.b16 %v4461, %v4461
      %v4478 = vpack.c.b16 %v4462, %v4462
      %v4479 = vpack.c.b16 %v4463, %v4463
      %v4480 = vpack.c.b16 %v4464, %v4464
      %v4481 = vpack.c.b16 %v4465, %v4465
      %v4482 = vpack.c.b16 %v4466, %v4466
      %v4483 = vpack.c.b16 %v4467, %v4467
      %4500 = vst [vmem:[%s495] sm:$0xf] %v4468
      %4501 = vst [vmem:[%s495 + $0x4] sm:$0xf] %v4469
      %4502 = vst [vmem:[%s495 + $0x8] sm:$0xf] %v4470
      %4503 = vst [vmem:[%s495 + $0xc] sm:$0xf] %v4471
      %4504 = vst [vmem:[%s495 + $0x10] sm:$0xf] %v4472
      %4505 = vst [vmem:[%s495 + $0x14] sm:$0xf] %v4473
      %4506 = vst [vmem:[%s495 + $0x18] sm:$0xf] %v4474
      %4507 = vst [vmem:[%s495 + $0x1c] sm:$0xf] %v4475
      %4508 = vst [vmem:[%s495 + $0x20] sm:$0xf] %v4476
      %4509 = vst [vmem:[%s495 + $0x24] sm:$0xf] %v4477
      %4510 = vst [vmem:[%s495 + $0x28] sm:$0xf] %v4478
      %4511 = vst [vmem:[%s495 + $0x2c] sm:$0xf] %v4479
      %4512 = vst [vmem:[%s495 + $0x30] sm:$0xf] %v4480
      %4513 = vst [vmem:[%s495 + $0x34] sm:$0xf] %v4481
      %4514 = vst [vmem:[%s495 + $0x38] sm:$0xf] %v4482
      %4515 = vst [vmem:[%s495 + $0x3c] sm:$0xf] %v4483
      %s4516 = smul.u32 8, %s25
      %p4517 = scmp.lt.s32.totalorder %s24, 1
      %s4518 = scalar_select %p4517, %s24, 1
      %p4519 = scmp.lt.s32.totalorder %s4516, 15
      %s4520 = scalar_select %p4519, %s4516, 15
      %s4521 = smul.addr %s4520, 2
      %s4522 = smul.addr %s4518, 32
      %s4523 = sadd.s32 %s4521, %s4522
      %s4524 = smul.addr %s4523, 4
      %s4525 = scalar_lea.vmem %s9, %s4524
      // Predicated region
      $region57: #{bottleneck_csp_forward.4} parent=55 // pred_check
        %p4526 = pneg %p274
      $region58: #{bottleneck_csp_forward.4} parent=55 // pred_check_branch
        %4528 = sbr.rel (%p4526) target = $region60
      $region59: #{bottleneck_csp_forward.4} parent=55 // pred_region
        %s4529 = smul.u32 8, %s25
      $region60: #{bottleneck_csp_forward.4} parent=55 // pred_fallthru
        _
    $region56: #{bottleneck_csp_forward.4} parent=5 // pred_fallthru
      _
    %p4530 = scmp.le.s32.totalorder 2, %s15
    // Predicated region
    $region61: #{bottleneck_csp_forward.4} parent=5 // pred_check
      %p4531 = pneg %p4530
    $region62: #{bottleneck_csp_forward.4} parent=5 // pred_check_branch
      %4533 = sbr.rel (%p4531) target = $region64
    $region63: #{bottleneck_csp_forward.4} parent=5 // pred_region
      %s4534 = ssub.s32 %s15, 2
      // Predicated region
      $region65: #{bottleneck_csp_forward.4} parent=63 // pred_check
        %p4535 = pneg %p280
      $region66: #{bottleneck_csp_forward.4} parent=63 // pred_check_branch
        %4537 = sbr.rel (%p4535) target = $region68
      $region67: #{bottleneck_csp_forward.4} parent=63 // pred_region
        %s4538 = smul.u32 8, %s27
        %p4539 = scmp.lt.s32.totalorder %s26, 1
        %s4540 = scalar_select %p4539, %s26, 1
        %p4541 = scmp.lt.s32.totalorder %s4538, 15
        %s4542 = scalar_select %p4541, %s4538, 15
        %s4543 = smul.addr %s4542, 2
        %s4544 = smul.addr %s4540, 32
        %s4545 = sadd.s32 %s4543, %s4544
        %s4546 = smul.addr %s4545, 4
        %s4547 = scalar_lea.vmem %s9, %s4546
      $region68: #{bottleneck_csp_forward.4} parent=63 // pred_fallthru
        _
    $region64: #{bottleneck_csp_forward.4} parent=5 // pred_fallthru
      _
  $region6: #{bottleneck_csp_forward.4} parent=0 // loop_footer
    %s19 = sadd.s32 1, %s15
  $region7: #{bottleneck_csp_forward.4} parent=0 // loop_footer_branch
    %14 = sbr.rel target = $region3
  $region8: #{bottleneck_csp_forward.4} parent=0 // loop_exit
    _

</llo_original>
